<compile_context>
chip_gen: v6e
topology: v6e:2x2x1
jax: 0.10.0
libtpu: 0.0.40
codegen_flags: <defaults>
</compile_context>

<pallas_src>
import math
from functools import partial

import jax
import jax.numpy as jnp
from jax import lax
from jax.experimental import pallas as pl
from jax.experimental.pallas import tpu as pltpu

_DN = (((1,), (1,)), ((), ()))          # x @ W.T : contract last dims of both
_F32 = jnp.float32


def _full_spec(shape):
    nd = len(shape)
    return pl.BlockSpec(shape, lambda i, _nd=nd: (0,) * _nd)


# --------------------------- in-kernel helpers -------------------------------

def _same_batch_mask(n_rows, n_cols, B):
    """Additive mask (0 / -1e30) for batch-interleaved rows/cols (idx % B = batch)."""
    ri = lax.broadcasted_iota(jnp.int32, (n_rows, n_cols), 0)
    cj = lax.broadcasted_iota(jnp.int32, (n_rows, n_cols), 1)
    if (B & (B - 1)) == 0:                       # power of two: bitwise path
        same = ((ri ^ cj) & (B - 1)) == 0
    else:
        same = ((ri - cj) % B) == 0
    return jnp.where(same, 0.0, -1e30).astype(_F32)


def _batch_collapse_matrix(n_in, n_out, B):
    """(n_in, n_out) 0/1 matrix; S[j, c] = 1 iff j // B == c (no int div needed)."""
    j = lax.broadcasted_iota(jnp.int32, (n_in, n_out), 0)
    c = lax.broadcasted_iota(jnp.int32, (n_in, n_out), 1)
    sel = (j >= c * B) & (j < (c + 1) * B)
    return jnp.where(sel, 1.0, 0.0).astype(_F32)


def _mha_block(x_q, x_kv, w_in3, b_in3, w_out_t, b_out, mask, *, E, nhead,
               need_probs):
    """Multihead attention (eval) on sublane-stacked (L*B, E) activations.

    x_q: (Lq*B, E), x_kv: (Lk*B, E); w_in3: (3E, E); b_in3: (3, E);
    w_out_t: (E, E) = out_proj.weight.T; b_out: (1, E); mask: (Lq*B, Lk*B).
    Returns (attn_output (Lq*B, E), head-summed probs (Lq*B, Lk*B) or None).
    """
    hd = E // nhead
    scale = 1.0 / math.sqrt(hd)

    # Fused projections covering both batches (sublane-aligned weight slices).
    q = lax.dot_general(x_q, w_in3[0:E], _DN,
                        preferred_element_type=_F32) + b_in3[0:1]
    k = lax.dot_general(x_kv, w_in3[E:2 * E], _DN,
                        preferred_element_type=_F32) + b_in3[1:2]
    v = lax.dot_general(x_kv, w_in3[2 * E:3 * E], _DN,
                        preferred_element_type=_F32) + b_in3[2:3]

    acc = jnp.zeros(q.shape, _F32)               # output-projection accumulator
    p_sum = None
    for h in range(nhead):
        lo, hi = h * hd, (h + 1) * hd
        s = lax.dot_general(q[:, lo:hi], k[:, lo:hi], _DN,
                            preferred_element_type=_F32) * scale + mask
        s = s - jnp.max(s, axis=-1, keepdims=True)
        e = jnp.exp(s)
        p = e / jnp.sum(e, axis=-1, keepdims=True)           # exact division
        ho = jnp.dot(p, v[:, lo:hi], preferred_element_type=_F32)   # (LqB, hd)
        # fold the output projection per head (sublane slice of w_out_t)
        acc = acc + jnp.dot(ho, w_out_t[lo:hi, :], preferred_element_type=_F32)
        if need_probs:
            p_sum = p if p_sum is None else p_sum + p
    return acc + b_out, p_sum


# ------------------------------ fused kernel ---------------------------------

def _qformer_kernel(*refs, B, E, nhead, n_self, n_cross, has_qpos, want_attn):
    it = iter(refs)
    cond_ref = next(it)
    qrs_ref = next(it)
    txt_ref = next(it)
    vis_ref = next(it)
    qpos_ref = next(it) if has_qpos else None
    sw_in = next(it); sb_in = next(it); sw_ot = next(it); sb_o = next(it)
    cw_in = next(it); cb_in = next(it); cw_ot = next(it); cb_o = next(it)
    fcw = next(it); fcb = next(it)
    src_ref = next(it)
    attn_ref = next(it) if want_attn else None

    cond = cond_ref[...].astype(_F32)            # (Nq*B, E)
    txt = txt_ref[...].astype(_F32)              # (Nt*B, E)

    # ---- self-attention stack: condition attends to txt (residual) ----------
    mask_self = _same_batch_mask(cond.shape[0], txt.shape[0], B)
    for li in range(n_self):
        out, _ = _mha_block(cond, txt, sw_in[li], sb_in[li], sw_ot[li], sb_o[li],
                            mask_self, E=E, nhead=nhead, need_probs=False)
        cond = cond + out

    # ---- tgt = condition + queries; fc(vis) in one matmul over both batches -
    tgt = cond + qrs_ref[...].astype(_F32)
    vis_p = lax.dot_general(vis_ref[...].astype(_F32), fcw[...], _DN,
                            preferred_element_type=_F32) + fcb[...]

    # ---- cross-attention stack (residual MHA blocks; see TODO in wrapper) ---
    mask_cross = _same_batch_mask(tgt.shape[0], vis_p.shape[0], B)
    qpos = qpos_ref[...].astype(_F32) if has_qpos else None
    src = tgt
    attn_slab = None
    for li in range(n_cross):
        q_in = (src + qpos) if has_qpos else src
        need_p = want_attn and (li == n_cross - 1)
        out, p_sum = _mha_block(q_in, vis_p, cw_in[li], cb_in[li], cw_ot[li],
                                cb_o[li], mask_cross, E=E, nhead=nhead,
                                need_probs=need_p)
        src = src + out
        if need_p:
            p_avg = p_sum * (1.0 / nhead)                     # (Nq*B, Nv*B)
            nv = vis_p.shape[0] // B
            collapse = _batch_collapse_matrix(p_avg.shape[1], nv, B)
            attn_slab = jnp.dot(p_avg, collapse,
                                preferred_element_type=_F32)  # (Nq*B, Nv)

    src_ref[...] = src.astype(src_ref.dtype)
    if want_attn:
        attn_ref[...] = attn_slab.astype(attn_ref.dtype)


# ------------------------------- Qformer_2 -----------------------------------

def qformer2_forward(params, condition, queries, vis, txt, query_pos=None,
                     return_attn=False, nhead=8):
    """Fused Qformer_2 forward (eval mode) — a single pallas_call.

    condition, queries: (N_q, B, D0); vis: (N_v, B, D1); txt: (N_t, B, D0).
    Returns (src (N_q, B, D0), attn (B, N_q, N_v) or None).
    """
    # TODO(synk): CrossAttention class is not defined in the provided source;
    # implemented as num_layers residual multihead cross-attention blocks
    # (tgt (+query_pos) attends to fc(vis)), attn taken from the last layer.
    Nq, B, D0 = condition.shape
    Nv = vis.shape[0]
    D1 = vis.shape[2]
    E = D0
    assert E % nhead == 0

    sp, cp = params["self_attn"], params["cross_attn"]
    n_self = sp["w_in"].shape[0]
    n_cross = cp["w_in"].shape[0]
    has_qpos = query_pos is not None

    # Free contiguous reshapes to sublane-stacked 2-D slabs (row = l*B + b).
    operands = [condition.reshape(Nq * B, D0),
                queries.reshape(Nq * B, D0),
                txt.reshape(txt.shape[0] * B, D0),
                vis.reshape(Nv * B, D1)]
    if has_qpos:
        operands.append(query_pos.reshape(Nq * B, D0))
    operands += [sp["w_in"], sp["b_in"], sp["w_out_t"], sp["b_out"],
                 cp["w_in"], cp["b_in"], cp["w_out_t"], cp["b_out"],
                 params["fc_weight"], params["fc_bias"]]

    in_specs = [_full_spec(op.shape) for op in operands]
    kern = partial(_qformer_kernel, B=B, E=E, nhead=nhead, n_self=n_self,
                   n_cross=n_cross, has_qpos=has_qpos, want_attn=return_attn)
    cparams = pltpu.CompilerParams(dimension_semantics=("arbitrary",))

    if return_attn:
        src2d, attn2d = pl.pallas_call(
            kern,
            out_shape=(jax.ShapeDtypeStruct((Nq * B, D0), condition.dtype),
                       jax.ShapeDtypeStruct((Nq * B, Nv), condition.dtype)),
            grid=(1,),
            in_specs=in_specs,
            out_specs=(_full_spec((Nq * B, D0)), _full_spec((Nq * B, Nv))),
            compiler_params=cparams,
        )(*operands)
        attn = attn2d.reshape(Nq, B, Nv).transpose(1, 0, 2)   # (B, Nq, Nv)
        return src2d.reshape(Nq, B, D0), attn

    src2d = pl.pallas_call(
        kern,
        out_shape=jax.ShapeDtypeStruct((Nq * B, D0), condition.dtype),
        grid=(1,),
        in_specs=in_specs,
        out_specs=_full_spec((Nq * B, D0)),
        compiler_params=cparams,
    )(*operands)
    return src2d.reshape(Nq, B, D0), None


# ------------------------------ init helpers ---------------------------------

def init_mha_params(key, E, n_layers):
    k1, k2, k3, k4 = jax.random.split(key, 4)
    w_in = jax.random.normal(k1, (3 * E, E), jnp.float32) * 0.05
    b_in = jax.random.normal(k2, (3 * E,), jnp.float32) * 0.05
    w_out = jax.random.normal(k3, (E, E), jnp.float32) * 0.05
    b_out = jax.random.normal(k4, (E,), jnp.float32) * 0.05
    # _get_clones deep-copies one initialized module -> every clone shares init.
    tile = lambda x: jnp.tile(x[None], (n_layers,) + (1,) * x.ndim)
    return {
        "w_in": tile(w_in),                       # (n, 3E, E)  rows = [q; k; v]
        "b_in": tile(b_in.reshape(3, E)),         # (n, 3, E)   rows = q/k/v bias
        "w_out_t": tile(w_out.T),                 # (n, E, E)   out_proj.weight.T
        "b_out": tile(b_out.reshape(1, E)),       # (n, 1, E)
    }


# --------------------------- pure-JAX reference ------------------------------

def _ref_mha(x_q, x_kv, w_in, b_in, w_out, b_out, nhead):
    Lq, B, E = x_q.shape
    Lk = x_kv.shape[0]
    hd = E // nhead
    hi = "highest"
    q = jnp.einsum("lbe,fe->lbf", x_q, w_in[:E], precision=hi) + b_in[:E]
    k = jnp.einsum("lbe,fe->lbf", x_kv, w_in[E:2 * E], precision=hi) + b_in[E:2 * E]
    v = jnp.einsum("lbe,fe->lbf", x_kv, w_in[2 * E:], precision=hi) + b_in[2 * E:]
    q = q.reshape(Lq, B, nhead, hd)
    k = k.reshape(Lk, B, nhead, hd)
    v = v.reshape(Lk, B, nhead, hd)
    s = jnp.einsum("qbhd,kbhd->bhqk", q, k, precision=hi) / math.sqrt(hd)
    p = jax.nn.softmax(s, axis=-1)
    o = jnp.einsum("bhqk,kbhd->qbhd", p, v, precision=hi).reshape(Lq, B, E)
    out = jnp.einsum("qbe,fe->qbf", o, w_out, precision=hi) + b_out
    return out, p.mean(axis=1)                    # attn: (B, Lq, Lk)


def qformer2_reference(params, condition, queries, vis, txt, query_pos=None,
                       return_attn=False, nhead=8):
    sp, cp = params["self_attn"], params["cross_attn"]
    for li in range(sp["w_in"].shape[0]):
        out, _ = _ref_mha(condition, txt, sp["w_in"][li],
                          sp["b_in"][li].reshape(-1), sp["w_out_t"][li].T,
                          sp["b_out"][li].reshape(-1), nhead)
        condition = condition + out
    tgt = condition + queries
    vis_p = jnp.einsum("vbd,ed->vbe", vis, params["fc_weight"],
                       precision="highest") + params["fc_bias"].reshape(-1)
    src, attn = tgt, None
    n_cross = cp["w_in"].shape[0]
    for li in range(n_cross):
        q_in = src + query_pos if query_pos is not None else src
        out, a = _ref_mha(q_in, vis_p, cp["w_in"][li],
                          cp["b_in"][li].reshape(-1), cp["w_out_t"][li].T,
                          cp["b_out"][li].reshape(-1), nhead)
        src = src + out
        if return_attn and li == n_cross - 1:
            attn = a
    return src, attn


# ----------------------------------- main -------------------------------------

if __name__ == "__main__":
    # hidden_size = [D0, D1], nhead=8 (module defaults), 1 self + 1 cross layer
    D0, D1 = 64, 48
    nhead = 8
    Nq, Nt, Nv, B = 8, 6, 12, 2

    key = jax.random.PRNGKey(0)
    keys = jax.random.split(key, 8)

    params = {
        "self_attn": init_mha_params(keys[0], D0, 1),       # selfattn_layer = 1
        "cross_attn": init_mha_params(keys[1], D0, 1),      # crossattn_layer = 1
        "fc_weight": jax.random.normal(keys[2], (D0, D1), jnp.float32) * 0.05,
        "fc_bias": (jax.random.normal(keys[3], (D0,), jnp.float32) * 0.05
                    ).reshape(1, D0),
    }

    condition = jax.random.normal(keys[4], (Nq, B, D0), jnp.float32)
    queries = jax.random.normal(keys[5], (Nq, B, D0), jnp.float32)
    vis = jax.random.normal(keys[6], (Nv, B, D1), jnp.float32)
    txt = jax.random.normal(keys[7], (Nt, B, D0), jnp.float32)

    fwd = jax.jit(qformer2_forward, static_argnames=("return_attn", "nhead"))

    src, attn = fwd(params, condition, queries, vis, txt,
                    query_pos=None, return_attn=False, nhead=nhead)
    jax.block_until_ready(src)
    assert src.shape == (Nq, B, D0) and attn is None

    src2, attn2 = fwd(params, condition, queries, vis, txt,
                      query_pos=None, return_attn=True, nhead=nhead)
    jax.block_until_ready((src2, attn2))
    assert src2.shape == (Nq, B, D0)
    assert attn2.shape == (B, Nq, Nv)

    # numerical check against a pure-JAX reference (eval-mode semantics)
    ref_src, ref_attn = qformer2_reference(params, condition, queries, vis, txt,
                                           query_pos=None, return_attn=True,
                                           nhead=nhead)
    assert jnp.allclose(src2, ref_src, atol=1e-3, rtol=1e-3)
    assert jnp.allclose(attn2, ref_attn, atol=1e-3, rtol=1e-3)
    assert jnp.allclose(jnp.sum(attn2, axis=-1), 1.0, atol=1e-4)

    print("KERNEL_OK")
</pallas_src>

<mosaic_0001>
module attributes {stable_mosaic.version = 11 : i64} {
  func.func @_qformer_kernel(%arg0: i32, %arg1: memref<16x64xf32, #tpu.memory_space<vmem>>, %arg2: memref<16x64xf32, #tpu.memory_space<vmem>>, %arg3: memref<12x64xf32, #tpu.memory_space<vmem>>, %arg4: memref<24x48xf32, #tpu.memory_space<vmem>>, %arg5: memref<1x192x64xf32, #tpu.memory_space<vmem>>, %arg6: memref<1x3x64xf32, #tpu.memory_space<vmem>>, %arg7: memref<1x64x64xf32, #tpu.memory_space<vmem>>, %arg8: memref<1x1x64xf32, #tpu.memory_space<vmem>>, %arg9: memref<1x192x64xf32, #tpu.memory_space<vmem>>, %arg10: memref<1x3x64xf32, #tpu.memory_space<vmem>>, %arg11: memref<1x64x64xf32, #tpu.memory_space<vmem>>, %arg12: memref<1x1x64xf32, #tpu.memory_space<vmem>>, %arg13: memref<64x48xf32, #tpu.memory_space<vmem>>, %arg14: memref<1x64xf32, #tpu.memory_space<vmem>>, %arg15: memref<16x64xf32, #tpu.memory_space<vmem>>) attributes {dimension_semantics = [#tpu.dimension_semantics<arbitrary>], iteration_bounds = array<i64: 1>, scalar_prefetch = 0 : i64, scratch_operands = 0 : i64, tpu.core_type = #tpu.core_type<tc>, window_params = [{pipeline_mode = #tpu.pipeline_mode<synchronous>, transform_indices = @transform_0, window_bounds = array<i64: 16, 64>}, {pipeline_mode = #tpu.pipeline_mode<synchronous>, transform_indices = @transform_1, window_bounds = array<i64: 16, 64>}, {pipeline_mode = #tpu.pipeline_mode<synchronous>, transform_indices = @transform_2, window_bounds = array<i64: 12, 64>}, {pipeline_mode = #tpu.pipeline_mode<synchronous>, transform_indices = @transform_3, window_bounds = array<i64: 24, 48>}, {pipeline_mode = #tpu.pipeline_mode<synchronous>, transform_indices = @transform_4, window_bounds = array<i64: 1, 192, 64>}, {pipeline_mode = #tpu.pipeline_mode<synchronous>, transform_indices = @transform_5, window_bounds = array<i64: 1, 3, 64>}, {pipeline_mode = #tpu.pipeline_mode<synchronous>, transform_indices = @transform_6, window_bounds = array<i64: 1, 64, 64>}, {pipeline_mode = #tpu.pipeline_mode<synchronous>, transform_indices = @transform_7, window_bounds = array<i64: 1, 1, 64>}, {pipeline_mode = #tpu.pipeline_mode<synchronous>, transform_indices = @transform_8, window_bounds = array<i64: 1, 192, 64>}, {pipeline_mode = #tpu.pipeline_mode<synchronous>, transform_indices = @transform_9, window_bounds = array<i64: 1, 3, 64>}, {pipeline_mode = #tpu.pipeline_mode<synchronous>, transform_indices = @transform_10, window_bounds = array<i64: 1, 64, 64>}, {pipeline_mode = #tpu.pipeline_mode<synchronous>, transform_indices = @transform_11, window_bounds = array<i64: 1, 1, 64>}, {pipeline_mode = #tpu.pipeline_mode<synchronous>, transform_indices = @transform_12, window_bounds = array<i64: 64, 48>}, {pipeline_mode = #tpu.pipeline_mode<synchronous>, transform_indices = @transform_13, window_bounds = array<i64: 1, 64>}, {pipeline_mode = #tpu.pipeline_mode<synchronous>, transform_indices = @transform_14, window_bounds = array<i64: 16, 64>}]} {
    %c0 = arith.constant 0 : index
    %c0_0 = arith.constant 0 : index
    %0 = vector.load %arg1[%c0, %c0_0] : memref<16x64xf32, #tpu.memory_space<vmem>>, vector<16x64xf32>
    %c0_1 = arith.constant 0 : index
    %c0_2 = arith.constant 0 : index
    %1 = vector.load %arg3[%c0_1, %c0_2] : memref<12x64xf32, #tpu.memory_space<vmem>>, vector<12x64xf32>
    %2 = tpu.iota {dimensions = array<i32: 0>} : vector<16x12xi32>
    %3 = tpu.iota {dimensions = array<i32: 1>} : vector<16x12xi32>
    %4 = arith.xori %2, %3 : vector<16x12xi32>
    %c1_i32 = arith.constant 1 : i32
    %5 = vector.broadcast %c1_i32 : i32 to vector<16x12xi32>
    %6 = arith.andi %4, %5 : vector<16x12xi32>
    %c0_i32 = arith.constant 0 : i32
    %7 = vector.broadcast %c0_i32 : i32 to vector<16x12xi32>
    %8 = arith.cmpi eq, %6, %7 : vector<16x12xi32>
    %cst = arith.constant 0.000000e+00 : f32
    %cst_3 = arith.constant -1.000000e+30 : f32
    %9 = vector.broadcast %cst : f32 to vector<16x12xf32>
    %10 = vector.broadcast %cst_3 : f32 to vector<16x12xf32>
    %11 = arith.select %8, %9, %10 : vector<16x12xi1>, vector<16x12xf32>
    %c0_4 = arith.constant 0 : index
    %c0_5 = arith.constant 0 : index
    %c0_6 = arith.constant 0 : index
    %12 = vector.load %arg5[%c0_4, %c0_5, %c0_6] : memref<1x192x64xf32, #tpu.memory_space<vmem>>, vector<1x192x64xf32>
    %13 = vector.shape_cast %12 : vector<1x192x64xf32> to vector<192x64xf32>
    %c0_7 = arith.constant 0 : index
    %c0_8 = arith.constant 0 : index
    %c0_9 = arith.constant 0 : index
    %14 = vector.load %arg6[%c0_7, %c0_8, %c0_9] : memref<1x3x64xf32, #tpu.memory_space<vmem>>, vector<1x3x64xf32>
    %15 = vector.shape_cast %14 : vector<1x3x64xf32> to vector<3x64xf32>
    %c0_10 = arith.constant 0 : index
    %c0_11 = arith.constant 0 : index
    %c0_12 = arith.constant 0 : index
    %16 = vector.load %arg7[%c0_10, %c0_11, %c0_12] : memref<1x64x64xf32, #tpu.memory_space<vmem>>, vector<1x64x64xf32>
    %17 = vector.shape_cast %16 : vector<1x64x64xf32> to vector<64x64xf32>
    %c0_13 = arith.constant 0 : index
    %c0_14 = arith.constant 0 : index
    %c0_15 = arith.constant 0 : index
    %18 = vector.load %arg8[%c0_13, %c0_14, %c0_15] : memref<1x1x64xf32, #tpu.memory_space<vmem>>, vector<1x1x64xf32>
    %19 = vector.shape_cast %18 : vector<1x1x64xf32> to vector<1x64xf32>
    %20 = vector.extract_strided_slice %13 {offsets = [0, 0], sizes = [64, 64], strides = [1, 1]} : vector<192x64xf32> to vector<64x64xf32>
    %cst_16 = arith.constant dense<0.000000e+00> : vector<16x64xf32>
    %21 = tpu.matmul %0, %20, %cst_16 {dimension_numbers = #tpu.dot_dimension_numbers<[1], [1], [0], [0], [0, 0, 1, 0], [], []>} : vector<16x64xf32>, vector<64x64xf32>, vector<16x64xf32> -> vector<16x64xf32>
    %22 = vector.extract_strided_slice %15 {offsets = [0, 0], sizes = [1, 64], strides = [1, 1]} : vector<3x64xf32> to vector<1x64xf32>
    %23 = vector.broadcast %22 : vector<1x64xf32> to vector<16x64xf32>
    %24 = arith.addf %21, %23 : vector<16x64xf32>
    %25 = vector.extract_strided_slice %13 {offsets = [64, 0], sizes = [64, 64], strides = [1, 1]} : vector<192x64xf32> to vector<64x64xf32>
    %cst_17 = arith.constant dense<0.000000e+00> : vector<12x64xf32>
    %26 = tpu.matmul %1, %25, %cst_17 {dimension_numbers = #tpu.dot_dimension_numbers<[1], [1], [0], [0], [0, 0, 1, 0], [], []>} : vector<12x64xf32>, vector<64x64xf32>, vector<12x64xf32> -> vector<12x64xf32>
    %27 = vector.extract_strided_slice %15 {offsets = [1, 0], sizes = [1, 64], strides = [1, 1]} : vector<3x64xf32> to vector<1x64xf32>
    %28 = vector.broadcast %27 : vector<1x64xf32> to vector<12x64xf32>
    %29 = arith.addf %26, %28 : vector<12x64xf32>
    %30 = vector.extract_strided_slice %13 {offsets = [128, 0], sizes = [64, 64], strides = [1, 1]} : vector<192x64xf32> to vector<64x64xf32>
    %cst_18 = arith.constant dense<0.000000e+00> : vector<12x64xf32>
    %31 = tpu.matmul %1, %30, %cst_18 {dimension_numbers = #tpu.dot_dimension_numbers<[1], [1], [0], [0], [0, 0, 1, 0], [], []>} : vector<12x64xf32>, vector<64x64xf32>, vector<12x64xf32> -> vector<12x64xf32>
    %32 = vector.extract_strided_slice %15 {offsets = [2, 0], sizes = [1, 64], strides = [1, 1]} : vector<3x64xf32> to vector<1x64xf32>
    %33 = vector.broadcast %32 : vector<1x64xf32> to vector<12x64xf32>
    %34 = arith.addf %31, %33 : vector<12x64xf32>
    %cst_19 = arith.constant 0.000000e+00 : f32
    %35 = vector.broadcast %cst_19 : f32 to vector<16x64xf32>
    %36 = vector.extract_strided_slice %24 {offsets = [0, 0], sizes = [16, 8], strides = [1, 1]} : vector<16x64xf32> to vector<16x8xf32>
    %37 = vector.extract_strided_slice %29 {offsets = [0, 0], sizes = [12, 8], strides = [1, 1]} : vector<12x64xf32> to vector<12x8xf32>
    %cst_20 = arith.constant dense<0.000000e+00> : vector<16x12xf32>
    %38 = tpu.matmul %36, %37, %cst_20 {dimension_numbers = #tpu.dot_dimension_numbers<[1], [1], [0], [0], [0, 0, 1, 0], [], []>} : vector<16x8xf32>, vector<12x8xf32>, vector<16x12xf32> -> vector<16x12xf32>
    %cst_21 = arith.constant 0.353553385 : f32
    %39 = vector.broadcast %cst_21 : f32 to vector<16x12xf32>
    %40 = arith.mulf %38, %39 : vector<16x12xf32>
    %41 = arith.addf %40, %11 : vector<16x12xf32>
    %cst_22 = arith.constant dense<0xFF800000> : vector<16xf32>
    %42 = vector.multi_reduction <maximumf>, %41, %cst_22 [1] : vector<16x12xf32> to vector<16xf32>
    %43 = vector.shape_cast %42 : vector<16xf32> to vector<16x1xf32>
    %44 = vector.broadcast %43 : vector<16x1xf32> to vector<16x12xf32>
    %45 = arith.subf %41, %44 : vector<16x12xf32>
    %46 = math.exp %45 : vector<16x12xf32>
    %cst_23 = arith.constant dense<0.000000e+00> : vector<16xf32>
    %47 = vector.multi_reduction <add>, %46, %cst_23 [1] : vector<16x12xf32> to vector<16xf32>
    %48 = vector.shape_cast %47 : vector<16xf32> to vector<16x1xf32>
    %49 = vector.broadcast %48 : vector<16x1xf32> to vector<16x12xf32>
    %50 = arith.divf %46, %49 : vector<16x12xf32>
    %51 = vector.extract_strided_slice %34 {offsets = [0, 0], sizes = [12, 8], strides = [1, 1]} : vector<12x64xf32> to vector<12x8xf32>
    %cst_24 = arith.constant dense<0.000000e+00> : vector<16x8xf32>
    %52 = tpu.matmul %50, %51, %cst_24 {dimension_numbers = #tpu.dot_dimension_numbers<[1], [0], [0], [1], [0, 0, 1, 1], [], []>} : vector<16x12xf32>, vector<12x8xf32>, vector<16x8xf32> -> vector<16x8xf32>
    %53 = vector.extract_strided_slice %17 {offsets = [0, 0], sizes = [8, 64], strides = [1, 1]} : vector<64x64xf32> to vector<8x64xf32>
    %cst_25 = arith.constant dense<0.000000e+00> : vector<16x64xf32>
    %54 = tpu.matmul %52, %53, %cst_25 {dimension_numbers = #tpu.dot_dimension_numbers<[1], [0], [0], [1], [0, 0, 1, 1], [], []>} : vector<16x8xf32>, vector<8x64xf32>, vector<16x64xf32> -> vector<16x64xf32>
    %55 = arith.addf %35, %54 : vector<16x64xf32>
    %56 = vector.extract_strided_slice %24 {offsets = [0, 8], sizes = [16, 8], strides = [1, 1]} : vector<16x64xf32> to vector<16x8xf32>
    %57 = vector.extract_strided_slice %29 {offsets = [0, 8], sizes = [12, 8], strides = [1, 1]} : vector<12x64xf32> to vector<12x8xf32>
    %cst_26 = arith.constant dense<0.000000e+00> : vector<16x12xf32>
    %58 = tpu.matmul %56, %57, %cst_26 {dimension_numbers = #tpu.dot_dimension_numbers<[1], [1], [0], [0], [0, 0, 1, 0], [], []>} : vector<16x8xf32>, vector<12x8xf32>, vector<16x12xf32> -> vector<16x12xf32>
    %cst_27 = arith.constant 0.353553385 : f32
    %59 = vector.broadcast %cst_27 : f32 to vector<16x12xf32>
    %60 = arith.mulf %58, %59 : vector<16x12xf32>
    %61 = arith.addf %60, %11 : vector<16x12xf32>
    %cst_28 = arith.constant dense<0xFF800000> : vector<16xf32>
    %62 = vector.multi_reduction <maximumf>, %61, %cst_28 [1] : vector<16x12xf32> to vector<16xf32>
    %63 = vector.shape_cast %62 : vector<16xf32> to vector<16x1xf32>
    %64 = vector.broadcast %63 : vector<16x1xf32> to vector<16x12xf32>
    %65 = arith.subf %61, %64 : vector<16x12xf32>
    %66 = math.exp %65 : vector<16x12xf32>
    %cst_29 = arith.constant dense<0.000000e+00> : vector<16xf32>
    %67 = vector.multi_reduction <add>, %66, %cst_29 [1] : vector<16x12xf32> to vector<16xf32>
    %68 = vector.shape_cast %67 : vector<16xf32> to vector<16x1xf32>
    %69 = vector.broadcast %68 : vector<16x1xf32> to vector<16x12xf32>
    %70 = arith.divf %66, %69 : vector<16x12xf32>
    %71 = vector.extract_strided_slice %34 {offsets = [0, 8], sizes = [12, 8], strides = [1, 1]} : vector<12x64xf32> to vector<12x8xf32>
    %cst_30 = arith.constant dense<0.000000e+00> : vector<16x8xf32>
    %72 = tpu.matmul %70, %71, %cst_30 {dimension_numbers = #tpu.dot_dimension_numbers<[1], [0], [0], [1], [0, 0, 1, 1], [], []>} : vector<16x12xf32>, vector<12x8xf32>, vector<16x8xf32> -> vector<16x8xf32>
    %73 = vector.extract_strided_slice %17 {offsets = [8, 0], sizes = [8, 64], strides = [1, 1]} : vector<64x64xf32> to vector<8x64xf32>
    %cst_31 = arith.constant dense<0.000000e+00> : vector<16x64xf32>
    %74 = tpu.matmul %72, %73, %cst_31 {dimension_numbers = #tpu.dot_dimension_numbers<[1], [0], [0], [1], [0, 0, 1, 1], [], []>} : vector<16x8xf32>, vector<8x64xf32>, vector<16x64xf32> -> vector<16x64xf32>
    %75 = arith.addf %55, %74 : vector<16x64xf32>
    %76 = vector.extract_strided_slice %24 {offsets = [0, 16], sizes = [16, 8], strides = [1, 1]} : vector<16x64xf32> to vector<16x8xf32>
    %77 = vector.extract_strided_slice %29 {offsets = [0, 16], sizes = [12, 8], strides = [1, 1]} : vector<12x64xf32> to vector<12x8xf32>
    %cst_32 = arith.constant dense<0.000000e+00> : vector<16x12xf32>
    %78 = tpu.matmul %76, %77, %cst_32 {dimension_numbers = #tpu.dot_dimension_numbers<[1], [1], [0], [0], [0, 0, 1, 0], [], []>} : vector<16x8xf32>, vector<12x8xf32>, vector<16x12xf32> -> vector<16x12xf32>
    %cst_33 = arith.constant 0.353553385 : f32
    %79 = vector.broadcast %cst_33 : f32 to vector<16x12xf32>
    %80 = arith.mulf %78, %79 : vector<16x12xf32>
    %81 = arith.addf %80, %11 : vector<16x12xf32>
    %cst_34 = arith.constant dense<0xFF800000> : vector<16xf32>
    %82 = vector.multi_reduction <maximumf>, %81, %cst_34 [1] : vector<16x12xf32> to vector<16xf32>
    %83 = vector.shape_cast %82 : vector<16xf32> to vector<16x1xf32>
    %84 = vector.broadcast %83 : vector<16x1xf32> to vector<16x12xf32>
    %85 = arith.subf %81, %84 : vector<16x12xf32>
    %86 = math.exp %85 : vector<16x12xf32>
    %cst_35 = arith.constant dense<0.000000e+00> : vector<16xf32>
    %87 = vector.multi_reduction <add>, %86, %cst_35 [1] : vector<16x12xf32> to vector<16xf32>
    %88 = vector.shape_cast %87 : vector<16xf32> to vector<16x1xf32>
    %89 = vector.broadcast %88 : vector<16x1xf32> to vector<16x12xf32>
    %90 = arith.divf %86, %89 : vector<16x12xf32>
    %91 = vector.extract_strided_slice %34 {offsets = [0, 16], sizes = [12, 8], strides = [1, 1]} : vector<12x64xf32> to vector<12x8xf32>
    %cst_36 = arith.constant dense<0.000000e+00> : vector<16x8xf32>
    %92 = tpu.matmul %90, %91, %cst_36 {dimension_numbers = #tpu.dot_dimension_numbers<[1], [0], [0], [1], [0, 0, 1, 1], [], []>} : vector<16x12xf32>, vector<12x8xf32>, vector<16x8xf32> -> vector<16x8xf32>
    %93 = vector.extract_strided_slice %17 {offsets = [16, 0], sizes = [8, 64], strides = [1, 1]} : vector<64x64xf32> to vector<8x64xf32>
    %cst_37 = arith.constant dense<0.000000e+00> : vector<16x64xf32>
    %94 = tpu.matmul %92, %93, %cst_37 {dimension_numbers = #tpu.dot_dimension_numbers<[1], [0], [0], [1], [0, 0, 1, 1], [], []>} : vector<16x8xf32>, vector<8x64xf32>, vector<16x64xf32> -> vector<16x64xf32>
    %95 = arith.addf %75, %94 : vector<16x64xf32>
    %96 = vector.extract_strided_slice %24 {offsets = [0, 24], sizes = [16, 8], strides = [1, 1]} : vector<16x64xf32> to vector<16x8xf32>
    %97 = vector.extract_strided_slice %29 {offsets = [0, 24], sizes = [12, 8], strides = [1, 1]} : vector<12x64xf32> to vector<12x8xf32>
    %cst_38 = arith.constant dense<0.000000e+00> : vector<16x12xf32>
    %98 = tpu.matmul %96, %97, %cst_38 {dimension_numbers = #tpu.dot_dimension_numbers<[1], [1], [0], [0], [0, 0, 1, 0], [], []>} : vector<16x8xf32>, vector<12x8xf32>, vector<16x12xf32> -> vector<16x12xf32>
    %cst_39 = arith.constant 0.353553385 : f32
    %99 = vector.broadcast %cst_39 : f32 to vector<16x12xf32>
    %100 = arith.mulf %98, %99 : vector<16x12xf32>
    %101 = arith.addf %100, %11 : vector<16x12xf32>
    %cst_40 = arith.constant dense<0xFF800000> : vector<16xf32>
    %102 = vector.multi_reduction <maximumf>, %101, %cst_40 [1] : vector<16x12xf32> to vector<16xf32>
    %103 = vector.shape_cast %102 : vector<16xf32> to vector<16x1xf32>
    %104 = vector.broadcast %103 : vector<16x1xf32> to vector<16x12xf32>
    %105 = arith.subf %101, %104 : vector<16x12xf32>
    %106 = math.exp %105 : vector<16x12xf32>
    %cst_41 = arith.constant dense<0.000000e+00> : vector<16xf32>
    %107 = vector.multi_reduction <add>, %106, %cst_41 [1] : vector<16x12xf32> to vector<16xf32>
    %108 = vector.shape_cast %107 : vector<16xf32> to vector<16x1xf32>
    %109 = vector.broadcast %108 : vector<16x1xf32> to vector<16x12xf32>
    %110 = arith.divf %106, %109 : vector<16x12xf32>
    %111 = vector.extract_strided_slice %34 {offsets = [0, 24], sizes = [12, 8], strides = [1, 1]} : vector<12x64xf32> to vector<12x8xf32>
    %cst_42 = arith.constant dense<0.000000e+00> : vector<16x8xf32>
    %112 = tpu.matmul %110, %111, %cst_42 {dimension_numbers = #tpu.dot_dimension_numbers<[1], [0], [0], [1], [0, 0, 1, 1], [], []>} : vector<16x12xf32>, vector<12x8xf32>, vector<16x8xf32> -> vector<16x8xf32>
    %113 = vector.extract_strided_slice %17 {offsets = [24, 0], sizes = [8, 64], strides = [1, 1]} : vector<64x64xf32> to vector<8x64xf32>
    %cst_43 = arith.constant dense<0.000000e+00> : vector<16x64xf32>
    %114 = tpu.matmul %112, %113, %cst_43 {dimension_numbers = #tpu.dot_dimension_numbers<[1], [0], [0], [1], [0, 0, 1, 1], [], []>} : vector<16x8xf32>, vector<8x64xf32>, vector<16x64xf32> -> vector<16x64xf32>
    %115 = arith.addf %95, %114 : vector<16x64xf32>
    %116 = vector.extract_strided_slice %24 {offsets = [0, 32], sizes = [16, 8], strides = [1, 1]} : vector<16x64xf32> to vector<16x8xf32>
    %117 = vector.extract_strided_slice %29 {offsets = [0, 32], sizes = [12, 8], strides = [1, 1]} : vector<12x64xf32> to vector<12x8xf32>
    %cst_44 = arith.constant dense<0.000000e+00> : vector<16x12xf32>
    %118 = tpu.matmul %116, %117, %cst_44 {dimension_numbers = #tpu.dot_dimension_numbers<[1], [1], [0], [0], [0, 0, 1, 0], [], []>} : vector<16x8xf32>, vector<12x8xf32>, vector<16x12xf32> -> vector<16x12xf32>
    %cst_45 = arith.constant 0.353553385 : f32
    %119 = vector.broadcast %cst_45 : f32 to vector<16x12xf32>
    %120 = arith.mulf %118, %119 : vector<16x12xf32>
    %121 = arith.addf %120, %11 : vector<16x12xf32>
    %cst_46 = arith.constant dense<0xFF800000> : vector<16xf32>
    %122 = vector.multi_reduction <maximumf>, %121, %cst_46 [1] : vector<16x12xf32> to vector<16xf32>
    %123 = vector.shape_cast %122 : vector<16xf32> to vector<16x1xf32>
    %124 = vector.broadcast %123 : vector<16x1xf32> to vector<16x12xf32>
    %125 = arith.subf %121, %124 : vector<16x12xf32>
    %126 = math.exp %125 : vector<16x12xf32>
    %cst_47 = arith.constant dense<0.000000e+00> : vector<16xf32>
    %127 = vector.multi_reduction <add>, %126, %cst_47 [1] : vector<16x12xf32> to vector<16xf32>
    %128 = vector.shape_cast %127 : vector<16xf32> to vector<16x1xf32>
    %129 = vector.broadcast %128 : vector<16x1xf32> to vector<16x12xf32>
    %130 = arith.divf %126, %129 : vector<16x12xf32>
    %131 = vector.extract_strided_slice %34 {offsets = [0, 32], sizes = [12, 8], strides = [1, 1]} : vector<12x64xf32> to vector<12x8xf32>
    %cst_48 = arith.constant dense<0.000000e+00> : vector<16x8xf32>
    %132 = tpu.matmul %130, %131, %cst_48 {dimension_numbers = #tpu.dot_dimension_numbers<[1], [0], [0], [1], [0, 0, 1, 1], [], []>} : vector<16x12xf32>, vector<12x8xf32>, vector<16x8xf32> -> vector<16x8xf32>
    %133 = vector.extract_strided_slice %17 {offsets = [32, 0], sizes = [8, 64], strides = [1, 1]} : vector<64x64xf32> to vector<8x64xf32>
    %cst_49 = arith.constant dense<0.000000e+00> : vector<16x64xf32>
    %134 = tpu.matmul %132, %133, %cst_49 {dimension_numbers = #tpu.dot_dimension_numbers<[1], [0], [0], [1], [0, 0, 1, 1], [], []>} : vector<16x8xf32>, vector<8x64xf32>, vector<16x64xf32> -> vector<16x64xf32>
    %135 = arith.addf %115, %134 : vector<16x64xf32>
    %136 = vector.extract_strided_slice %24 {offsets = [0, 40], sizes = [16, 8], strides = [1, 1]} : vector<16x64xf32> to vector<16x8xf32>
    %137 = vector.extract_strided_slice %29 {offsets = [0, 40], sizes = [12, 8], strides = [1, 1]} : vector<12x64xf32> to vector<12x8xf32>
    %cst_50 = arith.constant dense<0.000000e+00> : vector<16x12xf32>
    %138 = tpu.matmul %136, %137, %cst_50 {dimension_numbers = #tpu.dot_dimension_numbers<[1], [1], [0], [0], [0, 0, 1, 0], [], []>} : vector<16x8xf32>, vector<12x8xf32>, vector<16x12xf32> -> vector<16x12xf32>
    %cst_51 = arith.constant 0.353553385 : f32
    %139 = vector.broadcast %cst_51 : f32 to vector<16x12xf32>
    %140 = arith.mulf %138, %139 : vector<16x12xf32>
    %141 = arith.addf %140, %11 : vector<16x12xf32>
    %cst_52 = arith.constant dense<0xFF800000> : vector<16xf32>
    %142 = vector.multi_reduction <maximumf>, %141, %cst_52 [1] : vector<16x12xf32> to vector<16xf32>
    %143 = vector.shape_cast %142 : vector<16xf32> to vector<16x1xf32>
    %144 = vector.broadcast %143 : vector<16x1xf32> to vector<16x12xf32>
    %145 = arith.subf %141, %144 : vector<16x12xf32>
    %146 = math.exp %145 : vector<16x12xf32>
    %cst_53 = arith.constant dense<0.000000e+00> : vector<16xf32>
    %147 = vector.multi_reduction <add>, %146, %cst_53 [1] : vector<16x12xf32> to vector<16xf32>
    %148 = vector.shape_cast %147 : vector<16xf32> to vector<16x1xf32>
    %149 = vector.broadcast %148 : vector<16x1xf32> to vector<16x12xf32>
    %150 = arith.divf %146, %149 : vector<16x12xf32>
    %151 = vector.extract_strided_slice %34 {offsets = [0, 40], sizes = [12, 8], strides = [1, 1]} : vector<12x64xf32> to vector<12x8xf32>
    %cst_54 = arith.constant dense<0.000000e+00> : vector<16x8xf32>
    %152 = tpu.matmul %150, %151, %cst_54 {dimension_numbers = #tpu.dot_dimension_numbers<[1], [0], [0], [1], [0, 0, 1, 1], [], []>} : vector<16x12xf32>, vector<12x8xf32>, vector<16x8xf32> -> vector<16x8xf32>
    %153 = vector.extract_strided_slice %17 {offsets = [40, 0], sizes = [8, 64], strides = [1, 1]} : vector<64x64xf32> to vector<8x64xf32>
    %cst_55 = arith.constant dense<0.000000e+00> : vector<16x64xf32>
    %154 = tpu.matmul %152, %153, %cst_55 {dimension_numbers = #tpu.dot_dimension_numbers<[1], [0], [0], [1], [0, 0, 1, 1], [], []>} : vector<16x8xf32>, vector<8x64xf32>, vector<16x64xf32> -> vector<16x64xf32>
    %155 = arith.addf %135, %154 : vector<16x64xf32>
    %156 = vector.extract_strided_slice %24 {offsets = [0, 48], sizes = [16, 8], strides = [1, 1]} : vector<16x64xf32> to vector<16x8xf32>
    %157 = vector.extract_strided_slice %29 {offsets = [0, 48], sizes = [12, 8], strides = [1, 1]} : vector<12x64xf32> to vector<12x8xf32>
    %cst_56 = arith.constant dense<0.000000e+00> : vector<16x12xf32>
    %158 = tpu.matmul %156, %157, %cst_56 {dimension_numbers = #tpu.dot_dimension_numbers<[1], [1], [0], [0], [0, 0, 1, 0], [], []>} : vector<16x8xf32>, vector<12x8xf32>, vector<16x12xf32> -> vector<16x12xf32>
    %cst_57 = arith.constant 0.353553385 : f32
    %159 = vector.broadcast %cst_57 : f32 to vector<16x12xf32>
    %160 = arith.mulf %158, %159 : vector<16x12xf32>
    %161 = arith.addf %160, %11 : vector<16x12xf32>
    %cst_58 = arith.constant dense<0xFF800000> : vector<16xf32>
    %162 = vector.multi_reduction <maximumf>, %161, %cst_58 [1] : vector<16x12xf32> to vector<16xf32>
    %163 = vector.shape_cast %162 : vector<16xf32> to vector<16x1xf32>
    %164 = vector.broadcast %163 : vector<16x1xf32> to vector<16x12xf32>
    %165 = arith.subf %161, %164 : vector<16x12xf32>
    %166 = math.exp %165 : vector<16x12xf32>
    %cst_59 = arith.constant dense<0.000000e+00> : vector<16xf32>
    %167 = vector.multi_reduction <add>, %166, %cst_59 [1] : vector<16x12xf32> to vector<16xf32>
    %168 = vector.shape_cast %167 : vector<16xf32> to vector<16x1xf32>
    %169 = vector.broadcast %168 : vector<16x1xf32> to vector<16x12xf32>
    %170 = arith.divf %166, %169 : vector<16x12xf32>
    %171 = vector.extract_strided_slice %34 {offsets = [0, 48], sizes = [12, 8], strides = [1, 1]} : vector<12x64xf32> to vector<12x8xf32>
    %cst_60 = arith.constant dense<0.000000e+00> : vector<16x8xf32>
    %172 = tpu.matmul %170, %171, %cst_60 {dimension_numbers = #tpu.dot_dimension_numbers<[1], [0], [0], [1], [0, 0, 1, 1], [], []>} : vector<16x12xf32>, vector<12x8xf32>, vector<16x8xf32> -> vector<16x8xf32>
    %173 = vector.extract_strided_slice %17 {offsets = [48, 0], sizes = [8, 64], strides = [1, 1]} : vector<64x64xf32> to vector<8x64xf32>
    %cst_61 = arith.constant dense<0.000000e+00> : vector<16x64xf32>
    %174 = tpu.matmul %172, %173, %cst_61 {dimension_numbers = #tpu.dot_dimension_numbers<[1], [0], [0], [1], [0, 0, 1, 1], [], []>} : vector<16x8xf32>, vector<8x64xf32>, vector<16x64xf32> -> vector<16x64xf32>
    %175 = arith.addf %155, %174 : vector<16x64xf32>
    %176 = vector.extract_strided_slice %24 {offsets = [0, 56], sizes = [16, 8], strides = [1, 1]} : vector<16x64xf32> to vector<16x8xf32>
    %177 = vector.extract_strided_slice %29 {offsets = [0, 56], sizes = [12, 8], strides = [1, 1]} : vector<12x64xf32> to vector<12x8xf32>
    %cst_62 = arith.constant dense<0.000000e+00> : vector<16x12xf32>
    %178 = tpu.matmul %176, %177, %cst_62 {dimension_numbers = #tpu.dot_dimension_numbers<[1], [1], [0], [0], [0, 0, 1, 0], [], []>} : vector<16x8xf32>, vector<12x8xf32>, vector<16x12xf32> -> vector<16x12xf32>
    %cst_63 = arith.constant 0.353553385 : f32
    %179 = vector.broadcast %cst_63 : f32 to vector<16x12xf32>
    %180 = arith.mulf %178, %179 : vector<16x12xf32>
    %181 = arith.addf %180, %11 : vector<16x12xf32>
    %cst_64 = arith.constant dense<0xFF800000> : vector<16xf32>
    %182 = vector.multi_reduction <maximumf>, %181, %cst_64 [1] : vector<16x12xf32> to vector<16xf32>
    %183 = vector.shape_cast %182 : vector<16xf32> to vector<16x1xf32>
    %184 = vector.broadcast %183 : vector<16x1xf32> to vector<16x12xf32>
    %185 = arith.subf %181, %184 : vector<16x12xf32>
    %186 = math.exp %185 : vector<16x12xf32>
    %cst_65 = arith.constant dense<0.000000e+00> : vector<16xf32>
    %187 = vector.multi_reduction <add>, %186, %cst_65 [1] : vector<16x12xf32> to vector<16xf32>
    %188 = vector.shape_cast %187 : vector<16xf32> to vector<16x1xf32>
    %189 = vector.broadcast %188 : vector<16x1xf32> to vector<16x12xf32>
    %190 = arith.divf %186, %189 : vector<16x12xf32>
    %191 = vector.extract_strided_slice %34 {offsets = [0, 56], sizes = [12, 8], strides = [1, 1]} : vector<12x64xf32> to vector<12x8xf32>
    %cst_66 = arith.constant dense<0.000000e+00> : vector<16x8xf32>
    %192 = tpu.matmul %190, %191, %cst_66 {dimension_numbers = #tpu.dot_dimension_numbers<[1], [0], [0], [1], [0, 0, 1, 1], [], []>} : vector<16x12xf32>, vector<12x8xf32>, vector<16x8xf32> -> vector<16x8xf32>
    %193 = vector.extract_strided_slice %17 {offsets = [56, 0], sizes = [8, 64], strides = [1, 1]} : vector<64x64xf32> to vector<8x64xf32>
    %cst_67 = arith.constant dense<0.000000e+00> : vector<16x64xf32>
    %194 = tpu.matmul %192, %193, %cst_67 {dimension_numbers = #tpu.dot_dimension_numbers<[1], [0], [0], [1], [0, 0, 1, 1], [], []>} : vector<16x8xf32>, vector<8x64xf32>, vector<16x64xf32> -> vector<16x64xf32>
    %195 = arith.addf %175, %194 : vector<16x64xf32>
    %196 = vector.broadcast %19 : vector<1x64xf32> to vector<16x64xf32>
    %197 = arith.addf %195, %196 : vector<16x64xf32>
    %198 = arith.addf %0, %197 : vector<16x64xf32>
    %c0_68 = arith.constant 0 : index
    %c0_69 = arith.constant 0 : index
    %199 = vector.load %arg2[%c0_68, %c0_69] : memref<16x64xf32, #tpu.memory_space<vmem>>, vector<16x64xf32>
    %200 = arith.addf %198, %199 : vector<16x64xf32>
    %c0_70 = arith.constant 0 : index
    %c0_71 = arith.constant 0 : index
    %201 = vector.load %arg4[%c0_70, %c0_71] : memref<24x48xf32, #tpu.memory_space<vmem>>, vector<24x48xf32>
    %c0_72 = arith.constant 0 : index
    %c0_73 = arith.constant 0 : index
    %202 = vector.load %arg13[%c0_72, %c0_73] : memref<64x48xf32, #tpu.memory_space<vmem>>, vector<64x48xf32>
    %cst_74 = arith.constant dense<0.000000e+00> : vector<24x64xf32>
    %203 = tpu.matmul %201, %202, %cst_74 {dimension_numbers = #tpu.dot_dimension_numbers<[1], [1], [0], [0], [0, 0, 1, 0], [], []>} : vector<24x48xf32>, vector<64x48xf32>, vector<24x64xf32> -> vector<24x64xf32>
    %c0_75 = arith.constant 0 : index
    %c0_76 = arith.constant 0 : index
    %204 = vector.load %arg14[%c0_75, %c0_76] : memref<1x64xf32, #tpu.memory_space<vmem>>, vector<1x64xf32>
    %205 = vector.broadcast %204 : vector<1x64xf32> to vector<24x64xf32>
    %206 = arith.addf %203, %205 : vector<24x64xf32>
    %207 = tpu.iota {dimensions = array<i32: 0>} : vector<16x24xi32>
    %208 = tpu.iota {dimensions = array<i32: 1>} : vector<16x24xi32>
    %209 = arith.xori %207, %208 : vector<16x24xi32>
    %c1_i32_77 = arith.constant 1 : i32
    %210 = vector.broadcast %c1_i32_77 : i32 to vector<16x24xi32>
    %211 = arith.andi %209, %210 : vector<16x24xi32>
    %c0_i32_78 = arith.constant 0 : i32
    %212 = vector.broadcast %c0_i32_78 : i32 to vector<16x24xi32>
    %213 = arith.cmpi eq, %211, %212 : vector<16x24xi32>
    %cst_79 = arith.constant 0.000000e+00 : f32
    %cst_80 = arith.constant -1.000000e+30 : f32
    %214 = vector.broadcast %cst_79 : f32 to vector<16x24xf32>
    %215 = vector.broadcast %cst_80 : f32 to vector<16x24xf32>
    %216 = arith.select %213, %214, %215 : vector<16x24xi1>, vector<16x24xf32>
    %c0_81 = arith.constant 0 : index
    %c0_82 = arith.constant 0 : index
    %c0_83 = arith.constant 0 : index
    %217 = vector.load %arg9[%c0_81, %c0_82, %c0_83] : memref<1x192x64xf32, #tpu.memory_space<vmem>>, vector<1x192x64xf32>
    %218 = vector.shape_cast %217 : vector<1x192x64xf32> to vector<192x64xf32>
    %c0_84 = arith.constant 0 : index
    %c0_85 = arith.constant 0 : index
    %c0_86 = arith.constant 0 : index
    %219 = vector.load %arg10[%c0_84, %c0_85, %c0_86] : memref<1x3x64xf32, #tpu.memory_space<vmem>>, vector<1x3x64xf32>
    %220 = vector.shape_cast %219 : vector<1x3x64xf32> to vector<3x64xf32>
    %c0_87 = arith.constant 0 : index
    %c0_88 = arith.constant 0 : index
    %c0_89 = arith.constant 0 : index
    %221 = vector.load %arg11[%c0_87, %c0_88, %c0_89] : memref<1x64x64xf32, #tpu.memory_space<vmem>>, vector<1x64x64xf32>
    %222 = vector.shape_cast %221 : vector<1x64x64xf32> to vector<64x64xf32>
    %c0_90 = arith.constant 0 : index
    %c0_91 = arith.constant 0 : index
    %c0_92 = arith.constant 0 : index
    %223 = vector.load %arg12[%c0_90, %c0_91, %c0_92] : memref<1x1x64xf32, #tpu.memory_space<vmem>>, vector<1x1x64xf32>
    %224 = vector.shape_cast %223 : vector<1x1x64xf32> to vector<1x64xf32>
    %225 = vector.extract_strided_slice %218 {offsets = [0, 0], sizes = [64, 64], strides = [1, 1]} : vector<192x64xf32> to vector<64x64xf32>
    %cst_93 = arith.constant dense<0.000000e+00> : vector<16x64xf32>
    %226 = tpu.matmul %200, %225, %cst_93 {dimension_numbers = #tpu.dot_dimension_numbers<[1], [1], [0], [0], [0, 0, 1, 0], [], []>} : vector<16x64xf32>, vector<64x64xf32>, vector<16x64xf32> -> vector<16x64xf32>
    %227 = vector.extract_strided_slice %220 {offsets = [0, 0], sizes = [1, 64], strides = [1, 1]} : vector<3x64xf32> to vector<1x64xf32>
    %228 = vector.broadcast %227 : vector<1x64xf32> to vector<16x64xf32>
    %229 = arith.addf %226, %228 : vector<16x64xf32>
    %230 = vector.extract_strided_slice %218 {offsets = [64, 0], sizes = [64, 64], strides = [1, 1]} : vector<192x64xf32> to vector<64x64xf32>
    %cst_94 = arith.constant dense<0.000000e+00> : vector<24x64xf32>
    %231 = tpu.matmul %206, %230, %cst_94 {dimension_numbers = #tpu.dot_dimension_numbers<[1], [1], [0], [0], [0, 0, 1, 0], [], []>} : vector<24x64xf32>, vector<64x64xf32>, vector<24x64xf32> -> vector<24x64xf32>
    %232 = vector.extract_strided_slice %220 {offsets = [1, 0], sizes = [1, 64], strides = [1, 1]} : vector<3x64xf32> to vector<1x64xf32>
    %233 = vector.broadcast %232 : vector<1x64xf32> to vector<24x64xf32>
    %234 = arith.addf %231, %233 : vector<24x64xf32>
    %235 = vector.extract_strided_slice %218 {offsets = [128, 0], sizes = [64, 64], strides = [1, 1]} : vector<192x64xf32> to vector<64x64xf32>
    %cst_95 = arith.constant dense<0.000000e+00> : vector<24x64xf32>
    %236 = tpu.matmul %206, %235, %cst_95 {dimension_numbers = #tpu.dot_dimension_numbers<[1], [1], [0], [0], [0, 0, 1, 0], [], []>} : vector<24x64xf32>, vector<64x64xf32>, vector<24x64xf32> -> vector<24x64xf32>
    %237 = vector.extract_strided_slice %220 {offsets = [2, 0], sizes = [1, 64], strides = [1, 1]} : vector<3x64xf32> to vector<1x64xf32>
    %238 = vector.broadcast %237 : vector<1x64xf32> to vector<24x64xf32>
    %239 = arith.addf %236, %238 : vector<24x64xf32>
    %cst_96 = arith.constant 0.000000e+00 : f32
    %240 = vector.broadcast %cst_96 : f32 to vector<16x64xf32>
    %241 = vector.extract_strided_slice %229 {offsets = [0, 0], sizes = [16, 8], strides = [1, 1]} : vector<16x64xf32> to vector<16x8xf32>
    %242 = vector.extract_strided_slice %234 {offsets = [0, 0], sizes = [24, 8], strides = [1, 1]} : vector<24x64xf32> to vector<24x8xf32>
    %cst_97 = arith.constant dense<0.000000e+00> : vector<16x24xf32>
    %243 = tpu.matmul %241, %242, %cst_97 {dimension_numbers = #tpu.dot_dimension_numbers<[1], [1], [0], [0], [0, 0, 1, 0], [], []>} : vector<16x8xf32>, vector<24x8xf32>, vector<16x24xf32> -> vector<16x24xf32>
    %cst_98 = arith.constant 0.353553385 : f32
    %244 = vector.broadcast %cst_98 : f32 to vector<16x24xf32>
    %245 = arith.mulf %243, %244 : vector<16x24xf32>
    %246 = arith.addf %245, %216 : vector<16x24xf32>
    %cst_99 = arith.constant dense<0xFF800000> : vector<16xf32>
    %247 = vector.multi_reduction <maximumf>, %246, %cst_99 [1] : vector<16x24xf32> to vector<16xf32>
    %248 = vector.shape_cast %247 : vector<16xf32> to vector<16x1xf32>
    %249 = vector.broadcast %248 : vector<16x1xf32> to vector<16x24xf32>
    %250 = arith.subf %246, %249 : vector<16x24xf32>
    %251 = math.exp %250 : vector<16x24xf32>
    %cst_100 = arith.constant dense<0.000000e+00> : vector<16xf32>
    %252 = vector.multi_reduction <add>, %251, %cst_100 [1] : vector<16x24xf32> to vector<16xf32>
    %253 = vector.shape_cast %252 : vector<16xf32> to vector<16x1xf32>
    %254 = vector.broadcast %253 : vector<16x1xf32> to vector<16x24xf32>
    %255 = arith.divf %251, %254 : vector<16x24xf32>
    %256 = vector.extract_strided_slice %239 {offsets = [0, 0], sizes = [24, 8], strides = [1, 1]} : vector<24x64xf32> to vector<24x8xf32>
    %cst_101 = arith.constant dense<0.000000e+00> : vector<16x8xf32>
    %257 = tpu.matmul %255, %256, %cst_101 {dimension_numbers = #tpu.dot_dimension_numbers<[1], [0], [0], [1], [0, 0, 1, 1], [], []>} : vector<16x24xf32>, vector<24x8xf32>, vector<16x8xf32> -> vector<16x8xf32>
    %258 = vector.extract_strided_slice %222 {offsets = [0, 0], sizes = [8, 64], strides = [1, 1]} : vector<64x64xf32> to vector<8x64xf32>
    %cst_102 = arith.constant dense<0.000000e+00> : vector<16x64xf32>
    %259 = tpu.matmul %257, %258, %cst_102 {dimension_numbers = #tpu.dot_dimension_numbers<[1], [0], [0], [1], [0, 0, 1, 1], [], []>} : vector<16x8xf32>, vector<8x64xf32>, vector<16x64xf32> -> vector<16x64xf32>
    %260 = arith.addf %240, %259 : vector<16x64xf32>
    %261 = vector.extract_strided_slice %229 {offsets = [0, 8], sizes = [16, 8], strides = [1, 1]} : vector<16x64xf32> to vector<16x8xf32>
    %262 = vector.extract_strided_slice %234 {offsets = [0, 8], sizes = [24, 8], strides = [1, 1]} : vector<24x64xf32> to vector<24x8xf32>
    %cst_103 = arith.constant dense<0.000000e+00> : vector<16x24xf32>
    %263 = tpu.matmul %261, %262, %cst_103 {dimension_numbers = #tpu.dot_dimension_numbers<[1], [1], [0], [0], [0, 0, 1, 0], [], []>} : vector<16x8xf32>, vector<24x8xf32>, vector<16x24xf32> -> vector<16x24xf32>
    %cst_104 = arith.constant 0.353553385 : f32
    %264 = vector.broadcast %cst_104 : f32 to vector<16x24xf32>
    %265 = arith.mulf %263, %264 : vector<16x24xf32>
    %266 = arith.addf %265, %216 : vector<16x24xf32>
    %cst_105 = arith.constant dense<0xFF800000> : vector<16xf32>
    %267 = vector.multi_reduction <maximumf>, %266, %cst_105 [1] : vector<16x24xf32> to vector<16xf32>
    %268 = vector.shape_cast %267 : vector<16xf32> to vector<16x1xf32>
    %269 = vector.broadcast %268 : vector<16x1xf32> to vector<16x24xf32>
    %270 = arith.subf %266, %269 : vector<16x24xf32>
    %271 = math.exp %270 : vector<16x24xf32>
    %cst_106 = arith.constant dense<0.000000e+00> : vector<16xf32>
    %272 = vector.multi_reduction <add>, %271, %cst_106 [1] : vector<16x24xf32> to vector<16xf32>
    %273 = vector.shape_cast %272 : vector<16xf32> to vector<16x1xf32>
    %274 = vector.broadcast %273 : vector<16x1xf32> to vector<16x24xf32>
    %275 = arith.divf %271, %274 : vector<16x24xf32>
    %276 = vector.extract_strided_slice %239 {offsets = [0, 8], sizes = [24, 8], strides = [1, 1]} : vector<24x64xf32> to vector<24x8xf32>
    %cst_107 = arith.constant dense<0.000000e+00> : vector<16x8xf32>
    %277 = tpu.matmul %275, %276, %cst_107 {dimension_numbers = #tpu.dot_dimension_numbers<[1], [0], [0], [1], [0, 0, 1, 1], [], []>} : vector<16x24xf32>, vector<24x8xf32>, vector<16x8xf32> -> vector<16x8xf32>
    %278 = vector.extract_strided_slice %222 {offsets = [8, 0], sizes = [8, 64], strides = [1, 1]} : vector<64x64xf32> to vector<8x64xf32>
    %cst_108 = arith.constant dense<0.000000e+00> : vector<16x64xf32>
    %279 = tpu.matmul %277, %278, %cst_108 {dimension_numbers = #tpu.dot_dimension_numbers<[1], [0], [0], [1], [0, 0, 1, 1], [], []>} : vector<16x8xf32>, vector<8x64xf32>, vector<16x64xf32> -> vector<16x64xf32>
    %280 = arith.addf %260, %279 : vector<16x64xf32>
    %281 = vector.extract_strided_slice %229 {offsets = [0, 16], sizes = [16, 8], strides = [1, 1]} : vector<16x64xf32> to vector<16x8xf32>
    %282 = vector.extract_strided_slice %234 {offsets = [0, 16], sizes = [24, 8], strides = [1, 1]} : vector<24x64xf32> to vector<24x8xf32>
    %cst_109 = arith.constant dense<0.000000e+00> : vector<16x24xf32>
    %283 = tpu.matmul %281, %282, %cst_109 {dimension_numbers = #tpu.dot_dimension_numbers<[1], [1], [0], [0], [0, 0, 1, 0], [], []>} : vector<16x8xf32>, vector<24x8xf32>, vector<16x24xf32> -> vector<16x24xf32>
    %cst_110 = arith.constant 0.353553385 : f32
    %284 = vector.broadcast %cst_110 : f32 to vector<16x24xf32>
    %285 = arith.mulf %283, %284 : vector<16x24xf32>
    %286 = arith.addf %285, %216 : vector<16x24xf32>
    %cst_111 = arith.constant dense<0xFF800000> : vector<16xf32>
    %287 = vector.multi_reduction <maximumf>, %286, %cst_111 [1] : vector<16x24xf32> to vector<16xf32>
    %288 = vector.shape_cast %287 : vector<16xf32> to vector<16x1xf32>
    %289 = vector.broadcast %288 : vector<16x1xf32> to vector<16x24xf32>
    %290 = arith.subf %286, %289 : vector<16x24xf32>
    %291 = math.exp %290 : vector<16x24xf32>
    %cst_112 = arith.constant dense<0.000000e+00> : vector<16xf32>
    %292 = vector.multi_reduction <add>, %291, %cst_112 [1] : vector<16x24xf32> to vector<16xf32>
    %293 = vector.shape_cast %292 : vector<16xf32> to vector<16x1xf32>
    %294 = vector.broadcast %293 : vector<16x1xf32> to vector<16x24xf32>
    %295 = arith.divf %291, %294 : vector<16x24xf32>
    %296 = vector.extract_strided_slice %239 {offsets = [0, 16], sizes = [24, 8], strides = [1, 1]} : vector<24x64xf32> to vector<24x8xf32>
    %cst_113 = arith.constant dense<0.000000e+00> : vector<16x8xf32>
    %297 = tpu.matmul %295, %296, %cst_113 {dimension_numbers = #tpu.dot_dimension_numbers<[1], [0], [0], [1], [0, 0, 1, 1], [], []>} : vector<16x24xf32>, vector<24x8xf32>, vector<16x8xf32> -> vector<16x8xf32>
    %298 = vector.extract_strided_slice %222 {offsets = [16, 0], sizes = [8, 64], strides = [1, 1]} : vector<64x64xf32> to vector<8x64xf32>
    %cst_114 = arith.constant dense<0.000000e+00> : vector<16x64xf32>
    %299 = tpu.matmul %297, %298, %cst_114 {dimension_numbers = #tpu.dot_dimension_numbers<[1], [0], [0], [1], [0, 0, 1, 1], [], []>} : vector<16x8xf32>, vector<8x64xf32>, vector<16x64xf32> -> vector<16x64xf32>
    %300 = arith.addf %280, %299 : vector<16x64xf32>
    %301 = vector.extract_strided_slice %229 {offsets = [0, 24], sizes = [16, 8], strides = [1, 1]} : vector<16x64xf32> to vector<16x8xf32>
    %302 = vector.extract_strided_slice %234 {offsets = [0, 24], sizes = [24, 8], strides = [1, 1]} : vector<24x64xf32> to vector<24x8xf32>
    %cst_115 = arith.constant dense<0.000000e+00> : vector<16x24xf32>
    %303 = tpu.matmul %301, %302, %cst_115 {dimension_numbers = #tpu.dot_dimension_numbers<[1], [1], [0], [0], [0, 0, 1, 0], [], []>} : vector<16x8xf32>, vector<24x8xf32>, vector<16x24xf32> -> vector<16x24xf32>
    %cst_116 = arith.constant 0.353553385 : f32
    %304 = vector.broadcast %cst_116 : f32 to vector<16x24xf32>
    %305 = arith.mulf %303, %304 : vector<16x24xf32>
    %306 = arith.addf %305, %216 : vector<16x24xf32>
    %cst_117 = arith.constant dense<0xFF800000> : vector<16xf32>
    %307 = vector.multi_reduction <maximumf>, %306, %cst_117 [1] : vector<16x24xf32> to vector<16xf32>
    %308 = vector.shape_cast %307 : vector<16xf32> to vector<16x1xf32>
    %309 = vector.broadcast %308 : vector<16x1xf32> to vector<16x24xf32>
    %310 = arith.subf %306, %309 : vector<16x24xf32>
    %311 = math.exp %310 : vector<16x24xf32>
    %cst_118 = arith.constant dense<0.000000e+00> : vector<16xf32>
    %312 = vector.multi_reduction <add>, %311, %cst_118 [1] : vector<16x24xf32> to vector<16xf32>
    %313 = vector.shape_cast %312 : vector<16xf32> to vector<16x1xf32>
    %314 = vector.broadcast %313 : vector<16x1xf32> to vector<16x24xf32>
    %315 = arith.divf %311, %314 : vector<16x24xf32>
    %316 = vector.extract_strided_slice %239 {offsets = [0, 24], sizes = [24, 8], strides = [1, 1]} : vector<24x64xf32> to vector<24x8xf32>
    %cst_119 = arith.constant dense<0.000000e+00> : vector<16x8xf32>
    %317 = tpu.matmul %315, %316, %cst_119 {dimension_numbers = #tpu.dot_dimension_numbers<[1], [0], [0], [1], [0, 0, 1, 1], [], []>} : vector<16x24xf32>, vector<24x8xf32>, vector<16x8xf32> -> vector<16x8xf32>
    %318 = vector.extract_strided_slice %222 {offsets = [24, 0], sizes = [8, 64], strides = [1, 1]} : vector<64x64xf32> to vector<8x64xf32>
    %cst_120 = arith.constant dense<0.000000e+00> : vector<16x64xf32>
    %319 = tpu.matmul %317, %318, %cst_120 {dimension_numbers = #tpu.dot_dimension_numbers<[1], [0], [0], [1], [0, 0, 1, 1], [], []>} : vector<16x8xf32>, vector<8x64xf32>, vector<16x64xf32> -> vector<16x64xf32>
    %320 = arith.addf %300, %319 : vector<16x64xf32>
    %321 = vector.extract_strided_slice %229 {offsets = [0, 32], sizes = [16, 8], strides = [1, 1]} : vector<16x64xf32> to vector<16x8xf32>
    %322 = vector.extract_strided_slice %234 {offsets = [0, 32], sizes = [24, 8], strides = [1, 1]} : vector<24x64xf32> to vector<24x8xf32>
    %cst_121 = arith.constant dense<0.000000e+00> : vector<16x24xf32>
    %323 = tpu.matmul %321, %322, %cst_121 {dimension_numbers = #tpu.dot_dimension_numbers<[1], [1], [0], [0], [0, 0, 1, 0], [], []>} : vector<16x8xf32>, vector<24x8xf32>, vector<16x24xf32> -> vector<16x24xf32>
    %cst_122 = arith.constant 0.353553385 : f32
    %324 = vector.broadcast %cst_122 : f32 to vector<16x24xf32>
    %325 = arith.mulf %323, %324 : vector<16x24xf32>
    %326 = arith.addf %325, %216 : vector<16x24xf32>
    %cst_123 = arith.constant dense<0xFF800000> : vector<16xf32>
    %327 = vector.multi_reduction <maximumf>, %326, %cst_123 [1] : vector<16x24xf32> to vector<16xf32>
    %328 = vector.shape_cast %327 : vector<16xf32> to vector<16x1xf32>
    %329 = vector.broadcast %328 : vector<16x1xf32> to vector<16x24xf32>
    %330 = arith.subf %326, %329 : vector<16x24xf32>
    %331 = math.exp %330 : vector<16x24xf32>
    %cst_124 = arith.constant dense<0.000000e+00> : vector<16xf32>
    %332 = vector.multi_reduction <add>, %331, %cst_124 [1] : vector<16x24xf32> to vector<16xf32>
    %333 = vector.shape_cast %332 : vector<16xf32> to vector<16x1xf32>
    %334 = vector.broadcast %333 : vector<16x1xf32> to vector<16x24xf32>
    %335 = arith.divf %331, %334 : vector<16x24xf32>
    %336 = vector.extract_strided_slice %239 {offsets = [0, 32], sizes = [24, 8], strides = [1, 1]} : vector<24x64xf32> to vector<24x8xf32>
    %cst_125 = arith.constant dense<0.000000e+00> : vector<16x8xf32>
    %337 = tpu.matmul %335, %336, %cst_125 {dimension_numbers = #tpu.dot_dimension_numbers<[1], [0], [0], [1], [0, 0, 1, 1], [], []>} : vector<16x24xf32>, vector<24x8xf32>, vector<16x8xf32> -> vector<16x8xf32>
    %338 = vector.extract_strided_slice %222 {offsets = [32, 0], sizes = [8, 64], strides = [1, 1]} : vector<64x64xf32> to vector<8x64xf32>
    %cst_126 = arith.constant dense<0.000000e+00> : vector<16x64xf32>
    %339 = tpu.matmul %337, %338, %cst_126 {dimension_numbers = #tpu.dot_dimension_numbers<[1], [0], [0], [1], [0, 0, 1, 1], [], []>} : vector<16x8xf32>, vector<8x64xf32>, vector<16x64xf32> -> vector<16x64xf32>
    %340 = arith.addf %320, %339 : vector<16x64xf32>
    %341 = vector.extract_strided_slice %229 {offsets = [0, 40], sizes = [16, 8], strides = [1, 1]} : vector<16x64xf32> to vector<16x8xf32>
    %342 = vector.extract_strided_slice %234 {offsets = [0, 40], sizes = [24, 8], strides = [1, 1]} : vector<24x64xf32> to vector<24x8xf32>
    %cst_127 = arith.constant dense<0.000000e+00> : vector<16x24xf32>
    %343 = tpu.matmul %341, %342, %cst_127 {dimension_numbers = #tpu.dot_dimension_numbers<[1], [1], [0], [0], [0, 0, 1, 0], [], []>} : vector<16x8xf32>, vector<24x8xf32>, vector<16x24xf32> -> vector<16x24xf32>
    %cst_128 = arith.constant 0.353553385 : f32
    %344 = vector.broadcast %cst_128 : f32 to vector<16x24xf32>
    %345 = arith.mulf %343, %344 : vector<16x24xf32>
    %346 = arith.addf %345, %216 : vector<16x24xf32>
    %cst_129 = arith.constant dense<0xFF800000> : vector<16xf32>
    %347 = vector.multi_reduction <maximumf>, %346, %cst_129 [1] : vector<16x24xf32> to vector<16xf32>
    %348 = vector.shape_cast %347 : vector<16xf32> to vector<16x1xf32>
    %349 = vector.broadcast %348 : vector<16x1xf32> to vector<16x24xf32>
    %350 = arith.subf %346, %349 : vector<16x24xf32>
    %351 = math.exp %350 : vector<16x24xf32>
    %cst_130 = arith.constant dense<0.000000e+00> : vector<16xf32>
    %352 = vector.multi_reduction <add>, %351, %cst_130 [1] : vector<16x24xf32> to vector<16xf32>
    %353 = vector.shape_cast %352 : vector<16xf32> to vector<16x1xf32>
    %354 = vector.broadcast %353 : vector<16x1xf32> to vector<16x24xf32>
    %355 = arith.divf %351, %354 : vector<16x24xf32>
    %356 = vector.extract_strided_slice %239 {offsets = [0, 40], sizes = [24, 8], strides = [1, 1]} : vector<24x64xf32> to vector<24x8xf32>
    %cst_131 = arith.constant dense<0.000000e+00> : vector<16x8xf32>
    %357 = tpu.matmul %355, %356, %cst_131 {dimension_numbers = #tpu.dot_dimension_numbers<[1], [0], [0], [1], [0, 0, 1, 1], [], []>} : vector<16x24xf32>, vector<24x8xf32>, vector<16x8xf32> -> vector<16x8xf32>
    %358 = vector.extract_strided_slice %222 {offsets = [40, 0], sizes = [8, 64], strides = [1, 1]} : vector<64x64xf32> to vector<8x64xf32>
    %cst_132 = arith.constant dense<0.000000e+00> : vector<16x64xf32>
    %359 = tpu.matmul %357, %358, %cst_132 {dimension_numbers = #tpu.dot_dimension_numbers<[1], [0], [0], [1], [0, 0, 1, 1], [], []>} : vector<16x8xf32>, vector<8x64xf32>, vector<16x64xf32> -> vector<16x64xf32>
    %360 = arith.addf %340, %359 : vector<16x64xf32>
    %361 = vector.extract_strided_slice %229 {offsets = [0, 48], sizes = [16, 8], strides = [1, 1]} : vector<16x64xf32> to vector<16x8xf32>
    %362 = vector.extract_strided_slice %234 {offsets = [0, 48], sizes = [24, 8], strides = [1, 1]} : vector<24x64xf32> to vector<24x8xf32>
    %cst_133 = arith.constant dense<0.000000e+00> : vector<16x24xf32>
    %363 = tpu.matmul %361, %362, %cst_133 {dimension_numbers = #tpu.dot_dimension_numbers<[1], [1], [0], [0], [0, 0, 1, 0], [], []>} : vector<16x8xf32>, vector<24x8xf32>, vector<16x24xf32> -> vector<16x24xf32>
    %cst_134 = arith.constant 0.353553385 : f32
    %364 = vector.broadcast %cst_134 : f32 to vector<16x24xf32>
    %365 = arith.mulf %363, %364 : vector<16x24xf32>
    %366 = arith.addf %365, %216 : vector<16x24xf32>
    %cst_135 = arith.constant dense<0xFF800000> : vector<16xf32>
    %367 = vector.multi_reduction <maximumf>, %366, %cst_135 [1] : vector<16x24xf32> to vector<16xf32>
    %368 = vector.shape_cast %367 : vector<16xf32> to vector<16x1xf32>
    %369 = vector.broadcast %368 : vector<16x1xf32> to vector<16x24xf32>
    %370 = arith.subf %366, %369 : vector<16x24xf32>
    %371 = math.exp %370 : vector<16x24xf32>
    %cst_136 = arith.constant dense<0.000000e+00> : vector<16xf32>
    %372 = vector.multi_reduction <add>, %371, %cst_136 [1] : vector<16x24xf32> to vector<16xf32>
    %373 = vector.shape_cast %372 : vector<16xf32> to vector<16x1xf32>
    %374 = vector.broadcast %373 : vector<16x1xf32> to vector<16x24xf32>
    %375 = arith.divf %371, %374 : vector<16x24xf32>
    %376 = vector.extract_strided_slice %239 {offsets = [0, 48], sizes = [24, 8], strides = [1, 1]} : vector<24x64xf32> to vector<24x8xf32>
    %cst_137 = arith.constant dense<0.000000e+00> : vector<16x8xf32>
    %377 = tpu.matmul %375, %376, %cst_137 {dimension_numbers = #tpu.dot_dimension_numbers<[1], [0], [0], [1], [0, 0, 1, 1], [], []>} : vector<16x24xf32>, vector<24x8xf32>, vector<16x8xf32> -> vector<16x8xf32>
    %378 = vector.extract_strided_slice %222 {offsets = [48, 0], sizes = [8, 64], strides = [1, 1]} : vector<64x64xf32> to vector<8x64xf32>
    %cst_138 = arith.constant dense<0.000000e+00> : vector<16x64xf32>
    %379 = tpu.matmul %377, %378, %cst_138 {dimension_numbers = #tpu.dot_dimension_numbers<[1], [0], [0], [1], [0, 0, 1, 1], [], []>} : vector<16x8xf32>, vector<8x64xf32>, vector<16x64xf32> -> vector<16x64xf32>
    %380 = arith.addf %360, %379 : vector<16x64xf32>
    %381 = vector.extract_strided_slice %229 {offsets = [0, 56], sizes = [16, 8], strides = [1, 1]} : vector<16x64xf32> to vector<16x8xf32>
    %382 = vector.extract_strided_slice %234 {offsets = [0, 56], sizes = [24, 8], strides = [1, 1]} : vector<24x64xf32> to vector<24x8xf32>
    %cst_139 = arith.constant dense<0.000000e+00> : vector<16x24xf32>
    %383 = tpu.matmul %381, %382, %cst_139 {dimension_numbers = #tpu.dot_dimension_numbers<[1], [1], [0], [0], [0, 0, 1, 0], [], []>} : vector<16x8xf32>, vector<24x8xf32>, vector<16x24xf32> -> vector<16x24xf32>
    %cst_140 = arith.constant 0.353553385 : f32
    %384 = vector.broadcast %cst_140 : f32 to vector<16x24xf32>
    %385 = arith.mulf %383, %384 : vector<16x24xf32>
    %386 = arith.addf %385, %216 : vector<16x24xf32>
    %cst_141 = arith.constant dense<0xFF800000> : vector<16xf32>
    %387 = vector.multi_reduction <maximumf>, %386, %cst_141 [1] : vector<16x24xf32> to vector<16xf32>
    %388 = vector.shape_cast %387 : vector<16xf32> to vector<16x1xf32>
    %389 = vector.broadcast %388 : vector<16x1xf32> to vector<16x24xf32>
    %390 = arith.subf %386, %389 : vector<16x24xf32>
    %391 = math.exp %390 : vector<16x24xf32>
    %cst_142 = arith.constant dense<0.000000e+00> : vector<16xf32>
    %392 = vector.multi_reduction <add>, %391, %cst_142 [1] : vector<16x24xf32> to vector<16xf32>
    %393 = vector.shape_cast %392 : vector<16xf32> to vector<16x1xf32>
    %394 = vector.broadcast %393 : vector<16x1xf32> to vector<16x24xf32>
    %395 = arith.divf %391, %394 : vector<16x24xf32>
    %396 = vector.extract_strided_slice %239 {offsets = [0, 56], sizes = [24, 8], strides = [1, 1]} : vector<24x64xf32> to vector<24x8xf32>
    %cst_143 = arith.constant dense<0.000000e+00> : vector<16x8xf32>
    %397 = tpu.matmul %395, %396, %cst_143 {dimension_numbers = #tpu.dot_dimension_numbers<[1], [0], [0], [1], [0, 0, 1, 1], [], []>} : vector<16x24xf32>, vector<24x8xf32>, vector<16x8xf32> -> vector<16x8xf32>
    %398 = vector.extract_strided_slice %222 {offsets = [56, 0], sizes = [8, 64], strides = [1, 1]} : vector<64x64xf32> to vector<8x64xf32>
    %cst_144 = arith.constant dense<0.000000e+00> : vector<16x64xf32>
    %399 = tpu.matmul %397, %398, %cst_144 {dimension_numbers = #tpu.dot_dimension_numbers<[1], [0], [0], [1], [0, 0, 1, 1], [], []>} : vector<16x8xf32>, vector<8x64xf32>, vector<16x64xf32> -> vector<16x64xf32>
    %400 = arith.addf %380, %399 : vector<16x64xf32>
    %401 = vector.broadcast %224 : vector<1x64xf32> to vector<16x64xf32>
    %402 = arith.addf %400, %401 : vector<16x64xf32>
    %403 = arith.addf %200, %402 : vector<16x64xf32>
    %c0_145 = arith.constant 0 : index
    %c0_146 = arith.constant 0 : index
    %404 = vector.load %arg15[%c0_145, %c0_146] : memref<16x64xf32, #tpu.memory_space<vmem>>, vector<16x64xf32>
    tpu.vector_store %arg15[%c0_145, %c0_146], %403 {strides = array<i32>} : memref<16x64xf32, #tpu.memory_space<vmem>>, vector<16x64xf32>,
    return
  }
  func.func @transform_0(%arg0: i32) -> (i32, i32) {
    %c0_i32 = arith.constant 0 : i32
    %c0_i32_0 = arith.constant 0 : i32
    %c0_i32_1 = arith.constant 0 : i32
    return %c0_i32, %c0_i32_0 : i32, i32
  }
  func.func @transform_1(%arg0: i32) -> (i32, i32) {
    %c0_i32 = arith.constant 0 : i32
    %c0_i32_0 = arith.constant 0 : i32
    %c0_i32_1 = arith.constant 0 : i32
    return %c0_i32, %c0_i32_0 : i32, i32
  }
  func.func @transform_2(%arg0: i32) -> (i32, i32) {
    %c0_i32 = arith.constant 0 : i32
    %c0_i32_0 = arith.constant 0 : i32
    %c0_i32_1 = arith.constant 0 : i32
    return %c0_i32, %c0_i32_0 : i32, i32
  }
  func.func @transform_3(%arg0: i32) -> (i32, i32) {
    %c0_i32 = arith.constant 0 : i32
    %c0_i32_0 = arith.constant 0 : i32
    %c0_i32_1 = arith.constant 0 : i32
    return %c0_i32, %c0_i32_0 : i32, i32
  }
  func.func @transform_4(%arg0: i32) -> (i32, i32, i32) {
    %c0_i32 = arith.constant 0 : i32
    %c0_i32_0 = arith.constant 0 : i32
    %c0_i32_1 = arith.constant 0 : i32
    %c0_i32_2 = arith.constant 0 : i32
    return %c0_i32, %c0_i32_0, %c0_i32_1 : i32, i32, i32
  }
  func.func @transform_5(%arg0: i32) -> (i32, i32, i32) {
    %c0_i32 = arith.constant 0 : i32
    %c0_i32_0 = arith.constant 0 : i32
    %c0_i32_1 = arith.constant 0 : i32
    %c0_i32_2 = arith.constant 0 : i32
    return %c0_i32, %c0_i32_0, %c0_i32_1 : i32, i32, i32
  }
  func.func @transform_6(%arg0: i32) -> (i32, i32, i32) {
    %c0_i32 = arith.constant 0 : i32
    %c0_i32_0 = arith.constant 0 : i32
    %c0_i32_1 = arith.constant 0 : i32
    %c0_i32_2 = arith.constant 0 : i32
    return %c0_i32, %c0_i32_0, %c0_i32_1 : i32, i32, i32
  }
  func.func @transform_7(%arg0: i32) -> (i32, i32, i32) {
    %c0_i32 = arith.constant 0 : i32
    %c0_i32_0 = arith.constant 0 : i32
    %c0_i32_1 = arith.constant 0 : i32
    %c0_i32_2 = arith.constant 0 : i32
    return %c0_i32, %c0_i32_0, %c0_i32_1 : i32, i32, i32
  }
  func.func @transform_8(%arg0: i32) -> (i32, i32, i32) {
    %c0_i32 = arith.constant 0 : i32
    %c0_i32_0 = arith.constant 0 : i32
    %c0_i32_1 = arith.constant 0 : i32
    %c0_i32_2 = arith.constant 0 : i32
    return %c0_i32, %c0_i32_0, %c0_i32_1 : i32, i32, i32
  }
  func.func @transform_9(%arg0: i32) -> (i32, i32, i32) {
    %c0_i32 = arith.constant 0 : i32
    %c0_i32_0 = arith.constant 0 : i32
    %c0_i32_1 = arith.constant 0 : i32
    %c0_i32_2 = arith.constant 0 : i32
    return %c0_i32, %c0_i32_0, %c0_i32_1 : i32, i32, i32
  }
  func.func @transform_10(%arg0: i32) -> (i32, i32, i32) {
    %c0_i32 = arith.constant 0 : i32
    %c0_i32_0 = arith.constant 0 : i32
    %c0_i32_1 = arith.constant 0 : i32
    %c0_i32_2 = arith.constant 0 : i32
    return %c0_i32, %c0_i32_0, %c0_i32_1 : i32, i32, i32
  }
  func.func @transform_11(%arg0: i32) -> (i32, i32, i32) {
    %c0_i32 = arith.constant 0 : i32
    %c0_i32_0 = arith.constant 0 : i32
    %c0_i32_1 = arith.constant 0 : i32
    %c0_i32_2 = arith.constant 0 : i32
    return %c0_i32, %c0_i32_0, %c0_i32_1 : i32, i32, i32
  }
  func.func @transform_12(%arg0: i32) -> (i32, i32) {
    %c0_i32 = arith.constant 0 : i32
    %c0_i32_0 = arith.constant 0 : i32
    %c0_i32_1 = arith.constant 0 : i32
    return %c0_i32, %c0_i32_0 : i32, i32
  }
  func.func @transform_13(%arg0: i32) -> (i32, i32) {
    %c0_i32 = arith.constant 0 : i32
    %c0_i32_0 = arith.constant 0 : i32
    %c0_i32_1 = arith.constant 0 : i32
    return %c0_i32, %c0_i32_0 : i32, i32
  }
  func.func @transform_14(%arg0: i32) -> (i32, i32) {
    %c0_i32 = arith.constant 0 : i32
    %c0_i32_0 = arith.constant 0 : i32
    %c0_i32_1 = arith.constant 0 : i32
    return %c0_i32, %c0_i32_0 : i32, i32
  }
}

</mosaic_0001>

<llo_original>
// kernel: qformer2_forward.1
$region0: #{qformer2_forward.1}
  #allocation0 [shape = 'u32[]', space=smem, size = 0x4, offset = 0x4, fixed_abs, tag = 'smem constant byte address 0x4 - core index']
  #allocation1 [shape = 'u32[144,128]{1,0:T(1,128)}', space=vmem, size = 0x12000, scoped, tag = 'internal scratch']
  %s0 = inlined_call_operand.vmem [shape: f32[16,64], index: 0, kind: input, shape index: {}]
  %s1 = inlined_call_operand.vmem [shape: f32[16,64], index: 1, kind: input, shape index: {}]
  %s2 = inlined_call_operand.vmem [shape: f32[12,64], index: 2, kind: input, shape index: {}]
  %s3 = inlined_call_operand.vmem [shape: f32[24,48], index: 3, kind: input, shape index: {}]
  %s4 = inlined_call_operand.vmem [shape: f32[1,192,64], index: 4, kind: input, shape index: {}]
  %s5 = inlined_call_operand.vmem [shape: f32[1,3,64], index: 5, kind: input, shape index: {}]
  %s6 = inlined_call_operand.vmem [shape: f32[1,64,64], index: 6, kind: input, shape index: {}]
  %s7 = inlined_call_operand.vmem [shape: f32[1,1,64], index: 7, kind: input, shape index: {}]
  %s8 = inlined_call_operand.vmem [shape: f32[1,192,64], index: 8, kind: input, shape index: {}]
  %s9 = inlined_call_operand.vmem [shape: f32[1,3,64], index: 9, kind: input, shape index: {}]
  %s10 = inlined_call_operand.vmem [shape: f32[1,64,64], index: 10, kind: input, shape index: {}]
  %s11 = inlined_call_operand.vmem [shape: f32[1,1,64], index: 11, kind: input, shape index: {}]
  %s12 = inlined_call_operand.vmem [shape: f32[64,48], index: 12, kind: input, shape index: {}]
  %s13 = inlined_call_operand.vmem [shape: f32[1,64], index: 13, kind: input, shape index: {}]
  %s14 = inlined_call_operand.hbm [shape: f32[16,64], index: 14, kind: output, shape index: {}]
  %s15 = sld [smem:[#allocation0]]
  $region66: #{qformer2_forward.1} parent=0
    _
  %s17 = ssub.s32 1, %s15
  %s18 = scalar_select 0, %s17, %s15
  $region1: #{qformer2_forward.1} parent=0
    #allocation2 [shape = 'u8[8192]{0}', space=vmem, size = 0x2000, scoped, tag = 'output window, operand 0, single buffered']
    #allocation3 [shape = 's32[1]{0}', space=sflag, size = 0x4, scoped, tag = 'scoped memory for qformer2_forward.1']
    %19 = vsyncpa [#allocation3], 0
    // Predicated region
    $region2: #{qformer2_forward.1} parent=1 // pred_check
      _
    $region3: #{qformer2_forward.1} parent=1 // pred_check_branch
      %21 = sbr.rel (0) target = $region5
    $region4: #{qformer2_forward.1} parent=1 // pred_region
      _
    $region5: #{qformer2_forward.1} parent=1 // pred_fallthru
      _
    // Predicated region
    $region6: #{qformer2_forward.1} parent=1 // pred_check
      _
    $region7: #{qformer2_forward.1} parent=1 // pred_check_branch
      %23 = sbr.rel (0) target = $region9
    $region8: #{qformer2_forward.1} parent=1 // pred_region
      _
    $region9: #{qformer2_forward.1} parent=1 // pred_fallthru
      _
    // Predicated region
    $region10: #{qformer2_forward.1} parent=1 // pred_check
      _
    $region11: #{qformer2_forward.1} parent=1 // pred_check_branch
      %25 = sbr.rel (0) target = $region13
    $region12: #{qformer2_forward.1} parent=1 // pred_region
      _
    $region13: #{qformer2_forward.1} parent=1 // pred_fallthru
      _
    // Predicated region
    $region14: #{qformer2_forward.1} parent=1 // pred_check
      _
    $region15: #{qformer2_forward.1} parent=1 // pred_check_branch
      %27 = sbr.rel (0) target = $region17
    $region16: #{qformer2_forward.1} parent=1 // pred_region
      _
    $region17: #{qformer2_forward.1} parent=1 // pred_fallthru
      _
    // Predicated region
    $region18: #{qformer2_forward.1} parent=1 // pred_check
      _
    $region19: #{qformer2_forward.1} parent=1 // pred_check_branch
      %29 = sbr.rel (0) target = $region21
    $region20: #{qformer2_forward.1} parent=1 // pred_region
      _
    $region21: #{qformer2_forward.1} parent=1 // pred_fallthru
      _
    // Predicated region
    $region22: #{qformer2_forward.1} parent=1 // pred_check
      _
    $region23: #{qformer2_forward.1} parent=1 // pred_check_branch
      %31 = sbr.rel (0) target = $region25
    $region24: #{qformer2_forward.1} parent=1 // pred_region
      _
    $region25: #{qformer2_forward.1} parent=1 // pred_fallthru
      _
    // Predicated region
    $region26: #{qformer2_forward.1} parent=1 // pred_check
      _
    $region27: #{qformer2_forward.1} parent=1 // pred_check_branch
      %33 = sbr.rel (0) target = $region29
    $region28: #{qformer2_forward.1} parent=1 // pred_region
      _
    $region29: #{qformer2_forward.1} parent=1 // pred_fallthru
      _
    // Predicated region
    $region30: #{qformer2_forward.1} parent=1 // pred_check
      _
    $region31: #{qformer2_forward.1} parent=1 // pred_check_branch
      %35 = sbr.rel (0) target = $region33
    $region32: #{qformer2_forward.1} parent=1 // pred_region
      _
    $region33: #{qformer2_forward.1} parent=1 // pred_fallthru
      _
    // Predicated region
    $region34: #{qformer2_forward.1} parent=1 // pred_check
      _
    $region35: #{qformer2_forward.1} parent=1 // pred_check_branch
      %37 = sbr.rel (0) target = $region37
    $region36: #{qformer2_forward.1} parent=1 // pred_region
      _
    $region37: #{qformer2_forward.1} parent=1 // pred_fallthru
      _
    // Predicated region
    $region38: #{qformer2_forward.1} parent=1 // pred_check
      _
    $region39: #{qformer2_forward.1} parent=1 // pred_check_branch
      %39 = sbr.rel (0) target = $region41
    $region40: #{qformer2_forward.1} parent=1 // pred_region
      _
    $region41: #{qformer2_forward.1} parent=1 // pred_fallthru
      _
    // Predicated region
    $region42: #{qformer2_forward.1} parent=1 // pred_check
      _
    $region43: #{qformer2_forward.1} parent=1 // pred_check_branch
      %41 = sbr.rel (0) target = $region45
    $region44: #{qformer2_forward.1} parent=1 // pred_region
      _
    $region45: #{qformer2_forward.1} parent=1 // pred_fallthru
      _
    // Predicated region
    $region46: #{qformer2_forward.1} parent=1 // pred_check
      _
    $region47: #{qformer2_forward.1} parent=1 // pred_check_branch
      %43 = sbr.rel (0) target = $region49
    $region48: #{qformer2_forward.1} parent=1 // pred_region
      _
    $region49: #{qformer2_forward.1} parent=1 // pred_fallthru
      _
    // Predicated region
    $region50: #{qformer2_forward.1} parent=1 // pred_check
      _
    $region51: #{qformer2_forward.1} parent=1 // pred_check_branch
      %45 = sbr.rel (0) target = $region53
    $region52: #{qformer2_forward.1} parent=1 // pred_region
      _
    $region53: #{qformer2_forward.1} parent=1 // pred_fallthru
      _
    // Predicated region
    $region54: #{qformer2_forward.1} parent=1 // pred_check
      _
    $region55: #{qformer2_forward.1} parent=1 // pred_check_branch
      %47 = sbr.rel (0) target = $region57
    $region56: #{qformer2_forward.1} parent=1 // pred_region
      _
    $region57: #{qformer2_forward.1} parent=1 // pred_fallthru
      _
    %v48 = vld [vmem:[%s0] sm:$0xff]
    %v49 = vld [vmem:[%s0 + $0x8] sm:$0xff]
    %v50 = vld [vmem:[%s2] sm:$0xff]
    %v51 = vld [vmem:[%s2 + $0x8] sm:$0xf]
    %v52 = vlaneseq
    %v53 = vshrl.u32 %v52, 7
    %v54 = vadd.s32 %v53, 8
    %v55 = vlaneseq
    %v56 = vand.u32 %v55, 127
    %v57 = vxor.u32 %v53, %v56
    %v58 = vxor.u32 %v54, %v56
    %v59 = vand.u32 %v57, 1
    %v60 = vand.u32 %v58, 1
    %vm61 = vcmp.eq.s32.totalorder %v59, 0
    %vm62 = vcmp.eq.s32.totalorder %v60, 0
    %v63 = vsel %vm61, 0.0, -1e+30
    %v64 = vsel %vm62, 0.0, -1e+30
    %v65 = vld [vmem:[%s4] sm:$0xff]
    %v66 = vld [vmem:[%s4 + $0x8] sm:$0xff]
    %v67 = vld [vmem:[%s4 + $0x10] sm:$0xff]
    %v68 = vld [vmem:[%s4 + $0x18] sm:$0xff]
    %v69 = vld [vmem:[%s4 + $0x20] sm:$0xff]
    %v70 = vld [vmem:[%s4 + $0x28] sm:$0xff]
    %v71 = vld [vmem:[%s4 + $0x30] sm:$0xff]
    %v72 = vld [vmem:[%s4 + $0x38] sm:$0xff]
    %v73 = vld [vmem:[%s4 + $0x40] sm:$0xff]
    %v74 = vld [vmem:[%s4 + $0x48] sm:$0xff]
    %v75 = vld [vmem:[%s4 + $0x50] sm:$0xff]
    %v76 = vld [vmem:[%s4 + $0x58] sm:$0xff]
    %v77 = vld [vmem:[%s4 + $0x60] sm:$0xff]
    %v78 = vld [vmem:[%s4 + $0x68] sm:$0xff]
    %v79 = vld [vmem:[%s4 + $0x70] sm:$0xff]
    %v80 = vld [vmem:[%s4 + $0x78] sm:$0xff]
    %v81 = vld [vmem:[%s4 + $0x80] sm:$0xff]
    %v82 = vld [vmem:[%s4 + $0x88] sm:$0xff]
    %v83 = vld [vmem:[%s4 + $0x90] sm:$0xff]
    %v84 = vld [vmem:[%s4 + $0x98] sm:$0xff]
    %v85 = vld [vmem:[%s4 + $0xa0] sm:$0xff]
    %v86 = vld [vmem:[%s4 + $0xa8] sm:$0xff]
    %v87 = vld [vmem:[%s4 + $0xb0] sm:$0xff]
    %v88 = vld [vmem:[%s4 + $0xb8] sm:$0xff]
    %v89 = vld [vmem:[%s5] sm:$0x7]
    %v90 = vld [vmem:[%s6] sm:$0xff]
    %v91 = vld [vmem:[%s6 + $0x8] sm:$0xff]
    %v92 = vld [vmem:[%s6 + $0x10] sm:$0xff]
    %v93 = vld [vmem:[%s6 + $0x18] sm:$0xff]
    %v94 = vld [vmem:[%s6 + $0x20] sm:$0xff]
    %v95 = vld [vmem:[%s6 + $0x28] sm:$0xff]
    %v96 = vld [vmem:[%s6 + $0x30] sm:$0xff]
    %v97 = vld [vmem:[%s6 + $0x38] sm:$0xff]
    %v98 = vld [vmem:[%s7] sm:$0x1]
    %v99 = vlaneseq
    %v100 = vshrl.u32 %v99, 7
    %v101 = vsub.s32 0, %v100
    %v102 = vrot.slane %v89, %v101
    %vm103 = vcmask 523264
    %v105 = vsel %vm103, %v48, 0
    %v108 = vsel %vm103, %v49, 0
    %v111 = vsel %vm103, %v65, 0
    %v114 = vsel %vm103, %v66, 0
    %v117 = vsel %vm103, %v67, 0
    %v120 = vsel %vm103, %v68, 0
    %v123 = vsel %vm103, %v69, 0
    %v126 = vsel %vm103, %v70, 0
    %v129 = vsel %vm103, %v71, 0
    %v132 = vsel %vm103, %v72, 0
    %134 = vmatprep.subr.mxu0 0.0
    %135 = vmatpush1.xpose.msra.mxu0 0.0
    %136 = vmatprep.subr.mxu0 0.0
    %137 = vmatpush1.xpose.msra.mxu0 0.0
    %138 = vmatprep.subr.mxu0 0.0
    %139 = vmatpush1.xpose.msra.mxu0 0.0
    %140 = vmatprep.subr.mxu0 0.0
    %141 = vmatpush1.xpose.msra.mxu0 0.0
    %142 = vmatprep.subr.mxu0 0.0
    %143 = vmatpush1.xpose.msra.mxu0 0.0
    %144 = vmatprep.subr.mxu0 0.0
    %145 = vmatpush1.xpose.msra.mxu0 0.0
    %146 = vmatprep.subr.mxu0 0.0
    %147 = vmatpush1.xpose.msra.mxu0 0.0
    %148 = vmatprep.subr.mxu0 0.0
    %149 = vmatpush1.xpose.msra.mxu0 0.0
    %150 = vmatprep.subr.mxu0 0.0
    %151 = vmatpush1.xpose.msra.mxu0 %v132
    %152 = vmatprep.subr.mxu0 0.0
    %153 = vmatpush1.xpose.msra.mxu0 %v129
    %154 = vmatprep.subr.mxu0 0.0
    %155 = vmatpush1.xpose.msra.mxu0 %v126
    %156 = vmatprep.subr.mxu0 0.0
    %157 = vmatpush1.xpose.msra.mxu0 %v123
    %158 = vmatprep.subr.mxu0 0.0
    %159 = vmatpush1.xpose.msra.mxu0 %v120
    %160 = vmatprep.subr.mxu0 0.0
    %161 = vmatpush1.xpose.msra.mxu0 %v117
    %162 = vmatprep.subr.mxu0 0.0
    %163 = vmatpush1.xpose.msra.mxu0 %v114
    %164 = vmatprep.subr.mxu0 0.0
    %165 = vmatpush1.xpose.msra.mxu0 %v111
    %166 = vmatprep.subr.mxu0 0.0
    %167 = vmatpush2.xpose.msra.mxu0 0.0
    %168 = vmatprep.subr.mxu0 0.0
    %169 = vmatpush2.xpose.msra.mxu0 0.0
    %170 = vmatprep.subr.mxu0 0.0
    %171 = vmatpush2.xpose.msra.mxu0 0.0
    %172 = vmatprep.subr.mxu0 0.0
    %173 = vmatpush2.xpose.msra.mxu0 0.0
    %174 = vmatprep.subr.mxu0 0.0
    %175 = vmatpush2.xpose.msra.mxu0 0.0
    %176 = vmatprep.subr.mxu0 0.0
    %177 = vmatpush2.xpose.msra.mxu0 0.0
    %178 = vmatprep.subr.mxu0 0.0
    %179 = vmatpush2.xpose.msra.mxu0 0.0
    %180 = vmatprep.subr.mxu0 0.0
    %181 = vmatpush2.xpose.msra.mxu0 0.0
    %182 = vmatprep.subr.mxu0 0.0
    %183 = vmatpush2.xpose.msra.mxu0 0.0
    %184 = vmatprep.subr.mxu0 0.0
    %185 = vmatpush2.xpose.msra.mxu0 0.0
    %186 = vmatprep.subr.mxu0 0.0
    %187 = vmatpush2.xpose.msra.mxu0 0.0
    %188 = vmatprep.subr.mxu0 0.0
    %189 = vmatpush2.xpose.msra.mxu0 0.0
    %190 = vmatprep.subr.mxu0 0.0
    %191 = vmatpush2.xpose.msra.mxu0 0.0
    %192 = vmatprep.subr.mxu0 0.0
    %193 = vmatpush2.xpose.msra.mxu0 0.0
    %194 = vmatprep.subr.mxu0 0.0
    %195 = vmatpush2.xpose.msra.mxu0 0.0
    %196 = vmatprep.subr.mxu0 0.0
    %197 = vmatpush2.xpose.msra.mxu0 0.0
    %198 = vmatprep.mubr.f32.mxu0 0.0
    %199 = vmatmul.mubr.f32.gmra.mxu0 %v105
    %v200 = vpop.f32.mrf.mxu0
    %v201 = vadd.f32 %v102, %v200
    %v202 = vpop.f32.mrf.mxu0
    %203 = vmatprep.mubr.f32.mxu0 0.0
    %204 = vmatmul.mubr.f32.gmra.mxu0 %v108
    %v205 = vpop.f32.mrf.mxu0
    %v206 = vadd.f32 %v102, %v205
    %v207 = vpop.f32.mrf.mxu0
    %208 = vdwg.mxu0
    %v209 = vlaneseq
    %v210 = vshrl.u32 %v209, 7
    %v211 = vsub.s32 1, %v210
    %v212 = vrot.slane %v89, %v211
    %v214 = vsel %vm103, %v50, 0
    %v217 = vsel %vm103, %v51, 0
    %v220 = vsel %vm103, %v73, 0
    %v223 = vsel %vm103, %v74, 0
    %v226 = vsel %vm103, %v75, 0
    %v229 = vsel %vm103, %v76, 0
    %v232 = vsel %vm103, %v77, 0
    %v235 = vsel %vm103, %v78, 0
    %v238 = vsel %vm103, %v79, 0
    %v241 = vsel %vm103, %v80, 0
    %243 = vmatprep.subr.mxu0 0.0
    %244 = vmatpush1.xpose.msra.mxu0 0.0
    %245 = vmatprep.subr.mxu0 0.0
    %246 = vmatpush1.xpose.msra.mxu0 0.0
    %247 = vmatprep.subr.mxu0 0.0
    %248 = vmatpush1.xpose.msra.mxu0 0.0
    %249 = vmatprep.subr.mxu0 0.0
    %250 = vmatpush1.xpose.msra.mxu0 0.0
    %251 = vmatprep.subr.mxu0 0.0
    %252 = vmatpush1.xpose.msra.mxu0 0.0
    %253 = vmatprep.subr.mxu0 0.0
    %254 = vmatpush1.xpose.msra.mxu0 0.0
    %255 = vmatprep.subr.mxu0 0.0
    %256 = vmatpush1.xpose.msra.mxu0 0.0
    %257 = vmatprep.subr.mxu0 0.0
    %258 = vmatpush1.xpose.msra.mxu0 0.0
    %259 = vmatprep.subr.mxu0 0.0
    %260 = vmatpush1.xpose.msra.mxu0 %v241
    %261 = vmatprep.subr.mxu0 0.0
    %262 = vmatpush1.xpose.msra.mxu0 %v238
    %263 = vmatprep.subr.mxu0 0.0
    %264 = vmatpush1.xpose.msra.mxu0 %v235
    %265 = vmatprep.subr.mxu0 0.0
    %266 = vmatpush1.xpose.msra.mxu0 %v232
    %267 = vmatprep.subr.mxu0 0.0
    %268 = vmatpush1.xpose.msra.mxu0 %v229
    %269 = vmatprep.subr.mxu0 0.0
    %270 = vmatpush1.xpose.msra.mxu0 %v226
    %271 = vmatprep.subr.mxu0 0.0
    %272 = vmatpush1.xpose.msra.mxu0 %v223
    %273 = vmatprep.subr.mxu0 0.0
    %274 = vmatpush1.xpose.msra.mxu0 %v220
    %275 = vmatprep.subr.mxu0 0.0
    %276 = vmatpush2.xpose.msra.mxu0 0.0
    %277 = vmatprep.subr.mxu0 0.0
    %278 = vmatpush2.xpose.msra.mxu0 0.0
    %279 = vmatprep.subr.mxu0 0.0
    %280 = vmatpush2.xpose.msra.mxu0 0.0
    %281 = vmatprep.subr.mxu0 0.0
    %282 = vmatpush2.xpose.msra.mxu0 0.0
    %283 = vmatprep.subr.mxu0 0.0
    %284 = vmatpush2.xpose.msra.mxu0 0.0
    %285 = vmatprep.subr.mxu0 0.0
    %286 = vmatpush2.xpose.msra.mxu0 0.0
    %287 = vmatprep.subr.mxu0 0.0
    %288 = vmatpush2.xpose.msra.mxu0 0.0
    %289 = vmatprep.subr.mxu0 0.0
    %290 = vmatpush2.xpose.msra.mxu0 0.0
    %291 = vmatprep.subr.mxu0 0.0
    %292 = vmatpush2.xpose.msra.mxu0 0.0
    %293 = vmatprep.subr.mxu0 0.0
    %294 = vmatpush2.xpose.msra.mxu0 0.0
    %295 = vmatprep.subr.mxu0 0.0
    %296 = vmatpush2.xpose.msra.mxu0 0.0
    %297 = vmatprep.subr.mxu0 0.0
    %298 = vmatpush2.xpose.msra.mxu0 0.0
    %299 = vmatprep.subr.mxu0 0.0
    %300 = vmatpush2.xpose.msra.mxu0 0.0
    %301 = vmatprep.subr.mxu0 0.0
    %302 = vmatpush2.xpose.msra.mxu0 0.0
    %303 = vmatprep.subr.mxu0 0.0
    %304 = vmatpush2.xpose.msra.mxu0 0.0
    %305 = vmatprep.subr.mxu0 0.0
    %306 = vmatpush2.xpose.msra.mxu0 0.0
    %307 = vmatprep.mubr.f32.mxu0 0.0
    %308 = vmatmul.mubr.f32.gmra.mxu0 %v214
    %v309 = vpop.f32.mrf.mxu0
    %v310 = vadd.f32 %v212, %v309
    %v311 = vpop.f32.mrf.mxu0
    %312 = vmatprep.mubr.f32.mxu0 0.0
    %313 = vmatmul.mubr.f32.gmra.mxu0 %v217
    %v314 = vpop.f32.mrf.mxu0
    %v315 = vadd.f32 %v212, %v314
    %v316 = vpop.f32.mrf.mxu0
    %317 = vdwg.mxu0
    %v318 = vlaneseq
    %v319 = vshrl.u32 %v318, 7
    %v320 = vsub.s32 2, %v319
    %v321 = vrot.slane %v89, %v320
    %v323 = vsel %vm103, %v81, 0
    %v326 = vsel %vm103, %v82, 0
    %v329 = vsel %vm103, %v83, 0
    %v332 = vsel %vm103, %v84, 0
    %v335 = vsel %vm103, %v85, 0
    %v338 = vsel %vm103, %v86, 0
    %v341 = vsel %vm103, %v87, 0
    %v344 = vsel %vm103, %v88, 0
    %346 = vmatprep.subr.mxu0 0.0
    %347 = vmatpush1.xpose.msra.mxu0 0.0
    %348 = vmatprep.subr.mxu0 0.0
    %349 = vmatpush1.xpose.msra.mxu0 0.0
    %350 = vmatprep.subr.mxu0 0.0
    %351 = vmatpush1.xpose.msra.mxu0 0.0
    %352 = vmatprep.subr.mxu0 0.0
    %353 = vmatpush1.xpose.msra.mxu0 0.0
    %354 = vmatprep.subr.mxu0 0.0
    %355 = vmatpush1.xpose.msra.mxu0 0.0
    %356 = vmatprep.subr.mxu0 0.0
    %357 = vmatpush1.xpose.msra.mxu0 0.0
    %358 = vmatprep.subr.mxu0 0.0
    %359 = vmatpush1.xpose.msra.mxu0 0.0
    %360 = vmatprep.subr.mxu0 0.0
    %361 = vmatpush1.xpose.msra.mxu0 0.0
    %362 = vmatprep.subr.mxu0 0.0
    %363 = vmatpush1.xpose.msra.mxu0 %v344
    %364 = vmatprep.subr.mxu0 0.0
    %365 = vmatpush1.xpose.msra.mxu0 %v341
    %366 = vmatprep.subr.mxu0 0.0
    %367 = vmatpush1.xpose.msra.mxu0 %v338
    %368 = vmatprep.subr.mxu0 0.0
    %369 = vmatpush1.xpose.msra.mxu0 %v335
    %370 = vmatprep.subr.mxu0 0.0
    %371 = vmatpush1.xpose.msra.mxu0 %v332
    %372 = vmatprep.subr.mxu0 0.0
    %373 = vmatpush1.xpose.msra.mxu0 %v329
    %374 = vmatprep.subr.mxu0 0.0
    %375 = vmatpush1.xpose.msra.mxu0 %v326
    %376 = vmatprep.subr.mxu0 0.0
    %377 = vmatpush1.xpose.msra.mxu0 %v323
    %378 = vmatprep.subr.mxu0 0.0
    %379 = vmatpush2.xpose.msra.mxu0 0.0
    %380 = vmatprep.subr.mxu0 0.0
    %381 = vmatpush2.xpose.msra.mxu0 0.0
    %382 = vmatprep.subr.mxu0 0.0
    %383 = vmatpush2.xpose.msra.mxu0 0.0
    %384 = vmatprep.subr.mxu0 0.0
    %385 = vmatpush2.xpose.msra.mxu0 0.0
    %386 = vmatprep.subr.mxu0 0.0
    %387 = vmatpush2.xpose.msra.mxu0 0.0
    %388 = vmatprep.subr.mxu0 0.0
    %389 = vmatpush2.xpose.msra.mxu0 0.0
    %390 = vmatprep.subr.mxu0 0.0
    %391 = vmatpush2.xpose.msra.mxu0 0.0
    %392 = vmatprep.subr.mxu0 0.0
    %393 = vmatpush2.xpose.msra.mxu0 0.0
    %394 = vmatprep.subr.mxu0 0.0
    %395 = vmatpush2.xpose.msra.mxu0 0.0
    %396 = vmatprep.subr.mxu0 0.0
    %397 = vmatpush2.xpose.msra.mxu0 0.0
    %398 = vmatprep.subr.mxu0 0.0
    %399 = vmatpush2.xpose.msra.mxu0 0.0
    %400 = vmatprep.subr.mxu0 0.0
    %401 = vmatpush2.xpose.msra.mxu0 0.0
    %402 = vmatprep.subr.mxu0 0.0
    %403 = vmatpush2.xpose.msra.mxu0 0.0
    %404 = vmatprep.subr.mxu0 0.0
    %405 = vmatpush2.xpose.msra.mxu0 0.0
    %406 = vmatprep.subr.mxu0 0.0
    %407 = vmatpush2.xpose.msra.mxu0 0.0
    %408 = vmatprep.subr.mxu0 0.0
    %409 = vmatpush2.xpose.msra.mxu0 0.0
    %410 = vmatprep.mubr.f32.mxu0 0.0
    %411 = vmatmul.mubr.f32.gmra.mxu0 %v214
    %v412 = vpop.f32.mrf.mxu0
    %v413 = vadd.f32 %v321, %v412
    %v414 = vpop.f32.mrf.mxu0
    %415 = vmatprep.mubr.f32.mxu0 0.0
    %416 = vmatmul.mubr.f32.gmra.mxu0 %v217
    %v417 = vpop.f32.mrf.mxu0
    %v418 = vadd.f32 %v321, %v417
    %v419 = vpop.f32.mrf.mxu0
    %420 = vdwg.mxu0
    %vm421 = vcmask 64512
    %v423 = vsel %vm421, %v201, 0
    %v426 = vsel %vm421, %v206, 0
    %v429 = vsel %vm421, %v310, 0
    %v432 = vsel %vm421, %v315, 0
    %434 = vmatprep.subr.mxu0 0.0
    %435 = vmatpush1.xpose.msra.mxu0 0.0
    %436 = vmatprep.subr.mxu0 0.0
    %437 = vmatpush1.xpose.msra.mxu0 0.0
    %438 = vmatprep.subr.mxu0 0.0
    %439 = vmatpush1.xpose.msra.mxu0 0.0
    %440 = vmatprep.subr.mxu0 0.0
    %441 = vmatpush1.xpose.msra.mxu0 0.0
    %442 = vmatprep.subr.mxu0 0.0
    %443 = vmatpush1.xpose.msra.mxu0 0.0
    %444 = vmatprep.subr.mxu0 0.0
    %445 = vmatpush1.xpose.msra.mxu0 0.0
    %446 = vmatprep.subr.mxu0 0.0
    %447 = vmatpush1.xpose.msra.mxu0 0.0
    %448 = vmatprep.subr.mxu0 0.0
    %449 = vmatpush1.xpose.msra.mxu0 0.0
    %450 = vmatprep.subr.mxu0 0.0
    %451 = vmatpush1.xpose.msra.mxu0 0.0
    %452 = vmatprep.subr.mxu0 0.0
    %453 = vmatpush1.xpose.msra.mxu0 0.0
    %454 = vmatprep.subr.mxu0 0.0
    %455 = vmatpush1.xpose.msra.mxu0 0.0
    %456 = vmatprep.subr.mxu0 0.0
    %457 = vmatpush1.xpose.msra.mxu0 0.0
    %458 = vmatprep.subr.mxu0 0.0
    %459 = vmatpush1.xpose.msra.mxu0 0.0
    %460 = vmatprep.subr.mxu0 0.0
    %461 = vmatpush1.xpose.msra.mxu0 0.0
    %462 = vmatprep.subr.mxu0 0.0
    %463 = vmatpush1.xpose.msra.mxu0 %v432
    %464 = vmatprep.subr.mxu0 0.0
    %465 = vmatpush1.xpose.msra.mxu0 %v429
    %466 = vmatprep.subr.mxu0 0.0
    %467 = vmatpush2.xpose.msra.mxu0 0.0
    %468 = vmatprep.subr.mxu0 0.0
    %469 = vmatpush2.xpose.msra.mxu0 0.0
    %470 = vmatprep.subr.mxu0 0.0
    %471 = vmatpush2.xpose.msra.mxu0 0.0
    %472 = vmatprep.subr.mxu0 0.0
    %473 = vmatpush2.xpose.msra.mxu0 0.0
    %474 = vmatprep.subr.mxu0 0.0
    %475 = vmatpush2.xpose.msra.mxu0 0.0
    %476 = vmatprep.subr.mxu0 0.0
    %477 = vmatpush2.xpose.msra.mxu0 0.0
    %478 = vmatprep.subr.mxu0 0.0
    %479 = vmatpush2.xpose.msra.mxu0 0.0
    %480 = vmatprep.subr.mxu0 0.0
    %481 = vmatpush2.xpose.msra.mxu0 0.0
    %482 = vmatprep.subr.mxu0 0.0
    %483 = vmatpush2.xpose.msra.mxu0 0.0
    %484 = vmatprep.subr.mxu0 0.0
    %485 = vmatpush2.xpose.msra.mxu0 0.0
    %486 = vmatprep.subr.mxu0 0.0
    %487 = vmatpush2.xpose.msra.mxu0 0.0
    %488 = vmatprep.subr.mxu0 0.0
    %489 = vmatpush2.xpose.msra.mxu0 0.0
    %490 = vmatprep.subr.mxu0 0.0
    %491 = vmatpush2.xpose.msra.mxu0 0.0
    %492 = vmatprep.subr.mxu0 0.0
    %493 = vmatpush2.xpose.msra.mxu0 0.0
    %494 = vmatprep.subr.mxu0 0.0
    %495 = vmatpush2.xpose.msra.mxu0 0.0
    %496 = vmatprep.subr.mxu0 0.0
    %497 = vmatpush2.xpose.msra.mxu0 0.0
    %498 = vmatprep.mubr.f32.mxu0 0.0
    %499 = vmatmul.mubr.f32.gmra.mxu0 %v423
    %v500 = vpop.f32.mrf.mxu0
    %v501 = vadd.f32 0.0, %v500
    %v502 = vpop.f32.mrf.mxu0
    %503 = vmatprep.mubr.f32.mxu0 0.0
    %504 = vmatmul.mubr.f32.gmra.mxu0 %v426
    %v505 = vpop.f32.mrf.mxu0
    %v506 = vadd.f32 0.0, %v505
    %v507 = vpop.f32.mrf.mxu0
    %508 = vdwg.mxu0
    %v509 = vmul.f32 %v501, 0.35355338
    %v510 = vmul.f32 %v506, 0.35355338
    %v511 = vadd.f32 %v509, %v63
    %v512 = vadd.f32 %v510, %v64
    %vm513 = vcmask 97280
    %v514 = vsel %vm513, %v511, -inf
    %515 = vmax.xlane.f32.xlu0 %v514
    %v516 = vpop.xlane.xlu0 %515
    %v517 = vsel %vm513, %v512, -inf
    %518 = vmax.xlane.f32.xlu0 %v517
    %v519 = vpop.xlane.xlu0 %518
    %v520 = vsub.f32 %v511, %v516
    %v521 = vsub.f32 %v512, %v519
    %v522 = vmul.f32 %v520, 1.442695
    %v523 = vpow.pop %v522
    %v524 = vmul.f32 %v521, 1.442695
    %v525 = vpow.pop %v524
    %v526 = vsel %vm513, %v523, 0.0
    %527 = vadd.xlane.f32.xlu0 %v526
    %v528 = vpop.xlane.xlu0 %527
    %v529 = vsel %vm513, %v525, 0.0
    %530 = vadd.xlane.f32.xlu0 %v529
    %v531 = vpop.xlane.xlu0 %530
    %v532 = vrcp.pop %v528
    %v533 = vmul.f32 %v523, %v532
    %v534 = vrcp.pop %v531
    %v535 = vmul.f32 %v525, %v534
    %v537 = vsel %vm513, %v533, 0
    %v540 = vsel %vm513, %v535, 0
    %vm542 = vcmask 1043456
    %v544 = vsel %vm542, %v418, 0
    %546 = vmatprep.subr.mxu0 0.0
    %547 = vmatpush1.msra.mxu0 0.0
    %548 = vmatprep.subr.mxu0 0.0
    %549 = vmatpush1.msra.mxu0 0.0
    %550 = vmatprep.subr.mxu0 0.0
    %551 = vmatpush1.msra.mxu0 0.0
    %552 = vmatprep.subr.mxu0 0.0
    %553 = vmatpush1.msra.mxu0 0.0
    %554 = vmatprep.subr.mxu0 0.0
    %555 = vmatpush1.msra.mxu0 0.0
    %556 = vmatprep.subr.mxu0 0.0
    %557 = vmatpush1.msra.mxu0 0.0
    %558 = vmatprep.subr.mxu0 0.0
    %559 = vmatpush1.msra.mxu0 0.0
    %560 = vmatprep.subr.mxu0 0.0
    %561 = vmatpush1.msra.mxu0 0.0
    %562 = vmatprep.subr.mxu0 0.0
    %563 = vmatpush1.msra.mxu0 0.0
    %564 = vmatprep.subr.mxu0 0.0
    %565 = vmatpush1.msra.mxu0 0.0
    %566 = vmatprep.subr.mxu0 0.0
    %567 = vmatpush1.msra.mxu0 0.0
    %568 = vmatprep.subr.mxu0 0.0
    %569 = vmatpush1.msra.mxu0 0.0
    %570 = vmatprep.subr.mxu0 0.0
    %571 = vmatpush1.msra.mxu0 0.0
    %572 = vmatprep.subr.mxu0 0.0
    %573 = vmatpush1.msra.mxu0 0.0
    %574 = vmatprep.subr.mxu0 0.0
    %575 = vmatpush1.msra.mxu0 %v544
    %576 = vmatprep.subr.mxu0 0.0
    %577 = vmatpush1.msra.mxu0 %v413
    %578 = vmatprep.subr.mxu0 0.0
    %579 = vmatpush2.msra.mxu0 0.0
    %580 = vmatprep.subr.mxu0 0.0
    %581 = vmatpush2.msra.mxu0 0.0
    %582 = vmatprep.subr.mxu0 0.0
    %583 = vmatpush2.msra.mxu0 0.0
    %584 = vmatprep.subr.mxu0 0.0
    %585 = vmatpush2.msra.mxu0 0.0
    %586 = vmatprep.subr.mxu0 0.0
    %587 = vmatpush2.msra.mxu0 0.0
    %588 = vmatprep.subr.mxu0 0.0
    %589 = vmatpush2.msra.mxu0 0.0
    %590 = vmatprep.subr.mxu0 0.0
    %591 = vmatpush2.msra.mxu0 0.0
    %592 = vmatprep.subr.mxu0 0.0
    %593 = vmatpush2.msra.mxu0 0.0
    %594 = vmatprep.subr.mxu0 0.0
    %595 = vmatpush2.msra.mxu0 0.0
    %596 = vmatprep.subr.mxu0 0.0
    %597 = vmatpush2.msra.mxu0 0.0
    %598 = vmatprep.subr.mxu0 0.0
    %599 = vmatpush2.msra.mxu0 0.0
    %600 = vmatprep.subr.mxu0 0.0
    %601 = vmatpush2.msra.mxu0 0.0
    %602 = vmatprep.subr.mxu0 0.0
    %603 = vmatpush2.msra.mxu0 0.0
    %604 = vmatprep.subr.mxu0 0.0
    %605 = vmatpush2.msra.mxu0 0.0
    %606 = vmatprep.subr.mxu0 0.0
    %607 = vmatpush2.msra.mxu0 0.0
    %608 = vmatprep.subr.mxu0 0.0
    %609 = vmatpush2.msra.mxu0 0.0
    %610 = vmatprep.mubr.f32.mxu0 0.0
    %611 = vmatmul.mubr.f32.gmra.mxu0 %v537
    %v612 = vpop.f32.mrf.mxu0
    %v613 = vadd.f32 0.0, %v612
    %v614 = vpop.f32.mrf.mxu0
    %615 = vmatprep.mubr.f32.mxu0 0.0
    %616 = vmatmul.mubr.f32.gmra.mxu0 %v540
    %v617 = vpop.f32.mrf.mxu0
    %v618 = vadd.f32 0.0, %v617
    %v619 = vpop.f32.mrf.mxu0
    %620 = vdwg.mxu0
    %621 = vrot.lane.b32.xlu0 %v201, 120
    %v622 = vpop.permute.xlu0 %621
    %623 = vrot.lane.b32.xlu0 %v206, 120
    %v624 = vpop.permute.xlu0 %623
    %625 = vrot.lane.b32.xlu0 %v310, 120
    %v626 = vpop.permute.xlu0 %625
    %627 = vrot.lane.b32.xlu0 %v315, 120
    %v628 = vpop.permute.xlu0 %627
    %v629 = vsel %vm421, %v622, 0
    %v631 = vsel %vm421, %v624, 0
    %v633 = vsel %vm421, %v626, 0
    %v635 = vsel %vm421, %v628, 0
    %637 = vmatprep.subr.mxu0 0.0
    %638 = vmatpush1.xpose.msra.mxu0 0.0
    %639 = vmatprep.subr.mxu0 0.0
    %640 = vmatpush1.xpose.msra.mxu0 0.0
    %641 = vmatprep.subr.mxu0 0.0
    %642 = vmatpush1.xpose.msra.mxu0 0.0
    %643 = vmatprep.subr.mxu0 0.0
    %644 = vmatpush1.xpose.msra.mxu0 0.0
    %645 = vmatprep.subr.mxu0 0.0
    %646 = vmatpush1.xpose.msra.mxu0 0.0
    %647 = vmatprep.subr.mxu0 0.0
    %648 = vmatpush1.xpose.msra.mxu0 0.0
    %649 = vmatprep.subr.mxu0 0.0
    %650 = vmatpush1.xpose.msra.mxu0 0.0
    %651 = vmatprep.subr.mxu0 0.0
    %652 = vmatpush1.xpose.msra.mxu0 0.0
    %653 = vmatprep.subr.mxu0 0.0
    %654 = vmatpush1.xpose.msra.mxu0 0.0
    %655 = vmatprep.subr.mxu0 0.0
    %656 = vmatpush1.xpose.msra.mxu0 0.0
    %657 = vmatprep.subr.mxu0 0.0
    %658 = vmatpush1.xpose.msra.mxu0 0.0
    %659 = vmatprep.subr.mxu0 0.0
    %660 = vmatpush1.xpose.msra.mxu0 0.0
    %661 = vmatprep.subr.mxu0 0.0
    %662 = vmatpush1.xpose.msra.mxu0 0.0
    %663 = vmatprep.subr.mxu0 0.0
    %664 = vmatpush1.xpose.msra.mxu0 0.0
    %665 = vmatprep.subr.mxu0 0.0
    %666 = vmatpush1.xpose.msra.mxu0 %v635
    %667 = vmatprep.subr.mxu0 0.0
    %668 = vmatpush1.xpose.msra.mxu0 %v633
    %669 = vmatprep.subr.mxu0 0.0
    %670 = vmatpush2.xpose.msra.mxu0 0.0
    %671 = vmatprep.subr.mxu0 0.0
    %672 = vmatpush2.xpose.msra.mxu0 0.0
    %673 = vmatprep.subr.mxu0 0.0
    %674 = vmatpush2.xpose.msra.mxu0 0.0
    %675 = vmatprep.subr.mxu0 0.0
    %676 = vmatpush2.xpose.msra.mxu0 0.0
    %677 = vmatprep.subr.mxu0 0.0
    %678 = vmatpush2.xpose.msra.mxu0 0.0
    %679 = vmatprep.subr.mxu0 0.0
    %680 = vmatpush2.xpose.msra.mxu0 0.0
    %681 = vmatprep.subr.mxu0 0.0
    %682 = vmatpush2.xpose.msra.mxu0 0.0
    %683 = vmatprep.subr.mxu0 0.0
    %684 = vmatpush2.xpose.msra.mxu0 0.0
    %685 = vmatprep.subr.mxu0 0.0
    %686 = vmatpush2.xpose.msra.mxu0 0.0
    %687 = vmatprep.subr.mxu0 0.0
    %688 = vmatpush2.xpose.msra.mxu0 0.0
    %689 = vmatprep.subr.mxu0 0.0
    %690 = vmatpush2.xpose.msra.mxu0 0.0
    %691 = vmatprep.subr.mxu0 0.0
    %692 = vmatpush2.xpose.msra.mxu0 0.0
    %693 = vmatprep.subr.mxu0 0.0
    %694 = vmatpush2.xpose.msra.mxu0 0.0
    %695 = vmatprep.subr.mxu0 0.0
    %696 = vmatpush2.xpose.msra.mxu0 0.0
    %697 = vmatprep.subr.mxu0 0.0
    %698 = vmatpush2.xpose.msra.mxu0 0.0
    %699 = vmatprep.subr.mxu0 0.0
    %700 = vmatpush2.xpose.msra.mxu0 0.0
    %701 = vmatprep.mubr.f32.mxu0 0.0
    %702 = vmatmul.mubr.f32.gmra.mxu0 %v629
    %v703 = vpop.f32.mrf.mxu0
    %v704 = vadd.f32 0.0, %v703
    %v705 = vpop.f32.mrf.mxu0
    %706 = vmatprep.mubr.f32.mxu0 0.0
    %707 = vmatmul.mubr.f32.gmra.mxu0 %v631
    %v708 = vpop.f32.mrf.mxu0
    %v709 = vadd.f32 0.0, %v708
    %v710 = vpop.f32.mrf.mxu0
    %711 = vdwg.mxu0
    %v712 = vmul.f32 %v704, 0.35355338
    %v713 = vmul.f32 %v709, 0.35355338
    %v714 = vadd.f32 %v712, %v63
    %v715 = vadd.f32 %v713, %v64
    %v716 = vsel %vm513, %v714, -inf
    %717 = vmax.xlane.f32.xlu0 %v716
    %v718 = vpop.xlane.xlu0 %717
    %v719 = vsel %vm513, %v715, -inf
    %720 = vmax.xlane.f32.xlu0 %v719
    %v721 = vpop.xlane.xlu0 %720
    %v722 = vsub.f32 %v714, %v718
    %v723 = vsub.f32 %v715, %v721
    %v724 = vmul.f32 %v722, 1.442695
    %v725 = vpow.pop %v724
    %v726 = vmul.f32 %v723, 1.442695
    %v727 = vpow.pop %v726
    %v728 = vsel %vm513, %v725, 0.0
    %729 = vadd.xlane.f32.xlu0 %v728
    %v730 = vpop.xlane.xlu0 %729
    %v731 = vsel %vm513, %v727, 0.0
    %732 = vadd.xlane.f32.xlu0 %v731
    %v733 = vpop.xlane.xlu0 %732
    %v734 = vrcp.pop %v730
    %v735 = vmul.f32 %v725, %v734
    %v736 = vrcp.pop %v733
    %v737 = vmul.f32 %v727, %v736
    %739 = vrot.lane.b32.xlu0 %v413, 120
    %v740 = vpop.permute.xlu0 %739
    %741 = vrot.lane.b32.xlu0 %v418, 120
    %v742 = vpop.permute.xlu0 %741
    %v745 = vsel %vm513, %v735, 0
    %v748 = vsel %vm513, %v737, 0
    %v750 = vsel %vm542, %v742, 0
    %752 = vmatprep.subr.mxu0 0.0
    %753 = vmatpush1.msra.mxu0 0.0
    %754 = vmatprep.subr.mxu0 0.0
    %755 = vmatpush1.msra.mxu0 0.0
    %756 = vmatprep.subr.mxu0 0.0
    %757 = vmatpush1.msra.mxu0 0.0
    %758 = vmatprep.subr.mxu0 0.0
    %759 = vmatpush1.msra.mxu0 0.0
    %760 = vmatprep.subr.mxu0 0.0
    %761 = vmatpush1.msra.mxu0 0.0
    %762 = vmatprep.subr.mxu0 0.0
    %763 = vmatpush1.msra.mxu0 0.0
    %764 = vmatprep.subr.mxu0 0.0
    %765 = vmatpush1.msra.mxu0 0.0
    %766 = vmatprep.subr.mxu0 0.0
    %767 = vmatpush1.msra.mxu0 0.0
    %768 = vmatprep.subr.mxu0 0.0
    %769 = vmatpush1.msra.mxu0 0.0
    %770 = vmatprep.subr.mxu0 0.0
    %771 = vmatpush1.msra.mxu0 0.0
    %772 = vmatprep.subr.mxu0 0.0
    %773 = vmatpush1.msra.mxu0 0.0
    %774 = vmatprep.subr.mxu0 0.0
    %775 = vmatpush1.msra.mxu0 0.0
    %776 = vmatprep.subr.mxu0 0.0
    %777 = vmatpush1.msra.mxu0 0.0
    %778 = vmatprep.subr.mxu0 0.0
    %779 = vmatpush1.msra.mxu0 0.0
    %780 = vmatprep.subr.mxu0 0.0
    %781 = vmatpush1.msra.mxu0 %v750
    %782 = vmatprep.subr.mxu0 0.0
    %783 = vmatpush1.msra.mxu0 %v740
    %784 = vmatprep.subr.mxu0 0.0
    %785 = vmatpush2.msra.mxu0 0.0
    %786 = vmatprep.subr.mxu0 0.0
    %787 = vmatpush2.msra.mxu0 0.0
    %788 = vmatprep.subr.mxu0 0.0
    %789 = vmatpush2.msra.mxu0 0.0
    %790 = vmatprep.subr.mxu0 0.0
    %791 = vmatpush2.msra.mxu0 0.0
    %792 = vmatprep.subr.mxu0 0.0
    %793 = vmatpush2.msra.mxu0 0.0
    %794 = vmatprep.subr.mxu0 0.0
    %795 = vmatpush2.msra.mxu0 0.0
    %796 = vmatprep.subr.mxu0 0.0
    %797 = vmatpush2.msra.mxu0 0.0
    %798 = vmatprep.subr.mxu0 0.0
    %799 = vmatpush2.msra.mxu0 0.0
    %800 = vmatprep.subr.mxu0 0.0
    %801 = vmatpush2.msra.mxu0 0.0
    %802 = vmatprep.subr.mxu0 0.0
    %803 = vmatpush2.msra.mxu0 0.0
    %804 = vmatprep.subr.mxu0 0.0
    %805 = vmatpush2.msra.mxu0 0.0
    %806 = vmatprep.subr.mxu0 0.0
    %807 = vmatpush2.msra.mxu0 0.0
    %808 = vmatprep.subr.mxu0 0.0
    %809 = vmatpush2.msra.mxu0 0.0
    %810 = vmatprep.subr.mxu0 0.0
    %811 = vmatpush2.msra.mxu0 0.0
    %812 = vmatprep.subr.mxu0 0.0
    %813 = vmatpush2.msra.mxu0 0.0
    %814 = vmatprep.subr.mxu0 0.0
    %815 = vmatpush2.msra.mxu0 0.0
    %816 = vmatprep.mubr.f32.mxu0 0.0
    %817 = vmatmul.mubr.f32.gmra.mxu0 %v745
    %v818 = vpop.f32.mrf.mxu0
    %v819 = vadd.f32 0.0, %v818
    %v820 = vpop.f32.mrf.mxu0
    %821 = vmatprep.mubr.f32.mxu0 0.0
    %822 = vmatmul.mubr.f32.gmra.mxu0 %v748
    %v823 = vpop.f32.mrf.mxu0
    %v824 = vadd.f32 0.0, %v823
    %v825 = vpop.f32.mrf.mxu0
    %826 = vdwg.mxu0
    %v828 = vsel %vm421, %v819, 0
    %v831 = vsel %vm421, %v824, 0
    %833 = vmatprep.subr.mxu0 0.0
    %834 = vmatpush1.msra.mxu0 0.0
    %835 = vmatprep.subr.mxu0 0.0
    %836 = vmatpush1.msra.mxu0 0.0
    %837 = vmatprep.subr.mxu0 0.0
    %838 = vmatpush1.msra.mxu0 0.0
    %839 = vmatprep.subr.mxu0 0.0
    %840 = vmatpush1.msra.mxu0 0.0
    %841 = vmatprep.subr.mxu0 0.0
    %842 = vmatpush1.msra.mxu0 0.0
    %843 = vmatprep.subr.mxu0 0.0
    %844 = vmatpush1.msra.mxu0 0.0
    %845 = vmatprep.subr.mxu0 0.0
    %846 = vmatpush1.msra.mxu0 0.0
    %847 = vmatprep.subr.mxu0 0.0
    %848 = vmatpush1.msra.mxu0 0.0
    %849 = vmatprep.subr.mxu0 0.0
    %850 = vmatpush1.msra.mxu0 0.0
    %851 = vmatprep.subr.mxu0 0.0
    %852 = vmatpush1.msra.mxu0 0.0
    %853 = vmatprep.subr.mxu0 0.0
    %854 = vmatpush1.msra.mxu0 0.0
    %855 = vmatprep.subr.mxu0 0.0
    %856 = vmatpush1.msra.mxu0 0.0
    %857 = vmatprep.subr.mxu0 0.0
    %858 = vmatpush1.msra.mxu0 0.0
    %859 = vmatprep.subr.mxu0 0.0
    %860 = vmatpush1.msra.mxu0 0.0
    %861 = vmatprep.subr.mxu0 0.0
    %862 = vmatpush1.msra.mxu0 0.0
    %863 = vmatprep.subr.mxu0 0.0
    %864 = vmatpush1.msra.mxu0 %v91
    %865 = vmatprep.subr.mxu0 0.0
    %866 = vmatpush2.msra.mxu0 0.0
    %867 = vmatprep.subr.mxu0 0.0
    %868 = vmatpush2.msra.mxu0 0.0
    %869 = vmatprep.subr.mxu0 0.0
    %870 = vmatpush2.msra.mxu0 0.0
    %871 = vmatprep.subr.mxu0 0.0
    %872 = vmatpush2.msra.mxu0 0.0
    %873 = vmatprep.subr.mxu0 0.0
    %874 = vmatpush2.msra.mxu0 0.0
    %875 = vmatprep.subr.mxu0 0.0
    %876 = vmatpush2.msra.mxu0 0.0
    %877 = vmatprep.subr.mxu0 0.0
    %878 = vmatpush2.msra.mxu0 0.0
    %879 = vmatprep.subr.mxu0 0.0
    %880 = vmatpush2.msra.mxu0 0.0
    %881 = vmatprep.subr.mxu0 0.0
    %882 = vmatpush2.msra.mxu0 0.0
    %883 = vmatprep.subr.mxu0 0.0
    %884 = vmatpush2.msra.mxu0 0.0
    %885 = vmatprep.subr.mxu0 0.0
    %886 = vmatpush2.msra.mxu0 0.0
    %887 = vmatprep.subr.mxu0 0.0
    %888 = vmatpush2.msra.mxu0 0.0
    %889 = vmatprep.subr.mxu0 0.0
    %890 = vmatpush2.msra.mxu0 0.0
    %891 = vmatprep.subr.mxu0 0.0
    %892 = vmatpush2.msra.mxu0 0.0
    %893 = vmatprep.subr.mxu0 0.0
    %894 = vmatpush2.msra.mxu0 0.0
    %895 = vmatprep.subr.mxu0 0.0
    %896 = vmatpush2.msra.mxu0 0.0
    %897 = vmatprep.mubr.f32.mxu0 0.0
    %898 = vmatmul.mubr.f32.gmra.mxu0 %v828
    %v899 = vpop.f32.mrf.mxu0
    %v900 = vadd.f32 0.0, %v899
    %v901 = vpop.f32.mrf.mxu0
    %902 = vmatprep.mubr.f32.mxu0 0.0
    %903 = vmatmul.mubr.f32.gmra.mxu0 %v831
    %v904 = vpop.f32.mrf.mxu0
    %v905 = vadd.f32 0.0, %v904
    %v906 = vpop.f32.mrf.mxu0
    %907 = vdwg.mxu0
    %v909 = vsel %vm421, %v613, 0
    %v912 = vsel %vm421, %v618, 0
    %914 = vmatprep.subr.mxu0 0.0
    %915 = vmatpush1.msra.mxu0 0.0
    %916 = vmatprep.subr.mxu0 0.0
    %917 = vmatpush1.msra.mxu0 0.0
    %918 = vmatprep.subr.mxu0 0.0
    %919 = vmatpush1.msra.mxu0 0.0
    %920 = vmatprep.subr.mxu0 0.0
    %921 = vmatpush1.msra.mxu0 0.0
    %922 = vmatprep.subr.mxu0 0.0
    %923 = vmatpush1.msra.mxu0 0.0
    %924 = vmatprep.subr.mxu0 0.0
    %925 = vmatpush1.msra.mxu0 0.0
    %926 = vmatprep.subr.mxu0 0.0
    %927 = vmatpush1.msra.mxu0 0.0
    %928 = vmatprep.subr.mxu0 0.0
    %929 = vmatpush1.msra.mxu0 0.0
    %930 = vmatprep.subr.mxu0 0.0
    %931 = vmatpush1.msra.mxu0 0.0
    %932 = vmatprep.subr.mxu0 0.0
    %933 = vmatpush1.msra.mxu0 0.0
    %934 = vmatprep.subr.mxu0 0.0
    %935 = vmatpush1.msra.mxu0 0.0
    %936 = vmatprep.subr.mxu0 0.0
    %937 = vmatpush1.msra.mxu0 0.0
    %938 = vmatprep.subr.mxu0 0.0
    %939 = vmatpush1.msra.mxu0 0.0
    %940 = vmatprep.subr.mxu0 0.0
    %941 = vmatpush1.msra.mxu0 0.0
    %942 = vmatprep.subr.mxu0 0.0
    %943 = vmatpush1.msra.mxu0 0.0
    %944 = vmatprep.subr.mxu0 0.0
    %945 = vmatpush1.msra.mxu0 %v90
    %946 = vmatprep.subr.mxu0 0.0
    %947 = vmatpush2.msra.mxu0 0.0
    %948 = vmatprep.subr.mxu0 0.0
    %949 = vmatpush2.msra.mxu0 0.0
    %950 = vmatprep.subr.mxu0 0.0
    %951 = vmatpush2.msra.mxu0 0.0
    %952 = vmatprep.subr.mxu0 0.0
    %953 = vmatpush2.msra.mxu0 0.0
    %954 = vmatprep.subr.mxu0 0.0
    %955 = vmatpush2.msra.mxu0 0.0
    %956 = vmatprep.subr.mxu0 0.0
    %957 = vmatpush2.msra.mxu0 0.0
    %958 = vmatprep.subr.mxu0 0.0
    %959 = vmatpush2.msra.mxu0 0.0
    %960 = vmatprep.subr.mxu0 0.0
    %961 = vmatpush2.msra.mxu0 0.0
    %962 = vmatprep.subr.mxu0 0.0
    %963 = vmatpush2.msra.mxu0 0.0
    %964 = vmatprep.subr.mxu0 0.0
    %965 = vmatpush2.msra.mxu0 0.0
    %966 = vmatprep.subr.mxu0 0.0
    %967 = vmatpush2.msra.mxu0 0.0
    %968 = vmatprep.subr.mxu0 0.0
    %969 = vmatpush2.msra.mxu0 0.0
    %970 = vmatprep.subr.mxu0 0.0
    %971 = vmatpush2.msra.mxu0 0.0
    %972 = vmatprep.subr.mxu0 0.0
    %973 = vmatpush2.msra.mxu0 0.0
    %974 = vmatprep.subr.mxu0 0.0
    %975 = vmatpush2.msra.mxu0 0.0
    %976 = vmatprep.subr.mxu0 0.0
    %977 = vmatpush2.msra.mxu0 0.0
    %978 = vmatprep.mubr.f32.mxu0 0.0
    %979 = vmatmul.mubr.f32.gmra.mxu0 %v909
    %v980 = vpop.f32.mrf.mxu0
    %v981 = vadd.f32 %v900, %v980
    %v982 = vpop.f32.mrf.mxu0
    %983 = vmatprep.mubr.f32.mxu0 0.0
    %984 = vmatmul.mubr.f32.gmra.mxu0 %v912
    %v985 = vpop.f32.mrf.mxu0
    %v986 = vadd.f32 %v905, %v985
    %v987 = vpop.f32.mrf.mxu0
    %988 = vdwg.mxu0
    %989 = vrot.lane.b32.xlu0 %v201, 112
    %v990 = vpop.permute.xlu0 %989
    %991 = vrot.lane.b32.xlu0 %v206, 112
    %v992 = vpop.permute.xlu0 %991
    %993 = vrot.lane.b32.xlu0 %v310, 112
    %v994 = vpop.permute.xlu0 %993
    %995 = vrot.lane.b32.xlu0 %v315, 112
    %v996 = vpop.permute.xlu0 %995
    %v997 = vsel %vm421, %v990, 0
    %v999 = vsel %vm421, %v992, 0
    %v1001 = vsel %vm421, %v994, 0
    %v1003 = vsel %vm421, %v996, 0
    %1005 = vmatprep.subr.mxu0 0.0
    %1006 = vmatpush1.xpose.msra.mxu0 0.0
    %1007 = vmatprep.subr.mxu0 0.0
    %1008 = vmatpush1.xpose.msra.mxu0 0.0
    %1009 = vmatprep.subr.mxu0 0.0
    %1010 = vmatpush1.xpose.msra.mxu0 0.0
    %1011 = vmatprep.subr.mxu0 0.0
    %1012 = vmatpush1.xpose.msra.mxu0 0.0
    %1013 = vmatprep.subr.mxu0 0.0
    %1014 = vmatpush1.xpose.msra.mxu0 0.0
    %1015 = vmatprep.subr.mxu0 0.0
    %1016 = vmatpush1.xpose.msra.mxu0 0.0
    %1017 = vmatprep.subr.mxu0 0.0
    %1018 = vmatpush1.xpose.msra.mxu0 0.0
    %1019 = vmatprep.subr.mxu0 0.0
    %1020 = vmatpush1.xpose.msra.mxu0 0.0
    %1021 = vmatprep.subr.mxu0 0.0
    %1022 = vmatpush1.xpose.msra.mxu0 0.0
    %1023 = vmatprep.subr.mxu0 0.0
    %1024 = vmatpush1.xpose.msra.mxu0 0.0
    %1025 = vmatprep.subr.mxu0 0.0
    %1026 = vmatpush1.xpose.msra.mxu0 0.0
    %1027 = vmatprep.subr.mxu0 0.0
    %1028 = vmatpush1.xpose.msra.mxu0 0.0
    %1029 = vmatprep.subr.mxu0 0.0
    %1030 = vmatpush1.xpose.msra.mxu0 0.0
    %1031 = vmatprep.subr.mxu0 0.0
    %1032 = vmatpush1.xpose.msra.mxu0 0.0
    %1033 = vmatprep.subr.mxu0 0.0
    %1034 = vmatpush1.xpose.msra.mxu0 %v1003
    %1035 = vmatprep.subr.mxu0 0.0
    %1036 = vmatpush1.xpose.msra.mxu0 %v1001
    %1037 = vmatprep.subr.mxu0 0.0
    %1038 = vmatpush2.xpose.msra.mxu0 0.0
    %1039 = vmatprep.subr.mxu0 0.0
    %1040 = vmatpush2.xpose.msra.mxu0 0.0
    %1041 = vmatprep.subr.mxu0 0.0
    %1042 = vmatpush2.xpose.msra.mxu0 0.0
    %1043 = vmatprep.subr.mxu0 0.0
    %1044 = vmatpush2.xpose.msra.mxu0 0.0
    %1045 = vmatprep.subr.mxu0 0.0
    %1046 = vmatpush2.xpose.msra.mxu0 0.0
    %1047 = vmatprep.subr.mxu0 0.0
    %1048 = vmatpush2.xpose.msra.mxu0 0.0
    %1049 = vmatprep.subr.mxu0 0.0
    %1050 = vmatpush2.xpose.msra.mxu0 0.0
    %1051 = vmatprep.subr.mxu0 0.0
    %1052 = vmatpush2.xpose.msra.mxu0 0.0
    %1053 = vmatprep.subr.mxu0 0.0
    %1054 = vmatpush2.xpose.msra.mxu0 0.0
    %1055 = vmatprep.subr.mxu0 0.0
    %1056 = vmatpush2.xpose.msra.mxu0 0.0
    %1057 = vmatprep.subr.mxu0 0.0
    %1058 = vmatpush2.xpose.msra.mxu0 0.0
    %1059 = vmatprep.subr.mxu0 0.0
    %1060 = vmatpush2.xpose.msra.mxu0 0.0
    %1061 = vmatprep.subr.mxu0 0.0
    %1062 = vmatpush2.xpose.msra.mxu0 0.0
    %1063 = vmatprep.subr.mxu0 0.0
    %1064 = vmatpush2.xpose.msra.mxu0 0.0
    %1065 = vmatprep.subr.mxu0 0.0
    %1066 = vmatpush2.xpose.msra.mxu0 0.0
    %1067 = vmatprep.subr.mxu0 0.0
    %1068 = vmatpush2.xpose.msra.mxu0 0.0
    %1069 = vmatprep.mubr.f32.mxu0 0.0
    %1070 = vmatmul.mubr.f32.gmra.mxu0 %v997
    %v1071 = vpop.f32.mrf.mxu0
    %v1072 = vadd.f32 0.0, %v1071
    %v1073 = vpop.f32.mrf.mxu0
    %1074 = vmatprep.mubr.f32.mxu0 0.0
    %1075 = vmatmul.mubr.f32.gmra.mxu0 %v999
    %v1076 = vpop.f32.mrf.mxu0
    %v1077 = vadd.f32 0.0, %v1076
    %v1078 = vpop.f32.mrf.mxu0
    %1079 = vdwg.mxu0
    %v1080 = vmul.f32 %v1072, 0.35355338
    %v1081 = vmul.f32 %v1077, 0.35355338
    %v1082 = vadd.f32 %v1080, %v63
    %v1083 = vadd.f32 %v1081, %v64
    %v1084 = vsel %vm513, %v1082, -inf
    %1085 = vmax.xlane.f32.xlu0 %v1084
    %v1086 = vpop.xlane.xlu0 %1085
    %v1087 = vsel %vm513, %v1083, -inf
    %1088 = vmax.xlane.f32.xlu0 %v1087
    %v1089 = vpop.xlane.xlu0 %1088
    %v1090 = vsub.f32 %v1082, %v1086
    %v1091 = vsub.f32 %v1083, %v1089
    %v1092 = vmul.f32 %v1090, 1.442695
    %v1093 = vpow.pop %v1092
    %v1094 = vmul.f32 %v1091, 1.442695
    %v1095 = vpow.pop %v1094
    %v1096 = vsel %vm513, %v1093, 0.0
    %1097 = vadd.xlane.f32.xlu0 %v1096
    %v1098 = vpop.xlane.xlu0 %1097
    %v1099 = vsel %vm513, %v1095, 0.0
    %1100 = vadd.xlane.f32.xlu0 %v1099
    %v1101 = vpop.xlane.xlu0 %1100
    %v1102 = vrcp.pop %v1098
    %v1103 = vmul.f32 %v1093, %v1102
    %v1104 = vrcp.pop %v1101
    %v1105 = vmul.f32 %v1095, %v1104
    %1106 = vrot.lane.b32.xlu0 %v413, 112
    %v1107 = vpop.permute.xlu0 %1106
    %1108 = vrot.lane.b32.xlu0 %v418, 112
    %v1109 = vpop.permute.xlu0 %1108
    %v1112 = vsel %vm513, %v1103, 0
    %v1115 = vsel %vm513, %v1105, 0
    %v1117 = vsel %vm542, %v1109, 0
    %1119 = vmatprep.subr.mxu0 0.0
    %1120 = vmatpush1.msra.mxu0 0.0
    %1121 = vmatprep.subr.mxu0 0.0
    %1122 = vmatpush1.msra.mxu0 0.0
    %1123 = vmatprep.subr.mxu0 0.0
    %1124 = vmatpush1.msra.mxu0 0.0
    %1125 = vmatprep.subr.mxu0 0.0
    %1126 = vmatpush1.msra.mxu0 0.0
    %1127 = vmatprep.subr.mxu0 0.0
    %1128 = vmatpush1.msra.mxu0 0.0
    %1129 = vmatprep.subr.mxu0 0.0
    %1130 = vmatpush1.msra.mxu0 0.0
    %1131 = vmatprep.subr.mxu0 0.0
    %1132 = vmatpush1.msra.mxu0 0.0
    %1133 = vmatprep.subr.mxu0 0.0
    %1134 = vmatpush1.msra.mxu0 0.0
    %1135 = vmatprep.subr.mxu0 0.0
    %1136 = vmatpush1.msra.mxu0 0.0
    %1137 = vmatprep.subr.mxu0 0.0
    %1138 = vmatpush1.msra.mxu0 0.0
    %1139 = vmatprep.subr.mxu0 0.0
    %1140 = vmatpush1.msra.mxu0 0.0
    %1141 = vmatprep.subr.mxu0 0.0
    %1142 = vmatpush1.msra.mxu0 0.0
    %1143 = vmatprep.subr.mxu0 0.0
    %1144 = vmatpush1.msra.mxu0 0.0
    %1145 = vmatprep.subr.mxu0 0.0
    %1146 = vmatpush1.msra.mxu0 0.0
    %1147 = vmatprep.subr.mxu0 0.0
    %1148 = vmatpush1.msra.mxu0 %v1117
    %1149 = vmatprep.subr.mxu0 0.0
    %1150 = vmatpush1.msra.mxu0 %v1107
    %1151 = vmatprep.subr.mxu0 0.0
    %1152 = vmatpush2.msra.mxu0 0.0
    %1153 = vmatprep.subr.mxu0 0.0
    %1154 = vmatpush2.msra.mxu0 0.0
    %1155 = vmatprep.subr.mxu0 0.0
    %1156 = vmatpush2.msra.mxu0 0.0
    %1157 = vmatprep.subr.mxu0 0.0
    %1158 = vmatpush2.msra.mxu0 0.0
    %1159 = vmatprep.subr.mxu0 0.0
    %1160 = vmatpush2.msra.mxu0 0.0
    %1161 = vmatprep.subr.mxu0 0.0
    %1162 = vmatpush2.msra.mxu0 0.0
    %1163 = vmatprep.subr.mxu0 0.0
    %1164 = vmatpush2.msra.mxu0 0.0
    %1165 = vmatprep.subr.mxu0 0.0
    %1166 = vmatpush2.msra.mxu0 0.0
    %1167 = vmatprep.subr.mxu0 0.0
    %1168 = vmatpush2.msra.mxu0 0.0
    %1169 = vmatprep.subr.mxu0 0.0
    %1170 = vmatpush2.msra.mxu0 0.0
    %1171 = vmatprep.subr.mxu0 0.0
    %1172 = vmatpush2.msra.mxu0 0.0
    %1173 = vmatprep.subr.mxu0 0.0
    %1174 = vmatpush2.msra.mxu0 0.0
    %1175 = vmatprep.subr.mxu0 0.0
    %1176 = vmatpush2.msra.mxu0 0.0
    %1177 = vmatprep.subr.mxu0 0.0
    %1178 = vmatpush2.msra.mxu0 0.0
    %1179 = vmatprep.subr.mxu0 0.0
    %1180 = vmatpush2.msra.mxu0 0.0
    %1181 = vmatprep.subr.mxu0 0.0
    %1182 = vmatpush2.msra.mxu0 0.0
    %1183 = vmatprep.mubr.f32.mxu0 0.0
    %1184 = vmatmul.mubr.f32.gmra.mxu0 %v1112
    %v1185 = vpop.f32.mrf.mxu0
    %v1186 = vadd.f32 0.0, %v1185
    %v1187 = vpop.f32.mrf.mxu0
    %1188 = vmatprep.mubr.f32.mxu0 0.0
    %1189 = vmatmul.mubr.f32.gmra.mxu0 %v1115
    %v1190 = vpop.f32.mrf.mxu0
    %v1191 = vadd.f32 0.0, %v1190
    %v1192 = vpop.f32.mrf.mxu0
    %1193 = vdwg.mxu0
    %v1195 = vsel %vm421, %v1186, 0
    %v1198 = vsel %vm421, %v1191, 0
    %1200 = vmatprep.subr.mxu0 0.0
    %1201 = vmatpush1.msra.mxu0 0.0
    %1202 = vmatprep.subr.mxu0 0.0
    %1203 = vmatpush1.msra.mxu0 0.0
    %1204 = vmatprep.subr.mxu0 0.0
    %1205 = vmatpush1.msra.mxu0 0.0
    %1206 = vmatprep.subr.mxu0 0.0
    %1207 = vmatpush1.msra.mxu0 0.0
    %1208 = vmatprep.subr.mxu0 0.0
    %1209 = vmatpush1.msra.mxu0 0.0
    %1210 = vmatprep.subr.mxu0 0.0
    %1211 = vmatpush1.msra.mxu0 0.0
    %1212 = vmatprep.subr.mxu0 0.0
    %1213 = vmatpush1.msra.mxu0 0.0
    %1214 = vmatprep.subr.mxu0 0.0
    %1215 = vmatpush1.msra.mxu0 0.0
    %1216 = vmatprep.subr.mxu0 0.0
    %1217 = vmatpush1.msra.mxu0 0.0
    %1218 = vmatprep.subr.mxu0 0.0
    %1219 = vmatpush1.msra.mxu0 0.0
    %1220 = vmatprep.subr.mxu0 0.0
    %1221 = vmatpush1.msra.mxu0 0.0
    %1222 = vmatprep.subr.mxu0 0.0
    %1223 = vmatpush1.msra.mxu0 0.0
    %1224 = vmatprep.subr.mxu0 0.0
    %1225 = vmatpush1.msra.mxu0 0.0
    %1226 = vmatprep.subr.mxu0 0.0
    %1227 = vmatpush1.msra.mxu0 0.0
    %1228 = vmatprep.subr.mxu0 0.0
    %1229 = vmatpush1.msra.mxu0 0.0
    %1230 = vmatprep.subr.mxu0 0.0
    %1231 = vmatpush1.msra.mxu0 %v92
    %1232 = vmatprep.subr.mxu0 0.0
    %1233 = vmatpush2.msra.mxu0 0.0
    %1234 = vmatprep.subr.mxu0 0.0
    %1235 = vmatpush2.msra.mxu0 0.0
    %1236 = vmatprep.subr.mxu0 0.0
    %1237 = vmatpush2.msra.mxu0 0.0
    %1238 = vmatprep.subr.mxu0 0.0
    %1239 = vmatpush2.msra.mxu0 0.0
    %1240 = vmatprep.subr.mxu0 0.0
    %1241 = vmatpush2.msra.mxu0 0.0
    %1242 = vmatprep.subr.mxu0 0.0
    %1243 = vmatpush2.msra.mxu0 0.0
    %1244 = vmatprep.subr.mxu0 0.0
    %1245 = vmatpush2.msra.mxu0 0.0
    %1246 = vmatprep.subr.mxu0 0.0
    %1247 = vmatpush2.msra.mxu0 0.0
    %1248 = vmatprep.subr.mxu0 0.0
    %1249 = vmatpush2.msra.mxu0 0.0
    %1250 = vmatprep.subr.mxu0 0.0
    %1251 = vmatpush2.msra.mxu0 0.0
    %1252 = vmatprep.subr.mxu0 0.0
    %1253 = vmatpush2.msra.mxu0 0.0
    %1254 = vmatprep.subr.mxu0 0.0
    %1255 = vmatpush2.msra.mxu0 0.0
    %1256 = vmatprep.subr.mxu0 0.0
    %1257 = vmatpush2.msra.mxu0 0.0
    %1258 = vmatprep.subr.mxu0 0.0
    %1259 = vmatpush2.msra.mxu0 0.0
    %1260 = vmatprep.subr.mxu0 0.0
    %1261 = vmatpush2.msra.mxu0 0.0
    %1262 = vmatprep.subr.mxu0 0.0
    %1263 = vmatpush2.msra.mxu0 0.0
    %1264 = vmatprep.mubr.f32.mxu0 0.0
    %1265 = vmatmul.mubr.f32.gmra.mxu0 %v1195
    %v1266 = vpop.f32.mrf.mxu0
    %v1267 = vadd.f32 0.0, %v1266
    %v1268 = vpop.f32.mrf.mxu0
    %1269 = vmatprep.mubr.f32.mxu0 0.0
    %1270 = vmatmul.mubr.f32.gmra.mxu0 %v1198
    %v1271 = vpop.f32.mrf.mxu0
    %v1272 = vadd.f32 0.0, %v1271
    %v1273 = vpop.f32.mrf.mxu0
    %1274 = vdwg.mxu0
    %v1275 = vadd.f32 %v981, %v1267
    %v1276 = vadd.f32 %v986, %v1272
    %1277 = vrot.lane.b32.xlu0 %v201, 104
    %v1278 = vpop.permute.xlu0 %1277
    %1279 = vrot.lane.b32.xlu0 %v206, 104
    %v1280 = vpop.permute.xlu0 %1279
    %1281 = vrot.lane.b32.xlu0 %v310, 104
    %v1282 = vpop.permute.xlu0 %1281
    %1283 = vrot.lane.b32.xlu0 %v315, 104
    %v1284 = vpop.permute.xlu0 %1283
    %v1285 = vsel %vm421, %v1278, 0
    %v1287 = vsel %vm421, %v1280, 0
    %v1289 = vsel %vm421, %v1282, 0
    %v1291 = vsel %vm421, %v1284, 0
    %1293 = vmatprep.subr.mxu0 0.0
    %1294 = vmatpush1.xpose.msra.mxu0 0.0
    %1295 = vmatprep.subr.mxu0 0.0
    %1296 = vmatpush1.xpose.msra.mxu0 0.0
    %1297 = vmatprep.subr.mxu0 0.0
    %1298 = vmatpush1.xpose.msra.mxu0 0.0
    %1299 = vmatprep.subr.mxu0 0.0
    %1300 = vmatpush1.xpose.msra.mxu0 0.0
    %1301 = vmatprep.subr.mxu0 0.0
    %1302 = vmatpush1.xpose.msra.mxu0 0.0
    %1303 = vmatprep.subr.mxu0 0.0
    %1304 = vmatpush1.xpose.msra.mxu0 0.0
    %1305 = vmatprep.subr.mxu0 0.0
    %1306 = vmatpush1.xpose.msra.mxu0 0.0
    %1307 = vmatprep.subr.mxu0 0.0
    %1308 = vmatpush1.xpose.msra.mxu0 0.0
    %1309 = vmatprep.subr.mxu0 0.0
    %1310 = vmatpush1.xpose.msra.mxu0 0.0
    %1311 = vmatprep.subr.mxu0 0.0
    %1312 = vmatpush1.xpose.msra.mxu0 0.0
    %1313 = vmatprep.subr.mxu0 0.0
    %1314 = vmatpush1.xpose.msra.mxu0 0.0
    %1315 = vmatprep.subr.mxu0 0.0
    %1316 = vmatpush1.xpose.msra.mxu0 0.0
    %1317 = vmatprep.subr.mxu0 0.0
    %1318 = vmatpush1.xpose.msra.mxu0 0.0
    %1319 = vmatprep.subr.mxu0 0.0
    %1320 = vmatpush1.xpose.msra.mxu0 0.0
    %1321 = vmatprep.subr.mxu0 0.0
    %1322 = vmatpush1.xpose.msra.mxu0 %v1291
    %1323 = vmatprep.subr.mxu0 0.0
    %1324 = vmatpush1.xpose.msra.mxu0 %v1289
    %1325 = vmatprep.subr.mxu0 0.0
    %1326 = vmatpush2.xpose.msra.mxu0 0.0
    %1327 = vmatprep.subr.mxu0 0.0
    %1328 = vmatpush2.xpose.msra.mxu0 0.0
    %1329 = vmatprep.subr.mxu0 0.0
    %1330 = vmatpush2.xpose.msra.mxu0 0.0
    %1331 = vmatprep.subr.mxu0 0.0
    %1332 = vmatpush2.xpose.msra.mxu0 0.0
    %1333 = vmatprep.subr.mxu0 0.0
    %1334 = vmatpush2.xpose.msra.mxu0 0.0
    %1335 = vmatprep.subr.mxu0 0.0
    %1336 = vmatpush2.xpose.msra.mxu0 0.0
    %1337 = vmatprep.subr.mxu0 0.0
    %1338 = vmatpush2.xpose.msra.mxu0 0.0
    %1339 = vmatprep.subr.mxu0 0.0
    %1340 = vmatpush2.xpose.msra.mxu0 0.0
    %1341 = vmatprep.subr.mxu0 0.0
    %1342 = vmatpush2.xpose.msra.mxu0 0.0
    %1343 = vmatprep.subr.mxu0 0.0
    %1344 = vmatpush2.xpose.msra.mxu0 0.0
    %1345 = vmatprep.subr.mxu0 0.0
    %1346 = vmatpush2.xpose.msra.mxu0 0.0
    %1347 = vmatprep.subr.mxu0 0.0
    %1348 = vmatpush2.xpose.msra.mxu0 0.0
    %1349 = vmatprep.subr.mxu0 0.0
    %1350 = vmatpush2.xpose.msra.mxu0 0.0
    %1351 = vmatprep.subr.mxu0 0.0
    %1352 = vmatpush2.xpose.msra.mxu0 0.0
    %1353 = vmatprep.subr.mxu0 0.0
    %1354 = vmatpush2.xpose.msra.mxu0 0.0
    %1355 = vmatprep.subr.mxu0 0.0
    %1356 = vmatpush2.xpose.msra.mxu0 0.0
    %1357 = vmatprep.mubr.f32.mxu0 0.0
    %1358 = vmatmul.mubr.f32.gmra.mxu0 %v1285
    %v1359 = vpop.f32.mrf.mxu0
    %v1360 = vadd.f32 0.0, %v1359
    %v1361 = vpop.f32.mrf.mxu0
    %1362 = vmatprep.mubr.f32.mxu0 0.0
    %1363 = vmatmul.mubr.f32.gmra.mxu0 %v1287
    %v1364 = vpop.f32.mrf.mxu0
    %v1365 = vadd.f32 0.0, %v1364
    %v1366 = vpop.f32.mrf.mxu0
    %1367 = vdwg.mxu0
    %v1368 = vmul.f32 %v1360, 0.35355338
    %v1369 = vmul.f32 %v1365, 0.35355338
    %v1370 = vadd.f32 %v1368, %v63
    %v1371 = vadd.f32 %v1369, %v64
    %v1372 = vsel %vm513, %v1370, -inf
    %1373 = vmax.xlane.f32.xlu0 %v1372
    %v1374 = vpop.xlane.xlu0 %1373
    %v1375 = vsel %vm513, %v1371, -inf
    %1376 = vmax.xlane.f32.xlu0 %v1375
    %v1377 = vpop.xlane.xlu0 %1376
    %v1378 = vsub.f32 %v1370, %v1374
    %v1379 = vsub.f32 %v1371, %v1377
    %v1380 = vmul.f32 %v1378, 1.442695
    %v1381 = vpow.pop %v1380
    %v1382 = vmul.f32 %v1379, 1.442695
    %v1383 = vpow.pop %v1382
    %v1384 = vsel %vm513, %v1381, 0.0
    %1385 = vadd.xlane.f32.xlu0 %v1384
    %v1386 = vpop.xlane.xlu0 %1385
    %v1387 = vsel %vm513, %v1383, 0.0
    %1388 = vadd.xlane.f32.xlu0 %v1387
    %v1389 = vpop.xlane.xlu0 %1388
    %v1390 = vrcp.pop %v1386
    %v1391 = vmul.f32 %v1381, %v1390
    %v1392 = vrcp.pop %v1389
    %v1393 = vmul.f32 %v1383, %v1392
    %1394 = vrot.lane.b32.xlu0 %v413, 104
    %v1395 = vpop.permute.xlu0 %1394
    %1396 = vrot.lane.b32.xlu0 %v418, 104
    %v1397 = vpop.permute.xlu0 %1396
    %v1400 = vsel %vm513, %v1391, 0
    %v1403 = vsel %vm513, %v1393, 0
    %v1405 = vsel %vm542, %v1397, 0
    %1407 = vmatprep.subr.mxu0 0.0
    %1408 = vmatpush1.msra.mxu0 0.0
    %1409 = vmatprep.subr.mxu0 0.0
    %1410 = vmatpush1.msra.mxu0 0.0
    %1411 = vmatprep.subr.mxu0 0.0
    %1412 = vmatpush1.msra.mxu0 0.0
    %1413 = vmatprep.subr.mxu0 0.0
    %1414 = vmatpush1.msra.mxu0 0.0
    %1415 = vmatprep.subr.mxu0 0.0
    %1416 = vmatpush1.msra.mxu0 0.0
    %1417 = vmatprep.subr.mxu0 0.0
    %1418 = vmatpush1.msra.mxu0 0.0
    %1419 = vmatprep.subr.mxu0 0.0
    %1420 = vmatpush1.msra.mxu0 0.0
    %1421 = vmatprep.subr.mxu0 0.0
    %1422 = vmatpush1.msra.mxu0 0.0
    %1423 = vmatprep.subr.mxu0 0.0
    %1424 = vmatpush1.msra.mxu0 0.0
    %1425 = vmatprep.subr.mxu0 0.0
    %1426 = vmatpush1.msra.mxu0 0.0
    %1427 = vmatprep.subr.mxu0 0.0
    %1428 = vmatpush1.msra.mxu0 0.0
    %1429 = vmatprep.subr.mxu0 0.0
    %1430 = vmatpush1.msra.mxu0 0.0
    %1431 = vmatprep.subr.mxu0 0.0
    %1432 = vmatpush1.msra.mxu0 0.0
    %1433 = vmatprep.subr.mxu0 0.0
    %1434 = vmatpush1.msra.mxu0 0.0
    %1435 = vmatprep.subr.mxu0 0.0
    %1436 = vmatpush1.msra.mxu0 %v1405
    %1437 = vmatprep.subr.mxu0 0.0
    %1438 = vmatpush1.msra.mxu0 %v1395
    %1439 = vmatprep.subr.mxu0 0.0
    %1440 = vmatpush2.msra.mxu0 0.0
    %1441 = vmatprep.subr.mxu0 0.0
    %1442 = vmatpush2.msra.mxu0 0.0
    %1443 = vmatprep.subr.mxu0 0.0
    %1444 = vmatpush2.msra.mxu0 0.0
    %1445 = vmatprep.subr.mxu0 0.0
    %1446 = vmatpush2.msra.mxu0 0.0
    %1447 = vmatprep.subr.mxu0 0.0
    %1448 = vmatpush2.msra.mxu0 0.0
    %1449 = vmatprep.subr.mxu0 0.0
    %1450 = vmatpush2.msra.mxu0 0.0
    %1451 = vmatprep.subr.mxu0 0.0
    %1452 = vmatpush2.msra.mxu0 0.0
    %1453 = vmatprep.subr.mxu0 0.0
    %1454 = vmatpush2.msra.mxu0 0.0
    %1455 = vmatprep.subr.mxu0 0.0
    %1456 = vmatpush2.msra.mxu0 0.0
    %1457 = vmatprep.subr.mxu0 0.0
    %1458 = vmatpush2.msra.mxu0 0.0
    %1459 = vmatprep.subr.mxu0 0.0
    %1460 = vmatpush2.msra.mxu0 0.0
    %1461 = vmatprep.subr.mxu0 0.0
    %1462 = vmatpush2.msra.mxu0 0.0
    %1463 = vmatprep.subr.mxu0 0.0
    %1464 = vmatpush2.msra.mxu0 0.0
    %1465 = vmatprep.subr.mxu0 0.0
    %1466 = vmatpush2.msra.mxu0 0.0
    %1467 = vmatprep.subr.mxu0 0.0
    %1468 = vmatpush2.msra.mxu0 0.0
    %1469 = vmatprep.subr.mxu0 0.0
    %1470 = vmatpush2.msra.mxu0 0.0
    %1471 = vmatprep.mubr.f32.mxu0 0.0
    %1472 = vmatmul.mubr.f32.gmra.mxu0 %v1400
    %v1473 = vpop.f32.mrf.mxu0
    %v1474 = vadd.f32 0.0, %v1473
    %v1475 = vpop.f32.mrf.mxu0
    %1476 = vmatprep.mubr.f32.mxu0 0.0
    %1477 = vmatmul.mubr.f32.gmra.mxu0 %v1403
    %v1478 = vpop.f32.mrf.mxu0
    %v1479 = vadd.f32 0.0, %v1478
    %v1480 = vpop.f32.mrf.mxu0
    %1481 = vdwg.mxu0
    %v1483 = vsel %vm421, %v1474, 0
    %v1486 = vsel %vm421, %v1479, 0
    %1488 = vmatprep.subr.mxu0 0.0
    %1489 = vmatpush1.msra.mxu0 0.0
    %1490 = vmatprep.subr.mxu0 0.0
    %1491 = vmatpush1.msra.mxu0 0.0
    %1492 = vmatprep.subr.mxu0 0.0
    %1493 = vmatpush1.msra.mxu0 0.0
    %1494 = vmatprep.subr.mxu0 0.0
    %1495 = vmatpush1.msra.mxu0 0.0
    %1496 = vmatprep.subr.mxu0 0.0
    %1497 = vmatpush1.msra.mxu0 0.0
    %1498 = vmatprep.subr.mxu0 0.0
    %1499 = vmatpush1.msra.mxu0 0.0
    %1500 = vmatprep.subr.mxu0 0.0
    %1501 = vmatpush1.msra.mxu0 0.0
    %1502 = vmatprep.subr.mxu0 0.0
    %1503 = vmatpush1.msra.mxu0 0.0
    %1504 = vmatprep.subr.mxu0 0.0
    %1505 = vmatpush1.msra.mxu0 0.0
    %1506 = vmatprep.subr.mxu0 0.0
    %1507 = vmatpush1.msra.mxu0 0.0
    %1508 = vmatprep.subr.mxu0 0.0
    %1509 = vmatpush1.msra.mxu0 0.0
    %1510 = vmatprep.subr.mxu0 0.0
    %1511 = vmatpush1.msra.mxu0 0.0
    %1512 = vmatprep.subr.mxu0 0.0
    %1513 = vmatpush1.msra.mxu0 0.0
    %1514 = vmatprep.subr.mxu0 0.0
    %1515 = vmatpush1.msra.mxu0 0.0
    %1516 = vmatprep.subr.mxu0 0.0
    %1517 = vmatpush1.msra.mxu0 0.0
    %1518 = vmatprep.subr.mxu0 0.0
    %1519 = vmatpush1.msra.mxu0 %v93
    %1520 = vmatprep.subr.mxu0 0.0
    %1521 = vmatpush2.msra.mxu0 0.0
    %1522 = vmatprep.subr.mxu0 0.0
    %1523 = vmatpush2.msra.mxu0 0.0
    %1524 = vmatprep.subr.mxu0 0.0
    %1525 = vmatpush2.msra.mxu0 0.0
    %1526 = vmatprep.subr.mxu0 0.0
    %1527 = vmatpush2.msra.mxu0 0.0
    %1528 = vmatprep.subr.mxu0 0.0
    %1529 = vmatpush2.msra.mxu0 0.0
    %1530 = vmatprep.subr.mxu0 0.0
    %1531 = vmatpush2.msra.mxu0 0.0
    %1532 = vmatprep.subr.mxu0 0.0
    %1533 = vmatpush2.msra.mxu0 0.0
    %1534 = vmatprep.subr.mxu0 0.0
    %1535 = vmatpush2.msra.mxu0 0.0
    %1536 = vmatprep.subr.mxu0 0.0
    %1537 = vmatpush2.msra.mxu0 0.0
    %1538 = vmatprep.subr.mxu0 0.0
    %1539 = vmatpush2.msra.mxu0 0.0
    %1540 = vmatprep.subr.mxu0 0.0
    %1541 = vmatpush2.msra.mxu0 0.0
    %1542 = vmatprep.subr.mxu0 0.0
    %1543 = vmatpush2.msra.mxu0 0.0
    %1544 = vmatprep.subr.mxu0 0.0
    %1545 = vmatpush2.msra.mxu0 0.0
    %1546 = vmatprep.subr.mxu0 0.0
    %1547 = vmatpush2.msra.mxu0 0.0
    %1548 = vmatprep.subr.mxu0 0.0
    %1549 = vmatpush2.msra.mxu0 0.0
    %1550 = vmatprep.subr.mxu0 0.0
    %1551 = vmatpush2.msra.mxu0 0.0
    %1552 = vmatprep.mubr.f32.mxu0 0.0
    %1553 = vmatmul.mubr.f32.gmra.mxu0 %v1483
    %v1554 = vpop.f32.mrf.mxu0
    %v1555 = vadd.f32 0.0, %v1554
    %v1556 = vpop.f32.mrf.mxu0
    %1557 = vmatprep.mubr.f32.mxu0 0.0
    %1558 = vmatmul.mubr.f32.gmra.mxu0 %v1486
    %v1559 = vpop.f32.mrf.mxu0
    %v1560 = vadd.f32 0.0, %v1559
    %v1561 = vpop.f32.mrf.mxu0
    %1562 = vdwg.mxu0
    %v1563 = vadd.f32 %v1275, %v1555
    %v1564 = vadd.f32 %v1276, %v1560
    %1565 = vrot.lane.b32.xlu0 %v201, 96
    %v1566 = vpop.permute.xlu0 %1565
    %1567 = vrot.lane.b32.xlu0 %v206, 96
    %v1568 = vpop.permute.xlu0 %1567
    %1569 = vrot.lane.b32.xlu0 %v310, 96
    %v1570 = vpop.permute.xlu0 %1569
    %1571 = vrot.lane.b32.xlu0 %v315, 96
    %v1572 = vpop.permute.xlu0 %1571
    %v1573 = vsel %vm421, %v1566, 0
    %v1575 = vsel %vm421, %v1568, 0
    %v1577 = vsel %vm421, %v1570, 0
    %v1579 = vsel %vm421, %v1572, 0
    %1581 = vmatprep.subr.mxu0 0.0
    %1582 = vmatpush1.xpose.msra.mxu0 0.0
    %1583 = vmatprep.subr.mxu0 0.0
    %1584 = vmatpush1.xpose.msra.mxu0 0.0
    %1585 = vmatprep.subr.mxu0 0.0
    %1586 = vmatpush1.xpose.msra.mxu0 0.0
    %1587 = vmatprep.subr.mxu0 0.0
    %1588 = vmatpush1.xpose.msra.mxu0 0.0
    %1589 = vmatprep.subr.mxu0 0.0
    %1590 = vmatpush1.xpose.msra.mxu0 0.0
    %1591 = vmatprep.subr.mxu0 0.0
    %1592 = vmatpush1.xpose.msra.mxu0 0.0
    %1593 = vmatprep.subr.mxu0 0.0
    %1594 = vmatpush1.xpose.msra.mxu0 0.0
    %1595 = vmatprep.subr.mxu0 0.0
    %1596 = vmatpush1.xpose.msra.mxu0 0.0
    %1597 = vmatprep.subr.mxu0 0.0
    %1598 = vmatpush1.xpose.msra.mxu0 0.0
    %1599 = vmatprep.subr.mxu0 0.0
    %1600 = vmatpush1.xpose.msra.mxu0 0.0
    %1601 = vmatprep.subr.mxu0 0.0
    %1602 = vmatpush1.xpose.msra.mxu0 0.0
    %1603 = vmatprep.subr.mxu0 0.0
    %1604 = vmatpush1.xpose.msra.mxu0 0.0
    %1605 = vmatprep.subr.mxu0 0.0
    %1606 = vmatpush1.xpose.msra.mxu0 0.0
    %1607 = vmatprep.subr.mxu0 0.0
    %1608 = vmatpush1.xpose.msra.mxu0 0.0
    %1609 = vmatprep.subr.mxu0 0.0
    %1610 = vmatpush1.xpose.msra.mxu0 %v1579
    %1611 = vmatprep.subr.mxu0 0.0
    %1612 = vmatpush1.xpose.msra.mxu0 %v1577
    %1613 = vmatprep.subr.mxu0 0.0
    %1614 = vmatpush2.xpose.msra.mxu0 0.0
    %1615 = vmatprep.subr.mxu0 0.0
    %1616 = vmatpush2.xpose.msra.mxu0 0.0
    %1617 = vmatprep.subr.mxu0 0.0
    %1618 = vmatpush2.xpose.msra.mxu0 0.0
    %1619 = vmatprep.subr.mxu0 0.0
    %1620 = vmatpush2.xpose.msra.mxu0 0.0
    %1621 = vmatprep.subr.mxu0 0.0
    %1622 = vmatpush2.xpose.msra.mxu0 0.0
    %1623 = vmatprep.subr.mxu0 0.0
    %1624 = vmatpush2.xpose.msra.mxu0 0.0
    %1625 = vmatprep.subr.mxu0 0.0
    %1626 = vmatpush2.xpose.msra.mxu0 0.0
    %1627 = vmatprep.subr.mxu0 0.0
    %1628 = vmatpush2.xpose.msra.mxu0 0.0
    %1629 = vmatprep.subr.mxu0 0.0
    %1630 = vmatpush2.xpose.msra.mxu0 0.0
    %1631 = vmatprep.subr.mxu0 0.0
    %1632 = vmatpush2.xpose.msra.mxu0 0.0
    %1633 = vmatprep.subr.mxu0 0.0
    %1634 = vmatpush2.xpose.msra.mxu0 0.0
    %1635 = vmatprep.subr.mxu0 0.0
    %1636 = vmatpush2.xpose.msra.mxu0 0.0
    %1637 = vmatprep.subr.mxu0 0.0
    %1638 = vmatpush2.xpose.msra.mxu0 0.0
    %1639 = vmatprep.subr.mxu0 0.0
    %1640 = vmatpush2.xpose.msra.mxu0 0.0
    %1641 = vmatprep.subr.mxu0 0.0
    %1642 = vmatpush2.xpose.msra.mxu0 0.0
    %1643 = vmatprep.subr.mxu0 0.0
    %1644 = vmatpush2.xpose.msra.mxu0 0.0
    %1645 = vmatprep.mubr.f32.mxu0 0.0
    %1646 = vmatmul.mubr.f32.gmra.mxu0 %v1573
    %v1647 = vpop.f32.mrf.mxu0
    %v1648 = vadd.f32 0.0, %v1647
    %v1649 = vpop.f32.mrf.mxu0
    %1650 = vmatprep.mubr.f32.mxu0 0.0
    %1651 = vmatmul.mubr.f32.gmra.mxu0 %v1575
    %v1652 = vpop.f32.mrf.mxu0
    %v1653 = vadd.f32 0.0, %v1652
    %v1654 = vpop.f32.mrf.mxu0
    %1655 = vdwg.mxu0
    %v1656 = vmul.f32 %v1648, 0.35355338
    %v1657 = vmul.f32 %v1653, 0.35355338
    %v1658 = vadd.f32 %v1656, %v63
    %v1659 = vadd.f32 %v1657, %v64
    %v1660 = vsel %vm513, %v1658, -inf
    %1661 = vmax.xlane.f32.xlu0 %v1660
    %v1662 = vpop.xlane.xlu0 %1661
    %v1663 = vsel %vm513, %v1659, -inf
    %1664 = vmax.xlane.f32.xlu0 %v1663
    %v1665 = vpop.xlane.xlu0 %1664
    %v1666 = vsub.f32 %v1658, %v1662
    %v1667 = vsub.f32 %v1659, %v1665
    %v1668 = vmul.f32 %v1666, 1.442695
    %v1669 = vpow.pop %v1668
    %v1670 = vmul.f32 %v1667, 1.442695
    %v1671 = vpow.pop %v1670
    %v1672 = vsel %vm513, %v1669, 0.0
    %1673 = vadd.xlane.f32.xlu0 %v1672
    %v1674 = vpop.xlane.xlu0 %1673
    %v1675 = vsel %vm513, %v1671, 0.0
    %1676 = vadd.xlane.f32.xlu0 %v1675
    %v1677 = vpop.xlane.xlu0 %1676
    %v1678 = vrcp.pop %v1674
    %v1679 = vmul.f32 %v1669, %v1678
    %v1680 = vrcp.pop %v1677
    %v1681 = vmul.f32 %v1671, %v1680
    %1682 = vrot.lane.b32.xlu0 %v413, 96
    %v1683 = vpop.permute.xlu0 %1682
    %1684 = vrot.lane.b32.xlu0 %v418, 96
    %v1685 = vpop.permute.xlu0 %1684
    %v1688 = vsel %vm513, %v1679, 0
    %v1691 = vsel %vm513, %v1681, 0
    %v1693 = vsel %vm542, %v1685, 0
    %1695 = vmatprep.subr.mxu0 0.0
    %1696 = vmatpush1.msra.mxu0 0.0
    %1697 = vmatprep.subr.mxu0 0.0
    %1698 = vmatpush1.msra.mxu0 0.0
    %1699 = vmatprep.subr.mxu0 0.0
    %1700 = vmatpush1.msra.mxu0 0.0
    %1701 = vmatprep.subr.mxu0 0.0
    %1702 = vmatpush1.msra.mxu0 0.0
    %1703 = vmatprep.subr.mxu0 0.0
    %1704 = vmatpush1.msra.mxu0 0.0
    %1705 = vmatprep.subr.mxu0 0.0
    %1706 = vmatpush1.msra.mxu0 0.0
    %1707 = vmatprep.subr.mxu0 0.0
    %1708 = vmatpush1.msra.mxu0 0.0
    %1709 = vmatprep.subr.mxu0 0.0
    %1710 = vmatpush1.msra.mxu0 0.0
    %1711 = vmatprep.subr.mxu0 0.0
    %1712 = vmatpush1.msra.mxu0 0.0
    %1713 = vmatprep.subr.mxu0 0.0
    %1714 = vmatpush1.msra.mxu0 0.0
    %1715 = vmatprep.subr.mxu0 0.0
    %1716 = vmatpush1.msra.mxu0 0.0
    %1717 = vmatprep.subr.mxu0 0.0
    %1718 = vmatpush1.msra.mxu0 0.0
    %1719 = vmatprep.subr.mxu0 0.0
    %1720 = vmatpush1.msra.mxu0 0.0
    %1721 = vmatprep.subr.mxu0 0.0
    %1722 = vmatpush1.msra.mxu0 0.0
    %1723 = vmatprep.subr.mxu0 0.0
    %1724 = vmatpush1.msra.mxu0 %v1693
    %1725 = vmatprep.subr.mxu0 0.0
    %1726 = vmatpush1.msra.mxu0 %v1683
    %1727 = vmatprep.subr.mxu0 0.0
    %1728 = vmatpush2.msra.mxu0 0.0
    %1729 = vmatprep.subr.mxu0 0.0
    %1730 = vmatpush2.msra.mxu0 0.0
    %1731 = vmatprep.subr.mxu0 0.0
    %1732 = vmatpush2.msra.mxu0 0.0
    %1733 = vmatprep.subr.mxu0 0.0
    %1734 = vmatpush2.msra.mxu0 0.0
    %1735 = vmatprep.subr.mxu0 0.0
    %1736 = vmatpush2.msra.mxu0 0.0
    %1737 = vmatprep.subr.mxu0 0.0
    %1738 = vmatpush2.msra.mxu0 0.0
    %1739 = vmatprep.subr.mxu0 0.0
    %1740 = vmatpush2.msra.mxu0 0.0
    %1741 = vmatprep.subr.mxu0 0.0
    %1742 = vmatpush2.msra.mxu0 0.0
    %1743 = vmatprep.subr.mxu0 0.0
    %1744 = vmatpush2.msra.mxu0 0.0
    %1745 = vmatprep.subr.mxu0 0.0
    %1746 = vmatpush2.msra.mxu0 0.0
    %1747 = vmatprep.subr.mxu0 0.0
    %1748 = vmatpush2.msra.mxu0 0.0
    %1749 = vmatprep.subr.mxu0 0.0
    %1750 = vmatpush2.msra.mxu0 0.0
    %1751 = vmatprep.subr.mxu0 0.0
    %1752 = vmatpush2.msra.mxu0 0.0
    %1753 = vmatprep.subr.mxu0 0.0
    %1754 = vmatpush2.msra.mxu0 0.0
    %1755 = vmatprep.subr.mxu0 0.0
    %1756 = vmatpush2.msra.mxu0 0.0
    %1757 = vmatprep.subr.mxu0 0.0
    %1758 = vmatpush2.msra.mxu0 0.0
    %1759 = vmatprep.mubr.f32.mxu0 0.0
    %1760 = vmatmul.mubr.f32.gmra.mxu0 %v1688
    %v1761 = vpop.f32.mrf.mxu0
    %v1762 = vadd.f32 0.0, %v1761
    %v1763 = vpop.f32.mrf.mxu0
    %1764 = vmatprep.mubr.f32.mxu0 0.0
    %1765 = vmatmul.mubr.f32.gmra.mxu0 %v1691
    %v1766 = vpop.f32.mrf.mxu0
    %v1767 = vadd.f32 0.0, %v1766
    %v1768 = vpop.f32.mrf.mxu0
    %1769 = vdwg.mxu0
    %v1771 = vsel %vm421, %v1762, 0
    %v1774 = vsel %vm421, %v1767, 0
    %1776 = vmatprep.subr.mxu0 0.0
    %1777 = vmatpush1.msra.mxu0 0.0
    %1778 = vmatprep.subr.mxu0 0.0
    %1779 = vmatpush1.msra.mxu0 0.0
    %1780 = vmatprep.subr.mxu0 0.0
    %1781 = vmatpush1.msra.mxu0 0.0
    %1782 = vmatprep.subr.mxu0 0.0
    %1783 = vmatpush1.msra.mxu0 0.0
    %1784 = vmatprep.subr.mxu0 0.0
    %1785 = vmatpush1.msra.mxu0 0.0
    %1786 = vmatprep.subr.mxu0 0.0
    %1787 = vmatpush1.msra.mxu0 0.0
    %1788 = vmatprep.subr.mxu0 0.0
    %1789 = vmatpush1.msra.mxu0 0.0
    %1790 = vmatprep.subr.mxu0 0.0
    %1791 = vmatpush1.msra.mxu0 0.0
    %1792 = vmatprep.subr.mxu0 0.0
    %1793 = vmatpush1.msra.mxu0 0.0
    %1794 = vmatprep.subr.mxu0 0.0
    %1795 = vmatpush1.msra.mxu0 0.0
    %1796 = vmatprep.subr.mxu0 0.0
    %1797 = vmatpush1.msra.mxu0 0.0
    %1798 = vmatprep.subr.mxu0 0.0
    %1799 = vmatpush1.msra.mxu0 0.0
    %1800 = vmatprep.subr.mxu0 0.0
    %1801 = vmatpush1.msra.mxu0 0.0
    %1802 = vmatprep.subr.mxu0 0.0
    %1803 = vmatpush1.msra.mxu0 0.0
    %1804 = vmatprep.subr.mxu0 0.0
    %1805 = vmatpush1.msra.mxu0 0.0
    %1806 = vmatprep.subr.mxu0 0.0
    %1807 = vmatpush1.msra.mxu0 %v94
    %1808 = vmatprep.subr.mxu0 0.0
    %1809 = vmatpush2.msra.mxu0 0.0
    %1810 = vmatprep.subr.mxu0 0.0
    %1811 = vmatpush2.msra.mxu0 0.0
    %1812 = vmatprep.subr.mxu0 0.0
    %1813 = vmatpush2.msra.mxu0 0.0
    %1814 = vmatprep.subr.mxu0 0.0
    %1815 = vmatpush2.msra.mxu0 0.0
    %1816 = vmatprep.subr.mxu0 0.0
    %1817 = vmatpush2.msra.mxu0 0.0
    %1818 = vmatprep.subr.mxu0 0.0
    %1819 = vmatpush2.msra.mxu0 0.0
    %1820 = vmatprep.subr.mxu0 0.0
    %1821 = vmatpush2.msra.mxu0 0.0
    %1822 = vmatprep.subr.mxu0 0.0
    %1823 = vmatpush2.msra.mxu0 0.0
    %1824 = vmatprep.subr.mxu0 0.0
    %1825 = vmatpush2.msra.mxu0 0.0
    %1826 = vmatprep.subr.mxu0 0.0
    %1827 = vmatpush2.msra.mxu0 0.0
    %1828 = vmatprep.subr.mxu0 0.0
    %1829 = vmatpush2.msra.mxu0 0.0
    %1830 = vmatprep.subr.mxu0 0.0
    %1831 = vmatpush2.msra.mxu0 0.0
    %1832 = vmatprep.subr.mxu0 0.0
    %1833 = vmatpush2.msra.mxu0 0.0
    %1834 = vmatprep.subr.mxu0 0.0
    %1835 = vmatpush2.msra.mxu0 0.0
    %1836 = vmatprep.subr.mxu0 0.0
    %1837 = vmatpush2.msra.mxu0 0.0
    %1838 = vmatprep.subr.mxu0 0.0
    %1839 = vmatpush2.msra.mxu0 0.0
    %1840 = vmatprep.mubr.f32.mxu0 0.0
    %1841 = vmatmul.mubr.f32.gmra.mxu0 %v1771
    %v1842 = vpop.f32.mrf.mxu0
    %v1843 = vadd.f32 0.0, %v1842
    %v1844 = vpop.f32.mrf.mxu0
    %1845 = vmatprep.mubr.f32.mxu0 0.0
    %1846 = vmatmul.mubr.f32.gmra.mxu0 %v1774
    %v1847 = vpop.f32.mrf.mxu0
    %v1848 = vadd.f32 0.0, %v1847
    %v1849 = vpop.f32.mrf.mxu0
    %1850 = vdwg.mxu0
    %v1851 = vadd.f32 %v1563, %v1843
    %v1852 = vadd.f32 %v1564, %v1848
    %1853 = vrot.lane.b32.xlu0 %v201, 88
    %v1854 = vpop.permute.xlu0 %1853
    %1855 = vrot.lane.b32.xlu0 %v206, 88
    %v1856 = vpop.permute.xlu0 %1855
    %1857 = vrot.lane.b32.xlu0 %v310, 88
    %v1858 = vpop.permute.xlu0 %1857
    %1859 = vrot.lane.b32.xlu0 %v315, 88
    %v1860 = vpop.permute.xlu0 %1859
    %v1861 = vsel %vm421, %v1854, 0
    %v1863 = vsel %vm421, %v1856, 0
    %v1865 = vsel %vm421, %v1858, 0
    %v1867 = vsel %vm421, %v1860, 0
    %1869 = vmatprep.subr.mxu0 0.0
    %1870 = vmatpush1.xpose.msra.mxu0 0.0
    %1871 = vmatprep.subr.mxu0 0.0
    %1872 = vmatpush1.xpose.msra.mxu0 0.0
    %1873 = vmatprep.subr.mxu0 0.0
    %1874 = vmatpush1.xpose.msra.mxu0 0.0
    %1875 = vmatprep.subr.mxu0 0.0
    %1876 = vmatpush1.xpose.msra.mxu0 0.0
    %1877 = vmatprep.subr.mxu0 0.0
    %1878 = vmatpush1.xpose.msra.mxu0 0.0
    %1879 = vmatprep.subr.mxu0 0.0
    %1880 = vmatpush1.xpose.msra.mxu0 0.0
    %1881 = vmatprep.subr.mxu0 0.0
    %1882 = vmatpush1.xpose.msra.mxu0 0.0
    %1883 = vmatprep.subr.mxu0 0.0
    %1884 = vmatpush1.xpose.msra.mxu0 0.0
    %1885 = vmatprep.subr.mxu0 0.0
    %1886 = vmatpush1.xpose.msra.mxu0 0.0
    %1887 = vmatprep.subr.mxu0 0.0
    %1888 = vmatpush1.xpose.msra.mxu0 0.0
    %1889 = vmatprep.subr.mxu0 0.0
    %1890 = vmatpush1.xpose.msra.mxu0 0.0
    %1891 = vmatprep.subr.mxu0 0.0
    %1892 = vmatpush1.xpose.msra.mxu0 0.0
    %1893 = vmatprep.subr.mxu0 0.0
    %1894 = vmatpush1.xpose.msra.mxu0 0.0
    %1895 = vmatprep.subr.mxu0 0.0
    %1896 = vmatpush1.xpose.msra.mxu0 0.0
    %1897 = vmatprep.subr.mxu0 0.0
    %1898 = vmatpush1.xpose.msra.mxu0 %v1867
    %1899 = vmatprep.subr.mxu0 0.0
    %1900 = vmatpush1.xpose.msra.mxu0 %v1865
    %1901 = vmatprep.subr.mxu0 0.0
    %1902 = vmatpush2.xpose.msra.mxu0 0.0
    %1903 = vmatprep.subr.mxu0 0.0
    %1904 = vmatpush2.xpose.msra.mxu0 0.0
    %1905 = vmatprep.subr.mxu0 0.0
    %1906 = vmatpush2.xpose.msra.mxu0 0.0
    %1907 = vmatprep.subr.mxu0 0.0
    %1908 = vmatpush2.xpose.msra.mxu0 0.0
    %1909 = vmatprep.subr.mxu0 0.0
    %1910 = vmatpush2.xpose.msra.mxu0 0.0
    %1911 = vmatprep.subr.mxu0 0.0
    %1912 = vmatpush2.xpose.msra.mxu0 0.0
    %1913 = vmatprep.subr.mxu0 0.0
    %1914 = vmatpush2.xpose.msra.mxu0 0.0
    %1915 = vmatprep.subr.mxu0 0.0
    %1916 = vmatpush2.xpose.msra.mxu0 0.0
    %1917 = vmatprep.subr.mxu0 0.0
    %1918 = vmatpush2.xpose.msra.mxu0 0.0
    %1919 = vmatprep.subr.mxu0 0.0
    %1920 = vmatpush2.xpose.msra.mxu0 0.0
    %1921 = vmatprep.subr.mxu0 0.0
    %1922 = vmatpush2.xpose.msra.mxu0 0.0
    %1923 = vmatprep.subr.mxu0 0.0
    %1924 = vmatpush2.xpose.msra.mxu0 0.0
    %1925 = vmatprep.subr.mxu0 0.0
    %1926 = vmatpush2.xpose.msra.mxu0 0.0
    %1927 = vmatprep.subr.mxu0 0.0
    %1928 = vmatpush2.xpose.msra.mxu0 0.0
    %1929 = vmatprep.subr.mxu0 0.0
    %1930 = vmatpush2.xpose.msra.mxu0 0.0
    %1931 = vmatprep.subr.mxu0 0.0
    %1932 = vmatpush2.xpose.msra.mxu0 0.0
    %1933 = vmatprep.mubr.f32.mxu0 0.0
    %1934 = vmatmul.mubr.f32.gmra.mxu0 %v1861
    %v1935 = vpop.f32.mrf.mxu0
    %v1936 = vadd.f32 0.0, %v1935
    %v1937 = vpop.f32.mrf.mxu0
    %1938 = vmatprep.mubr.f32.mxu0 0.0
    %1939 = vmatmul.mubr.f32.gmra.mxu0 %v1863
    %v1940 = vpop.f32.mrf.mxu0
    %v1941 = vadd.f32 0.0, %v1940
    %v1942 = vpop.f32.mrf.mxu0
    %1943 = vdwg.mxu0
    %v1944 = vmul.f32 %v1936, 0.35355338
    %v1945 = vmul.f32 %v1941, 0.35355338
    %v1946 = vadd.f32 %v1944, %v63
    %v1947 = vadd.f32 %v1945, %v64
    %v1948 = vsel %vm513, %v1946, -inf
    %1949 = vmax.xlane.f32.xlu0 %v1948
    %v1950 = vpop.xlane.xlu0 %1949
    %v1951 = vsel %vm513, %v1947, -inf
    %1952 = vmax.xlane.f32.xlu0 %v1951
    %v1953 = vpop.xlane.xlu0 %1952
    %v1954 = vsub.f32 %v1946, %v1950
    %v1955 = vsub.f32 %v1947, %v1953
    %v1956 = vmul.f32 %v1954, 1.442695
    %v1957 = vpow.pop %v1956
    %v1958 = vmul.f32 %v1955, 1.442695
    %v1959 = vpow.pop %v1958
    %v1960 = vsel %vm513, %v1957, 0.0
    %1961 = vadd.xlane.f32.xlu0 %v1960
    %v1962 = vpop.xlane.xlu0 %1961
    %v1963 = vsel %vm513, %v1959, 0.0
    %1964 = vadd.xlane.f32.xlu0 %v1963
    %v1965 = vpop.xlane.xlu0 %1964
    %v1966 = vrcp.pop %v1962
    %v1967 = vmul.f32 %v1957, %v1966
    %v1968 = vrcp.pop %v1965
    %v1969 = vmul.f32 %v1959, %v1968
    %1970 = vrot.lane.b32.xlu0 %v413, 88
    %v1971 = vpop.permute.xlu0 %1970
    %1972 = vrot.lane.b32.xlu0 %v418, 88
    %v1973 = vpop.permute.xlu0 %1972
    %v1976 = vsel %vm513, %v1967, 0
    %v1979 = vsel %vm513, %v1969, 0
    %v1981 = vsel %vm542, %v1973, 0
    %1983 = vmatprep.subr.mxu0 0.0
    %1984 = vmatpush1.msra.mxu0 0.0
    %1985 = vmatprep.subr.mxu0 0.0
    %1986 = vmatpush1.msra.mxu0 0.0
    %1987 = vmatprep.subr.mxu0 0.0
    %1988 = vmatpush1.msra.mxu0 0.0
    %1989 = vmatprep.subr.mxu0 0.0
    %1990 = vmatpush1.msra.mxu0 0.0
    %1991 = vmatprep.subr.mxu0 0.0
    %1992 = vmatpush1.msra.mxu0 0.0
    %1993 = vmatprep.subr.mxu0 0.0
    %1994 = vmatpush1.msra.mxu0 0.0
    %1995 = vmatprep.subr.mxu0 0.0
    %1996 = vmatpush1.msra.mxu0 0.0
    %1997 = vmatprep.subr.mxu0 0.0
    %1998 = vmatpush1.msra.mxu0 0.0
    %1999 = vmatprep.subr.mxu0 0.0
    %2000 = vmatpush1.msra.mxu0 0.0
    %2001 = vmatprep.subr.mxu0 0.0
    %2002 = vmatpush1.msra.mxu0 0.0
    %2003 = vmatprep.subr.mxu0 0.0
    %2004 = vmatpush1.msra.mxu0 0.0
    %2005 = vmatprep.subr.mxu0 0.0
    %2006 = vmatpush1.msra.mxu0 0.0
    %2007 = vmatprep.subr.mxu0 0.0
    %2008 = vmatpush1.msra.mxu0 0.0
    %2009 = vmatprep.subr.mxu0 0.0
    %2010 = vmatpush1.msra.mxu0 0.0
    %2011 = vmatprep.subr.mxu0 0.0
    %2012 = vmatpush1.msra.mxu0 %v1981
    %2013 = vmatprep.subr.mxu0 0.0
    %2014 = vmatpush1.msra.mxu0 %v1971
    %2015 = vmatprep.subr.mxu0 0.0
    %2016 = vmatpush2.msra.mxu0 0.0
    %2017 = vmatprep.subr.mxu0 0.0
    %2018 = vmatpush2.msra.mxu0 0.0
    %2019 = vmatprep.subr.mxu0 0.0
    %2020 = vmatpush2.msra.mxu0 0.0
    %2021 = vmatprep.subr.mxu0 0.0
    %2022 = vmatpush2.msra.mxu0 0.0
    %2023 = vmatprep.subr.mxu0 0.0
    %2024 = vmatpush2.msra.mxu0 0.0
    %2025 = vmatprep.subr.mxu0 0.0
    %2026 = vmatpush2.msra.mxu0 0.0
    %2027 = vmatprep.subr.mxu0 0.0
    %2028 = vmatpush2.msra.mxu0 0.0
    %2029 = vmatprep.subr.mxu0 0.0
    %2030 = vmatpush2.msra.mxu0 0.0
    %2031 = vmatprep.subr.mxu0 0.0
    %2032 = vmatpush2.msra.mxu0 0.0
    %2033 = vmatprep.subr.mxu0 0.0
    %2034 = vmatpush2.msra.mxu0 0.0
    %2035 = vmatprep.subr.mxu0 0.0
    %2036 = vmatpush2.msra.mxu0 0.0
    %2037 = vmatprep.subr.mxu0 0.0
    %2038 = vmatpush2.msra.mxu0 0.0
    %2039 = vmatprep.subr.mxu0 0.0
    %2040 = vmatpush2.msra.mxu0 0.0
    %2041 = vmatprep.subr.mxu0 0.0
    %2042 = vmatpush2.msra.mxu0 0.0
    %2043 = vmatprep.subr.mxu0 0.0
    %2044 = vmatpush2.msra.mxu0 0.0
    %2045 = vmatprep.subr.mxu0 0.0
    %2046 = vmatpush2.msra.mxu0 0.0
    %2047 = vmatprep.mubr.f32.mxu0 0.0
    %2048 = vmatmul.mubr.f32.gmra.mxu0 %v1976
    %v2049 = vpop.f32.mrf.mxu0
    %v2050 = vadd.f32 0.0, %v2049
    %v2051 = vpop.f32.mrf.mxu0
    %2052 = vmatprep.mubr.f32.mxu0 0.0
    %2053 = vmatmul.mubr.f32.gmra.mxu0 %v1979
    %v2054 = vpop.f32.mrf.mxu0
    %v2055 = vadd.f32 0.0, %v2054
    %v2056 = vpop.f32.mrf.mxu0
    %2057 = vdwg.mxu0
    %v2059 = vsel %vm421, %v2050, 0
    %v2062 = vsel %vm421, %v2055, 0
    %2064 = vmatprep.subr.mxu0 0.0
    %2065 = vmatpush1.msra.mxu0 0.0
    %2066 = vmatprep.subr.mxu0 0.0
    %2067 = vmatpush1.msra.mxu0 0.0
    %2068 = vmatprep.subr.mxu0 0.0
    %2069 = vmatpush1.msra.mxu0 0.0
    %2070 = vmatprep.subr.mxu0 0.0
    %2071 = vmatpush1.msra.mxu0 0.0
    %2072 = vmatprep.subr.mxu0 0.0
    %2073 = vmatpush1.msra.mxu0 0.0
    %2074 = vmatprep.subr.mxu0 0.0
    %2075 = vmatpush1.msra.mxu0 0.0
    %2076 = vmatprep.subr.mxu0 0.0
    %2077 = vmatpush1.msra.mxu0 0.0
    %2078 = vmatprep.subr.mxu0 0.0
    %2079 = vmatpush1.msra.mxu0 0.0
    %2080 = vmatprep.subr.mxu0 0.0
    %2081 = vmatpush1.msra.mxu0 0.0
    %2082 = vmatprep.subr.mxu0 0.0
    %2083 = vmatpush1.msra.mxu0 0.0
    %2084 = vmatprep.subr.mxu0 0.0
    %2085 = vmatpush1.msra.mxu0 0.0
    %2086 = vmatprep.subr.mxu0 0.0
    %2087 = vmatpush1.msra.mxu0 0.0
    %2088 = vmatprep.subr.mxu0 0.0
    %2089 = vmatpush1.msra.mxu0 0.0
    %2090 = vmatprep.subr.mxu0 0.0
    %2091 = vmatpush1.msra.mxu0 0.0
    %2092 = vmatprep.subr.mxu0 0.0
    %2093 = vmatpush1.msra.mxu0 0.0
    %2094 = vmatprep.subr.mxu0 0.0
    %2095 = vmatpush1.msra.mxu0 %v95
    %2096 = vmatprep.subr.mxu0 0.0
    %2097 = vmatpush2.msra.mxu0 0.0
    %2098 = vmatprep.subr.mxu0 0.0
    %2099 = vmatpush2.msra.mxu0 0.0
    %2100 = vmatprep.subr.mxu0 0.0
    %2101 = vmatpush2.msra.mxu0 0.0
    %2102 = vmatprep.subr.mxu0 0.0
    %2103 = vmatpush2.msra.mxu0 0.0
    %2104 = vmatprep.subr.mxu0 0.0
    %2105 = vmatpush2.msra.mxu0 0.0
    %2106 = vmatprep.subr.mxu0 0.0
    %2107 = vmatpush2.msra.mxu0 0.0
    %2108 = vmatprep.subr.mxu0 0.0
    %2109 = vmatpush2.msra.mxu0 0.0
    %2110 = vmatprep.subr.mxu0 0.0
    %2111 = vmatpush2.msra.mxu0 0.0
    %2112 = vmatprep.subr.mxu0 0.0
    %2113 = vmatpush2.msra.mxu0 0.0
    %2114 = vmatprep.subr.mxu0 0.0
    %2115 = vmatpush2.msra.mxu0 0.0
    %2116 = vmatprep.subr.mxu0 0.0
    %2117 = vmatpush2.msra.mxu0 0.0
    %2118 = vmatprep.subr.mxu0 0.0
    %2119 = vmatpush2.msra.mxu0 0.0
    %2120 = vmatprep.subr.mxu0 0.0
    %2121 = vmatpush2.msra.mxu0 0.0
    %2122 = vmatprep.subr.mxu0 0.0
    %2123 = vmatpush2.msra.mxu0 0.0
    %2124 = vmatprep.subr.mxu0 0.0
    %2125 = vmatpush2.msra.mxu0 0.0
    %2126 = vmatprep.subr.mxu0 0.0
    %2127 = vmatpush2.msra.mxu0 0.0
    %2128 = vmatprep.mubr.f32.mxu0 0.0
    %2129 = vmatmul.mubr.f32.gmra.mxu0 %v2059
    %v2130 = vpop.f32.mrf.mxu0
    %v2131 = vadd.f32 0.0, %v2130
    %v2132 = vpop.f32.mrf.mxu0
    %2133 = vmatprep.mubr.f32.mxu0 0.0
    %2134 = vmatmul.mubr.f32.gmra.mxu0 %v2062
    %v2135 = vpop.f32.mrf.mxu0
    %v2136 = vadd.f32 0.0, %v2135
    %v2137 = vpop.f32.mrf.mxu0
    %2138 = vdwg.mxu0
    %v2139 = vadd.f32 %v1851, %v2131
    %v2140 = vadd.f32 %v1852, %v2136
    %2141 = vrot.lane.b32.xlu0 %v201, 80
    %v2142 = vpop.permute.xlu0 %2141
    %2143 = vrot.lane.b32.xlu0 %v206, 80
    %v2144 = vpop.permute.xlu0 %2143
    %2145 = vrot.lane.b32.xlu0 %v310, 80
    %v2146 = vpop.permute.xlu0 %2145
    %2147 = vrot.lane.b32.xlu0 %v315, 80
    %v2148 = vpop.permute.xlu0 %2147
    %v2149 = vsel %vm421, %v2142, 0
    %v2151 = vsel %vm421, %v2144, 0
    %v2153 = vsel %vm421, %v2146, 0
    %v2155 = vsel %vm421, %v2148, 0
    %2157 = vmatprep.subr.mxu0 0.0
    %2158 = vmatpush1.xpose.msra.mxu0 0.0
    %2159 = vmatprep.subr.mxu0 0.0
    %2160 = vmatpush1.xpose.msra.mxu0 0.0
    %2161 = vmatprep.subr.mxu0 0.0
    %2162 = vmatpush1.xpose.msra.mxu0 0.0
    %2163 = vmatprep.subr.mxu0 0.0
    %2164 = vmatpush1.xpose.msra.mxu0 0.0
    %2165 = vmatprep.subr.mxu0 0.0
    %2166 = vmatpush1.xpose.msra.mxu0 0.0
    %2167 = vmatprep.subr.mxu0 0.0
    %2168 = vmatpush1.xpose.msra.mxu0 0.0
    %2169 = vmatprep.subr.mxu0 0.0
    %2170 = vmatpush1.xpose.msra.mxu0 0.0
    %2171 = vmatprep.subr.mxu0 0.0
    %2172 = vmatpush1.xpose.msra.mxu0 0.0
    %2173 = vmatprep.subr.mxu0 0.0
    %2174 = vmatpush1.xpose.msra.mxu0 0.0
    %2175 = vmatprep.subr.mxu0 0.0
    %2176 = vmatpush1.xpose.msra.mxu0 0.0
    %2177 = vmatprep.subr.mxu0 0.0
    %2178 = vmatpush1.xpose.msra.mxu0 0.0
    %2179 = vmatprep.subr.mxu0 0.0
    %2180 = vmatpush1.xpose.msra.mxu0 0.0
    %2181 = vmatprep.subr.mxu0 0.0
    %2182 = vmatpush1.xpose.msra.mxu0 0.0
    %2183 = vmatprep.subr.mxu0 0.0
    %2184 = vmatpush1.xpose.msra.mxu0 0.0
    %2185 = vmatprep.subr.mxu0 0.0
    %2186 = vmatpush1.xpose.msra.mxu0 %v2155
    %2187 = vmatprep.subr.mxu0 0.0
    %2188 = vmatpush1.xpose.msra.mxu0 %v2153
    %2189 = vmatprep.subr.mxu0 0.0
    %2190 = vmatpush2.xpose.msra.mxu0 0.0
    %2191 = vmatprep.subr.mxu0 0.0
    %2192 = vmatpush2.xpose.msra.mxu0 0.0
    %2193 = vmatprep.subr.mxu0 0.0
    %2194 = vmatpush2.xpose.msra.mxu0 0.0
    %2195 = vmatprep.subr.mxu0 0.0
    %2196 = vmatpush2.xpose.msra.mxu0 0.0
    %2197 = vmatprep.subr.mxu0 0.0
    %2198 = vmatpush2.xpose.msra.mxu0 0.0
    %2199 = vmatprep.subr.mxu0 0.0
    %2200 = vmatpush2.xpose.msra.mxu0 0.0
    %2201 = vmatprep.subr.mxu0 0.0
    %2202 = vmatpush2.xpose.msra.mxu0 0.0
    %2203 = vmatprep.subr.mxu0 0.0
    %2204 = vmatpush2.xpose.msra.mxu0 0.0
    %2205 = vmatprep.subr.mxu0 0.0
    %2206 = vmatpush2.xpose.msra.mxu0 0.0
    %2207 = vmatprep.subr.mxu0 0.0
    %2208 = vmatpush2.xpose.msra.mxu0 0.0
    %2209 = vmatprep.subr.mxu0 0.0
    %2210 = vmatpush2.xpose.msra.mxu0 0.0
    %2211 = vmatprep.subr.mxu0 0.0
    %2212 = vmatpush2.xpose.msra.mxu0 0.0
    %2213 = vmatprep.subr.mxu0 0.0
    %2214 = vmatpush2.xpose.msra.mxu0 0.0
    %2215 = vmatprep.subr.mxu0 0.0
    %2216 = vmatpush2.xpose.msra.mxu0 0.0
    %2217 = vmatprep.subr.mxu0 0.0
    %2218 = vmatpush2.xpose.msra.mxu0 0.0
    %2219 = vmatprep.subr.mxu0 0.0
    %2220 = vmatpush2.xpose.msra.mxu0 0.0
    %2221 = vmatprep.mubr.f32.mxu0 0.0
    %2222 = vmatmul.mubr.f32.gmra.mxu0 %v2149
    %v2223 = vpop.f32.mrf.mxu0
    %v2224 = vadd.f32 0.0, %v2223
    %v2225 = vpop.f32.mrf.mxu0
    %2226 = vmatprep.mubr.f32.mxu0 0.0
    %2227 = vmatmul.mubr.f32.gmra.mxu0 %v2151
    %v2228 = vpop.f32.mrf.mxu0
    %v2229 = vadd.f32 0.0, %v2228
    %v2230 = vpop.f32.mrf.mxu0
    %2231 = vdwg.mxu0
    %v2232 = vmul.f32 %v2224, 0.35355338
    %v2233 = vmul.f32 %v2229, 0.35355338
    %v2234 = vadd.f32 %v2232, %v63
    %v2235 = vadd.f32 %v2233, %v64
    %v2236 = vsel %vm513, %v2234, -inf
    %2237 = vmax.xlane.f32.xlu0 %v2236
    %v2238 = vpop.xlane.xlu0 %2237
    %v2239 = vsel %vm513, %v2235, -inf
    %2240 = vmax.xlane.f32.xlu0 %v2239
    %v2241 = vpop.xlane.xlu0 %2240
    %v2242 = vsub.f32 %v2234, %v2238
    %v2243 = vsub.f32 %v2235, %v2241
    %v2244 = vmul.f32 %v2242, 1.442695
    %v2245 = vpow.pop %v2244
    %v2246 = vmul.f32 %v2243, 1.442695
    %v2247 = vpow.pop %v2246
    %v2248 = vsel %vm513, %v2245, 0.0
    %2249 = vadd.xlane.f32.xlu0 %v2248
    %v2250 = vpop.xlane.xlu0 %2249
    %v2251 = vsel %vm513, %v2247, 0.0
    %2252 = vadd.xlane.f32.xlu0 %v2251
    %v2253 = vpop.xlane.xlu0 %2252
    %v2254 = vrcp.pop %v2250
    %v2255 = vmul.f32 %v2245, %v2254
    %v2256 = vrcp.pop %v2253
    %v2257 = vmul.f32 %v2247, %v2256
    %2258 = vrot.lane.b32.xlu0 %v413, 80
    %v2259 = vpop.permute.xlu0 %2258
    %2260 = vrot.lane.b32.xlu0 %v418, 80
    %v2261 = vpop.permute.xlu0 %2260
    %v2264 = vsel %vm513, %v2255, 0
    %v2267 = vsel %vm513, %v2257, 0
    %v2269 = vsel %vm542, %v2261, 0
    %2271 = vmatprep.subr.mxu0 0.0
    %2272 = vmatpush1.msra.mxu0 0.0
    %2273 = vmatprep.subr.mxu0 0.0
    %2274 = vmatpush1.msra.mxu0 0.0
    %2275 = vmatprep.subr.mxu0 0.0
    %2276 = vmatpush1.msra.mxu0 0.0
    %2277 = vmatprep.subr.mxu0 0.0
    %2278 = vmatpush1.msra.mxu0 0.0
    %2279 = vmatprep.subr.mxu0 0.0
    %2280 = vmatpush1.msra.mxu0 0.0
    %2281 = vmatprep.subr.mxu0 0.0
    %2282 = vmatpush1.msra.mxu0 0.0
    %2283 = vmatprep.subr.mxu0 0.0
    %2284 = vmatpush1.msra.mxu0 0.0
    %2285 = vmatprep.subr.mxu0 0.0
    %2286 = vmatpush1.msra.mxu0 0.0
    %2287 = vmatprep.subr.mxu0 0.0
    %2288 = vmatpush1.msra.mxu0 0.0
    %2289 = vmatprep.subr.mxu0 0.0
    %2290 = vmatpush1.msra.mxu0 0.0
    %2291 = vmatprep.subr.mxu0 0.0
    %2292 = vmatpush1.msra.mxu0 0.0
    %2293 = vmatprep.subr.mxu0 0.0
    %2294 = vmatpush1.msra.mxu0 0.0
    %2295 = vmatprep.subr.mxu0 0.0
    %2296 = vmatpush1.msra.mxu0 0.0
    %2297 = vmatprep.subr.mxu0 0.0
    %2298 = vmatpush1.msra.mxu0 0.0
    %2299 = vmatprep.subr.mxu0 0.0
    %2300 = vmatpush1.msra.mxu0 %v2269
    %2301 = vmatprep.subr.mxu0 0.0
    %2302 = vmatpush1.msra.mxu0 %v2259
    %2303 = vmatprep.subr.mxu0 0.0
    %2304 = vmatpush2.msra.mxu0 0.0
    %2305 = vmatprep.subr.mxu0 0.0
    %2306 = vmatpush2.msra.mxu0 0.0
    %2307 = vmatprep.subr.mxu0 0.0
    %2308 = vmatpush2.msra.mxu0 0.0
    %2309 = vmatprep.subr.mxu0 0.0
    %2310 = vmatpush2.msra.mxu0 0.0
    %2311 = vmatprep.subr.mxu0 0.0
    %2312 = vmatpush2.msra.mxu0 0.0
    %2313 = vmatprep.subr.mxu0 0.0
    %2314 = vmatpush2.msra.mxu0 0.0
    %2315 = vmatprep.subr.mxu0 0.0
    %2316 = vmatpush2.msra.mxu0 0.0
    %2317 = vmatprep.subr.mxu0 0.0
    %2318 = vmatpush2.msra.mxu0 0.0
    %2319 = vmatprep.subr.mxu0 0.0
    %2320 = vmatpush2.msra.mxu0 0.0
    %2321 = vmatprep.subr.mxu0 0.0
    %2322 = vmatpush2.msra.mxu0 0.0
    %2323 = vmatprep.subr.mxu0 0.0
    %2324 = vmatpush2.msra.mxu0 0.0
    %2325 = vmatprep.subr.mxu0 0.0
    %2326 = vmatpush2.msra.mxu0 0.0
    %2327 = vmatprep.subr.mxu0 0.0
    %2328 = vmatpush2.msra.mxu0 0.0
    %2329 = vmatprep.subr.mxu0 0.0
    %2330 = vmatpush2.msra.mxu0 0.0
    %2331 = vmatprep.subr.mxu0 0.0
    %2332 = vmatpush2.msra.mxu0 0.0
    %2333 = vmatprep.subr.mxu0 0.0
    %2334 = vmatpush2.msra.mxu0 0.0
    %2335 = vmatprep.mubr.f32.mxu0 0.0
    %2336 = vmatmul.mubr.f32.gmra.mxu0 %v2264
    %v2337 = vpop.f32.mrf.mxu0
    %v2338 = vadd.f32 0.0, %v2337
    %v2339 = vpop.f32.mrf.mxu0
    %2340 = vmatprep.mubr.f32.mxu0 0.0
    %2341 = vmatmul.mubr.f32.gmra.mxu0 %v2267
    %v2342 = vpop.f32.mrf.mxu0
    %v2343 = vadd.f32 0.0, %v2342
    %v2344 = vpop.f32.mrf.mxu0
    %2345 = vdwg.mxu0
    %v2347 = vsel %vm421, %v2338, 0
    %v2350 = vsel %vm421, %v2343, 0
    %2352 = vmatprep.subr.mxu0 0.0
    %2353 = vmatpush1.msra.mxu0 0.0
    %2354 = vmatprep.subr.mxu0 0.0
    %2355 = vmatpush1.msra.mxu0 0.0
    %2356 = vmatprep.subr.mxu0 0.0
    %2357 = vmatpush1.msra.mxu0 0.0
    %2358 = vmatprep.subr.mxu0 0.0
    %2359 = vmatpush1.msra.mxu0 0.0
    %2360 = vmatprep.subr.mxu0 0.0
    %2361 = vmatpush1.msra.mxu0 0.0
    %2362 = vmatprep.subr.mxu0 0.0
    %2363 = vmatpush1.msra.mxu0 0.0
    %2364 = vmatprep.subr.mxu0 0.0
    %2365 = vmatpush1.msra.mxu0 0.0
    %2366 = vmatprep.subr.mxu0 0.0
    %2367 = vmatpush1.msra.mxu0 0.0
    %2368 = vmatprep.subr.mxu0 0.0
    %2369 = vmatpush1.msra.mxu0 0.0
    %2370 = vmatprep.subr.mxu0 0.0
    %2371 = vmatpush1.msra.mxu0 0.0
    %2372 = vmatprep.subr.mxu0 0.0
    %2373 = vmatpush1.msra.mxu0 0.0
    %2374 = vmatprep.subr.mxu0 0.0
    %2375 = vmatpush1.msra.mxu0 0.0
    %2376 = vmatprep.subr.mxu0 0.0
    %2377 = vmatpush1.msra.mxu0 0.0
    %2378 = vmatprep.subr.mxu0 0.0
    %2379 = vmatpush1.msra.mxu0 0.0
    %2380 = vmatprep.subr.mxu0 0.0
    %2381 = vmatpush1.msra.mxu0 0.0
    %2382 = vmatprep.subr.mxu0 0.0
    %2383 = vmatpush1.msra.mxu0 %v96
    %2384 = vmatprep.subr.mxu0 0.0
    %2385 = vmatpush2.msra.mxu0 0.0
    %2386 = vmatprep.subr.mxu0 0.0
    %2387 = vmatpush2.msra.mxu0 0.0
    %2388 = vmatprep.subr.mxu0 0.0
    %2389 = vmatpush2.msra.mxu0 0.0
    %2390 = vmatprep.subr.mxu0 0.0
    %2391 = vmatpush2.msra.mxu0 0.0
    %2392 = vmatprep.subr.mxu0 0.0
    %2393 = vmatpush2.msra.mxu0 0.0
    %2394 = vmatprep.subr.mxu0 0.0
    %2395 = vmatpush2.msra.mxu0 0.0
    %2396 = vmatprep.subr.mxu0 0.0
    %2397 = vmatpush2.msra.mxu0 0.0
    %2398 = vmatprep.subr.mxu0 0.0
    %2399 = vmatpush2.msra.mxu0 0.0
    %2400 = vmatprep.subr.mxu0 0.0
    %2401 = vmatpush2.msra.mxu0 0.0
    %2402 = vmatprep.subr.mxu0 0.0
    %2403 = vmatpush2.msra.mxu0 0.0
    %2404 = vmatprep.subr.mxu0 0.0
    %2405 = vmatpush2.msra.mxu0 0.0
    %2406 = vmatprep.subr.mxu0 0.0
    %2407 = vmatpush2.msra.mxu0 0.0
    %2408 = vmatprep.subr.mxu0 0.0
    %2409 = vmatpush2.msra.mxu0 0.0
    %2410 = vmatprep.subr.mxu0 0.0
    %2411 = vmatpush2.msra.mxu0 0.0
    %2412 = vmatprep.subr.mxu0 0.0
    %2413 = vmatpush2.msra.mxu0 0.0
    %2414 = vmatprep.subr.mxu0 0.0
    %2415 = vmatpush2.msra.mxu0 0.0
    %2416 = vmatprep.mubr.f32.mxu0 0.0
    %2417 = vmatmul.mubr.f32.gmra.mxu0 %v2347
    %v2418 = vpop.f32.mrf.mxu0
    %v2419 = vadd.f32 0.0, %v2418
    %v2420 = vpop.f32.mrf.mxu0
    %2421 = vmatprep.mubr.f32.mxu0 0.0
    %2422 = vmatmul.mubr.f32.gmra.mxu0 %v2350
    %v2423 = vpop.f32.mrf.mxu0
    %v2424 = vadd.f32 0.0, %v2423
    %v2425 = vpop.f32.mrf.mxu0
    %2426 = vdwg.mxu0
    %v2427 = vadd.f32 %v2139, %v2419
    %v2428 = vadd.f32 %v2140, %v2424
    %2429 = vrot.lane.b32.xlu0 %v201, 72
    %v2430 = vpop.permute.xlu0 %2429
    %2431 = vrot.lane.b32.xlu0 %v206, 72
    %v2432 = vpop.permute.xlu0 %2431
    %2433 = vrot.lane.b32.xlu0 %v310, 72
    %v2434 = vpop.permute.xlu0 %2433
    %2435 = vrot.lane.b32.xlu0 %v315, 72
    %v2436 = vpop.permute.xlu0 %2435
    %v2437 = vsel %vm421, %v2430, 0
    %v2439 = vsel %vm421, %v2432, 0
    %v2441 = vsel %vm421, %v2434, 0
    %v2443 = vsel %vm421, %v2436, 0
    %2445 = vmatprep.subr.mxu0 0.0
    %2446 = vmatpush1.xpose.msra.mxu0 0.0
    %2447 = vmatprep.subr.mxu0 0.0
    %2448 = vmatpush1.xpose.msra.mxu0 0.0
    %2449 = vmatprep.subr.mxu0 0.0
    %2450 = vmatpush1.xpose.msra.mxu0 0.0
    %2451 = vmatprep.subr.mxu0 0.0
    %2452 = vmatpush1.xpose.msra.mxu0 0.0
    %2453 = vmatprep.subr.mxu0 0.0
    %2454 = vmatpush1.xpose.msra.mxu0 0.0
    %2455 = vmatprep.subr.mxu0 0.0
    %2456 = vmatpush1.xpose.msra.mxu0 0.0
    %2457 = vmatprep.subr.mxu0 0.0
    %2458 = vmatpush1.xpose.msra.mxu0 0.0
    %2459 = vmatprep.subr.mxu0 0.0
    %2460 = vmatpush1.xpose.msra.mxu0 0.0
    %2461 = vmatprep.subr.mxu0 0.0
    %2462 = vmatpush1.xpose.msra.mxu0 0.0
    %2463 = vmatprep.subr.mxu0 0.0
    %2464 = vmatpush1.xpose.msra.mxu0 0.0
    %2465 = vmatprep.subr.mxu0 0.0
    %2466 = vmatpush1.xpose.msra.mxu0 0.0
    %2467 = vmatprep.subr.mxu0 0.0
    %2468 = vmatpush1.xpose.msra.mxu0 0.0
    %2469 = vmatprep.subr.mxu0 0.0
    %2470 = vmatpush1.xpose.msra.mxu0 0.0
    %2471 = vmatprep.subr.mxu0 0.0
    %2472 = vmatpush1.xpose.msra.mxu0 0.0
    %2473 = vmatprep.subr.mxu0 0.0
    %2474 = vmatpush1.xpose.msra.mxu0 %v2443
    %2475 = vmatprep.subr.mxu0 0.0
    %2476 = vmatpush1.xpose.msra.mxu0 %v2441
    %2477 = vmatprep.subr.mxu0 0.0
    %2478 = vmatpush2.xpose.msra.mxu0 0.0
    %2479 = vmatprep.subr.mxu0 0.0
    %2480 = vmatpush2.xpose.msra.mxu0 0.0
    %2481 = vmatprep.subr.mxu0 0.0
    %2482 = vmatpush2.xpose.msra.mxu0 0.0
    %2483 = vmatprep.subr.mxu0 0.0
    %2484 = vmatpush2.xpose.msra.mxu0 0.0
    %2485 = vmatprep.subr.mxu0 0.0
    %2486 = vmatpush2.xpose.msra.mxu0 0.0
    %2487 = vmatprep.subr.mxu0 0.0
    %2488 = vmatpush2.xpose.msra.mxu0 0.0
    %2489 = vmatprep.subr.mxu0 0.0
    %2490 = vmatpush2.xpose.msra.mxu0 0.0
    %2491 = vmatprep.subr.mxu0 0.0
    %2492 = vmatpush2.xpose.msra.mxu0 0.0
    %2493 = vmatprep.subr.mxu0 0.0
    %2494 = vmatpush2.xpose.msra.mxu0 0.0
    %2495 = vmatprep.subr.mxu0 0.0
    %2496 = vmatpush2.xpose.msra.mxu0 0.0
    %2497 = vmatprep.subr.mxu0 0.0
    %2498 = vmatpush2.xpose.msra.mxu0 0.0
    %2499 = vmatprep.subr.mxu0 0.0
    %2500 = vmatpush2.xpose.msra.mxu0 0.0
    %2501 = vmatprep.subr.mxu0 0.0
    %2502 = vmatpush2.xpose.msra.mxu0 0.0
    %2503 = vmatprep.subr.mxu0 0.0
    %2504 = vmatpush2.xpose.msra.mxu0 0.0
    %2505 = vmatprep.subr.mxu0 0.0
    %2506 = vmatpush2.xpose.msra.mxu0 0.0
    %2507 = vmatprep.subr.mxu0 0.0
    %2508 = vmatpush2.xpose.msra.mxu0 0.0
    %2509 = vmatprep.mubr.f32.mxu0 0.0
    %2510 = vmatmul.mubr.f32.gmra.mxu0 %v2437
    %v2511 = vpop.f32.mrf.mxu0
    %v2512 = vadd.f32 0.0, %v2511
    %v2513 = vpop.f32.mrf.mxu0
    %2514 = vmatprep.mubr.f32.mxu0 0.0
    %2515 = vmatmul.mubr.f32.gmra.mxu0 %v2439
    %v2516 = vpop.f32.mrf.mxu0
    %v2517 = vadd.f32 0.0, %v2516
    %v2518 = vpop.f32.mrf.mxu0
    %2519 = vdwg.mxu0
    %v2520 = vmul.f32 %v2512, 0.35355338
    %v2521 = vmul.f32 %v2517, 0.35355338
    %v2522 = vadd.f32 %v2520, %v63
    %v2523 = vadd.f32 %v2521, %v64
    %v2524 = vsel %vm513, %v2522, -inf
    %2525 = vmax.xlane.f32.xlu0 %v2524
    %v2526 = vpop.xlane.xlu0 %2525
    %v2527 = vsel %vm513, %v2523, -inf
    %2528 = vmax.xlane.f32.xlu0 %v2527
    %v2529 = vpop.xlane.xlu0 %2528
    %v2530 = vsub.f32 %v2522, %v2526
    %v2531 = vsub.f32 %v2523, %v2529
    %v2532 = vmul.f32 %v2530, 1.442695
    %v2533 = vpow.pop %v2532
    %v2534 = vmul.f32 %v2531, 1.442695
    %v2535 = vpow.pop %v2534
    %v2536 = vsel %vm513, %v2533, 0.0
    %2537 = vadd.xlane.f32.xlu0 %v2536
    %v2538 = vpop.xlane.xlu0 %2537
    %v2539 = vsel %vm513, %v2535, 0.0
    %2540 = vadd.xlane.f32.xlu0 %v2539
    %v2541 = vpop.xlane.xlu0 %2540
    %v2542 = vrcp.pop %v2538
    %v2543 = vmul.f32 %v2533, %v2542
    %v2544 = vrcp.pop %v2541
    %v2545 = vmul.f32 %v2535, %v2544
    %2546 = vrot.lane.b32.xlu0 %v413, 72
    %v2547 = vpop.permute.xlu0 %2546
    %2548 = vrot.lane.b32.xlu0 %v418, 72
    %v2549 = vpop.permute.xlu0 %2548
    %v2552 = vsel %vm513, %v2543, 0
    %v2555 = vsel %vm513, %v2545, 0
    %v2557 = vsel %vm542, %v2549, 0
    %2559 = vmatprep.subr.mxu0 0.0
    %2560 = vmatpush1.msra.mxu0 0.0
    %2561 = vmatprep.subr.mxu0 0.0
    %2562 = vmatpush1.msra.mxu0 0.0
    %2563 = vmatprep.subr.mxu0 0.0
    %2564 = vmatpush1.msra.mxu0 0.0
    %2565 = vmatprep.subr.mxu0 0.0
    %2566 = vmatpush1.msra.mxu0 0.0
    %2567 = vmatprep.subr.mxu0 0.0
    %2568 = vmatpush1.msra.mxu0 0.0
    %2569 = vmatprep.subr.mxu0 0.0
    %2570 = vmatpush1.msra.mxu0 0.0
    %2571 = vmatprep.subr.mxu0 0.0
    %2572 = vmatpush1.msra.mxu0 0.0
    %2573 = vmatprep.subr.mxu0 0.0
    %2574 = vmatpush1.msra.mxu0 0.0
    %2575 = vmatprep.subr.mxu0 0.0
    %2576 = vmatpush1.msra.mxu0 0.0
    %2577 = vmatprep.subr.mxu0 0.0
    %2578 = vmatpush1.msra.mxu0 0.0
    %2579 = vmatprep.subr.mxu0 0.0
    %2580 = vmatpush1.msra.mxu0 0.0
    %2581 = vmatprep.subr.mxu0 0.0
    %2582 = vmatpush1.msra.mxu0 0.0
    %2583 = vmatprep.subr.mxu0 0.0
    %2584 = vmatpush1.msra.mxu0 0.0
    %2585 = vmatprep.subr.mxu0 0.0
    %2586 = vmatpush1.msra.mxu0 0.0
    %2587 = vmatprep.subr.mxu0 0.0
    %2588 = vmatpush1.msra.mxu0 %v2557
    %2589 = vmatprep.subr.mxu0 0.0
    %2590 = vmatpush1.msra.mxu0 %v2547
    %2591 = vmatprep.subr.mxu0 0.0
    %2592 = vmatpush2.msra.mxu0 0.0
    %2593 = vmatprep.subr.mxu0 0.0
    %2594 = vmatpush2.msra.mxu0 0.0
    %2595 = vmatprep.subr.mxu0 0.0
    %2596 = vmatpush2.msra.mxu0 0.0
    %2597 = vmatprep.subr.mxu0 0.0
    %2598 = vmatpush2.msra.mxu0 0.0
    %2599 = vmatprep.subr.mxu0 0.0
    %2600 = vmatpush2.msra.mxu0 0.0
    %2601 = vmatprep.subr.mxu0 0.0
    %2602 = vmatpush2.msra.mxu0 0.0
    %2603 = vmatprep.subr.mxu0 0.0
    %2604 = vmatpush2.msra.mxu0 0.0
    %2605 = vmatprep.subr.mxu0 0.0
    %2606 = vmatpush2.msra.mxu0 0.0
    %2607 = vmatprep.subr.mxu0 0.0
    %2608 = vmatpush2.msra.mxu0 0.0
    %2609 = vmatprep.subr.mxu0 0.0
    %2610 = vmatpush2.msra.mxu0 0.0
    %2611 = vmatprep.subr.mxu0 0.0
    %2612 = vmatpush2.msra.mxu0 0.0
    %2613 = vmatprep.subr.mxu0 0.0
    %2614 = vmatpush2.msra.mxu0 0.0
    %2615 = vmatprep.subr.mxu0 0.0
    %2616 = vmatpush2.msra.mxu0 0.0
    %2617 = vmatprep.subr.mxu0 0.0
    %2618 = vmatpush2.msra.mxu0 0.0
    %2619 = vmatprep.subr.mxu0 0.0
    %2620 = vmatpush2.msra.mxu0 0.0
    %2621 = vmatprep.subr.mxu0 0.0
    %2622 = vmatpush2.msra.mxu0 0.0
    %2623 = vmatprep.mubr.f32.mxu0 0.0
    %2624 = vmatmul.mubr.f32.gmra.mxu0 %v2552
    %v2625 = vpop.f32.mrf.mxu0
    %v2626 = vadd.f32 0.0, %v2625
    %v2627 = vpop.f32.mrf.mxu0
    %2628 = vmatprep.mubr.f32.mxu0 0.0
    %2629 = vmatmul.mubr.f32.gmra.mxu0 %v2555
    %v2630 = vpop.f32.mrf.mxu0
    %v2631 = vadd.f32 0.0, %v2630
    %v2632 = vpop.f32.mrf.mxu0
    %2633 = vdwg.mxu0
    %v2635 = vsel %vm421, %v2626, 0
    %v2638 = vsel %vm421, %v2631, 0
    %2640 = vmatprep.subr.mxu0 0.0
    %2641 = vmatpush1.msra.mxu0 0.0
    %2642 = vmatprep.subr.mxu0 0.0
    %2643 = vmatpush1.msra.mxu0 0.0
    %2644 = vmatprep.subr.mxu0 0.0
    %2645 = vmatpush1.msra.mxu0 0.0
    %2646 = vmatprep.subr.mxu0 0.0
    %2647 = vmatpush1.msra.mxu0 0.0
    %2648 = vmatprep.subr.mxu0 0.0
    %2649 = vmatpush1.msra.mxu0 0.0
    %2650 = vmatprep.subr.mxu0 0.0
    %2651 = vmatpush1.msra.mxu0 0.0
    %2652 = vmatprep.subr.mxu0 0.0
    %2653 = vmatpush1.msra.mxu0 0.0
    %2654 = vmatprep.subr.mxu0 0.0
    %2655 = vmatpush1.msra.mxu0 0.0
    %2656 = vmatprep.subr.mxu0 0.0
    %2657 = vmatpush1.msra.mxu0 0.0
    %2658 = vmatprep.subr.mxu0 0.0
    %2659 = vmatpush1.msra.mxu0 0.0
    %2660 = vmatprep.subr.mxu0 0.0
    %2661 = vmatpush1.msra.mxu0 0.0
    %2662 = vmatprep.subr.mxu0 0.0
    %2663 = vmatpush1.msra.mxu0 0.0
    %2664 = vmatprep.subr.mxu0 0.0
    %2665 = vmatpush1.msra.mxu0 0.0
    %2666 = vmatprep.subr.mxu0 0.0
    %2667 = vmatpush1.msra.mxu0 0.0
    %2668 = vmatprep.subr.mxu0 0.0
    %2669 = vmatpush1.msra.mxu0 0.0
    %2670 = vmatprep.subr.mxu0 0.0
    %2671 = vmatpush1.msra.mxu0 %v97
    %2672 = vmatprep.subr.mxu0 0.0
    %2673 = vmatpush2.msra.mxu0 0.0
    %2674 = vmatprep.subr.mxu0 0.0
    %2675 = vmatpush2.msra.mxu0 0.0
    %2676 = vmatprep.subr.mxu0 0.0
    %2677 = vmatpush2.msra.mxu0 0.0
    %2678 = vmatprep.subr.mxu0 0.0
    %2679 = vmatpush2.msra.mxu0 0.0
    %2680 = vmatprep.subr.mxu0 0.0
    %2681 = vmatpush2.msra.mxu0 0.0
    %2682 = vmatprep.subr.mxu0 0.0
    %2683 = vmatpush2.msra.mxu0 0.0
    %2684 = vmatprep.subr.mxu0 0.0
    %2685 = vmatpush2.msra.mxu0 0.0
    %2686 = vmatprep.subr.mxu0 0.0
    %2687 = vmatpush2.msra.mxu0 0.0
    %2688 = vmatprep.subr.mxu0 0.0
    %2689 = vmatpush2.msra.mxu0 0.0
    %2690 = vmatprep.subr.mxu0 0.0
    %2691 = vmatpush2.msra.mxu0 0.0
    %2692 = vmatprep.subr.mxu0 0.0
    %2693 = vmatpush2.msra.mxu0 0.0
    %2694 = vmatprep.subr.mxu0 0.0
    %2695 = vmatpush2.msra.mxu0 0.0
    %2696 = vmatprep.subr.mxu0 0.0
    %2697 = vmatpush2.msra.mxu0 0.0
    %2698 = vmatprep.subr.mxu0 0.0
    %2699 = vmatpush2.msra.mxu0 0.0
    %2700 = vmatprep.subr.mxu0 0.0
    %2701 = vmatpush2.msra.mxu0 0.0
    %2702 = vmatprep.subr.mxu0 0.0
    %2703 = vmatpush2.msra.mxu0 0.0
    %2704 = vmatprep.mubr.f32.mxu0 0.0
    %2705 = vmatmul.mubr.f32.gmra.mxu0 %v2635
    %v2706 = vpop.f32.mrf.mxu0
    %v2707 = vadd.f32 0.0, %v2706
    %v2708 = vpop.f32.mrf.mxu0
    %2709 = vmatprep.mubr.f32.mxu0 0.0
    %2710 = vmatmul.mubr.f32.gmra.mxu0 %v2638
    %v2711 = vpop.f32.mrf.mxu0
    %v2712 = vadd.f32 0.0, %v2711
    %v2713 = vpop.f32.mrf.mxu0
    %2714 = vdwg.mxu0
    %v2715 = vadd.f32 %v2427, %v2707
    %v2716 = vadd.f32 %v2428, %v2712
    %v2718 = vlaneseq
    %v2719 = vshrl.u32 %v2718, 7
    %v2720 = vsub.s32 0, %v2719
    %v2721 = vrot.slane %v98, %v2720
    %v2723 = vadd.f32 %v2715, %v2721
    %v2724 = vadd.f32 %v2716, %v2721
    %v2725 = vadd.f32 %v48, %v2723
    %v2726 = vadd.f32 %v49, %v2724
    %v2727 = vld [vmem:[%s1] sm:$0xff]
    %v2728 = vld [vmem:[%s1 + $0x8] sm:$0xff]
    %v2729 = vadd.f32 %v2725, %v2727
    %v2730 = vadd.f32 %v2726, %v2728
    %v2731 = vld [vmem:[%s3] sm:$0xff]
    %v2732 = vld [vmem:[%s3 + $0x8] sm:$0xff]
    %v2733 = vld [vmem:[%s3 + $0x10] sm:$0xff]
    %v2734 = vld [vmem:[%s12] sm:$0xff]
    %v2735 = vld [vmem:[%s12 + $0x8] sm:$0xff]
    %v2736 = vld [vmem:[%s12 + $0x10] sm:$0xff]
    %v2737 = vld [vmem:[%s12 + $0x18] sm:$0xff]
    %v2738 = vld [vmem:[%s12 + $0x20] sm:$0xff]
    %v2739 = vld [vmem:[%s12 + $0x28] sm:$0xff]
    %v2740 = vld [vmem:[%s12 + $0x30] sm:$0xff]
    %v2741 = vld [vmem:[%s12 + $0x38] sm:$0xff]
    %v2742 = vld [vmem:[%s13] sm:$0x1]
    %v2744 = vlaneseq
    %v2745 = vshrl.u32 %v2744, 7
    %v2746 = vsub.s32 0, %v2745
    %v2747 = vrot.slane %v2742, %v2746
    %vm2749 = vcmask 392192
    %v2751 = vsel %vm2749, %v2731, 0
    %v2754 = vsel %vm2749, %v2732, 0
    %v2757 = vsel %vm2749, %v2733, 0
    %v2760 = vsel %vm2749, %v2734, 0
    %v2763 = vsel %vm2749, %v2735, 0
    %v2766 = vsel %vm2749, %v2736, 0
    %v2769 = vsel %vm2749, %v2737, 0
    %v2772 = vsel %vm2749, %v2738, 0
    %v2775 = vsel %vm2749, %v2739, 0
    %v2778 = vsel %vm2749, %v2740, 0
    %v2781 = vsel %vm2749, %v2741, 0
    %2783 = vmatprep.subr.mxu0 0.0
    %2784 = vmatpush1.xpose.msra.mxu0 0.0
    %2785 = vmatprep.subr.mxu0 0.0
    %2786 = vmatpush1.xpose.msra.mxu0 0.0
    %2787 = vmatprep.subr.mxu0 0.0
    %2788 = vmatpush1.xpose.msra.mxu0 0.0
    %2789 = vmatprep.subr.mxu0 0.0
    %2790 = vmatpush1.xpose.msra.mxu0 0.0
    %2791 = vmatprep.subr.mxu0 0.0
    %2792 = vmatpush1.xpose.msra.mxu0 0.0
    %2793 = vmatprep.subr.mxu0 0.0
    %2794 = vmatpush1.xpose.msra.mxu0 0.0
    %2795 = vmatprep.subr.mxu0 0.0
    %2796 = vmatpush1.xpose.msra.mxu0 0.0
    %2797 = vmatprep.subr.mxu0 0.0
    %2798 = vmatpush1.xpose.msra.mxu0 0.0
    %2799 = vmatprep.subr.mxu0 0.0
    %2800 = vmatpush1.xpose.msra.mxu0 %v2781
    %2801 = vmatprep.subr.mxu0 0.0
    %2802 = vmatpush1.xpose.msra.mxu0 %v2778
    %2803 = vmatprep.subr.mxu0 0.0
    %2804 = vmatpush1.xpose.msra.mxu0 %v2775
    %2805 = vmatprep.subr.mxu0 0.0
    %2806 = vmatpush1.xpose.msra.mxu0 %v2772
    %2807 = vmatprep.subr.mxu0 0.0
    %2808 = vmatpush1.xpose.msra.mxu0 %v2769
    %2809 = vmatprep.subr.mxu0 0.0
    %2810 = vmatpush1.xpose.msra.mxu0 %v2766
    %2811 = vmatprep.subr.mxu0 0.0
    %2812 = vmatpush1.xpose.msra.mxu0 %v2763
    %2813 = vmatprep.subr.mxu0 0.0
    %2814 = vmatpush1.xpose.msra.mxu0 %v2760
    %2815 = vmatprep.subr.mxu0 0.0
    %2816 = vmatpush2.xpose.msra.mxu0 0.0
    %2817 = vmatprep.subr.mxu0 0.0
    %2818 = vmatpush2.xpose.msra.mxu0 0.0
    %2819 = vmatprep.subr.mxu0 0.0
    %2820 = vmatpush2.xpose.msra.mxu0 0.0
    %2821 = vmatprep.subr.mxu0 0.0
    %2822 = vmatpush2.xpose.msra.mxu0 0.0
    %2823 = vmatprep.subr.mxu0 0.0
    %2824 = vmatpush2.xpose.msra.mxu0 0.0
    %2825 = vmatprep.subr.mxu0 0.0
    %2826 = vmatpush2.xpose.msra.mxu0 0.0
    %2827 = vmatprep.subr.mxu0 0.0
    %2828 = vmatpush2.xpose.msra.mxu0 0.0
    %2829 = vmatprep.subr.mxu0 0.0
    %2830 = vmatpush2.xpose.msra.mxu0 0.0
    %2831 = vmatprep.subr.mxu0 0.0
    %2832 = vmatpush2.xpose.msra.mxu0 0.0
    %2833 = vmatprep.subr.mxu0 0.0
    %2834 = vmatpush2.xpose.msra.mxu0 0.0
    %2835 = vmatprep.subr.mxu0 0.0
    %2836 = vmatpush2.xpose.msra.mxu0 0.0
    %2837 = vmatprep.subr.mxu0 0.0
    %2838 = vmatpush2.xpose.msra.mxu0 0.0
    %2839 = vmatprep.subr.mxu0 0.0
    %2840 = vmatpush2.xpose.msra.mxu0 0.0
    %2841 = vmatprep.subr.mxu0 0.0
    %2842 = vmatpush2.xpose.msra.mxu0 0.0
    %2843 = vmatprep.subr.mxu0 0.0
    %2844 = vmatpush2.xpose.msra.mxu0 0.0
    %2845 = vmatprep.subr.mxu0 0.0
    %2846 = vmatpush2.xpose.msra.mxu0 0.0
    %2847 = vmatprep.mubr.f32.mxu0 0.0
    %2848 = vmatmul.mubr.f32.gmra.mxu0 %v2751
    %v2849 = vpop.f32.mrf.mxu0
    %v2850 = vadd.f32 %v2747, %v2849
    %v2851 = vpop.f32.mrf.mxu0
    %2852 = vmatprep.mubr.f32.mxu0 0.0
    %2853 = vmatmul.mubr.f32.gmra.mxu0 %v2754
    %v2854 = vpop.f32.mrf.mxu0
    %v2855 = vadd.f32 %v2747, %v2854
    %v2856 = vpop.f32.mrf.mxu0
    %2857 = vmatprep.mubr.f32.mxu0 0.0
    %2858 = vmatmul.mubr.f32.gmra.mxu0 %v2757
    %v2859 = vpop.f32.mrf.mxu0
    %v2860 = vadd.f32 %v2747, %v2859
    %v2861 = vpop.f32.mrf.mxu0
    %2862 = vdwg.mxu0
    %v2863 = vld [vmem:[%s8] sm:$0xff]
    %v2864 = vld [vmem:[%s8 + $0x8] sm:$0xff]
    %v2865 = vld [vmem:[%s8 + $0x10] sm:$0xff]
    %v2866 = vld [vmem:[%s8 + $0x18] sm:$0xff]
    %v2867 = vld [vmem:[%s8 + $0x20] sm:$0xff]
    %v2868 = vld [vmem:[%s8 + $0x28] sm:$0xff]
    %v2869 = vld [vmem:[%s8 + $0x30] sm:$0xff]
    %v2870 = vld [vmem:[%s8 + $0x38] sm:$0xff]
    %v2871 = vld [vmem:[%s8 + $0x40] sm:$0xff]
    %v2872 = vld [vmem:[%s8 + $0x48] sm:$0xff]
    %v2873 = vld [vmem:[%s8 + $0x50] sm:$0xff]
    %v2874 = vld [vmem:[%s8 + $0x58] sm:$0xff]
    %v2875 = vld [vmem:[%s8 + $0x60] sm:$0xff]
    %v2876 = vld [vmem:[%s8 + $0x68] sm:$0xff]
    %v2877 = vld [vmem:[%s8 + $0x70] sm:$0xff]
    %v2878 = vld [vmem:[%s8 + $0x78] sm:$0xff]
    %v2879 = vld [vmem:[%s8 + $0x80] sm:$0xff]
    %v2880 = vld [vmem:[%s8 + $0x88] sm:$0xff]
    %v2881 = vld [vmem:[%s8 + $0x90] sm:$0xff]
    %v2882 = vld [vmem:[%s8 + $0x98] sm:$0xff]
    %v2883 = vld [vmem:[%s8 + $0xa0] sm:$0xff]
    %v2884 = vld [vmem:[%s8 + $0xa8] sm:$0xff]
    %v2885 = vld [vmem:[%s8 + $0xb0] sm:$0xff]
    %v2886 = vld [vmem:[%s8 + $0xb8] sm:$0xff]
    %v2887 = vld [vmem:[%s9] sm:$0x7]
    %v2888 = vld [vmem:[%s10] sm:$0xff]
    %v2889 = vld [vmem:[%s10 + $0x8] sm:$0xff]
    %v2890 = vld [vmem:[%s10 + $0x10] sm:$0xff]
    %v2891 = vld [vmem:[%s10 + $0x18] sm:$0xff]
    %v2892 = vld [vmem:[%s10 + $0x20] sm:$0xff]
    %v2893 = vld [vmem:[%s10 + $0x28] sm:$0xff]
    %v2894 = vld [vmem:[%s10 + $0x30] sm:$0xff]
    %v2895 = vld [vmem:[%s10 + $0x38] sm:$0xff]
    %v2896 = vld [vmem:[%s11] sm:$0x1]
    %v2897 = vlaneseq
    %v2898 = vshrl.u32 %v2897, 7
    %v2899 = vsub.s32 0, %v2898
    %v2900 = vrot.slane %v2887, %v2899
    %v2902 = vsel %vm103, %v2729, 0
    %v2905 = vsel %vm103, %v2730, 0
    %v2908 = vsel %vm103, %v2863, 0
    %v2911 = vsel %vm103, %v2864, 0
    %v2914 = vsel %vm103, %v2865, 0
    %v2917 = vsel %vm103, %v2866, 0
    %v2920 = vsel %vm103, %v2867, 0
    %v2923 = vsel %vm103, %v2868, 0
    %v2926 = vsel %vm103, %v2869, 0
    %v2929 = vsel %vm103, %v2870, 0
    %2931 = vmatprep.subr.mxu0 0.0
    %2932 = vmatpush1.xpose.msra.mxu0 0.0
    %2933 = vmatprep.subr.mxu0 0.0
    %2934 = vmatpush1.xpose.msra.mxu0 0.0
    %2935 = vmatprep.subr.mxu0 0.0
    %2936 = vmatpush1.xpose.msra.mxu0 0.0
    %2937 = vmatprep.subr.mxu0 0.0
    %2938 = vmatpush1.xpose.msra.mxu0 0.0
    %2939 = vmatprep.subr.mxu0 0.0
    %2940 = vmatpush1.xpose.msra.mxu0 0.0
    %2941 = vmatprep.subr.mxu0 0.0
    %2942 = vmatpush1.xpose.msra.mxu0 0.0
    %2943 = vmatprep.subr.mxu0 0.0
    %2944 = vmatpush1.xpose.msra.mxu0 0.0
    %2945 = vmatprep.subr.mxu0 0.0
    %2946 = vmatpush1.xpose.msra.mxu0 0.0
    %2947 = vmatprep.subr.mxu0 0.0
    %2948 = vmatpush1.xpose.msra.mxu0 %v2929
    %2949 = vmatprep.subr.mxu0 0.0
    %2950 = vmatpush1.xpose.msra.mxu0 %v2926
    %2951 = vmatprep.subr.mxu0 0.0
    %2952 = vmatpush1.xpose.msra.mxu0 %v2923
    %2953 = vmatprep.subr.mxu0 0.0
    %2954 = vmatpush1.xpose.msra.mxu0 %v2920
    %2955 = vmatprep.subr.mxu0 0.0
    %2956 = vmatpush1.xpose.msra.mxu0 %v2917
    %2957 = vmatprep.subr.mxu0 0.0
    %2958 = vmatpush1.xpose.msra.mxu0 %v2914
    %2959 = vmatprep.subr.mxu0 0.0
    %2960 = vmatpush1.xpose.msra.mxu0 %v2911
    %2961 = vmatprep.subr.mxu0 0.0
    %2962 = vmatpush1.xpose.msra.mxu0 %v2908
    %2963 = vmatprep.subr.mxu0 0.0
    %2964 = vmatpush2.xpose.msra.mxu0 0.0
    %2965 = vmatprep.subr.mxu0 0.0
    %2966 = vmatpush2.xpose.msra.mxu0 0.0
    %2967 = vmatprep.subr.mxu0 0.0
    %2968 = vmatpush2.xpose.msra.mxu0 0.0
    %2969 = vmatprep.subr.mxu0 0.0
    %2970 = vmatpush2.xpose.msra.mxu0 0.0
    %2971 = vmatprep.subr.mxu0 0.0
    %2972 = vmatpush2.xpose.msra.mxu0 0.0
    %2973 = vmatprep.subr.mxu0 0.0
    %2974 = vmatpush2.xpose.msra.mxu0 0.0
    %2975 = vmatprep.subr.mxu0 0.0
    %2976 = vmatpush2.xpose.msra.mxu0 0.0
    %2977 = vmatprep.subr.mxu0 0.0
    %2978 = vmatpush2.xpose.msra.mxu0 0.0
    %2979 = vmatprep.subr.mxu0 0.0
    %2980 = vmatpush2.xpose.msra.mxu0 0.0
    %2981 = vmatprep.subr.mxu0 0.0
    %2982 = vmatpush2.xpose.msra.mxu0 0.0
    %2983 = vmatprep.subr.mxu0 0.0
    %2984 = vmatpush2.xpose.msra.mxu0 0.0
    %2985 = vmatprep.subr.mxu0 0.0
    %2986 = vmatpush2.xpose.msra.mxu0 0.0
    %2987 = vmatprep.subr.mxu0 0.0
    %2988 = vmatpush2.xpose.msra.mxu0 0.0
    %2989 = vmatprep.subr.mxu0 0.0
    %2990 = vmatpush2.xpose.msra.mxu0 0.0
    %2991 = vmatprep.subr.mxu0 0.0
    %2992 = vmatpush2.xpose.msra.mxu0 0.0
    %2993 = vmatprep.subr.mxu0 0.0
    %2994 = vmatpush2.xpose.msra.mxu0 0.0
    %2995 = vmatprep.mubr.f32.mxu0 0.0
    %2996 = vmatmul.mubr.f32.gmra.mxu0 %v2902
    %v2997 = vpop.f32.mrf.mxu0
    %v2998 = vadd.f32 %v2900, %v2997
    %v2999 = vpop.f32.mrf.mxu0
    %3000 = vmatprep.mubr.f32.mxu0 0.0
    %3001 = vmatmul.mubr.f32.gmra.mxu0 %v2905
    %v3002 = vpop.f32.mrf.mxu0
    %v3003 = vadd.f32 %v2900, %v3002
    %v3004 = vpop.f32.mrf.mxu0
    %3005 = vdwg.mxu0
    %v3006 = vlaneseq
    %v3007 = vshrl.u32 %v3006, 7
    %v3008 = vsub.s32 1, %v3007
    %v3009 = vrot.slane %v2887, %v3008
    %v3011 = vsel %vm103, %v2850, 0
    %v3014 = vsel %vm103, %v2855, 0
    %v3017 = vsel %vm103, %v2860, 0
    %v3020 = vsel %vm103, %v2871, 0
    %v3023 = vsel %vm103, %v2872, 0
    %v3026 = vsel %vm103, %v2873, 0
    %v3029 = vsel %vm103, %v2874, 0
    %v3032 = vsel %vm103, %v2875, 0
    %v3035 = vsel %vm103, %v2876, 0
    %v3038 = vsel %vm103, %v2877, 0
    %v3041 = vsel %vm103, %v2878, 0
    %3043 = vmatprep.subr.mxu0 0.0
    %3044 = vmatpush1.xpose.msra.mxu0 0.0
    %3045 = vmatprep.subr.mxu0 0.0
    %3046 = vmatpush1.xpose.msra.mxu0 0.0
    %3047 = vmatprep.subr.mxu0 0.0
    %3048 = vmatpush1.xpose.msra.mxu0 0.0
    %3049 = vmatprep.subr.mxu0 0.0
    %3050 = vmatpush1.xpose.msra.mxu0 0.0
    %3051 = vmatprep.subr.mxu0 0.0
    %3052 = vmatpush1.xpose.msra.mxu0 0.0
    %3053 = vmatprep.subr.mxu0 0.0
    %3054 = vmatpush1.xpose.msra.mxu0 0.0
    %3055 = vmatprep.subr.mxu0 0.0
    %3056 = vmatpush1.xpose.msra.mxu0 0.0
    %3057 = vmatprep.subr.mxu0 0.0
    %3058 = vmatpush1.xpose.msra.mxu0 0.0
    %3059 = vmatprep.subr.mxu0 0.0
    %3060 = vmatpush1.xpose.msra.mxu0 %v3041
    %3061 = vmatprep.subr.mxu0 0.0
    %3062 = vmatpush1.xpose.msra.mxu0 %v3038
    %3063 = vmatprep.subr.mxu0 0.0
    %3064 = vmatpush1.xpose.msra.mxu0 %v3035
    %3065 = vmatprep.subr.mxu0 0.0
    %3066 = vmatpush1.xpose.msra.mxu0 %v3032
    %3067 = vmatprep.subr.mxu0 0.0
    %3068 = vmatpush1.xpose.msra.mxu0 %v3029
    %3069 = vmatprep.subr.mxu0 0.0
    %3070 = vmatpush1.xpose.msra.mxu0 %v3026
    %3071 = vmatprep.subr.mxu0 0.0
    %3072 = vmatpush1.xpose.msra.mxu0 %v3023
    %3073 = vmatprep.subr.mxu0 0.0
    %3074 = vmatpush1.xpose.msra.mxu0 %v3020
    %3075 = vmatprep.subr.mxu0 0.0
    %3076 = vmatpush2.xpose.msra.mxu0 0.0
    %3077 = vmatprep.subr.mxu0 0.0
    %3078 = vmatpush2.xpose.msra.mxu0 0.0
    %3079 = vmatprep.subr.mxu0 0.0
    %3080 = vmatpush2.xpose.msra.mxu0 0.0
    %3081 = vmatprep.subr.mxu0 0.0
    %3082 = vmatpush2.xpose.msra.mxu0 0.0
    %3083 = vmatprep.subr.mxu0 0.0
    %3084 = vmatpush2.xpose.msra.mxu0 0.0
    %3085 = vmatprep.subr.mxu0 0.0
    %3086 = vmatpush2.xpose.msra.mxu0 0.0
    %3087 = vmatprep.subr.mxu0 0.0
    %3088 = vmatpush2.xpose.msra.mxu0 0.0
    %3089 = vmatprep.subr.mxu0 0.0
    %3090 = vmatpush2.xpose.msra.mxu0 0.0
    %3091 = vmatprep.subr.mxu0 0.0
    %3092 = vmatpush2.xpose.msra.mxu0 0.0
    %3093 = vmatprep.subr.mxu0 0.0
    %3094 = vmatpush2.xpose.msra.mxu0 0.0
    %3095 = vmatprep.subr.mxu0 0.0
    %3096 = vmatpush2.xpose.msra.mxu0 0.0
    %3097 = vmatprep.subr.mxu0 0.0
    %3098 = vmatpush2.xpose.msra.mxu0 0.0
    %3099 = vmatprep.subr.mxu0 0.0
    %3100 = vmatpush2.xpose.msra.mxu0 0.0
    %3101 = vmatprep.subr.mxu0 0.0
    %3102 = vmatpush2.xpose.msra.mxu0 0.0
    %3103 = vmatprep.subr.mxu0 0.0
    %3104 = vmatpush2.xpose.msra.mxu0 0.0
    %3105 = vmatprep.subr.mxu0 0.0
    %3106 = vmatpush2.xpose.msra.mxu0 0.0
    %3107 = vmatprep.mubr.f32.mxu0 0.0
    %3108 = vmatmul.mubr.f32.gmra.mxu0 %v3011
    %v3109 = vpop.f32.mrf.mxu0
    %v3110 = vadd.f32 %v3009, %v3109
    %v3111 = vpop.f32.mrf.mxu0
    %3112 = vmatprep.mubr.f32.mxu0 0.0
    %3113 = vmatmul.mubr.f32.gmra.mxu0 %v3014
    %v3114 = vpop.f32.mrf.mxu0
    %v3115 = vadd.f32 %v3009, %v3114
    %v3116 = vpop.f32.mrf.mxu0
    %3117 = vmatprep.mubr.f32.mxu0 0.0
    %3118 = vmatmul.mubr.f32.gmra.mxu0 %v3017
    %v3119 = vpop.f32.mrf.mxu0
    %v3120 = vadd.f32 %v3009, %v3119
    %v3121 = vpop.f32.mrf.mxu0
    %3122 = vdwg.mxu0
    %v3123 = vlaneseq
    %v3124 = vshrl.u32 %v3123, 7
    %v3125 = vsub.s32 2, %v3124
    %v3126 = vrot.slane %v2887, %v3125
    %v3128 = vsel %vm103, %v2879, 0
    %v3131 = vsel %vm103, %v2880, 0
    %v3134 = vsel %vm103, %v2881, 0
    %v3137 = vsel %vm103, %v2882, 0
    %v3140 = vsel %vm103, %v2883, 0
    %v3143 = vsel %vm103, %v2884, 0
    %v3146 = vsel %vm103, %v2885, 0
    %v3149 = vsel %vm103, %v2886, 0
    %3151 = vmatprep.subr.mxu0 0.0
    %3152 = vmatpush1.xpose.msra.mxu0 0.0
    %3153 = vmatprep.subr.mxu0 0.0
    %3154 = vmatpush1.xpose.msra.mxu0 0.0
    %3155 = vmatprep.subr.mxu0 0.0
    %3156 = vmatpush1.xpose.msra.mxu0 0.0
    %3157 = vmatprep.subr.mxu0 0.0
    %3158 = vmatpush1.xpose.msra.mxu0 0.0
    %3159 = vmatprep.subr.mxu0 0.0
    %3160 = vmatpush1.xpose.msra.mxu0 0.0
    %3161 = vmatprep.subr.mxu0 0.0
    %3162 = vmatpush1.xpose.msra.mxu0 0.0
    %3163 = vmatprep.subr.mxu0 0.0
    %3164 = vmatpush1.xpose.msra.mxu0 0.0
    %3165 = vmatprep.subr.mxu0 0.0
    %3166 = vmatpush1.xpose.msra.mxu0 0.0
    %3167 = vmatprep.subr.mxu0 0.0
    %3168 = vmatpush1.xpose.msra.mxu0 %v3149
    %3169 = vmatprep.subr.mxu0 0.0
    %3170 = vmatpush1.xpose.msra.mxu0 %v3146
    %3171 = vmatprep.subr.mxu0 0.0
    %3172 = vmatpush1.xpose.msra.mxu0 %v3143
    %3173 = vmatprep.subr.mxu0 0.0
    %3174 = vmatpush1.xpose.msra.mxu0 %v3140
    %3175 = vmatprep.subr.mxu0 0.0
    %3176 = vmatpush1.xpose.msra.mxu0 %v3137
    %3177 = vmatprep.subr.mxu0 0.0
    %3178 = vmatpush1.xpose.msra.mxu0 %v3134
    %3179 = vmatprep.subr.mxu0 0.0
    %3180 = vmatpush1.xpose.msra.mxu0 %v3131
    %3181 = vmatprep.subr.mxu0 0.0
    %3182 = vmatpush1.xpose.msra.mxu0 %v3128
    %3183 = vmatprep.subr.mxu0 0.0
    %3184 = vmatpush2.xpose.msra.mxu0 0.0
    %3185 = vmatprep.subr.mxu0 0.0
    %3186 = vmatpush2.xpose.msra.mxu0 0.0
    %3187 = vmatprep.subr.mxu0 0.0
    %3188 = vmatpush2.xpose.msra.mxu0 0.0
    %3189 = vmatprep.subr.mxu0 0.0
    %3190 = vmatpush2.xpose.msra.mxu0 0.0
    %3191 = vmatprep.subr.mxu0 0.0
    %3192 = vmatpush2.xpose.msra.mxu0 0.0
    %3193 = vmatprep.subr.mxu0 0.0
    %3194 = vmatpush2.xpose.msra.mxu0 0.0
    %3195 = vmatprep.subr.mxu0 0.0
    %3196 = vmatpush2.xpose.msra.mxu0 0.0
    %3197 = vmatprep.subr.mxu0 0.0
    %3198 = vmatpush2.xpose.msra.mxu0 0.0
    %3199 = vmatprep.subr.mxu0 0.0
    %3200 = vmatpush2.xpose.msra.mxu0 0.0
    %3201 = vmatprep.subr.mxu0 0.0
    %3202 = vmatpush2.xpose.msra.mxu0 0.0
    %3203 = vmatprep.subr.mxu0 0.0
    %3204 = vmatpush2.xpose.msra.mxu0 0.0
    %3205 = vmatprep.subr.mxu0 0.0
    %3206 = vmatpush2.xpose.msra.mxu0 0.0
    %3207 = vmatprep.subr.mxu0 0.0
    %3208 = vmatpush2.xpose.msra.mxu0 0.0
    %3209 = vmatprep.subr.mxu0 0.0
    %3210 = vmatpush2.xpose.msra.mxu0 0.0
    %3211 = vmatprep.subr.mxu0 0.0
    %3212 = vmatpush2.xpose.msra.mxu0 0.0
    %3213 = vmatprep.subr.mxu0 0.0
    %3214 = vmatpush2.xpose.msra.mxu0 0.0
    %3215 = vmatprep.mubr.f32.mxu0 0.0
    %3216 = vmatmul.mubr.f32.gmra.mxu0 %v3011
    %v3217 = vpop.f32.mrf.mxu0
    %v3218 = vadd.f32 %v3126, %v3217
    %v3219 = vpop.f32.mrf.mxu0
    %3220 = vmatprep.mubr.f32.mxu0 0.0
    %3221 = vmatmul.mubr.f32.gmra.mxu0 %v3014
    %v3222 = vpop.f32.mrf.mxu0
    %v3223 = vadd.f32 %v3126, %v3222
    %v3224 = vpop.f32.mrf.mxu0
    %3225 = vmatprep.mubr.f32.mxu0 0.0
    %3226 = vmatmul.mubr.f32.gmra.mxu0 %v3017
    %v3227 = vpop.f32.mrf.mxu0
    %v3228 = vadd.f32 %v3126, %v3227
    %v3229 = vpop.f32.mrf.mxu0
    %3230 = vdwg.mxu0
    %v3232 = vsel %vm421, %v2998, 0
    %v3235 = vsel %vm421, %v3003, 0
    %v3238 = vsel %vm421, %v3110, 0
    %v3241 = vsel %vm421, %v3115, 0
    %v3244 = vsel %vm421, %v3120, 0
    %3246 = vmatprep.subr.mxu0 0.0
    %3247 = vmatpush1.xpose.msra.mxu0 0.0
    %3248 = vmatprep.subr.mxu0 0.0
    %3249 = vmatpush1.xpose.msra.mxu0 0.0
    %3250 = vmatprep.subr.mxu0 0.0
    %3251 = vmatpush1.xpose.msra.mxu0 0.0
    %3252 = vmatprep.subr.mxu0 0.0
    %3253 = vmatpush1.xpose.msra.mxu0 0.0
    %3254 = vmatprep.subr.mxu0 0.0
    %3255 = vmatpush1.xpose.msra.mxu0 0.0
    %3256 = vmatprep.subr.mxu0 0.0
    %3257 = vmatpush1.xpose.msra.mxu0 0.0
    %3258 = vmatprep.subr.mxu0 0.0
    %3259 = vmatpush1.xpose.msra.mxu0 0.0
    %3260 = vmatprep.subr.mxu0 0.0
    %3261 = vmatpush1.xpose.msra.mxu0 0.0
    %3262 = vmatprep.subr.mxu0 0.0
    %3263 = vmatpush1.xpose.msra.mxu0 0.0
    %3264 = vmatprep.subr.mxu0 0.0
    %3265 = vmatpush1.xpose.msra.mxu0 0.0
    %3266 = vmatprep.subr.mxu0 0.0
    %3267 = vmatpush1.xpose.msra.mxu0 0.0
    %3268 = vmatprep.subr.mxu0 0.0
    %3269 = vmatpush1.xpose.msra.mxu0 0.0
    %3270 = vmatprep.subr.mxu0 0.0
    %3271 = vmatpush1.xpose.msra.mxu0 0.0
    %3272 = vmatprep.subr.mxu0 0.0
    %3273 = vmatpush1.xpose.msra.mxu0 %v3244
    %3274 = vmatprep.subr.mxu0 0.0
    %3275 = vmatpush1.xpose.msra.mxu0 %v3241
    %3276 = vmatprep.subr.mxu0 0.0
    %3277 = vmatpush1.xpose.msra.mxu0 %v3238
    %3278 = vmatprep.subr.mxu0 0.0
    %3279 = vmatpush2.xpose.msra.mxu0 0.0
    %3280 = vmatprep.subr.mxu0 0.0
    %3281 = vmatpush2.xpose.msra.mxu0 0.0
    %3282 = vmatprep.subr.mxu0 0.0
    %3283 = vmatpush2.xpose.msra.mxu0 0.0
    %3284 = vmatprep.subr.mxu0 0.0
    %3285 = vmatpush2.xpose.msra.mxu0 0.0
    %3286 = vmatprep.subr.mxu0 0.0
    %3287 = vmatpush2.xpose.msra.mxu0 0.0
    %3288 = vmatprep.subr.mxu0 0.0
    %3289 = vmatpush2.xpose.msra.mxu0 0.0
    %3290 = vmatprep.subr.mxu0 0.0
    %3291 = vmatpush2.xpose.msra.mxu0 0.0
    %3292 = vmatprep.subr.mxu0 0.0
    %3293 = vmatpush2.xpose.msra.mxu0 0.0
    %3294 = vmatprep.subr.mxu0 0.0
    %3295 = vmatpush2.xpose.msra.mxu0 0.0
    %3296 = vmatprep.subr.mxu0 0.0
    %3297 = vmatpush2.xpose.msra.mxu0 0.0
    %3298 = vmatprep.subr.mxu0 0.0
    %3299 = vmatpush2.xpose.msra.mxu0 0.0
    %3300 = vmatprep.subr.mxu0 0.0
    %3301 = vmatpush2.xpose.msra.mxu0 0.0
    %3302 = vmatprep.subr.mxu0 0.0
    %3303 = vmatpush2.xpose.msra.mxu0 0.0
    %3304 = vmatprep.subr.mxu0 0.0
    %3305 = vmatpush2.xpose.msra.mxu0 0.0
    %3306 = vmatprep.subr.mxu0 0.0
    %3307 = vmatpush2.xpose.msra.mxu0 0.0
    %3308 = vmatprep.subr.mxu0 0.0
    %3309 = vmatpush2.xpose.msra.mxu0 0.0
    %3310 = vmatprep.mubr.f32.mxu0 0.0
    %3311 = vmatmul.mubr.f32.gmra.mxu0 %v3232
    %v3312 = vpop.f32.mrf.mxu0
    %v3313 = vadd.f32 0.0, %v3312
    %v3314 = vpop.f32.mrf.mxu0
    %3315 = vmatprep.mubr.f32.mxu0 0.0
    %3316 = vmatmul.mubr.f32.gmra.mxu0 %v3235
    %v3317 = vpop.f32.mrf.mxu0
    %v3318 = vadd.f32 0.0, %v3317
    %v3319 = vpop.f32.mrf.mxu0
    %3320 = vdwg.mxu0
    %v3321 = vmul.f32 %v3313, 0.35355338
    %v3322 = vmul.f32 %v3318, 0.35355338
    %v3323 = vadd.f32 %v3321, %v63
    %v3324 = vadd.f32 %v3322, %v64
    %vm3325 = vcmask 195584
    %v3326 = vsel %vm3325, %v3323, -inf
    %3327 = vmax.xlane.f32.xlu0 %v3326
    %v3328 = vpop.xlane.xlu0 %3327
    %v3329 = vsel %vm3325, %v3324, -inf
    %3330 = vmax.xlane.f32.xlu0 %v3329
    %v3331 = vpop.xlane.xlu0 %3330
    %v3332 = vsub.f32 %v3323, %v3328
    %v3333 = vsub.f32 %v3324, %v3331
    %v3334 = vmul.f32 %v3332, 1.442695
    %v3335 = vpow.pop %v3334
    %v3336 = vmul.f32 %v3333, 1.442695
    %v3337 = vpow.pop %v3336
    %v3338 = vsel %vm3325, %v3335, 0.0
    %3339 = vadd.xlane.f32.xlu0 %v3338
    %v3340 = vpop.xlane.xlu0 %3339
    %v3341 = vsel %vm3325, %v3337, 0.0
    %3342 = vadd.xlane.f32.xlu0 %v3341
    %v3343 = vpop.xlane.xlu0 %3342
    %v3344 = vrcp.pop %v3340
    %v3345 = vmul.f32 %v3335, %v3344
    %v3346 = vrcp.pop %v3343
    %v3347 = vmul.f32 %v3337, %v3346
    %v3349 = vsel %vm3325, %v3345, 0
    %v3352 = vsel %vm3325, %v3347, 0
    %3354 = vmatprep.subr.mxu0 0.0
    %3355 = vmatpush1.msra.mxu0 0.0
    %3356 = vmatprep.subr.mxu0 0.0
    %3357 = vmatpush1.msra.mxu0 0.0
    %3358 = vmatprep.subr.mxu0 0.0
    %3359 = vmatpush1.msra.mxu0 0.0
    %3360 = vmatprep.subr.mxu0 0.0
    %3361 = vmatpush1.msra.mxu0 0.0
    %3362 = vmatprep.subr.mxu0 0.0
    %3363 = vmatpush1.msra.mxu0 0.0
    %3364 = vmatprep.subr.mxu0 0.0
    %3365 = vmatpush1.msra.mxu0 0.0
    %3366 = vmatprep.subr.mxu0 0.0
    %3367 = vmatpush1.msra.mxu0 0.0
    %3368 = vmatprep.subr.mxu0 0.0
    %3369 = vmatpush1.msra.mxu0 0.0
    %3370 = vmatprep.subr.mxu0 0.0
    %3371 = vmatpush1.msra.mxu0 0.0
    %3372 = vmatprep.subr.mxu0 0.0
    %3373 = vmatpush1.msra.mxu0 0.0
    %3374 = vmatprep.subr.mxu0 0.0
    %3375 = vmatpush1.msra.mxu0 0.0
    %3376 = vmatprep.subr.mxu0 0.0
    %3377 = vmatpush1.msra.mxu0 0.0
    %3378 = vmatprep.subr.mxu0 0.0
    %3379 = vmatpush1.msra.mxu0 0.0
    %3380 = vmatprep.subr.mxu0 0.0
    %3381 = vmatpush1.msra.mxu0 %v3228
    %3382 = vmatprep.subr.mxu0 0.0
    %3383 = vmatpush1.msra.mxu0 %v3223
    %3384 = vmatprep.subr.mxu0 0.0
    %3385 = vmatpush1.msra.mxu0 %v3218
    %3386 = vmatprep.subr.mxu0 0.0
    %3387 = vmatpush2.msra.mxu0 0.0
    %3388 = vmatprep.subr.mxu0 0.0
    %3389 = vmatpush2.msra.mxu0 0.0
    %3390 = vmatprep.subr.mxu0 0.0
    %3391 = vmatpush2.msra.mxu0 0.0
    %3392 = vmatprep.subr.mxu0 0.0
    %3393 = vmatpush2.msra.mxu0 0.0
    %3394 = vmatprep.subr.mxu0 0.0
    %3395 = vmatpush2.msra.mxu0 0.0
    %3396 = vmatprep.subr.mxu0 0.0
    %3397 = vmatpush2.msra.mxu0 0.0
    %3398 = vmatprep.subr.mxu0 0.0
    %3399 = vmatpush2.msra.mxu0 0.0
    %3400 = vmatprep.subr.mxu0 0.0
    %3401 = vmatpush2.msra.mxu0 0.0
    %3402 = vmatprep.subr.mxu0 0.0
    %3403 = vmatpush2.msra.mxu0 0.0
    %3404 = vmatprep.subr.mxu0 0.0
    %3405 = vmatpush2.msra.mxu0 0.0
    %3406 = vmatprep.subr.mxu0 0.0
    %3407 = vmatpush2.msra.mxu0 0.0
    %3408 = vmatprep.subr.mxu0 0.0
    %3409 = vmatpush2.msra.mxu0 0.0
    %3410 = vmatprep.subr.mxu0 0.0
    %3411 = vmatpush2.msra.mxu0 0.0
    %3412 = vmatprep.subr.mxu0 0.0
    %3413 = vmatpush2.msra.mxu0 0.0
    %3414 = vmatprep.subr.mxu0 0.0
    %3415 = vmatpush2.msra.mxu0 0.0
    %3416 = vmatprep.subr.mxu0 0.0
    %3417 = vmatpush2.msra.mxu0 0.0
    %3418 = vmatprep.mubr.f32.mxu0 0.0
    %3419 = vmatmul.mubr.f32.gmra.mxu0 %v3349
    %v3420 = vpop.f32.mrf.mxu0
    %v3421 = vadd.f32 0.0, %v3420
    %v3422 = vpop.f32.mrf.mxu0
    %3423 = vmatprep.mubr.f32.mxu0 0.0
    %3424 = vmatmul.mubr.f32.gmra.mxu0 %v3352
    %v3425 = vpop.f32.mrf.mxu0
    %v3426 = vadd.f32 0.0, %v3425
    %v3427 = vpop.f32.mrf.mxu0
    %3428 = vdwg.mxu0
    %3429 = vrot.lane.b32.xlu0 %v2998, 120
    %v3430 = vpop.permute.xlu0 %3429
    %3431 = vrot.lane.b32.xlu0 %v3003, 120
    %v3432 = vpop.permute.xlu0 %3431
    %3433 = vrot.lane.b32.xlu0 %v3110, 120
    %v3434 = vpop.permute.xlu0 %3433
    %3435 = vrot.lane.b32.xlu0 %v3115, 120
    %v3436 = vpop.permute.xlu0 %3435
    %3437 = vrot.lane.b32.xlu0 %v3120, 120
    %v3438 = vpop.permute.xlu0 %3437
    %v3439 = vsel %vm421, %v3430, 0
    %v3441 = vsel %vm421, %v3432, 0
    %v3443 = vsel %vm421, %v3434, 0
    %v3445 = vsel %vm421, %v3436, 0
    %v3447 = vsel %vm421, %v3438, 0
    %3449 = vmatprep.subr.mxu0 0.0
    %3450 = vmatpush1.xpose.msra.mxu0 0.0
    %3451 = vmatprep.subr.mxu0 0.0
    %3452 = vmatpush1.xpose.msra.mxu0 0.0
    %3453 = vmatprep.subr.mxu0 0.0
    %3454 = vmatpush1.xpose.msra.mxu0 0.0
    %3455 = vmatprep.subr.mxu0 0.0
    %3456 = vmatpush1.xpose.msra.mxu0 0.0
    %3457 = vmatprep.subr.mxu0 0.0
    %3458 = vmatpush1.xpose.msra.mxu0 0.0
    %3459 = vmatprep.subr.mxu0 0.0
    %3460 = vmatpush1.xpose.msra.mxu0 0.0
    %3461 = vmatprep.subr.mxu0 0.0
    %3462 = vmatpush1.xpose.msra.mxu0 0.0
    %3463 = vmatprep.subr.mxu0 0.0
    %3464 = vmatpush1.xpose.msra.mxu0 0.0
    %3465 = vmatprep.subr.mxu0 0.0
    %3466 = vmatpush1.xpose.msra.mxu0 0.0
    %3467 = vmatprep.subr.mxu0 0.0
    %3468 = vmatpush1.xpose.msra.mxu0 0.0
    %3469 = vmatprep.subr.mxu0 0.0
    %3470 = vmatpush1.xpose.msra.mxu0 0.0
    %3471 = vmatprep.subr.mxu0 0.0
    %3472 = vmatpush1.xpose.msra.mxu0 0.0
    %3473 = vmatprep.subr.mxu0 0.0
    %3474 = vmatpush1.xpose.msra.mxu0 0.0
    %3475 = vmatprep.subr.mxu0 0.0
    %3476 = vmatpush1.xpose.msra.mxu0 %v3447
    %3477 = vmatprep.subr.mxu0 0.0
    %3478 = vmatpush1.xpose.msra.mxu0 %v3445
    %3479 = vmatprep.subr.mxu0 0.0
    %3480 = vmatpush1.xpose.msra.mxu0 %v3443
    %3481 = vmatprep.subr.mxu0 0.0
    %3482 = vmatpush2.xpose.msra.mxu0 0.0
    %3483 = vmatprep.subr.mxu0 0.0
    %3484 = vmatpush2.xpose.msra.mxu0 0.0
    %3485 = vmatprep.subr.mxu0 0.0
    %3486 = vmatpush2.xpose.msra.mxu0 0.0
    %3487 = vmatprep.subr.mxu0 0.0
    %3488 = vmatpush2.xpose.msra.mxu0 0.0
    %3489 = vmatprep.subr.mxu0 0.0
    %3490 = vmatpush2.xpose.msra.mxu0 0.0
    %3491 = vmatprep.subr.mxu0 0.0
    %3492 = vmatpush2.xpose.msra.mxu0 0.0
    %3493 = vmatprep.subr.mxu0 0.0
    %3494 = vmatpush2.xpose.msra.mxu0 0.0
    %3495 = vmatprep.subr.mxu0 0.0
    %3496 = vmatpush2.xpose.msra.mxu0 0.0
    %3497 = vmatprep.subr.mxu0 0.0
    %3498 = vmatpush2.xpose.msra.mxu0 0.0
    %3499 = vmatprep.subr.mxu0 0.0
    %3500 = vmatpush2.xpose.msra.mxu0 0.0
    %3501 = vmatprep.subr.mxu0 0.0
    %3502 = vmatpush2.xpose.msra.mxu0 0.0
    %3503 = vmatprep.subr.mxu0 0.0
    %3504 = vmatpush2.xpose.msra.mxu0 0.0
    %3505 = vmatprep.subr.mxu0 0.0
    %3506 = vmatpush2.xpose.msra.mxu0 0.0
    %3507 = vmatprep.subr.mxu0 0.0
    %3508 = vmatpush2.xpose.msra.mxu0 0.0
    %3509 = vmatprep.subr.mxu0 0.0
    %3510 = vmatpush2.xpose.msra.mxu0 0.0
    %3511 = vmatprep.subr.mxu0 0.0
    %3512 = vmatpush2.xpose.msra.mxu0 0.0
    %3513 = vmatprep.mubr.f32.mxu0 0.0
    %3514 = vmatmul.mubr.f32.gmra.mxu0 %v3439
    %v3515 = vpop.f32.mrf.mxu0
    %v3516 = vadd.f32 0.0, %v3515
    %v3517 = vpop.f32.mrf.mxu0
    %3518 = vmatprep.mubr.f32.mxu0 0.0
    %3519 = vmatmul.mubr.f32.gmra.mxu0 %v3441
    %v3520 = vpop.f32.mrf.mxu0
    %v3521 = vadd.f32 0.0, %v3520
    %v3522 = vpop.f32.mrf.mxu0
    %3523 = vdwg.mxu0
    %v3524 = vmul.f32 %v3516, 0.35355338
    %v3525 = vmul.f32 %v3521, 0.35355338
    %v3526 = vadd.f32 %v3524, %v63
    %v3527 = vadd.f32 %v3525, %v64
    %v3528 = vsel %vm3325, %v3526, -inf
    %3529 = vmax.xlane.f32.xlu0 %v3528
    %v3530 = vpop.xlane.xlu0 %3529
    %v3531 = vsel %vm3325, %v3527, -inf
    %3532 = vmax.xlane.f32.xlu0 %v3531
    %v3533 = vpop.xlane.xlu0 %3532
    %v3534 = vsub.f32 %v3526, %v3530
    %v3535 = vsub.f32 %v3527, %v3533
    %v3536 = vmul.f32 %v3534, 1.442695
    %v3537 = vpow.pop %v3536
    %v3538 = vmul.f32 %v3535, 1.442695
    %v3539 = vpow.pop %v3538
    %v3540 = vsel %vm3325, %v3537, 0.0
    %3541 = vadd.xlane.f32.xlu0 %v3540
    %v3542 = vpop.xlane.xlu0 %3541
    %v3543 = vsel %vm3325, %v3539, 0.0
    %3544 = vadd.xlane.f32.xlu0 %v3543
    %v3545 = vpop.xlane.xlu0 %3544
    %v3546 = vrcp.pop %v3542
    %v3547 = vmul.f32 %v3537, %v3546
    %v3548 = vrcp.pop %v3545
    %v3549 = vmul.f32 %v3539, %v3548
    %3553 = vrot.lane.b32.xlu0 %v3218, 120
    %v3554 = vpop.permute.xlu0 %3553
    %3555 = vrot.lane.b32.xlu0 %v3223, 120
    %v3556 = vpop.permute.xlu0 %3555
    %3557 = vrot.lane.b32.xlu0 %v3228, 120
    %v3558 = vpop.permute.xlu0 %3557
    %v3563 = vsel %vm3325, %v3547, 0
    %v3566 = vsel %vm3325, %v3549, 0
    %3568 = vmatprep.subr.mxu0 0.0
    %3569 = vmatpush1.msra.mxu0 0.0
    %3570 = vmatprep.subr.mxu0 0.0
    %3571 = vmatpush1.msra.mxu0 0.0
    %3572 = vmatprep.subr.mxu0 0.0
    %3573 = vmatpush1.msra.mxu0 0.0
    %3574 = vmatprep.subr.mxu0 0.0
    %3575 = vmatpush1.msra.mxu0 0.0
    %3576 = vmatprep.subr.mxu0 0.0
    %3577 = vmatpush1.msra.mxu0 0.0
    %3578 = vmatprep.subr.mxu0 0.0
    %3579 = vmatpush1.msra.mxu0 0.0
    %3580 = vmatprep.subr.mxu0 0.0
    %3581 = vmatpush1.msra.mxu0 0.0
    %3582 = vmatprep.subr.mxu0 0.0
    %3583 = vmatpush1.msra.mxu0 0.0
    %3584 = vmatprep.subr.mxu0 0.0
    %3585 = vmatpush1.msra.mxu0 0.0
    %3586 = vmatprep.subr.mxu0 0.0
    %3587 = vmatpush1.msra.mxu0 0.0
    %3588 = vmatprep.subr.mxu0 0.0
    %3589 = vmatpush1.msra.mxu0 0.0
    %3590 = vmatprep.subr.mxu0 0.0
    %3591 = vmatpush1.msra.mxu0 0.0
    %3592 = vmatprep.subr.mxu0 0.0
    %3593 = vmatpush1.msra.mxu0 0.0
    %3594 = vmatprep.subr.mxu0 0.0
    %3595 = vmatpush1.msra.mxu0 %v3558
    %3596 = vmatprep.subr.mxu0 0.0
    %3597 = vmatpush1.msra.mxu0 %v3556
    %3598 = vmatprep.subr.mxu0 0.0
    %3599 = vmatpush1.msra.mxu0 %v3554
    %3600 = vmatprep.subr.mxu0 0.0
    %3601 = vmatpush2.msra.mxu0 0.0
    %3602 = vmatprep.subr.mxu0 0.0
    %3603 = vmatpush2.msra.mxu0 0.0
    %3604 = vmatprep.subr.mxu0 0.0
    %3605 = vmatpush2.msra.mxu0 0.0
    %3606 = vmatprep.subr.mxu0 0.0
    %3607 = vmatpush2.msra.mxu0 0.0
    %3608 = vmatprep.subr.mxu0 0.0
    %3609 = vmatpush2.msra.mxu0 0.0
    %3610 = vmatprep.subr.mxu0 0.0
    %3611 = vmatpush2.msra.mxu0 0.0
    %3612 = vmatprep.subr.mxu0 0.0
    %3613 = vmatpush2.msra.mxu0 0.0
    %3614 = vmatprep.subr.mxu0 0.0
    %3615 = vmatpush2.msra.mxu0 0.0
    %3616 = vmatprep.subr.mxu0 0.0
    %3617 = vmatpush2.msra.mxu0 0.0
    %3618 = vmatprep.subr.mxu0 0.0
    %3619 = vmatpush2.msra.mxu0 0.0
    %3620 = vmatprep.subr.mxu0 0.0
    %3621 = vmatpush2.msra.mxu0 0.0
    %3622 = vmatprep.subr.mxu0 0.0
    %3623 = vmatpush2.msra.mxu0 0.0
    %3624 = vmatprep.subr.mxu0 0.0
    %3625 = vmatpush2.msra.mxu0 0.0
    %3626 = vmatprep.subr.mxu0 0.0
    %3627 = vmatpush2.msra.mxu0 0.0
    %3628 = vmatprep.subr.mxu0 0.0
    %3629 = vmatpush2.msra.mxu0 0.0
    %3630 = vmatprep.subr.mxu0 0.0
    %3631 = vmatpush2.msra.mxu0 0.0
    %3632 = vmatprep.mubr.f32.mxu0 0.0
    %3633 = vmatmul.mubr.f32.gmra.mxu0 %v3563
    %v3634 = vpop.f32.mrf.mxu0
    %v3635 = vadd.f32 0.0, %v3634
    %v3636 = vpop.f32.mrf.mxu0
    %3637 = vmatprep.mubr.f32.mxu0 0.0
    %3638 = vmatmul.mubr.f32.gmra.mxu0 %v3566
    %v3639 = vpop.f32.mrf.mxu0
    %v3640 = vadd.f32 0.0, %v3639
    %v3641 = vpop.f32.mrf.mxu0
    %3642 = vdwg.mxu0
    %v3644 = vsel %vm421, %v3635, 0
    %v3647 = vsel %vm421, %v3640, 0
    %3649 = vmatprep.subr.mxu0 0.0
    %3650 = vmatpush1.msra.mxu0 0.0
    %3651 = vmatprep.subr.mxu0 0.0
    %3652 = vmatpush1.msra.mxu0 0.0
    %3653 = vmatprep.subr.mxu0 0.0
    %3654 = vmatpush1.msra.mxu0 0.0
    %3655 = vmatprep.subr.mxu0 0.0
    %3656 = vmatpush1.msra.mxu0 0.0
    %3657 = vmatprep.subr.mxu0 0.0
    %3658 = vmatpush1.msra.mxu0 0.0
    %3659 = vmatprep.subr.mxu0 0.0
    %3660 = vmatpush1.msra.mxu0 0.0
    %3661 = vmatprep.subr.mxu0 0.0
    %3662 = vmatpush1.msra.mxu0 0.0
    %3663 = vmatprep.subr.mxu0 0.0
    %3664 = vmatpush1.msra.mxu0 0.0
    %3665 = vmatprep.subr.mxu0 0.0
    %3666 = vmatpush1.msra.mxu0 0.0
    %3667 = vmatprep.subr.mxu0 0.0
    %3668 = vmatpush1.msra.mxu0 0.0
    %3669 = vmatprep.subr.mxu0 0.0
    %3670 = vmatpush1.msra.mxu0 0.0
    %3671 = vmatprep.subr.mxu0 0.0
    %3672 = vmatpush1.msra.mxu0 0.0
    %3673 = vmatprep.subr.mxu0 0.0
    %3674 = vmatpush1.msra.mxu0 0.0
    %3675 = vmatprep.subr.mxu0 0.0
    %3676 = vmatpush1.msra.mxu0 0.0
    %3677 = vmatprep.subr.mxu0 0.0
    %3678 = vmatpush1.msra.mxu0 0.0
    %3679 = vmatprep.subr.mxu0 0.0
    %3680 = vmatpush1.msra.mxu0 %v2889
    %3681 = vmatprep.subr.mxu0 0.0
    %3682 = vmatpush2.msra.mxu0 0.0
    %3683 = vmatprep.subr.mxu0 0.0
    %3684 = vmatpush2.msra.mxu0 0.0
    %3685 = vmatprep.subr.mxu0 0.0
    %3686 = vmatpush2.msra.mxu0 0.0
    %3687 = vmatprep.subr.mxu0 0.0
    %3688 = vmatpush2.msra.mxu0 0.0
    %3689 = vmatprep.subr.mxu0 0.0
    %3690 = vmatpush2.msra.mxu0 0.0
    %3691 = vmatprep.subr.mxu0 0.0
    %3692 = vmatpush2.msra.mxu0 0.0
    %3693 = vmatprep.subr.mxu0 0.0
    %3694 = vmatpush2.msra.mxu0 0.0
    %3695 = vmatprep.subr.mxu0 0.0
    %3696 = vmatpush2.msra.mxu0 0.0
    %3697 = vmatprep.subr.mxu0 0.0
    %3698 = vmatpush2.msra.mxu0 0.0
    %3699 = vmatprep.subr.mxu0 0.0
    %3700 = vmatpush2.msra.mxu0 0.0
    %3701 = vmatprep.subr.mxu0 0.0
    %3702 = vmatpush2.msra.mxu0 0.0
    %3703 = vmatprep.subr.mxu0 0.0
    %3704 = vmatpush2.msra.mxu0 0.0
    %3705 = vmatprep.subr.mxu0 0.0
    %3706 = vmatpush2.msra.mxu0 0.0
    %3707 = vmatprep.subr.mxu0 0.0
    %3708 = vmatpush2.msra.mxu0 0.0
    %3709 = vmatprep.subr.mxu0 0.0
    %3710 = vmatpush2.msra.mxu0 0.0
    %3711 = vmatprep.subr.mxu0 0.0
    %3712 = vmatpush2.msra.mxu0 0.0
    %3713 = vmatprep.mubr.f32.mxu0 0.0
    %3714 = vmatmul.mubr.f32.gmra.mxu0 %v3644
    %v3715 = vpop.f32.mrf.mxu0
    %v3716 = vadd.f32 0.0, %v3715
    %v3717 = vpop.f32.mrf.mxu0
    %3718 = vmatprep.mubr.f32.mxu0 0.0
    %3719 = vmatmul.mubr.f32.gmra.mxu0 %v3647
    %v3720 = vpop.f32.mrf.mxu0
    %v3721 = vadd.f32 0.0, %v3720
    %v3722 = vpop.f32.mrf.mxu0
    %3723 = vdwg.mxu0
    %v3725 = vsel %vm421, %v3421, 0
    %v3728 = vsel %vm421, %v3426, 0
    %3730 = vmatprep.subr.mxu0 0.0
    %3731 = vmatpush1.msra.mxu0 0.0
    %3732 = vmatprep.subr.mxu0 0.0
    %3733 = vmatpush1.msra.mxu0 0.0
    %3734 = vmatprep.subr.mxu0 0.0
    %3735 = vmatpush1.msra.mxu0 0.0
    %3736 = vmatprep.subr.mxu0 0.0
    %3737 = vmatpush1.msra.mxu0 0.0
    %3738 = vmatprep.subr.mxu0 0.0
    %3739 = vmatpush1.msra.mxu0 0.0
    %3740 = vmatprep.subr.mxu0 0.0
    %3741 = vmatpush1.msra.mxu0 0.0
    %3742 = vmatprep.subr.mxu0 0.0
    %3743 = vmatpush1.msra.mxu0 0.0
    %3744 = vmatprep.subr.mxu0 0.0
    %3745 = vmatpush1.msra.mxu0 0.0
    %3746 = vmatprep.subr.mxu0 0.0
    %3747 = vmatpush1.msra.mxu0 0.0
    %3748 = vmatprep.subr.mxu0 0.0
    %3749 = vmatpush1.msra.mxu0 0.0
    %3750 = vmatprep.subr.mxu0 0.0
    %3751 = vmatpush1.msra.mxu0 0.0
    %3752 = vmatprep.subr.mxu0 0.0
    %3753 = vmatpush1.msra.mxu0 0.0
    %3754 = vmatprep.subr.mxu0 0.0
    %3755 = vmatpush1.msra.mxu0 0.0
    %3756 = vmatprep.subr.mxu0 0.0
    %3757 = vmatpush1.msra.mxu0 0.0
    %3758 = vmatprep.subr.mxu0 0.0
    %3759 = vmatpush1.msra.mxu0 0.0
    %3760 = vmatprep.subr.mxu0 0.0
    %3761 = vmatpush1.msra.mxu0 %v2888
    %3762 = vmatprep.subr.mxu0 0.0
    %3763 = vmatpush2.msra.mxu0 0.0
    %3764 = vmatprep.subr.mxu0 0.0
    %3765 = vmatpush2.msra.mxu0 0.0
    %3766 = vmatprep.subr.mxu0 0.0
    %3767 = vmatpush2.msra.mxu0 0.0
    %3768 = vmatprep.subr.mxu0 0.0
    %3769 = vmatpush2.msra.mxu0 0.0
    %3770 = vmatprep.subr.mxu0 0.0
    %3771 = vmatpush2.msra.mxu0 0.0
    %3772 = vmatprep.subr.mxu0 0.0
    %3773 = vmatpush2.msra.mxu0 0.0
    %3774 = vmatprep.subr.mxu0 0.0
    %3775 = vmatpush2.msra.mxu0 0.0
    %3776 = vmatprep.subr.mxu0 0.0
    %3777 = vmatpush2.msra.mxu0 0.0
    %3778 = vmatprep.subr.mxu0 0.0
    %3779 = vmatpush2.msra.mxu0 0.0
    %3780 = vmatprep.subr.mxu0 0.0
    %3781 = vmatpush2.msra.mxu0 0.0
    %3782 = vmatprep.subr.mxu0 0.0
    %3783 = vmatpush2.msra.mxu0 0.0
    %3784 = vmatprep.subr.mxu0 0.0
    %3785 = vmatpush2.msra.mxu0 0.0
    %3786 = vmatprep.subr.mxu0 0.0
    %3787 = vmatpush2.msra.mxu0 0.0
    %3788 = vmatprep.subr.mxu0 0.0
    %3789 = vmatpush2.msra.mxu0 0.0
    %3790 = vmatprep.subr.mxu0 0.0
    %3791 = vmatpush2.msra.mxu0 0.0
    %3792 = vmatprep.subr.mxu0 0.0
    %3793 = vmatpush2.msra.mxu0 0.0
    %3794 = vmatprep.mubr.f32.mxu0 0.0
    %3795 = vmatmul.mubr.f32.gmra.mxu0 %v3725
    %v3796 = vpop.f32.mrf.mxu0
    %v3797 = vadd.f32 %v3716, %v3796
    %v3798 = vpop.f32.mrf.mxu0
    %3799 = vmatprep.mubr.f32.mxu0 0.0
    %3800 = vmatmul.mubr.f32.gmra.mxu0 %v3728
    %v3801 = vpop.f32.mrf.mxu0
    %v3802 = vadd.f32 %v3721, %v3801
    %v3803 = vpop.f32.mrf.mxu0
    %3804 = vdwg.mxu0
    %3805 = vrot.lane.b32.xlu0 %v2998, 112
    %v3806 = vpop.permute.xlu0 %3805
    %3807 = vrot.lane.b32.xlu0 %v3003, 112
    %v3808 = vpop.permute.xlu0 %3807
    %3809 = vrot.lane.b32.xlu0 %v3110, 112
    %v3810 = vpop.permute.xlu0 %3809
    %3811 = vrot.lane.b32.xlu0 %v3115, 112
    %v3812 = vpop.permute.xlu0 %3811
    %3813 = vrot.lane.b32.xlu0 %v3120, 112
    %v3814 = vpop.permute.xlu0 %3813
    %v3815 = vsel %vm421, %v3806, 0
    %v3817 = vsel %vm421, %v3808, 0
    %v3819 = vsel %vm421, %v3810, 0
    %v3821 = vsel %vm421, %v3812, 0
    %v3823 = vsel %vm421, %v3814, 0
    %3825 = vmatprep.subr.mxu0 0.0
    %3826 = vmatpush1.xpose.msra.mxu0 0.0
    %3827 = vmatprep.subr.mxu0 0.0
    %3828 = vmatpush1.xpose.msra.mxu0 0.0
    %3829 = vmatprep.subr.mxu0 0.0
    %3830 = vmatpush1.xpose.msra.mxu0 0.0
    %3831 = vmatprep.subr.mxu0 0.0
    %3832 = vmatpush1.xpose.msra.mxu0 0.0
    %3833 = vmatprep.subr.mxu0 0.0
    %3834 = vmatpush1.xpose.msra.mxu0 0.0
    %3835 = vmatprep.subr.mxu0 0.0
    %3836 = vmatpush1.xpose.msra.mxu0 0.0
    %3837 = vmatprep.subr.mxu0 0.0
    %3838 = vmatpush1.xpose.msra.mxu0 0.0
    %3839 = vmatprep.subr.mxu0 0.0
    %3840 = vmatpush1.xpose.msra.mxu0 0.0
    %3841 = vmatprep.subr.mxu0 0.0
    %3842 = vmatpush1.xpose.msra.mxu0 0.0
    %3843 = vmatprep.subr.mxu0 0.0
    %3844 = vmatpush1.xpose.msra.mxu0 0.0
    %3845 = vmatprep.subr.mxu0 0.0
    %3846 = vmatpush1.xpose.msra.mxu0 0.0
    %3847 = vmatprep.subr.mxu0 0.0
    %3848 = vmatpush1.xpose.msra.mxu0 0.0
    %3849 = vmatprep.subr.mxu0 0.0
    %3850 = vmatpush1.xpose.msra.mxu0 0.0
    %3851 = vmatprep.subr.mxu0 0.0
    %3852 = vmatpush1.xpose.msra.mxu0 %v3823
    %3853 = vmatprep.subr.mxu0 0.0
    %3854 = vmatpush1.xpose.msra.mxu0 %v3821
    %3855 = vmatprep.subr.mxu0 0.0
    %3856 = vmatpush1.xpose.msra.mxu0 %v3819
    %3857 = vmatprep.subr.mxu0 0.0
    %3858 = vmatpush2.xpose.msra.mxu0 0.0
    %3859 = vmatprep.subr.mxu0 0.0
    %3860 = vmatpush2.xpose.msra.mxu0 0.0
    %3861 = vmatprep.subr.mxu0 0.0
    %3862 = vmatpush2.xpose.msra.mxu0 0.0
    %3863 = vmatprep.subr.mxu0 0.0
    %3864 = vmatpush2.xpose.msra.mxu0 0.0
    %3865 = vmatprep.subr.mxu0 0.0
    %3866 = vmatpush2.xpose.msra.mxu0 0.0
    %3867 = vmatprep.subr.mxu0 0.0
    %3868 = vmatpush2.xpose.msra.mxu0 0.0
    %3869 = vmatprep.subr.mxu0 0.0
    %3870 = vmatpush2.xpose.msra.mxu0 0.0
    %3871 = vmatprep.subr.mxu0 0.0
    %3872 = vmatpush2.xpose.msra.mxu0 0.0
    %3873 = vmatprep.subr.mxu0 0.0
    %3874 = vmatpush2.xpose.msra.mxu0 0.0
    %3875 = vmatprep.subr.mxu0 0.0
    %3876 = vmatpush2.xpose.msra.mxu0 0.0
    %3877 = vmatprep.subr.mxu0 0.0
    %3878 = vmatpush2.xpose.msra.mxu0 0.0
    %3879 = vmatprep.subr.mxu0 0.0
    %3880 = vmatpush2.xpose.msra.mxu0 0.0
    %3881 = vmatprep.subr.mxu0 0.0
    %3882 = vmatpush2.xpose.msra.mxu0 0.0
    %3883 = vmatprep.subr.mxu0 0.0
    %3884 = vmatpush2.xpose.msra.mxu0 0.0
    %3885 = vmatprep.subr.mxu0 0.0
    %3886 = vmatpush2.xpose.msra.mxu0 0.0
    %3887 = vmatprep.subr.mxu0 0.0
    %3888 = vmatpush2.xpose.msra.mxu0 0.0
    %3889 = vmatprep.mubr.f32.mxu0 0.0
    %3890 = vmatmul.mubr.f32.gmra.mxu0 %v3815
    %v3891 = vpop.f32.mrf.mxu0
    %v3892 = vadd.f32 0.0, %v3891
    %v3893 = vpop.f32.mrf.mxu0
    %3894 = vmatprep.mubr.f32.mxu0 0.0
    %3895 = vmatmul.mubr.f32.gmra.mxu0 %v3817
    %v3896 = vpop.f32.mrf.mxu0
    %v3897 = vadd.f32 0.0, %v3896
    %v3898 = vpop.f32.mrf.mxu0
    %3899 = vdwg.mxu0
    %v3900 = vmul.f32 %v3892, 0.35355338
    %v3901 = vmul.f32 %v3897, 0.35355338
    %v3902 = vadd.f32 %v3900, %v63
    %v3903 = vadd.f32 %v3901, %v64
    %v3904 = vsel %vm3325, %v3902, -inf
    %3905 = vmax.xlane.f32.xlu0 %v3904
    %v3906 = vpop.xlane.xlu0 %3905
    %v3907 = vsel %vm3325, %v3903, -inf
    %3908 = vmax.xlane.f32.xlu0 %v3907
    %v3909 = vpop.xlane.xlu0 %3908
    %v3910 = vsub.f32 %v3902, %v3906
    %v3911 = vsub.f32 %v3903, %v3909
    %v3912 = vmul.f32 %v3910, 1.442695
    %v3913 = vpow.pop %v3912
    %v3914 = vmul.f32 %v3911, 1.442695
    %v3915 = vpow.pop %v3914
    %v3916 = vsel %vm3325, %v3913, 0.0
    %3917 = vadd.xlane.f32.xlu0 %v3916
    %v3918 = vpop.xlane.xlu0 %3917
    %v3919 = vsel %vm3325, %v3915, 0.0
    %3920 = vadd.xlane.f32.xlu0 %v3919
    %v3921 = vpop.xlane.xlu0 %3920
    %v3922 = vrcp.pop %v3918
    %v3923 = vmul.f32 %v3913, %v3922
    %v3924 = vrcp.pop %v3921
    %v3925 = vmul.f32 %v3915, %v3924
    %3926 = vrot.lane.b32.xlu0 %v3218, 112
    %v3927 = vpop.permute.xlu0 %3926
    %3928 = vrot.lane.b32.xlu0 %v3223, 112
    %v3929 = vpop.permute.xlu0 %3928
    %3930 = vrot.lane.b32.xlu0 %v3228, 112
    %v3931 = vpop.permute.xlu0 %3930
    %v3936 = vsel %vm3325, %v3923, 0
    %v3939 = vsel %vm3325, %v3925, 0
    %3941 = vmatprep.subr.mxu0 0.0
    %3942 = vmatpush1.msra.mxu0 0.0
    %3943 = vmatprep.subr.mxu0 0.0
    %3944 = vmatpush1.msra.mxu0 0.0
    %3945 = vmatprep.subr.mxu0 0.0
    %3946 = vmatpush1.msra.mxu0 0.0
    %3947 = vmatprep.subr.mxu0 0.0
    %3948 = vmatpush1.msra.mxu0 0.0
    %3949 = vmatprep.subr.mxu0 0.0
    %3950 = vmatpush1.msra.mxu0 0.0
    %3951 = vmatprep.subr.mxu0 0.0
    %3952 = vmatpush1.msra.mxu0 0.0
    %3953 = vmatprep.subr.mxu0 0.0
    %3954 = vmatpush1.msra.mxu0 0.0
    %3955 = vmatprep.subr.mxu0 0.0
    %3956 = vmatpush1.msra.mxu0 0.0
    %3957 = vmatprep.subr.mxu0 0.0
    %3958 = vmatpush1.msra.mxu0 0.0
    %3959 = vmatprep.subr.mxu0 0.0
    %3960 = vmatpush1.msra.mxu0 0.0
    %3961 = vmatprep.subr.mxu0 0.0
    %3962 = vmatpush1.msra.mxu0 0.0
    %3963 = vmatprep.subr.mxu0 0.0
    %3964 = vmatpush1.msra.mxu0 0.0
    %3965 = vmatprep.subr.mxu0 0.0
    %3966 = vmatpush1.msra.mxu0 0.0
    %3967 = vmatprep.subr.mxu0 0.0
    %3968 = vmatpush1.msra.mxu0 %v3931
    %3969 = vmatprep.subr.mxu0 0.0
    %3970 = vmatpush1.msra.mxu0 %v3929
    %3971 = vmatprep.subr.mxu0 0.0
    %3972 = vmatpush1.msra.mxu0 %v3927
    %3973 = vmatprep.subr.mxu0 0.0
    %3974 = vmatpush2.msra.mxu0 0.0
    %3975 = vmatprep.subr.mxu0 0.0
    %3976 = vmatpush2.msra.mxu0 0.0
    %3977 = vmatprep.subr.mxu0 0.0
    %3978 = vmatpush2.msra.mxu0 0.0
    %3979 = vmatprep.subr.mxu0 0.0
    %3980 = vmatpush2.msra.mxu0 0.0
    %3981 = vmatprep.subr.mxu0 0.0
    %3982 = vmatpush2.msra.mxu0 0.0
    %3983 = vmatprep.subr.mxu0 0.0
    %3984 = vmatpush2.msra.mxu0 0.0
    %3985 = vmatprep.subr.mxu0 0.0
    %3986 = vmatpush2.msra.mxu0 0.0
    %3987 = vmatprep.subr.mxu0 0.0
    %3988 = vmatpush2.msra.mxu0 0.0
    %3989 = vmatprep.subr.mxu0 0.0
    %3990 = vmatpush2.msra.mxu0 0.0
    %3991 = vmatprep.subr.mxu0 0.0
    %3992 = vmatpush2.msra.mxu0 0.0
    %3993 = vmatprep.subr.mxu0 0.0
    %3994 = vmatpush2.msra.mxu0 0.0
    %3995 = vmatprep.subr.mxu0 0.0
    %3996 = vmatpush2.msra.mxu0 0.0
    %3997 = vmatprep.subr.mxu0 0.0
    %3998 = vmatpush2.msra.mxu0 0.0
    %3999 = vmatprep.subr.mxu0 0.0
    %4000 = vmatpush2.msra.mxu0 0.0
    %4001 = vmatprep.subr.mxu0 0.0
    %4002 = vmatpush2.msra.mxu0 0.0
    %4003 = vmatprep.subr.mxu0 0.0
    %4004 = vmatpush2.msra.mxu0 0.0
    %4005 = vmatprep.mubr.f32.mxu0 0.0
    %4006 = vmatmul.mubr.f32.gmra.mxu0 %v3936
    %v4007 = vpop.f32.mrf.mxu0
    %v4008 = vadd.f32 0.0, %v4007
    %v4009 = vpop.f32.mrf.mxu0
    %4010 = vmatprep.mubr.f32.mxu0 0.0
    %4011 = vmatmul.mubr.f32.gmra.mxu0 %v3939
    %v4012 = vpop.f32.mrf.mxu0
    %v4013 = vadd.f32 0.0, %v4012
    %v4014 = vpop.f32.mrf.mxu0
    %4015 = vdwg.mxu0
    %v4017 = vsel %vm421, %v4008, 0
    %v4020 = vsel %vm421, %v4013, 0
    %4022 = vmatprep.subr.mxu0 0.0
    %4023 = vmatpush1.msra.mxu0 0.0
    %4024 = vmatprep.subr.mxu0 0.0
    %4025 = vmatpush1.msra.mxu0 0.0
    %4026 = vmatprep.subr.mxu0 0.0
    %4027 = vmatpush1.msra.mxu0 0.0
    %4028 = vmatprep.subr.mxu0 0.0
    %4029 = vmatpush1.msra.mxu0 0.0
    %4030 = vmatprep.subr.mxu0 0.0
    %4031 = vmatpush1.msra.mxu0 0.0
    %4032 = vmatprep.subr.mxu0 0.0
    %4033 = vmatpush1.msra.mxu0 0.0
    %4034 = vmatprep.subr.mxu0 0.0
    %4035 = vmatpush1.msra.mxu0 0.0
    %4036 = vmatprep.subr.mxu0 0.0
    %4037 = vmatpush1.msra.mxu0 0.0
    %4038 = vmatprep.subr.mxu0 0.0
    %4039 = vmatpush1.msra.mxu0 0.0
    %4040 = vmatprep.subr.mxu0 0.0
    %4041 = vmatpush1.msra.mxu0 0.0
    %4042 = vmatprep.subr.mxu0 0.0
    %4043 = vmatpush1.msra.mxu0 0.0
    %4044 = vmatprep.subr.mxu0 0.0
    %4045 = vmatpush1.msra.mxu0 0.0
    %4046 = vmatprep.subr.mxu0 0.0
    %4047 = vmatpush1.msra.mxu0 0.0
    %4048 = vmatprep.subr.mxu0 0.0
    %4049 = vmatpush1.msra.mxu0 0.0
    %4050 = vmatprep.subr.mxu0 0.0
    %4051 = vmatpush1.msra.mxu0 0.0
    %4052 = vmatprep.subr.mxu0 0.0
    %4053 = vmatpush1.msra.mxu0 %v2890
    %4054 = vmatprep.subr.mxu0 0.0
    %4055 = vmatpush2.msra.mxu0 0.0
    %4056 = vmatprep.subr.mxu0 0.0
    %4057 = vmatpush2.msra.mxu0 0.0
    %4058 = vmatprep.subr.mxu0 0.0
    %4059 = vmatpush2.msra.mxu0 0.0
    %4060 = vmatprep.subr.mxu0 0.0
    %4061 = vmatpush2.msra.mxu0 0.0
    %4062 = vmatprep.subr.mxu0 0.0
    %4063 = vmatpush2.msra.mxu0 0.0
    %4064 = vmatprep.subr.mxu0 0.0
    %4065 = vmatpush2.msra.mxu0 0.0
    %4066 = vmatprep.subr.mxu0 0.0
    %4067 = vmatpush2.msra.mxu0 0.0
    %4068 = vmatprep.subr.mxu0 0.0
    %4069 = vmatpush2.msra.mxu0 0.0
    %4070 = vmatprep.subr.mxu0 0.0
    %4071 = vmatpush2.msra.mxu0 0.0
    %4072 = vmatprep.subr.mxu0 0.0
    %4073 = vmatpush2.msra.mxu0 0.0
    %4074 = vmatprep.subr.mxu0 0.0
    %4075 = vmatpush2.msra.mxu0 0.0
    %4076 = vmatprep.subr.mxu0 0.0
    %4077 = vmatpush2.msra.mxu0 0.0
    %4078 = vmatprep.subr.mxu0 0.0
    %4079 = vmatpush2.msra.mxu0 0.0
    %4080 = vmatprep.subr.mxu0 0.0
    %4081 = vmatpush2.msra.mxu0 0.0
    %4082 = vmatprep.subr.mxu0 0.0
    %4083 = vmatpush2.msra.mxu0 0.0
    %4084 = vmatprep.subr.mxu0 0.0
    %4085 = vmatpush2.msra.mxu0 0.0
    %4086 = vmatprep.mubr.f32.mxu0 0.0
    %4087 = vmatmul.mubr.f32.gmra.mxu0 %v4017
    %v4088 = vpop.f32.mrf.mxu0
    %v4089 = vadd.f32 0.0, %v4088
    %v4090 = vpop.f32.mrf.mxu0
    %4091 = vmatprep.mubr.f32.mxu0 0.0
    %4092 = vmatmul.mubr.f32.gmra.mxu0 %v4020
    %v4093 = vpop.f32.mrf.mxu0
    %v4094 = vadd.f32 0.0, %v4093
    %v4095 = vpop.f32.mrf.mxu0
    %4096 = vdwg.mxu0
    %v4097 = vadd.f32 %v3797, %v4089
    %v4098 = vadd.f32 %v3802, %v4094
    %4099 = vrot.lane.b32.xlu0 %v2998, 104
    %v4100 = vpop.permute.xlu0 %4099
    %4101 = vrot.lane.b32.xlu0 %v3003, 104
    %v4102 = vpop.permute.xlu0 %4101
    %4103 = vrot.lane.b32.xlu0 %v3110, 104
    %v4104 = vpop.permute.xlu0 %4103
    %4105 = vrot.lane.b32.xlu0 %v3115, 104
    %v4106 = vpop.permute.xlu0 %4105
    %4107 = vrot.lane.b32.xlu0 %v3120, 104
    %v4108 = vpop.permute.xlu0 %4107
    %v4109 = vsel %vm421, %v4100, 0
    %v4111 = vsel %vm421, %v4102, 0
    %v4113 = vsel %vm421, %v4104, 0
    %v4115 = vsel %vm421, %v4106, 0
    %v4117 = vsel %vm421, %v4108, 0
    %4119 = vmatprep.subr.mxu0 0.0
    %4120 = vmatpush1.xpose.msra.mxu0 0.0
    %4121 = vmatprep.subr.mxu0 0.0
    %4122 = vmatpush1.xpose.msra.mxu0 0.0
    %4123 = vmatprep.subr.mxu0 0.0
    %4124 = vmatpush1.xpose.msra.mxu0 0.0
    %4125 = vmatprep.subr.mxu0 0.0
    %4126 = vmatpush1.xpose.msra.mxu0 0.0
    %4127 = vmatprep.subr.mxu0 0.0
    %4128 = vmatpush1.xpose.msra.mxu0 0.0
    %4129 = vmatprep.subr.mxu0 0.0
    %4130 = vmatpush1.xpose.msra.mxu0 0.0
    %4131 = vmatprep.subr.mxu0 0.0
    %4132 = vmatpush1.xpose.msra.mxu0 0.0
    %4133 = vmatprep.subr.mxu0 0.0
    %4134 = vmatpush1.xpose.msra.mxu0 0.0
    %4135 = vmatprep.subr.mxu0 0.0
    %4136 = vmatpush1.xpose.msra.mxu0 0.0
    %4137 = vmatprep.subr.mxu0 0.0
    %4138 = vmatpush1.xpose.msra.mxu0 0.0
    %4139 = vmatprep.subr.mxu0 0.0
    %4140 = vmatpush1.xpose.msra.mxu0 0.0
    %4141 = vmatprep.subr.mxu0 0.0
    %4142 = vmatpush1.xpose.msra.mxu0 0.0
    %4143 = vmatprep.subr.mxu0 0.0
    %4144 = vmatpush1.xpose.msra.mxu0 0.0
    %4145 = vmatprep.subr.mxu0 0.0
    %4146 = vmatpush1.xpose.msra.mxu0 %v4117
    %4147 = vmatprep.subr.mxu0 0.0
    %4148 = vmatpush1.xpose.msra.mxu0 %v4115
    %4149 = vmatprep.subr.mxu0 0.0
    %4150 = vmatpush1.xpose.msra.mxu0 %v4113
    %4151 = vmatprep.subr.mxu0 0.0
    %4152 = vmatpush2.xpose.msra.mxu0 0.0
    %4153 = vmatprep.subr.mxu0 0.0
    %4154 = vmatpush2.xpose.msra.mxu0 0.0
    %4155 = vmatprep.subr.mxu0 0.0
    %4156 = vmatpush2.xpose.msra.mxu0 0.0
    %4157 = vmatprep.subr.mxu0 0.0
    %4158 = vmatpush2.xpose.msra.mxu0 0.0
    %4159 = vmatprep.subr.mxu0 0.0
    %4160 = vmatpush2.xpose.msra.mxu0 0.0
    %4161 = vmatprep.subr.mxu0 0.0
    %4162 = vmatpush2.xpose.msra.mxu0 0.0
    %4163 = vmatprep.subr.mxu0 0.0
    %4164 = vmatpush2.xpose.msra.mxu0 0.0
    %4165 = vmatprep.subr.mxu0 0.0
    %4166 = vmatpush2.xpose.msra.mxu0 0.0
    %4167 = vmatprep.subr.mxu0 0.0
    %4168 = vmatpush2.xpose.msra.mxu0 0.0
    %4169 = vmatprep.subr.mxu0 0.0
    %4170 = vmatpush2.xpose.msra.mxu0 0.0
    %4171 = vmatprep.subr.mxu0 0.0
    %4172 = vmatpush2.xpose.msra.mxu0 0.0
    %4173 = vmatprep.subr.mxu0 0.0
    %4174 = vmatpush2.xpose.msra.mxu0 0.0
    %4175 = vmatprep.subr.mxu0 0.0
    %4176 = vmatpush2.xpose.msra.mxu0 0.0
    %4177 = vmatprep.subr.mxu0 0.0
    %4178 = vmatpush2.xpose.msra.mxu0 0.0
    %4179 = vmatprep.subr.mxu0 0.0
    %4180 = vmatpush2.xpose.msra.mxu0 0.0
    %4181 = vmatprep.subr.mxu0 0.0
    %4182 = vmatpush2.xpose.msra.mxu0 0.0
    %4183 = vmatprep.mubr.f32.mxu0 0.0
    %4184 = vmatmul.mubr.f32.gmra.mxu0 %v4109
    %v4185 = vpop.f32.mrf.mxu0
    %v4186 = vadd.f32 0.0, %v4185
    %v4187 = vpop.f32.mrf.mxu0
    %4188 = vmatprep.mubr.f32.mxu0 0.0
    %4189 = vmatmul.mubr.f32.gmra.mxu0 %v4111
    %v4190 = vpop.f32.mrf.mxu0
    %v4191 = vadd.f32 0.0, %v4190
    %v4192 = vpop.f32.mrf.mxu0
    %4193 = vdwg.mxu0
    %v4194 = vmul.f32 %v4186, 0.35355338
    %v4195 = vmul.f32 %v4191, 0.35355338
    %v4196 = vadd.f32 %v4194, %v63
    %v4197 = vadd.f32 %v4195, %v64
    %v4198 = vsel %vm3325, %v4196, -inf
    %4199 = vmax.xlane.f32.xlu0 %v4198
    %v4200 = vpop.xlane.xlu0 %4199
    %v4201 = vsel %vm3325, %v4197, -inf
    %4202 = vmax.xlane.f32.xlu0 %v4201
    %v4203 = vpop.xlane.xlu0 %4202
    %v4204 = vsub.f32 %v4196, %v4200
    %v4205 = vsub.f32 %v4197, %v4203
    %v4206 = vmul.f32 %v4204, 1.442695
    %v4207 = vpow.pop %v4206
    %v4208 = vmul.f32 %v4205, 1.442695
    %v4209 = vpow.pop %v4208
    %v4210 = vsel %vm3325, %v4207, 0.0
    %4211 = vadd.xlane.f32.xlu0 %v4210
    %v4212 = vpop.xlane.xlu0 %4211
    %v4213 = vsel %vm3325, %v4209, 0.0
    %4214 = vadd.xlane.f32.xlu0 %v4213
    %v4215 = vpop.xlane.xlu0 %4214
    %v4216 = vrcp.pop %v4212
    %v4217 = vmul.f32 %v4207, %v4216
    %v4218 = vrcp.pop %v4215
    %v4219 = vmul.f32 %v4209, %v4218
    %4220 = vrot.lane.b32.xlu0 %v3218, 104
    %v4221 = vpop.permute.xlu0 %4220
    %4222 = vrot.lane.b32.xlu0 %v3223, 104
    %v4223 = vpop.permute.xlu0 %4222
    %4224 = vrot.lane.b32.xlu0 %v3228, 104
    %v4225 = vpop.permute.xlu0 %4224
    %v4230 = vsel %vm3325, %v4217, 0
    %v4233 = vsel %vm3325, %v4219, 0
    %4235 = vmatprep.subr.mxu0 0.0
    %4236 = vmatpush1.msra.mxu0 0.0
    %4237 = vmatprep.subr.mxu0 0.0
    %4238 = vmatpush1.msra.mxu0 0.0
    %4239 = vmatprep.subr.mxu0 0.0
    %4240 = vmatpush1.msra.mxu0 0.0
    %4241 = vmatprep.subr.mxu0 0.0
    %4242 = vmatpush1.msra.mxu0 0.0
    %4243 = vmatprep.subr.mxu0 0.0
    %4244 = vmatpush1.msra.mxu0 0.0
    %4245 = vmatprep.subr.mxu0 0.0
    %4246 = vmatpush1.msra.mxu0 0.0
    %4247 = vmatprep.subr.mxu0 0.0
    %4248 = vmatpush1.msra.mxu0 0.0
    %4249 = vmatprep.subr.mxu0 0.0
    %4250 = vmatpush1.msra.mxu0 0.0
    %4251 = vmatprep.subr.mxu0 0.0
    %4252 = vmatpush1.msra.mxu0 0.0
    %4253 = vmatprep.subr.mxu0 0.0
    %4254 = vmatpush1.msra.mxu0 0.0
    %4255 = vmatprep.subr.mxu0 0.0
    %4256 = vmatpush1.msra.mxu0 0.0
    %4257 = vmatprep.subr.mxu0 0.0
    %4258 = vmatpush1.msra.mxu0 0.0
    %4259 = vmatprep.subr.mxu0 0.0
    %4260 = vmatpush1.msra.mxu0 0.0
    %4261 = vmatprep.subr.mxu0 0.0
    %4262 = vmatpush1.msra.mxu0 %v4225
    %4263 = vmatprep.subr.mxu0 0.0
    %4264 = vmatpush1.msra.mxu0 %v4223
    %4265 = vmatprep.subr.mxu0 0.0
    %4266 = vmatpush1.msra.mxu0 %v4221
    %4267 = vmatprep.subr.mxu0 0.0
    %4268 = vmatpush2.msra.mxu0 0.0
    %4269 = vmatprep.subr.mxu0 0.0
    %4270 = vmatpush2.msra.mxu0 0.0
    %4271 = vmatprep.subr.mxu0 0.0
    %4272 = vmatpush2.msra.mxu0 0.0
    %4273 = vmatprep.subr.mxu0 0.0
    %4274 = vmatpush2.msra.mxu0 0.0
    %4275 = vmatprep.subr.mxu0 0.0
    %4276 = vmatpush2.msra.mxu0 0.0
    %4277 = vmatprep.subr.mxu0 0.0
    %4278 = vmatpush2.msra.mxu0 0.0
    %4279 = vmatprep.subr.mxu0 0.0
    %4280 = vmatpush2.msra.mxu0 0.0
    %4281 = vmatprep.subr.mxu0 0.0
    %4282 = vmatpush2.msra.mxu0 0.0
    %4283 = vmatprep.subr.mxu0 0.0
    %4284 = vmatpush2.msra.mxu0 0.0
    %4285 = vmatprep.subr.mxu0 0.0
    %4286 = vmatpush2.msra.mxu0 0.0
    %4287 = vmatprep.subr.mxu0 0.0
    %4288 = vmatpush2.msra.mxu0 0.0
    %4289 = vmatprep.subr.mxu0 0.0
    %4290 = vmatpush2.msra.mxu0 0.0
    %4291 = vmatprep.subr.mxu0 0.0
    %4292 = vmatpush2.msra.mxu0 0.0
    %4293 = vmatprep.subr.mxu0 0.0
    %4294 = vmatpush2.msra.mxu0 0.0
    %4295 = vmatprep.subr.mxu0 0.0
    %4296 = vmatpush2.msra.mxu0 0.0
    %4297 = vmatprep.subr.mxu0 0.0
    %4298 = vmatpush2.msra.mxu0 0.0
    %4299 = vmatprep.mubr.f32.mxu0 0.0
    %4300 = vmatmul.mubr.f32.gmra.mxu0 %v4230
    %v4301 = vpop.f32.mrf.mxu0
    %v4302 = vadd.f32 0.0, %v4301
    %v4303 = vpop.f32.mrf.mxu0
    %4304 = vmatprep.mubr.f32.mxu0 0.0
    %4305 = vmatmul.mubr.f32.gmra.mxu0 %v4233
    %v4306 = vpop.f32.mrf.mxu0
    %v4307 = vadd.f32 0.0, %v4306
    %v4308 = vpop.f32.mrf.mxu0
    %4309 = vdwg.mxu0
    %v4311 = vsel %vm421, %v4302, 0
    %v4314 = vsel %vm421, %v4307, 0
    %4316 = vmatprep.subr.mxu0 0.0
    %4317 = vmatpush1.msra.mxu0 0.0
    %4318 = vmatprep.subr.mxu0 0.0
    %4319 = vmatpush1.msra.mxu0 0.0
    %4320 = vmatprep.subr.mxu0 0.0
    %4321 = vmatpush1.msra.mxu0 0.0
    %4322 = vmatprep.subr.mxu0 0.0
    %4323 = vmatpush1.msra.mxu0 0.0
    %4324 = vmatprep.subr.mxu0 0.0
    %4325 = vmatpush1.msra.mxu0 0.0
    %4326 = vmatprep.subr.mxu0 0.0
    %4327 = vmatpush1.msra.mxu0 0.0
    %4328 = vmatprep.subr.mxu0 0.0
    %4329 = vmatpush1.msra.mxu0 0.0
    %4330 = vmatprep.subr.mxu0 0.0
    %4331 = vmatpush1.msra.mxu0 0.0
    %4332 = vmatprep.subr.mxu0 0.0
    %4333 = vmatpush1.msra.mxu0 0.0
    %4334 = vmatprep.subr.mxu0 0.0
    %4335 = vmatpush1.msra.mxu0 0.0
    %4336 = vmatprep.subr.mxu0 0.0
    %4337 = vmatpush1.msra.mxu0 0.0
    %4338 = vmatprep.subr.mxu0 0.0
    %4339 = vmatpush1.msra.mxu0 0.0
    %4340 = vmatprep.subr.mxu0 0.0
    %4341 = vmatpush1.msra.mxu0 0.0
    %4342 = vmatprep.subr.mxu0 0.0
    %4343 = vmatpush1.msra.mxu0 0.0
    %4344 = vmatprep.subr.mxu0 0.0
    %4345 = vmatpush1.msra.mxu0 0.0
    %4346 = vmatprep.subr.mxu0 0.0
    %4347 = vmatpush1.msra.mxu0 %v2891
    %4348 = vmatprep.subr.mxu0 0.0
    %4349 = vmatpush2.msra.mxu0 0.0
    %4350 = vmatprep.subr.mxu0 0.0
    %4351 = vmatpush2.msra.mxu0 0.0
    %4352 = vmatprep.subr.mxu0 0.0
    %4353 = vmatpush2.msra.mxu0 0.0
    %4354 = vmatprep.subr.mxu0 0.0
    %4355 = vmatpush2.msra.mxu0 0.0
    %4356 = vmatprep.subr.mxu0 0.0
    %4357 = vmatpush2.msra.mxu0 0.0
    %4358 = vmatprep.subr.mxu0 0.0
    %4359 = vmatpush2.msra.mxu0 0.0
    %4360 = vmatprep.subr.mxu0 0.0
    %4361 = vmatpush2.msra.mxu0 0.0
    %4362 = vmatprep.subr.mxu0 0.0
    %4363 = vmatpush2.msra.mxu0 0.0
    %4364 = vmatprep.subr.mxu0 0.0
    %4365 = vmatpush2.msra.mxu0 0.0
    %4366 = vmatprep.subr.mxu0 0.0
    %4367 = vmatpush2.msra.mxu0 0.0
    %4368 = vmatprep.subr.mxu0 0.0
    %4369 = vmatpush2.msra.mxu0 0.0
    %4370 = vmatprep.subr.mxu0 0.0
    %4371 = vmatpush2.msra.mxu0 0.0
    %4372 = vmatprep.subr.mxu0 0.0
    %4373 = vmatpush2.msra.mxu0 0.0
    %4374 = vmatprep.subr.mxu0 0.0
    %4375 = vmatpush2.msra.mxu0 0.0
    %4376 = vmatprep.subr.mxu0 0.0
    %4377 = vmatpush2.msra.mxu0 0.0
    %4378 = vmatprep.subr.mxu0 0.0
    %4379 = vmatpush2.msra.mxu0 0.0
    %4380 = vmatprep.mubr.f32.mxu0 0.0
    %4381 = vmatmul.mubr.f32.gmra.mxu0 %v4311
    %v4382 = vpop.f32.mrf.mxu0
    %v4383 = vadd.f32 0.0, %v4382
    %v4384 = vpop.f32.mrf.mxu0
    %4385 = vmatprep.mubr.f32.mxu0 0.0
    %4386 = vmatmul.mubr.f32.gmra.mxu0 %v4314
    %v4387 = vpop.f32.mrf.mxu0
    %v4388 = vadd.f32 0.0, %v4387
    %v4389 = vpop.f32.mrf.mxu0
    %4390 = vdwg.mxu0
    %v4391 = vadd.f32 %v4097, %v4383
    %v4392 = vadd.f32 %v4098, %v4388
    %4393 = vrot.lane.b32.xlu0 %v2998, 96
    %v4394 = vpop.permute.xlu0 %4393
    %4395 = vrot.lane.b32.xlu0 %v3003, 96
    %v4396 = vpop.permute.xlu0 %4395
    %4397 = vrot.lane.b32.xlu0 %v3110, 96
    %v4398 = vpop.permute.xlu0 %4397
    %4399 = vrot.lane.b32.xlu0 %v3115, 96
    %v4400 = vpop.permute.xlu0 %4399
    %4401 = vrot.lane.b32.xlu0 %v3120, 96
    %v4402 = vpop.permute.xlu0 %4401
    %v4403 = vsel %vm421, %v4394, 0
    %v4405 = vsel %vm421, %v4396, 0
    %v4407 = vsel %vm421, %v4398, 0
    %v4409 = vsel %vm421, %v4400, 0
    %v4411 = vsel %vm421, %v4402, 0
    %4413 = vmatprep.subr.mxu0 0.0
    %4414 = vmatpush1.xpose.msra.mxu0 0.0
    %4415 = vmatprep.subr.mxu0 0.0
    %4416 = vmatpush1.xpose.msra.mxu0 0.0
    %4417 = vmatprep.subr.mxu0 0.0
    %4418 = vmatpush1.xpose.msra.mxu0 0.0
    %4419 = vmatprep.subr.mxu0 0.0
    %4420 = vmatpush1.xpose.msra.mxu0 0.0
    %4421 = vmatprep.subr.mxu0 0.0
    %4422 = vmatpush1.xpose.msra.mxu0 0.0
    %4423 = vmatprep.subr.mxu0 0.0
    %4424 = vmatpush1.xpose.msra.mxu0 0.0
    %4425 = vmatprep.subr.mxu0 0.0
    %4426 = vmatpush1.xpose.msra.mxu0 0.0
    %4427 = vmatprep.subr.mxu0 0.0
    %4428 = vmatpush1.xpose.msra.mxu0 0.0
    %4429 = vmatprep.subr.mxu0 0.0
    %4430 = vmatpush1.xpose.msra.mxu0 0.0
    %4431 = vmatprep.subr.mxu0 0.0
    %4432 = vmatpush1.xpose.msra.mxu0 0.0
    %4433 = vmatprep.subr.mxu0 0.0
    %4434 = vmatpush1.xpose.msra.mxu0 0.0
    %4435 = vmatprep.subr.mxu0 0.0
    %4436 = vmatpush1.xpose.msra.mxu0 0.0
    %4437 = vmatprep.subr.mxu0 0.0
    %4438 = vmatpush1.xpose.msra.mxu0 0.0
    %4439 = vmatprep.subr.mxu0 0.0
    %4440 = vmatpush1.xpose.msra.mxu0 %v4411
    %4441 = vmatprep.subr.mxu0 0.0
    %4442 = vmatpush1.xpose.msra.mxu0 %v4409
    %4443 = vmatprep.subr.mxu0 0.0
    %4444 = vmatpush1.xpose.msra.mxu0 %v4407
    %4445 = vmatprep.subr.mxu0 0.0
    %4446 = vmatpush2.xpose.msra.mxu0 0.0
    %4447 = vmatprep.subr.mxu0 0.0
    %4448 = vmatpush2.xpose.msra.mxu0 0.0
    %4449 = vmatprep.subr.mxu0 0.0
    %4450 = vmatpush2.xpose.msra.mxu0 0.0
    %4451 = vmatprep.subr.mxu0 0.0
    %4452 = vmatpush2.xpose.msra.mxu0 0.0
    %4453 = vmatprep.subr.mxu0 0.0
    %4454 = vmatpush2.xpose.msra.mxu0 0.0
    %4455 = vmatprep.subr.mxu0 0.0
    %4456 = vmatpush2.xpose.msra.mxu0 0.0
    %4457 = vmatprep.subr.mxu0 0.0
    %4458 = vmatpush2.xpose.msra.mxu0 0.0
    %4459 = vmatprep.subr.mxu0 0.0
    %4460 = vmatpush2.xpose.msra.mxu0 0.0
    %4461 = vmatprep.subr.mxu0 0.0
    %4462 = vmatpush2.xpose.msra.mxu0 0.0
    %4463 = vmatprep.subr.mxu0 0.0
    %4464 = vmatpush2.xpose.msra.mxu0 0.0
    %4465 = vmatprep.subr.mxu0 0.0
    %4466 = vmatpush2.xpose.msra.mxu0 0.0
    %4467 = vmatprep.subr.mxu0 0.0
    %4468 = vmatpush2.xpose.msra.mxu0 0.0
    %4469 = vmatprep.subr.mxu0 0.0
    %4470 = vmatpush2.xpose.msra.mxu0 0.0
    %4471 = vmatprep.subr.mxu0 0.0
    %4472 = vmatpush2.xpose.msra.mxu0 0.0
    %4473 = vmatprep.subr.mxu0 0.0
    %4474 = vmatpush2.xpose.msra.mxu0 0.0
    %4475 = vmatprep.subr.mxu0 0.0
    %4476 = vmatpush2.xpose.msra.mxu0 0.0
    %4477 = vmatprep.mubr.f32.mxu0 0.0
    %4478 = vmatmul.mubr.f32.gmra.mxu0 %v4403
    %v4479 = vpop.f32.mrf.mxu0
    %v4480 = vadd.f32 0.0, %v4479
    %v4481 = vpop.f32.mrf.mxu0
    %4482 = vmatprep.mubr.f32.mxu0 0.0
    %4483 = vmatmul.mubr.f32.gmra.mxu0 %v4405
    %v4484 = vpop.f32.mrf.mxu0
    %v4485 = vadd.f32 0.0, %v4484
    %v4486 = vpop.f32.mrf.mxu0
    %4487 = vdwg.mxu0
    %v4488 = vmul.f32 %v4480, 0.35355338
    %v4489 = vmul.f32 %v4485, 0.35355338
    %v4490 = vadd.f32 %v4488, %v63
    %v4491 = vadd.f32 %v4489, %v64
    %v4492 = vsel %vm3325, %v4490, -inf
    %4493 = vmax.xlane.f32.xlu0 %v4492
    %v4494 = vpop.xlane.xlu0 %4493
    %v4495 = vsel %vm3325, %v4491, -inf
    %4496 = vmax.xlane.f32.xlu0 %v4495
    %v4497 = vpop.xlane.xlu0 %4496
    %v4498 = vsub.f32 %v4490, %v4494
    %v4499 = vsub.f32 %v4491, %v4497
    %v4500 = vmul.f32 %v4498, 1.442695
    %v4501 = vpow.pop %v4500
    %v4502 = vmul.f32 %v4499, 1.442695
    %v4503 = vpow.pop %v4502
    %v4504 = vsel %vm3325, %v4501, 0.0
    %4505 = vadd.xlane.f32.xlu0 %v4504
    %v4506 = vpop.xlane.xlu0 %4505
    %v4507 = vsel %vm3325, %v4503, 0.0
    %4508 = vadd.xlane.f32.xlu0 %v4507
    %v4509 = vpop.xlane.xlu0 %4508
    %v4510 = vrcp.pop %v4506
    %v4511 = vmul.f32 %v4501, %v4510
    %v4512 = vrcp.pop %v4509
    %v4513 = vmul.f32 %v4503, %v4512
    %4514 = vrot.lane.b32.xlu0 %v3218, 96
    %v4515 = vpop.permute.xlu0 %4514
    %4516 = vrot.lane.b32.xlu0 %v3223, 96
    %v4517 = vpop.permute.xlu0 %4516
    %4518 = vrot.lane.b32.xlu0 %v3228, 96
    %v4519 = vpop.permute.xlu0 %4518
    %v4524 = vsel %vm3325, %v4511, 0
    %v4527 = vsel %vm3325, %v4513, 0
    %4529 = vmatprep.subr.mxu0 0.0
    %4530 = vmatpush1.msra.mxu0 0.0
    %4531 = vmatprep.subr.mxu0 0.0
    %4532 = vmatpush1.msra.mxu0 0.0
    %4533 = vmatprep.subr.mxu0 0.0
    %4534 = vmatpush1.msra.mxu0 0.0
    %4535 = vmatprep.subr.mxu0 0.0
    %4536 = vmatpush1.msra.mxu0 0.0
    %4537 = vmatprep.subr.mxu0 0.0
    %4538 = vmatpush1.msra.mxu0 0.0
    %4539 = vmatprep.subr.mxu0 0.0
    %4540 = vmatpush1.msra.mxu0 0.0
    %4541 = vmatprep.subr.mxu0 0.0
    %4542 = vmatpush1.msra.mxu0 0.0
    %4543 = vmatprep.subr.mxu0 0.0
    %4544 = vmatpush1.msra.mxu0 0.0
    %4545 = vmatprep.subr.mxu0 0.0
    %4546 = vmatpush1.msra.mxu0 0.0
    %4547 = vmatprep.subr.mxu0 0.0
    %4548 = vmatpush1.msra.mxu0 0.0
    %4549 = vmatprep.subr.mxu0 0.0
    %4550 = vmatpush1.msra.mxu0 0.0
    %4551 = vmatprep.subr.mxu0 0.0
    %4552 = vmatpush1.msra.mxu0 0.0
    %4553 = vmatprep.subr.mxu0 0.0
    %4554 = vmatpush1.msra.mxu0 0.0
    %4555 = vmatprep.subr.mxu0 0.0
    %4556 = vmatpush1.msra.mxu0 %v4519
    %4557 = vmatprep.subr.mxu0 0.0
    %4558 = vmatpush1.msra.mxu0 %v4517
    %4559 = vmatprep.subr.mxu0 0.0
    %4560 = vmatpush1.msra.mxu0 %v4515
    %4561 = vmatprep.subr.mxu0 0.0
    %4562 = vmatpush2.msra.mxu0 0.0
    %4563 = vmatprep.subr.mxu0 0.0
    %4564 = vmatpush2.msra.mxu0 0.0
    %4565 = vmatprep.subr.mxu0 0.0
    %4566 = vmatpush2.msra.mxu0 0.0
    %4567 = vmatprep.subr.mxu0 0.0
    %4568 = vmatpush2.msra.mxu0 0.0
    %4569 = vmatprep.subr.mxu0 0.0
    %4570 = vmatpush2.msra.mxu0 0.0
    %4571 = vmatprep.subr.mxu0 0.0
    %4572 = vmatpush2.msra.mxu0 0.0
    %4573 = vmatprep.subr.mxu0 0.0
    %4574 = vmatpush2.msra.mxu0 0.0
    %4575 = vmatprep.subr.mxu0 0.0
    %4576 = vmatpush2.msra.mxu0 0.0
    %4577 = vmatprep.subr.mxu0 0.0
    %4578 = vmatpush2.msra.mxu0 0.0
    %4579 = vmatprep.subr.mxu0 0.0
    %4580 = vmatpush2.msra.mxu0 0.0
    %4581 = vmatprep.subr.mxu0 0.0
    %4582 = vmatpush2.msra.mxu0 0.0
    %4583 = vmatprep.subr.mxu0 0.0
    %4584 = vmatpush2.msra.mxu0 0.0
    %4585 = vmatprep.subr.mxu0 0.0
    %4586 = vmatpush2.msra.mxu0 0.0
    %4587 = vmatprep.subr.mxu0 0.0
    %4588 = vmatpush2.msra.mxu0 0.0
    %4589 = vmatprep.subr.mxu0 0.0
    %4590 = vmatpush2.msra.mxu0 0.0
    %4591 = vmatprep.subr.mxu0 0.0
    %4592 = vmatpush2.msra.mxu0 0.0
    %4593 = vmatprep.mubr.f32.mxu0 0.0
    %4594 = vmatmul.mubr.f32.gmra.mxu0 %v4524
    %v4595 = vpop.f32.mrf.mxu0
    %v4596 = vadd.f32 0.0, %v4595
    %v4597 = vpop.f32.mrf.mxu0
    %4598 = vmatprep.mubr.f32.mxu0 0.0
    %4599 = vmatmul.mubr.f32.gmra.mxu0 %v4527
    %v4600 = vpop.f32.mrf.mxu0
    %v4601 = vadd.f32 0.0, %v4600
    %v4602 = vpop.f32.mrf.mxu0
    %4603 = vdwg.mxu0
    %v4605 = vsel %vm421, %v4596, 0
    %v4608 = vsel %vm421, %v4601, 0
    %4610 = vmatprep.subr.mxu0 0.0
    %4611 = vmatpush1.msra.mxu0 0.0
    %4612 = vmatprep.subr.mxu0 0.0
    %4613 = vmatpush1.msra.mxu0 0.0
    %4614 = vmatprep.subr.mxu0 0.0
    %4615 = vmatpush1.msra.mxu0 0.0
    %4616 = vmatprep.subr.mxu0 0.0
    %4617 = vmatpush1.msra.mxu0 0.0
    %4618 = vmatprep.subr.mxu0 0.0
    %4619 = vmatpush1.msra.mxu0 0.0
    %4620 = vmatprep.subr.mxu0 0.0
    %4621 = vmatpush1.msra.mxu0 0.0
    %4622 = vmatprep.subr.mxu0 0.0
    %4623 = vmatpush1.msra.mxu0 0.0
    %4624 = vmatprep.subr.mxu0 0.0
    %4625 = vmatpush1.msra.mxu0 0.0
    %4626 = vmatprep.subr.mxu0 0.0
    %4627 = vmatpush1.msra.mxu0 0.0
    %4628 = vmatprep.subr.mxu0 0.0
    %4629 = vmatpush1.msra.mxu0 0.0
    %4630 = vmatprep.subr.mxu0 0.0
    %4631 = vmatpush1.msra.mxu0 0.0
    %4632 = vmatprep.subr.mxu0 0.0
    %4633 = vmatpush1.msra.mxu0 0.0
    %4634 = vmatprep.subr.mxu0 0.0
    %4635 = vmatpush1.msra.mxu0 0.0
    %4636 = vmatprep.subr.mxu0 0.0
    %4637 = vmatpush1.msra.mxu0 0.0
    %4638 = vmatprep.subr.mxu0 0.0
    %4639 = vmatpush1.msra.mxu0 0.0
    %4640 = vmatprep.subr.mxu0 0.0
    %4641 = vmatpush1.msra.mxu0 %v2892
    %4642 = vmatprep.subr.mxu0 0.0
    %4643 = vmatpush2.msra.mxu0 0.0
    %4644 = vmatprep.subr.mxu0 0.0
    %4645 = vmatpush2.msra.mxu0 0.0
    %4646 = vmatprep.subr.mxu0 0.0
    %4647 = vmatpush2.msra.mxu0 0.0
    %4648 = vmatprep.subr.mxu0 0.0
    %4649 = vmatpush2.msra.mxu0 0.0
    %4650 = vmatprep.subr.mxu0 0.0
    %4651 = vmatpush2.msra.mxu0 0.0
    %4652 = vmatprep.subr.mxu0 0.0
    %4653 = vmatpush2.msra.mxu0 0.0
    %4654 = vmatprep.subr.mxu0 0.0
    %4655 = vmatpush2.msra.mxu0 0.0
    %4656 = vmatprep.subr.mxu0 0.0
    %4657 = vmatpush2.msra.mxu0 0.0
    %4658 = vmatprep.subr.mxu0 0.0
    %4659 = vmatpush2.msra.mxu0 0.0
    %4660 = vmatprep.subr.mxu0 0.0
    %4661 = vmatpush2.msra.mxu0 0.0
    %4662 = vmatprep.subr.mxu0 0.0
    %4663 = vmatpush2.msra.mxu0 0.0
    %4664 = vmatprep.subr.mxu0 0.0
    %4665 = vmatpush2.msra.mxu0 0.0
    %4666 = vmatprep.subr.mxu0 0.0
    %4667 = vmatpush2.msra.mxu0 0.0
    %4668 = vmatprep.subr.mxu0 0.0
    %4669 = vmatpush2.msra.mxu0 0.0
    %4670 = vmatprep.subr.mxu0 0.0
    %4671 = vmatpush2.msra.mxu0 0.0
    %4672 = vmatprep.subr.mxu0 0.0
    %4673 = vmatpush2.msra.mxu0 0.0
    %4674 = vmatprep.mubr.f32.mxu0 0.0
    %4675 = vmatmul.mubr.f32.gmra.mxu0 %v4605
    %v4676 = vpop.f32.mrf.mxu0
    %v4677 = vadd.f32 0.0, %v4676
    %v4678 = vpop.f32.mrf.mxu0
    %4679 = vmatprep.mubr.f32.mxu0 0.0
    %4680 = vmatmul.mubr.f32.gmra.mxu0 %v4608
    %v4681 = vpop.f32.mrf.mxu0
    %v4682 = vadd.f32 0.0, %v4681
    %v4683 = vpop.f32.mrf.mxu0
    %4684 = vdwg.mxu0
    %v4685 = vadd.f32 %v4391, %v4677
    %v4686 = vadd.f32 %v4392, %v4682
    %4687 = vrot.lane.b32.xlu0 %v2998, 88
    %v4688 = vpop.permute.xlu0 %4687
    %4689 = vrot.lane.b32.xlu0 %v3003, 88
    %v4690 = vpop.permute.xlu0 %4689
    %4691 = vrot.lane.b32.xlu0 %v3110, 88
    %v4692 = vpop.permute.xlu0 %4691
    %4693 = vrot.lane.b32.xlu0 %v3115, 88
    %v4694 = vpop.permute.xlu0 %4693
    %4695 = vrot.lane.b32.xlu0 %v3120, 88
    %v4696 = vpop.permute.xlu0 %4695
    %v4697 = vsel %vm421, %v4688, 0
    %v4699 = vsel %vm421, %v4690, 0
    %v4701 = vsel %vm421, %v4692, 0
    %v4703 = vsel %vm421, %v4694, 0
    %v4705 = vsel %vm421, %v4696, 0
    %4707 = vmatprep.subr.mxu0 0.0
    %4708 = vmatpush1.xpose.msra.mxu0 0.0
    %4709 = vmatprep.subr.mxu0 0.0
    %4710 = vmatpush1.xpose.msra.mxu0 0.0
    %4711 = vmatprep.subr.mxu0 0.0
    %4712 = vmatpush1.xpose.msra.mxu0 0.0
    %4713 = vmatprep.subr.mxu0 0.0
    %4714 = vmatpush1.xpose.msra.mxu0 0.0
    %4715 = vmatprep.subr.mxu0 0.0
    %4716 = vmatpush1.xpose.msra.mxu0 0.0
    %4717 = vmatprep.subr.mxu0 0.0
    %4718 = vmatpush1.xpose.msra.mxu0 0.0
    %4719 = vmatprep.subr.mxu0 0.0
    %4720 = vmatpush1.xpose.msra.mxu0 0.0
    %4721 = vmatprep.subr.mxu0 0.0
    %4722 = vmatpush1.xpose.msra.mxu0 0.0
    %4723 = vmatprep.subr.mxu0 0.0
    %4724 = vmatpush1.xpose.msra.mxu0 0.0
    %4725 = vmatprep.subr.mxu0 0.0
    %4726 = vmatpush1.xpose.msra.mxu0 0.0
    %4727 = vmatprep.subr.mxu0 0.0
    %4728 = vmatpush1.xpose.msra.mxu0 0.0
    %4729 = vmatprep.subr.mxu0 0.0
    %4730 = vmatpush1.xpose.msra.mxu0 0.0
    %4731 = vmatprep.subr.mxu0 0.0
    %4732 = vmatpush1.xpose.msra.mxu0 0.0
    %4733 = vmatprep.subr.mxu0 0.0
    %4734 = vmatpush1.xpose.msra.mxu0 %v4705
    %4735 = vmatprep.subr.mxu0 0.0
    %4736 = vmatpush1.xpose.msra.mxu0 %v4703
    %4737 = vmatprep.subr.mxu0 0.0
    %4738 = vmatpush1.xpose.msra.mxu0 %v4701
    %4739 = vmatprep.subr.mxu0 0.0
    %4740 = vmatpush2.xpose.msra.mxu0 0.0
    %4741 = vmatprep.subr.mxu0 0.0
    %4742 = vmatpush2.xpose.msra.mxu0 0.0
    %4743 = vmatprep.subr.mxu0 0.0
    %4744 = vmatpush2.xpose.msra.mxu0 0.0
    %4745 = vmatprep.subr.mxu0 0.0
    %4746 = vmatpush2.xpose.msra.mxu0 0.0
    %4747 = vmatprep.subr.mxu0 0.0
    %4748 = vmatpush2.xpose.msra.mxu0 0.0
    %4749 = vmatprep.subr.mxu0 0.0
    %4750 = vmatpush2.xpose.msra.mxu0 0.0
    %4751 = vmatprep.subr.mxu0 0.0
    %4752 = vmatpush2.xpose.msra.mxu0 0.0
    %4753 = vmatprep.subr.mxu0 0.0
    %4754 = vmatpush2.xpose.msra.mxu0 0.0
    %4755 = vmatprep.subr.mxu0 0.0
    %4756 = vmatpush2.xpose.msra.mxu0 0.0
    %4757 = vmatprep.subr.mxu0 0.0
    %4758 = vmatpush2.xpose.msra.mxu0 0.0
    %4759 = vmatprep.subr.mxu0 0.0
    %4760 = vmatpush2.xpose.msra.mxu0 0.0
    %4761 = vmatprep.subr.mxu0 0.0
    %4762 = vmatpush2.xpose.msra.mxu0 0.0
    %4763 = vmatprep.subr.mxu0 0.0
    %4764 = vmatpush2.xpose.msra.mxu0 0.0
    %4765 = vmatprep.subr.mxu0 0.0
    %4766 = vmatpush2.xpose.msra.mxu0 0.0
    %4767 = vmatprep.subr.mxu0 0.0
    %4768 = vmatpush2.xpose.msra.mxu0 0.0
    %4769 = vmatprep.subr.mxu0 0.0
    %4770 = vmatpush2.xpose.msra.mxu0 0.0
    %4771 = vmatprep.mubr.f32.mxu0 0.0
    %4772 = vmatmul.mubr.f32.gmra.mxu0 %v4697
    %v4773 = vpop.f32.mrf.mxu0
    %v4774 = vadd.f32 0.0, %v4773
    %v4775 = vpop.f32.mrf.mxu0
    %4776 = vmatprep.mubr.f32.mxu0 0.0
    %4777 = vmatmul.mubr.f32.gmra.mxu0 %v4699
    %v4778 = vpop.f32.mrf.mxu0
    %v4779 = vadd.f32 0.0, %v4778
    %v4780 = vpop.f32.mrf.mxu0
    %4781 = vdwg.mxu0
    %v4782 = vmul.f32 %v4774, 0.35355338
    %v4783 = vmul.f32 %v4779, 0.35355338
    %v4784 = vadd.f32 %v4782, %v63
    %v4785 = vadd.f32 %v4783, %v64
    %v4786 = vsel %vm3325, %v4784, -inf
    %4787 = vmax.xlane.f32.xlu0 %v4786
    %v4788 = vpop.xlane.xlu0 %4787
    %v4789 = vsel %vm3325, %v4785, -inf
    %4790 = vmax.xlane.f32.xlu0 %v4789
    %v4791 = vpop.xlane.xlu0 %4790
    %v4792 = vsub.f32 %v4784, %v4788
    %v4793 = vsub.f32 %v4785, %v4791
    %v4794 = vmul.f32 %v4792, 1.442695
    %v4795 = vpow.pop %v4794
    %v4796 = vmul.f32 %v4793, 1.442695
    %v4797 = vpow.pop %v4796
    %v4798 = vsel %vm3325, %v4795, 0.0
    %4799 = vadd.xlane.f32.xlu0 %v4798
    %v4800 = vpop.xlane.xlu0 %4799
    %v4801 = vsel %vm3325, %v4797, 0.0
    %4802 = vadd.xlane.f32.xlu0 %v4801
    %v4803 = vpop.xlane.xlu0 %4802
    %v4804 = vrcp.pop %v4800
    %v4805 = vmul.f32 %v4795, %v4804
    %v4806 = vrcp.pop %v4803
    %v4807 = vmul.f32 %v4797, %v4806
    %4808 = vrot.lane.b32.xlu0 %v3218, 88
    %v4809 = vpop.permute.xlu0 %4808
    %4810 = vrot.lane.b32.xlu0 %v3223, 88
    %v4811 = vpop.permute.xlu0 %4810
    %4812 = vrot.lane.b32.xlu0 %v3228, 88
    %v4813 = vpop.permute.xlu0 %4812
    %v4818 = vsel %vm3325, %v4805, 0
    %v4821 = vsel %vm3325, %v4807, 0
    %4823 = vmatprep.subr.mxu0 0.0
    %4824 = vmatpush1.msra.mxu0 0.0
    %4825 = vmatprep.subr.mxu0 0.0
    %4826 = vmatpush1.msra.mxu0 0.0
    %4827 = vmatprep.subr.mxu0 0.0
    %4828 = vmatpush1.msra.mxu0 0.0
    %4829 = vmatprep.subr.mxu0 0.0
    %4830 = vmatpush1.msra.mxu0 0.0
    %4831 = vmatprep.subr.mxu0 0.0
    %4832 = vmatpush1.msra.mxu0 0.0
    %4833 = vmatprep.subr.mxu0 0.0
    %4834 = vmatpush1.msra.mxu0 0.0
    %4835 = vmatprep.subr.mxu0 0.0
    %4836 = vmatpush1.msra.mxu0 0.0
    %4837 = vmatprep.subr.mxu0 0.0
    %4838 = vmatpush1.msra.mxu0 0.0
    %4839 = vmatprep.subr.mxu0 0.0
    %4840 = vmatpush1.msra.mxu0 0.0
    %4841 = vmatprep.subr.mxu0 0.0
    %4842 = vmatpush1.msra.mxu0 0.0
    %4843 = vmatprep.subr.mxu0 0.0
    %4844 = vmatpush1.msra.mxu0 0.0
    %4845 = vmatprep.subr.mxu0 0.0
    %4846 = vmatpush1.msra.mxu0 0.0
    %4847 = vmatprep.subr.mxu0 0.0
    %4848 = vmatpush1.msra.mxu0 0.0
    %4849 = vmatprep.subr.mxu0 0.0
    %4850 = vmatpush1.msra.mxu0 %v4813
    %4851 = vmatprep.subr.mxu0 0.0
    %4852 = vmatpush1.msra.mxu0 %v4811
    %4853 = vmatprep.subr.mxu0 0.0
    %4854 = vmatpush1.msra.mxu0 %v4809
    %4855 = vmatprep.subr.mxu0 0.0
    %4856 = vmatpush2.msra.mxu0 0.0
    %4857 = vmatprep.subr.mxu0 0.0
    %4858 = vmatpush2.msra.mxu0 0.0
    %4859 = vmatprep.subr.mxu0 0.0
    %4860 = vmatpush2.msra.mxu0 0.0
    %4861 = vmatprep.subr.mxu0 0.0
    %4862 = vmatpush2.msra.mxu0 0.0
    %4863 = vmatprep.subr.mxu0 0.0
    %4864 = vmatpush2.msra.mxu0 0.0
    %4865 = vmatprep.subr.mxu0 0.0
    %4866 = vmatpush2.msra.mxu0 0.0
    %4867 = vmatprep.subr.mxu0 0.0
    %4868 = vmatpush2.msra.mxu0 0.0
    %4869 = vmatprep.subr.mxu0 0.0
    %4870 = vmatpush2.msra.mxu0 0.0
    %4871 = vmatprep.subr.mxu0 0.0
    %4872 = vmatpush2.msra.mxu0 0.0
    %4873 = vmatprep.subr.mxu0 0.0
    %4874 = vmatpush2.msra.mxu0 0.0
    %4875 = vmatprep.subr.mxu0 0.0
    %4876 = vmatpush2.msra.mxu0 0.0
    %4877 = vmatprep.subr.mxu0 0.0
    %4878 = vmatpush2.msra.mxu0 0.0
    %4879 = vmatprep.subr.mxu0 0.0
    %4880 = vmatpush2.msra.mxu0 0.0
    %4881 = vmatprep.subr.mxu0 0.0
    %4882 = vmatpush2.msra.mxu0 0.0
    %4883 = vmatprep.subr.mxu0 0.0
    %4884 = vmatpush2.msra.mxu0 0.0
    %4885 = vmatprep.subr.mxu0 0.0
    %4886 = vmatpush2.msra.mxu0 0.0
    %4887 = vmatprep.mubr.f32.mxu0 0.0
    %4888 = vmatmul.mubr.f32.gmra.mxu0 %v4818
    %v4889 = vpop.f32.mrf.mxu0
    %v4890 = vadd.f32 0.0, %v4889
    %v4891 = vpop.f32.mrf.mxu0
    %4892 = vmatprep.mubr.f32.mxu0 0.0
    %4893 = vmatmul.mubr.f32.gmra.mxu0 %v4821
    %v4894 = vpop.f32.mrf.mxu0
    %v4895 = vadd.f32 0.0, %v4894
    %v4896 = vpop.f32.mrf.mxu0
    %4897 = vdwg.mxu0
    %v4899 = vsel %vm421, %v4890, 0
    %v4902 = vsel %vm421, %v4895, 0
    %4904 = vmatprep.subr.mxu0 0.0
    %4905 = vmatpush1.msra.mxu0 0.0
    %4906 = vmatprep.subr.mxu0 0.0
    %4907 = vmatpush1.msra.mxu0 0.0
    %4908 = vmatprep.subr.mxu0 0.0
    %4909 = vmatpush1.msra.mxu0 0.0
    %4910 = vmatprep.subr.mxu0 0.0
    %4911 = vmatpush1.msra.mxu0 0.0
    %4912 = vmatprep.subr.mxu0 0.0
    %4913 = vmatpush1.msra.mxu0 0.0
    %4914 = vmatprep.subr.mxu0 0.0
    %4915 = vmatpush1.msra.mxu0 0.0
    %4916 = vmatprep.subr.mxu0 0.0
    %4917 = vmatpush1.msra.mxu0 0.0
    %4918 = vmatprep.subr.mxu0 0.0
    %4919 = vmatpush1.msra.mxu0 0.0
    %4920 = vmatprep.subr.mxu0 0.0
    %4921 = vmatpush1.msra.mxu0 0.0
    %4922 = vmatprep.subr.mxu0 0.0
    %4923 = vmatpush1.msra.mxu0 0.0
    %4924 = vmatprep.subr.mxu0 0.0
    %4925 = vmatpush1.msra.mxu0 0.0
    %4926 = vmatprep.subr.mxu0 0.0
    %4927 = vmatpush1.msra.mxu0 0.0
    %4928 = vmatprep.subr.mxu0 0.0
    %4929 = vmatpush1.msra.mxu0 0.0
    %4930 = vmatprep.subr.mxu0 0.0
    %4931 = vmatpush1.msra.mxu0 0.0
    %4932 = vmatprep.subr.mxu0 0.0
    %4933 = vmatpush1.msra.mxu0 0.0
    %4934 = vmatprep.subr.mxu0 0.0
    %4935 = vmatpush1.msra.mxu0 %v2893
    %4936 = vmatprep.subr.mxu0 0.0
    %4937 = vmatpush2.msra.mxu0 0.0
    %4938 = vmatprep.subr.mxu0 0.0
    %4939 = vmatpush2.msra.mxu0 0.0
    %4940 = vmatprep.subr.mxu0 0.0
    %4941 = vmatpush2.msra.mxu0 0.0
    %4942 = vmatprep.subr.mxu0 0.0
    %4943 = vmatpush2.msra.mxu0 0.0
    %4944 = vmatprep.subr.mxu0 0.0
    %4945 = vmatpush2.msra.mxu0 0.0
    %4946 = vmatprep.subr.mxu0 0.0
    %4947 = vmatpush2.msra.mxu0 0.0
    %4948 = vmatprep.subr.mxu0 0.0
    %4949 = vmatpush2.msra.mxu0 0.0
    %4950 = vmatprep.subr.mxu0 0.0
    %4951 = vmatpush2.msra.mxu0 0.0
    %4952 = vmatprep.subr.mxu0 0.0
    %4953 = vmatpush2.msra.mxu0 0.0
    %4954 = vmatprep.subr.mxu0 0.0
    %4955 = vmatpush2.msra.mxu0 0.0
    %4956 = vmatprep.subr.mxu0 0.0
    %4957 = vmatpush2.msra.mxu0 0.0
    %4958 = vmatprep.subr.mxu0 0.0
    %4959 = vmatpush2.msra.mxu0 0.0
    %4960 = vmatprep.subr.mxu0 0.0
    %4961 = vmatpush2.msra.mxu0 0.0
    %4962 = vmatprep.subr.mxu0 0.0
    %4963 = vmatpush2.msra.mxu0 0.0
    %4964 = vmatprep.subr.mxu0 0.0
    %4965 = vmatpush2.msra.mxu0 0.0
    %4966 = vmatprep.subr.mxu0 0.0
    %4967 = vmatpush2.msra.mxu0 0.0
    %4968 = vmatprep.mubr.f32.mxu0 0.0
    %4969 = vmatmul.mubr.f32.gmra.mxu0 %v4899
    %v4970 = vpop.f32.mrf.mxu0
    %v4971 = vadd.f32 0.0, %v4970
    %v4972 = vpop.f32.mrf.mxu0
    %4973 = vmatprep.mubr.f32.mxu0 0.0
    %4974 = vmatmul.mubr.f32.gmra.mxu0 %v4902
    %v4975 = vpop.f32.mrf.mxu0
    %v4976 = vadd.f32 0.0, %v4975
    %v4977 = vpop.f32.mrf.mxu0
    %4978 = vdwg.mxu0
    %v4979 = vadd.f32 %v4685, %v4971
    %v4980 = vadd.f32 %v4686, %v4976
    %4981 = vrot.lane.b32.xlu0 %v2998, 80
    %v4982 = vpop.permute.xlu0 %4981
    %4983 = vrot.lane.b32.xlu0 %v3003, 80
    %v4984 = vpop.permute.xlu0 %4983
    %4985 = vrot.lane.b32.xlu0 %v3110, 80
    %v4986 = vpop.permute.xlu0 %4985
    %4987 = vrot.lane.b32.xlu0 %v3115, 80
    %v4988 = vpop.permute.xlu0 %4987
    %4989 = vrot.lane.b32.xlu0 %v3120, 80
    %v4990 = vpop.permute.xlu0 %4989
    %v4991 = vsel %vm421, %v4982, 0
    %v4993 = vsel %vm421, %v4984, 0
    %v4995 = vsel %vm421, %v4986, 0
    %v4997 = vsel %vm421, %v4988, 0
    %v4999 = vsel %vm421, %v4990, 0
    %5001 = vmatprep.subr.mxu0 0.0
    %5002 = vmatpush1.xpose.msra.mxu0 0.0
    %5003 = vmatprep.subr.mxu0 0.0
    %5004 = vmatpush1.xpose.msra.mxu0 0.0
    %5005 = vmatprep.subr.mxu0 0.0
    %5006 = vmatpush1.xpose.msra.mxu0 0.0
    %5007 = vmatprep.subr.mxu0 0.0
    %5008 = vmatpush1.xpose.msra.mxu0 0.0
    %5009 = vmatprep.subr.mxu0 0.0
    %5010 = vmatpush1.xpose.msra.mxu0 0.0
    %5011 = vmatprep.subr.mxu0 0.0
    %5012 = vmatpush1.xpose.msra.mxu0 0.0
    %5013 = vmatprep.subr.mxu0 0.0
    %5014 = vmatpush1.xpose.msra.mxu0 0.0
    %5015 = vmatprep.subr.mxu0 0.0
    %5016 = vmatpush1.xpose.msra.mxu0 0.0
    %5017 = vmatprep.subr.mxu0 0.0
    %5018 = vmatpush1.xpose.msra.mxu0 0.0
    %5019 = vmatprep.subr.mxu0 0.0
    %5020 = vmatpush1.xpose.msra.mxu0 0.0
    %5021 = vmatprep.subr.mxu0 0.0
    %5022 = vmatpush1.xpose.msra.mxu0 0.0
    %5023 = vmatprep.subr.mxu0 0.0
    %5024 = vmatpush1.xpose.msra.mxu0 0.0
    %5025 = vmatprep.subr.mxu0 0.0
    %5026 = vmatpush1.xpose.msra.mxu0 0.0
    %5027 = vmatprep.subr.mxu0 0.0
    %5028 = vmatpush1.xpose.msra.mxu0 %v4999
    %5029 = vmatprep.subr.mxu0 0.0
    %5030 = vmatpush1.xpose.msra.mxu0 %v4997
    %5031 = vmatprep.subr.mxu0 0.0
    %5032 = vmatpush1.xpose.msra.mxu0 %v4995
    %5033 = vmatprep.subr.mxu0 0.0
    %5034 = vmatpush2.xpose.msra.mxu0 0.0
    %5035 = vmatprep.subr.mxu0 0.0
    %5036 = vmatpush2.xpose.msra.mxu0 0.0
    %5037 = vmatprep.subr.mxu0 0.0
    %5038 = vmatpush2.xpose.msra.mxu0 0.0
    %5039 = vmatprep.subr.mxu0 0.0
    %5040 = vmatpush2.xpose.msra.mxu0 0.0
    %5041 = vmatprep.subr.mxu0 0.0
    %5042 = vmatpush2.xpose.msra.mxu0 0.0
    %5043 = vmatprep.subr.mxu0 0.0
    %5044 = vmatpush2.xpose.msra.mxu0 0.0
    %5045 = vmatprep.subr.mxu0 0.0
    %5046 = vmatpush2.xpose.msra.mxu0 0.0
    %5047 = vmatprep.subr.mxu0 0.0
    %5048 = vmatpush2.xpose.msra.mxu0 0.0
    %5049 = vmatprep.subr.mxu0 0.0
    %5050 = vmatpush2.xpose.msra.mxu0 0.0
    %5051 = vmatprep.subr.mxu0 0.0
    %5052 = vmatpush2.xpose.msra.mxu0 0.0
    %5053 = vmatprep.subr.mxu0 0.0
    %5054 = vmatpush2.xpose.msra.mxu0 0.0
    %5055 = vmatprep.subr.mxu0 0.0
    %5056 = vmatpush2.xpose.msra.mxu0 0.0
    %5057 = vmatprep.subr.mxu0 0.0
    %5058 = vmatpush2.xpose.msra.mxu0 0.0
    %5059 = vmatprep.subr.mxu0 0.0
    %5060 = vmatpush2.xpose.msra.mxu0 0.0
    %5061 = vmatprep.subr.mxu0 0.0
    %5062 = vmatpush2.xpose.msra.mxu0 0.0
    %5063 = vmatprep.subr.mxu0 0.0
    %5064 = vmatpush2.xpose.msra.mxu0 0.0
    %5065 = vmatprep.mubr.f32.mxu0 0.0
    %5066 = vmatmul.mubr.f32.gmra.mxu0 %v4991
    %v5067 = vpop.f32.mrf.mxu0
    %v5068 = vadd.f32 0.0, %v5067
    %v5069 = vpop.f32.mrf.mxu0
    %5070 = vmatprep.mubr.f32.mxu0 0.0
    %5071 = vmatmul.mubr.f32.gmra.mxu0 %v4993
    %v5072 = vpop.f32.mrf.mxu0
    %v5073 = vadd.f32 0.0, %v5072
    %v5074 = vpop.f32.mrf.mxu0
    %5075 = vdwg.mxu0
    %v5076 = vmul.f32 %v5068, 0.35355338
    %v5077 = vmul.f32 %v5073, 0.35355338
    %v5078 = vadd.f32 %v5076, %v63
    %v5079 = vadd.f32 %v5077, %v64
    %v5080 = vsel %vm3325, %v5078, -inf
    %5081 = vmax.xlane.f32.xlu0 %v5080
    %v5082 = vpop.xlane.xlu0 %5081
    %v5083 = vsel %vm3325, %v5079, -inf
    %5084 = vmax.xlane.f32.xlu0 %v5083
    %v5085 = vpop.xlane.xlu0 %5084
    %v5086 = vsub.f32 %v5078, %v5082
    %v5087 = vsub.f32 %v5079, %v5085
    %v5088 = vmul.f32 %v5086, 1.442695
    %v5089 = vpow.pop %v5088
    %v5090 = vmul.f32 %v5087, 1.442695
    %v5091 = vpow.pop %v5090
    %v5092 = vsel %vm3325, %v5089, 0.0
    %5093 = vadd.xlane.f32.xlu0 %v5092
    %v5094 = vpop.xlane.xlu0 %5093
    %v5095 = vsel %vm3325, %v5091, 0.0
    %5096 = vadd.xlane.f32.xlu0 %v5095
    %v5097 = vpop.xlane.xlu0 %5096
    %v5098 = vrcp.pop %v5094
    %v5099 = vmul.f32 %v5089, %v5098
    %v5100 = vrcp.pop %v5097
    %v5101 = vmul.f32 %v5091, %v5100
    %5102 = vrot.lane.b32.xlu0 %v3218, 80
    %v5103 = vpop.permute.xlu0 %5102
    %5104 = vrot.lane.b32.xlu0 %v3223, 80
    %v5105 = vpop.permute.xlu0 %5104
    %5106 = vrot.lane.b32.xlu0 %v3228, 80
    %v5107 = vpop.permute.xlu0 %5106
    %v5112 = vsel %vm3325, %v5099, 0
    %v5115 = vsel %vm3325, %v5101, 0
    %5117 = vmatprep.subr.mxu0 0.0
    %5118 = vmatpush1.msra.mxu0 0.0
    %5119 = vmatprep.subr.mxu0 0.0
    %5120 = vmatpush1.msra.mxu0 0.0
    %5121 = vmatprep.subr.mxu0 0.0
    %5122 = vmatpush1.msra.mxu0 0.0
    %5123 = vmatprep.subr.mxu0 0.0
    %5124 = vmatpush1.msra.mxu0 0.0
    %5125 = vmatprep.subr.mxu0 0.0
    %5126 = vmatpush1.msra.mxu0 0.0
    %5127 = vmatprep.subr.mxu0 0.0
    %5128 = vmatpush1.msra.mxu0 0.0
    %5129 = vmatprep.subr.mxu0 0.0
    %5130 = vmatpush1.msra.mxu0 0.0
    %5131 = vmatprep.subr.mxu0 0.0
    %5132 = vmatpush1.msra.mxu0 0.0
    %5133 = vmatprep.subr.mxu0 0.0
    %5134 = vmatpush1.msra.mxu0 0.0
    %5135 = vmatprep.subr.mxu0 0.0
    %5136 = vmatpush1.msra.mxu0 0.0
    %5137 = vmatprep.subr.mxu0 0.0
    %5138 = vmatpush1.msra.mxu0 0.0
    %5139 = vmatprep.subr.mxu0 0.0
    %5140 = vmatpush1.msra.mxu0 0.0
    %5141 = vmatprep.subr.mxu0 0.0
    %5142 = vmatpush1.msra.mxu0 0.0
    %5143 = vmatprep.subr.mxu0 0.0
    %5144 = vmatpush1.msra.mxu0 %v5107
    %5145 = vmatprep.subr.mxu0 0.0
    %5146 = vmatpush1.msra.mxu0 %v5105
    %5147 = vmatprep.subr.mxu0 0.0
    %5148 = vmatpush1.msra.mxu0 %v5103
    %5149 = vmatprep.subr.mxu0 0.0
    %5150 = vmatpush2.msra.mxu0 0.0
    %5151 = vmatprep.subr.mxu0 0.0
    %5152 = vmatpush2.msra.mxu0 0.0
    %5153 = vmatprep.subr.mxu0 0.0
    %5154 = vmatpush2.msra.mxu0 0.0
    %5155 = vmatprep.subr.mxu0 0.0
    %5156 = vmatpush2.msra.mxu0 0.0
    %5157 = vmatprep.subr.mxu0 0.0
    %5158 = vmatpush2.msra.mxu0 0.0
    %5159 = vmatprep.subr.mxu0 0.0
    %5160 = vmatpush2.msra.mxu0 0.0
    %5161 = vmatprep.subr.mxu0 0.0
    %5162 = vmatpush2.msra.mxu0 0.0
    %5163 = vmatprep.subr.mxu0 0.0
    %5164 = vmatpush2.msra.mxu0 0.0
    %5165 = vmatprep.subr.mxu0 0.0
    %5166 = vmatpush2.msra.mxu0 0.0
    %5167 = vmatprep.subr.mxu0 0.0
    %5168 = vmatpush2.msra.mxu0 0.0
    %5169 = vmatprep.subr.mxu0 0.0
    %5170 = vmatpush2.msra.mxu0 0.0
    %5171 = vmatprep.subr.mxu0 0.0
    %5172 = vmatpush2.msra.mxu0 0.0
    %5173 = vmatprep.subr.mxu0 0.0
    %5174 = vmatpush2.msra.mxu0 0.0
    %5175 = vmatprep.subr.mxu0 0.0
    %5176 = vmatpush2.msra.mxu0 0.0
    %5177 = vmatprep.subr.mxu0 0.0
    %5178 = vmatpush2.msra.mxu0 0.0
    %5179 = vmatprep.subr.mxu0 0.0
    %5180 = vmatpush2.msra.mxu0 0.0
    %5181 = vmatprep.mubr.f32.mxu0 0.0
    %5182 = vmatmul.mubr.f32.gmra.mxu0 %v5112
    %v5183 = vpop.f32.mrf.mxu0
    %v5184 = vadd.f32 0.0, %v5183
    %v5185 = vpop.f32.mrf.mxu0
    %5186 = vmatprep.mubr.f32.mxu0 0.0
    %5187 = vmatmul.mubr.f32.gmra.mxu0 %v5115
    %v5188 = vpop.f32.mrf.mxu0
    %v5189 = vadd.f32 0.0, %v5188
    %v5190 = vpop.f32.mrf.mxu0
    %5191 = vdwg.mxu0
    %v5193 = vsel %vm421, %v5184, 0
    %v5196 = vsel %vm421, %v5189, 0
    %5198 = vmatprep.subr.mxu0 0.0
    %5199 = vmatpush1.msra.mxu0 0.0
    %5200 = vmatprep.subr.mxu0 0.0
    %5201 = vmatpush1.msra.mxu0 0.0
    %5202 = vmatprep.subr.mxu0 0.0
    %5203 = vmatpush1.msra.mxu0 0.0
    %5204 = vmatprep.subr.mxu0 0.0
    %5205 = vmatpush1.msra.mxu0 0.0
    %5206 = vmatprep.subr.mxu0 0.0
    %5207 = vmatpush1.msra.mxu0 0.0
    %5208 = vmatprep.subr.mxu0 0.0
    %5209 = vmatpush1.msra.mxu0 0.0
    %5210 = vmatprep.subr.mxu0 0.0
    %5211 = vmatpush1.msra.mxu0 0.0
    %5212 = vmatprep.subr.mxu0 0.0
    %5213 = vmatpush1.msra.mxu0 0.0
    %5214 = vmatprep.subr.mxu0 0.0
    %5215 = vmatpush1.msra.mxu0 0.0
    %5216 = vmatprep.subr.mxu0 0.0
    %5217 = vmatpush1.msra.mxu0 0.0
    %5218 = vmatprep.subr.mxu0 0.0
    %5219 = vmatpush1.msra.mxu0 0.0
    %5220 = vmatprep.subr.mxu0 0.0
    %5221 = vmatpush1.msra.mxu0 0.0
    %5222 = vmatprep.subr.mxu0 0.0
    %5223 = vmatpush1.msra.mxu0 0.0
    %5224 = vmatprep.subr.mxu0 0.0
    %5225 = vmatpush1.msra.mxu0 0.0
    %5226 = vmatprep.subr.mxu0 0.0
    %5227 = vmatpush1.msra.mxu0 0.0
    %5228 = vmatprep.subr.mxu0 0.0
    %5229 = vmatpush1.msra.mxu0 %v2894
    %5230 = vmatprep.subr.mxu0 0.0
    %5231 = vmatpush2.msra.mxu0 0.0
    %5232 = vmatprep.subr.mxu0 0.0
    %5233 = vmatpush2.msra.mxu0 0.0
    %5234 = vmatprep.subr.mxu0 0.0
    %5235 = vmatpush2.msra.mxu0 0.0
    %5236 = vmatprep.subr.mxu0 0.0
    %5237 = vmatpush2.msra.mxu0 0.0
    %5238 = vmatprep.subr.mxu0 0.0
    %5239 = vmatpush2.msra.mxu0 0.0
    %5240 = vmatprep.subr.mxu0 0.0
    %5241 = vmatpush2.msra.mxu0 0.0
    %5242 = vmatprep.subr.mxu0 0.0
    %5243 = vmatpush2.msra.mxu0 0.0
    %5244 = vmatprep.subr.mxu0 0.0
    %5245 = vmatpush2.msra.mxu0 0.0
    %5246 = vmatprep.subr.mxu0 0.0
    %5247 = vmatpush2.msra.mxu0 0.0
    %5248 = vmatprep.subr.mxu0 0.0
    %5249 = vmatpush2.msra.mxu0 0.0
    %5250 = vmatprep.subr.mxu0 0.0
    %5251 = vmatpush2.msra.mxu0 0.0
    %5252 = vmatprep.subr.mxu0 0.0
    %5253 = vmatpush2.msra.mxu0 0.0
    %5254 = vmatprep.subr.mxu0 0.0
    %5255 = vmatpush2.msra.mxu0 0.0
    %5256 = vmatprep.subr.mxu0 0.0
    %5257 = vmatpush2.msra.mxu0 0.0
    %5258 = vmatprep.subr.mxu0 0.0
    %5259 = vmatpush2.msra.mxu0 0.0
    %5260 = vmatprep.subr.mxu0 0.0
    %5261 = vmatpush2.msra.mxu0 0.0
    %5262 = vmatprep.mubr.f32.mxu0 0.0
    %5263 = vmatmul.mubr.f32.gmra.mxu0 %v5193
    %v5264 = vpop.f32.mrf.mxu0
    %v5265 = vadd.f32 0.0, %v5264
    %v5266 = vpop.f32.mrf.mxu0
    %5267 = vmatprep.mubr.f32.mxu0 0.0
    %5268 = vmatmul.mubr.f32.gmra.mxu0 %v5196
    %v5269 = vpop.f32.mrf.mxu0
    %v5270 = vadd.f32 0.0, %v5269
    %v5271 = vpop.f32.mrf.mxu0
    %5272 = vdwg.mxu0
    %v5273 = vadd.f32 %v4979, %v5265
    %v5274 = vadd.f32 %v4980, %v5270
    %5275 = vrot.lane.b32.xlu0 %v2998, 72
    %v5276 = vpop.permute.xlu0 %5275
    %5277 = vrot.lane.b32.xlu0 %v3003, 72
    %v5278 = vpop.permute.xlu0 %5277
    %5279 = vrot.lane.b32.xlu0 %v3110, 72
    %v5280 = vpop.permute.xlu0 %5279
    %5281 = vrot.lane.b32.xlu0 %v3115, 72
    %v5282 = vpop.permute.xlu0 %5281
    %5283 = vrot.lane.b32.xlu0 %v3120, 72
    %v5284 = vpop.permute.xlu0 %5283
    %v5285 = vsel %vm421, %v5276, 0
    %v5287 = vsel %vm421, %v5278, 0
    %v5289 = vsel %vm421, %v5280, 0
    %v5291 = vsel %vm421, %v5282, 0
    %v5293 = vsel %vm421, %v5284, 0
    %5295 = vmatprep.subr.mxu0 0.0
    %5296 = vmatpush1.xpose.msra.mxu0 0.0
    %5297 = vmatprep.subr.mxu0 0.0
    %5298 = vmatpush1.xpose.msra.mxu0 0.0
    %5299 = vmatprep.subr.mxu0 0.0
    %5300 = vmatpush1.xpose.msra.mxu0 0.0
    %5301 = vmatprep.subr.mxu0 0.0
    %5302 = vmatpush1.xpose.msra.mxu0 0.0
    %5303 = vmatprep.subr.mxu0 0.0
    %5304 = vmatpush1.xpose.msra.mxu0 0.0
    %5305 = vmatprep.subr.mxu0 0.0
    %5306 = vmatpush1.xpose.msra.mxu0 0.0
    %5307 = vmatprep.subr.mxu0 0.0
    %5308 = vmatpush1.xpose.msra.mxu0 0.0
    %5309 = vmatprep.subr.mxu0 0.0
    %5310 = vmatpush1.xpose.msra.mxu0 0.0
    %5311 = vmatprep.subr.mxu0 0.0
    %5312 = vmatpush1.xpose.msra.mxu0 0.0
    %5313 = vmatprep.subr.mxu0 0.0
    %5314 = vmatpush1.xpose.msra.mxu0 0.0
    %5315 = vmatprep.subr.mxu0 0.0
    %5316 = vmatpush1.xpose.msra.mxu0 0.0
    %5317 = vmatprep.subr.mxu0 0.0
    %5318 = vmatpush1.xpose.msra.mxu0 0.0
    %5319 = vmatprep.subr.mxu0 0.0
    %5320 = vmatpush1.xpose.msra.mxu0 0.0
    %5321 = vmatprep.subr.mxu0 0.0
    %5322 = vmatpush1.xpose.msra.mxu0 %v5293
    %5323 = vmatprep.subr.mxu0 0.0
    %5324 = vmatpush1.xpose.msra.mxu0 %v5291
    %5325 = vmatprep.subr.mxu0 0.0
    %5326 = vmatpush1.xpose.msra.mxu0 %v5289
    %5327 = vmatprep.subr.mxu0 0.0
    %5328 = vmatpush2.xpose.msra.mxu0 0.0
    %5329 = vmatprep.subr.mxu0 0.0
    %5330 = vmatpush2.xpose.msra.mxu0 0.0
    %5331 = vmatprep.subr.mxu0 0.0
    %5332 = vmatpush2.xpose.msra.mxu0 0.0
    %5333 = vmatprep.subr.mxu0 0.0
    %5334 = vmatpush2.xpose.msra.mxu0 0.0
    %5335 = vmatprep.subr.mxu0 0.0
    %5336 = vmatpush2.xpose.msra.mxu0 0.0
    %5337 = vmatprep.subr.mxu0 0.0
    %5338 = vmatpush2.xpose.msra.mxu0 0.0
    %5339 = vmatprep.subr.mxu0 0.0
    %5340 = vmatpush2.xpose.msra.mxu0 0.0
    %5341 = vmatprep.subr.mxu0 0.0
    %5342 = vmatpush2.xpose.msra.mxu0 0.0
    %5343 = vmatprep.subr.mxu0 0.0
    %5344 = vmatpush2.xpose.msra.mxu0 0.0
    %5345 = vmatprep.subr.mxu0 0.0
    %5346 = vmatpush2.xpose.msra.mxu0 0.0
    %5347 = vmatprep.subr.mxu0 0.0
    %5348 = vmatpush2.xpose.msra.mxu0 0.0
    %5349 = vmatprep.subr.mxu0 0.0
    %5350 = vmatpush2.xpose.msra.mxu0 0.0
    %5351 = vmatprep.subr.mxu0 0.0
    %5352 = vmatpush2.xpose.msra.mxu0 0.0
    %5353 = vmatprep.subr.mxu0 0.0
    %5354 = vmatpush2.xpose.msra.mxu0 0.0
    %5355 = vmatprep.subr.mxu0 0.0
    %5356 = vmatpush2.xpose.msra.mxu0 0.0
    %5357 = vmatprep.subr.mxu0 0.0
    %5358 = vmatpush2.xpose.msra.mxu0 0.0
    %5359 = vmatprep.mubr.f32.mxu0 0.0
    %5360 = vmatmul.mubr.f32.gmra.mxu0 %v5285
    %v5361 = vpop.f32.mrf.mxu0
    %v5362 = vadd.f32 0.0, %v5361
    %v5363 = vpop.f32.mrf.mxu0
    %5364 = vmatprep.mubr.f32.mxu0 0.0
    %5365 = vmatmul.mubr.f32.gmra.mxu0 %v5287
    %v5366 = vpop.f32.mrf.mxu0
    %v5367 = vadd.f32 0.0, %v5366
    %v5368 = vpop.f32.mrf.mxu0
    %5369 = vdwg.mxu0
    %v5370 = vmul.f32 %v5362, 0.35355338
    %v5371 = vmul.f32 %v5367, 0.35355338
    %v5372 = vadd.f32 %v5370, %v63
    %v5373 = vadd.f32 %v5371, %v64
    %v5374 = vsel %vm3325, %v5372, -inf
    %5375 = vmax.xlane.f32.xlu0 %v5374
    %v5376 = vpop.xlane.xlu0 %5375
    %v5377 = vsel %vm3325, %v5373, -inf
    %5378 = vmax.xlane.f32.xlu0 %v5377
    %v5379 = vpop.xlane.xlu0 %5378
    %v5380 = vsub.f32 %v5372, %v5376
    %v5381 = vsub.f32 %v5373, %v5379
    %v5382 = vmul.f32 %v5380, 1.442695
    %v5383 = vpow.pop %v5382
    %v5384 = vmul.f32 %v5381, 1.442695
    %v5385 = vpow.pop %v5384
    %v5386 = vsel %vm3325, %v5383, 0.0
    %5387 = vadd.xlane.f32.xlu0 %v5386
    %v5388 = vpop.xlane.xlu0 %5387
    %v5389 = vsel %vm3325, %v5385, 0.0
    %5390 = vadd.xlane.f32.xlu0 %v5389
    %v5391 = vpop.xlane.xlu0 %5390
    %v5392 = vrcp.pop %v5388
    %v5393 = vmul.f32 %v5383, %v5392
    %v5394 = vrcp.pop %v5391
    %v5395 = vmul.f32 %v5385, %v5394
    %5396 = vrot.lane.b32.xlu0 %v3218, 72
    %v5397 = vpop.permute.xlu0 %5396
    %5398 = vrot.lane.b32.xlu0 %v3223, 72
    %v5399 = vpop.permute.xlu0 %5398
    %5400 = vrot.lane.b32.xlu0 %v3228, 72
    %v5401 = vpop.permute.xlu0 %5400
    %v5406 = vsel %vm3325, %v5393, 0
    %v5409 = vsel %vm3325, %v5395, 0
    %5411 = vmatprep.subr.mxu0 0.0
    %5412 = vmatpush1.msra.mxu0 0.0
    %5413 = vmatprep.subr.mxu0 0.0
    %5414 = vmatpush1.msra.mxu0 0.0
    %5415 = vmatprep.subr.mxu0 0.0
    %5416 = vmatpush1.msra.mxu0 0.0
    %5417 = vmatprep.subr.mxu0 0.0
    %5418 = vmatpush1.msra.mxu0 0.0
    %5419 = vmatprep.subr.mxu0 0.0
    %5420 = vmatpush1.msra.mxu0 0.0
    %5421 = vmatprep.subr.mxu0 0.0
    %5422 = vmatpush1.msra.mxu0 0.0
    %5423 = vmatprep.subr.mxu0 0.0
    %5424 = vmatpush1.msra.mxu0 0.0
    %5425 = vmatprep.subr.mxu0 0.0
    %5426 = vmatpush1.msra.mxu0 0.0
    %5427 = vmatprep.subr.mxu0 0.0
    %5428 = vmatpush1.msra.mxu0 0.0
    %5429 = vmatprep.subr.mxu0 0.0
    %5430 = vmatpush1.msra.mxu0 0.0
    %5431 = vmatprep.subr.mxu0 0.0
    %5432 = vmatpush1.msra.mxu0 0.0
    %5433 = vmatprep.subr.mxu0 0.0
    %5434 = vmatpush1.msra.mxu0 0.0
    %5435 = vmatprep.subr.mxu0 0.0
    %5436 = vmatpush1.msra.mxu0 0.0
    %5437 = vmatprep.subr.mxu0 0.0
    %5438 = vmatpush1.msra.mxu0 %v5401
    %5439 = vmatprep.subr.mxu0 0.0
    %5440 = vmatpush1.msra.mxu0 %v5399
    %5441 = vmatprep.subr.mxu0 0.0
    %5442 = vmatpush1.msra.mxu0 %v5397
    %5443 = vmatprep.subr.mxu0 0.0
    %5444 = vmatpush2.msra.mxu0 0.0
    %5445 = vmatprep.subr.mxu0 0.0
    %5446 = vmatpush2.msra.mxu0 0.0
    %5447 = vmatprep.subr.mxu0 0.0
    %5448 = vmatpush2.msra.mxu0 0.0
    %5449 = vmatprep.subr.mxu0 0.0
    %5450 = vmatpush2.msra.mxu0 0.0
    %5451 = vmatprep.subr.mxu0 0.0
    %5452 = vmatpush2.msra.mxu0 0.0
    %5453 = vmatprep.subr.mxu0 0.0
    %5454 = vmatpush2.msra.mxu0 0.0
    %5455 = vmatprep.subr.mxu0 0.0
    %5456 = vmatpush2.msra.mxu0 0.0
    %5457 = vmatprep.subr.mxu0 0.0
    %5458 = vmatpush2.msra.mxu0 0.0
    %5459 = vmatprep.subr.mxu0 0.0
    %5460 = vmatpush2.msra.mxu0 0.0
    %5461 = vmatprep.subr.mxu0 0.0
    %5462 = vmatpush2.msra.mxu0 0.0
    %5463 = vmatprep.subr.mxu0 0.0
    %5464 = vmatpush2.msra.mxu0 0.0
    %5465 = vmatprep.subr.mxu0 0.0
    %5466 = vmatpush2.msra.mxu0 0.0
    %5467 = vmatprep.subr.mxu0 0.0
    %5468 = vmatpush2.msra.mxu0 0.0
    %5469 = vmatprep.subr.mxu0 0.0
    %5470 = vmatpush2.msra.mxu0 0.0
    %5471 = vmatprep.subr.mxu0 0.0
    %5472 = vmatpush2.msra.mxu0 0.0
    %5473 = vmatprep.subr.mxu0 0.0
    %5474 = vmatpush2.msra.mxu0 0.0
    %5475 = vmatprep.mubr.f32.mxu0 0.0
    %5476 = vmatmul.mubr.f32.gmra.mxu0 %v5406
    %v5477 = vpop.f32.mrf.mxu0
    %v5478 = vadd.f32 0.0, %v5477
    %v5479 = vpop.f32.mrf.mxu0
    %5480 = vmatprep.mubr.f32.mxu0 0.0
    %5481 = vmatmul.mubr.f32.gmra.mxu0 %v5409
    %v5482 = vpop.f32.mrf.mxu0
    %v5483 = vadd.f32 0.0, %v5482
    %v5484 = vpop.f32.mrf.mxu0
    %5485 = vdwg.mxu0
    %v5487 = vsel %vm421, %v5478, 0
    %v5490 = vsel %vm421, %v5483, 0
    %5492 = vmatprep.subr.mxu0 0.0
    %5493 = vmatpush1.msra.mxu0 0.0
    %5494 = vmatprep.subr.mxu0 0.0
    %5495 = vmatpush1.msra.mxu0 0.0
    %5496 = vmatprep.subr.mxu0 0.0
    %5497 = vmatpush1.msra.mxu0 0.0
    %5498 = vmatprep.subr.mxu0 0.0
    %5499 = vmatpush1.msra.mxu0 0.0
    %5500 = vmatprep.subr.mxu0 0.0
    %5501 = vmatpush1.msra.mxu0 0.0
    %5502 = vmatprep.subr.mxu0 0.0
    %5503 = vmatpush1.msra.mxu0 0.0
    %5504 = vmatprep.subr.mxu0 0.0
    %5505 = vmatpush1.msra.mxu0 0.0
    %5506 = vmatprep.subr.mxu0 0.0
    %5507 = vmatpush1.msra.mxu0 0.0
    %5508 = vmatprep.subr.mxu0 0.0
    %5509 = vmatpush1.msra.mxu0 0.0
    %5510 = vmatprep.subr.mxu0 0.0
    %5511 = vmatpush1.msra.mxu0 0.0
    %5512 = vmatprep.subr.mxu0 0.0
    %5513 = vmatpush1.msra.mxu0 0.0
    %5514 = vmatprep.subr.mxu0 0.0
    %5515 = vmatpush1.msra.mxu0 0.0
    %5516 = vmatprep.subr.mxu0 0.0
    %5517 = vmatpush1.msra.mxu0 0.0
    %5518 = vmatprep.subr.mxu0 0.0
    %5519 = vmatpush1.msra.mxu0 0.0
    %5520 = vmatprep.subr.mxu0 0.0
    %5521 = vmatpush1.msra.mxu0 0.0
    %5522 = vmatprep.subr.mxu0 0.0
    %5523 = vmatpush1.msra.mxu0 %v2895
    %5524 = vmatprep.subr.mxu0 0.0
    %5525 = vmatpush2.msra.mxu0 0.0
    %5526 = vmatprep.subr.mxu0 0.0
    %5527 = vmatpush2.msra.mxu0 0.0
    %5528 = vmatprep.subr.mxu0 0.0
    %5529 = vmatpush2.msra.mxu0 0.0
    %5530 = vmatprep.subr.mxu0 0.0
    %5531 = vmatpush2.msra.mxu0 0.0
    %5532 = vmatprep.subr.mxu0 0.0
    %5533 = vmatpush2.msra.mxu0 0.0
    %5534 = vmatprep.subr.mxu0 0.0
    %5535 = vmatpush2.msra.mxu0 0.0
    %5536 = vmatprep.subr.mxu0 0.0
    %5537 = vmatpush2.msra.mxu0 0.0
    %5538 = vmatprep.subr.mxu0 0.0
    %5539 = vmatpush2.msra.mxu0 0.0
    %5540 = vmatprep.subr.mxu0 0.0
    %5541 = vmatpush2.msra.mxu0 0.0
    %5542 = vmatprep.subr.mxu0 0.0
    %5543 = vmatpush2.msra.mxu0 0.0
    %5544 = vmatprep.subr.mxu0 0.0
    %5545 = vmatpush2.msra.mxu0 0.0
    %5546 = vmatprep.subr.mxu0 0.0
    %5547 = vmatpush2.msra.mxu0 0.0
    %5548 = vmatprep.subr.mxu0 0.0
    %5549 = vmatpush2.msra.mxu0 0.0
    %5550 = vmatprep.subr.mxu0 0.0
    %5551 = vmatpush2.msra.mxu0 0.0
    %5552 = vmatprep.subr.mxu0 0.0
    %5553 = vmatpush2.msra.mxu0 0.0
    %5554 = vmatprep.subr.mxu0 0.0
    %5555 = vmatpush2.msra.mxu0 0.0
    %5556 = vmatprep.mubr.f32.mxu0 0.0
    %5557 = vmatmul.mubr.f32.gmra.mxu0 %v5487
    %v5558 = vpop.f32.mrf.mxu0
    %v5559 = vadd.f32 0.0, %v5558
    %v5560 = vpop.f32.mrf.mxu0
    %5561 = vmatprep.mubr.f32.mxu0 0.0
    %5562 = vmatmul.mubr.f32.gmra.mxu0 %v5490
    %v5563 = vpop.f32.mrf.mxu0
    %v5564 = vadd.f32 0.0, %v5563
    %v5565 = vpop.f32.mrf.mxu0
    %5566 = vdwg.mxu0
    %v5567 = vadd.f32 %v5273, %v5559
    %v5568 = vadd.f32 %v5274, %v5564
    %v5570 = vlaneseq
    %v5571 = vshrl.u32 %v5570, 7
    %v5572 = vsub.s32 0, %v5571
    %v5573 = vrot.slane %v2896, %v5572
    %v5575 = vadd.f32 %v5567, %v5573
    %v5576 = vadd.f32 %v5568, %v5573
    %v5577 = vadd.f32 %v2729, %v5575
    %v5578 = vadd.f32 %v2730, %v5576
    %5579 = vst.msk [vmem:[#allocation2] sm:$0xff] %vm103, %v5577
    %5580 = vst.msk [vmem:[#allocation2 + $0x8] sm:$0xff] %vm103, %v5578
    // Predicated region
    $region58: #{qformer2_forward.1} parent=1 // pred_check
      _
    $region59: #{qformer2_forward.1} parent=1 // pred_check_branch
      %5582 = sbr.rel (0) target = $region61
    $region60: #{qformer2_forward.1} parent=1 // pred_region
      %s5584 = ssub.s32 256, 256
      %5585 = vsyncadd [#allocation3], %s5584
      %s5586 = sshll.u32 [#allocation2], 4
      %s5587 = int_to_ptr.vmem [resolvable:$true] %s5586
      %5592 = dma.vmem_to_hbm [thread:$0]  %s5587, 256, %s14, [#allocation3], 128, 128, 8
    $region61: #{qformer2_forward.1} parent=1 // pred_fallthru
      _
    // Predicated region
    $region62: #{qformer2_forward.1} parent=1 // pred_check
      _
    $region63: #{qformer2_forward.1} parent=1 // pred_check_branch
      %5594 = sbr.rel (0) target = $region65
    $region64: #{qformer2_forward.1} parent=1 // pred_region
      %5595 = dma.done [#allocation3], 256
    $region65: #{qformer2_forward.1} parent=1 // pred_fallthru
      _
    %5596 = vsyncpa [#allocation3], 1

</llo_original>
